<compile_context>
chip_gen: v7x
topology: tpu7x:2x2x1
jax: 0.10.0
libtpu: 0.0.40
codegen_flags: <defaults>
</compile_context>

<pallas_src>
import jax
import jax.numpy as jnp
import numpy as np
from jax.experimental import pallas as pl
from jax.experimental.pallas import tpu as pltpu

FEATURE_SIZE = 64
SHARED = 512
H1, H2, H3, H4, H5 = 256, 128, 64, 32, 16
OUT = 1
N_SHARED = 4                      # shared towers
N_SMALL = 3                       # small towers (tower1_1..tower1_3)
N_PATHS = N_SHARED * N_SMALL      # 12 scalar outputs per sample
OUT_PAD = 128                     # lane-dense padded output width

# Dense (executed) MACs per sample of the fused layer stack.
DENSE_MACS_PER_SAMPLE = (
    FEATURE_SIZE * SHARED                               # W0: 64x512
    + SHARED * (N_SHARED * H1)                          # W1: 512x1024
    + N_SHARED * (H1 * H2)                              # W2 split: 4 x 256x128
    + (N_SHARED * H2) * (N_SHARED * H3)                 # W3: 512x256
    + (N_SHARED * H3) * (N_SHARED * N_SMALL * H4)       # W4: 256x384
    + (N_PATHS * H4) * (N_PATHS * H5)                   # W5: 384x192
    + (N_PATHS * H5) * OUT_PAD)                         # W6: 192x128


def _relu(x):
    return jnp.maximum(x, 0.0)


def mtl_kernel(x_ref,
               w0_ref, b0_ref,
               w1_ref, b1_ref,
               w2_ref, b2_ref,
               w3_ref, b3_ref,
               w4_ref, b4_ref,
               w5_ref, b5_ref,
               w6_ref, b6_ref,
               out_ref):
    """One batch tile of the fused MTLnet forward.

    bf16 operands feed the MXU (f32 accumulation); bias add / ReLU stay f32
    on the VPU.  W2 is executed as 4 per-tower dots (no block-diag waste).
    """
    f32 = jnp.float32
    bf16 = jnp.bfloat16

    x = x_ref[...].astype(bf16)                                          # (Bt, 64)
    h = _relu(jnp.dot(x, w0_ref[...],
                      preferred_element_type=f32) + b0_ref[...])         # (Bt, 512) f32

    a = _relu(jnp.dot(h.astype(bf16), w1_ref[...],
                      preferred_element_type=f32) + b1_ref[...])         # (Bt, 1024)

    # W2: the largest layer -- per-tower (K=256, N=128) dots on static slices.
    a_b = a.astype(bf16)
    parts = [
        jnp.dot(a_b[:, s * H1:(s + 1) * H1], w2_ref[s],
                preferred_element_type=f32)
        for s in range(N_SHARED)
    ]
    a = _relu(jnp.concatenate(parts, axis=1) + b2_ref[...])              # (Bt, 512)

    a = _relu(jnp.dot(a.astype(bf16), w3_ref[...],
                      preferred_element_type=f32) + b3_ref[...])         # (Bt, 256)
    t = _relu(jnp.dot(a.astype(bf16), w4_ref[...],
                      preferred_element_type=f32) + b4_ref[...])         # (Bt, 384)
    t = _relu(jnp.dot(t.astype(bf16), w5_ref[...],
                      preferred_element_type=f32) + b5_ref[...])         # (Bt, 192)
    out_ref[...] = (jnp.dot(t.astype(bf16), w6_ref[...],
                            preferred_element_type=f32)
                    + b6_ref[...])                                       # (Bt, 128)


# ----------------------------------------------------------------------------
# Parameter construction / fusion
# ----------------------------------------------------------------------------
def init_params(key):
    """PyTorch-default-style init (uniform(-1/sqrt(fan_in), +1/sqrt(fan_in))).
    Weights stored transposed (in_features, out_features) so y = x @ W + b."""
    keys = iter(jax.random.split(key, 64))

    def lin(fan_in, fan_out):
        bound = 1.0 / np.sqrt(fan_in)
        w = jax.random.uniform(next(keys), (fan_in, fan_out), jnp.float32,
                               -bound, bound)
        b = jax.random.uniform(next(keys), (fan_out,), jnp.float32,
                               -bound, bound)
        return w, b

    w0, b0 = lin(FEATURE_SIZE, SHARED)

    ws1, bs1, ws2, bs2, ws3, bs3 = [], [], [], [], [], []
    for _ in range(N_SHARED):
        w, b = lin(SHARED, H1); ws1.append(w); bs1.append(b)
        w, b = lin(H1, H2);     ws2.append(w); bs2.append(b)
        w, b = lin(H2, H3);     ws3.append(w); bs3.append(b)
    ws1, bs1 = jnp.stack(ws1), jnp.stack(bs1)          # (4,512,256), (4,256)
    ws2, bs2 = jnp.stack(ws2), jnp.stack(bs2)          # (4,256,128), (4,128)
    ws3, bs3 = jnp.stack(ws3), jnp.stack(bs3)          # (4,128,64),  (4,64)

    wt1, bt1, wt2, bt2, wt3, bt3 = [], [], [], [], [], []
    for _ in range(N_SMALL):
        w, b = lin(H3, H4);  wt1.append(w); bt1.append(b)
        w, b = lin(H4, H5);  wt2.append(w); bt2.append(b)
        w, b = lin(H5, OUT); wt3.append(w); bt3.append(b)
    wt1, bt1 = jnp.stack(wt1), jnp.stack(bt1)          # (3,64,32), (3,32)
    wt2, bt2 = jnp.stack(wt2), jnp.stack(bt2)          # (3,32,16), (3,16)
    wt3, bt3 = jnp.stack(wt3), jnp.stack(bt3)          # (3,16,1),  (3,1)

    return (w0, b0, ws1, bs1, ws2, bs2, ws3, bs3,
            wt1, bt1, wt2, bt2, wt3, bt3)


def _block_diag(blocks):
    blocks = [np.asarray(b, dtype=np.float32) for b in blocks]
    R = sum(b.shape[0] for b in blocks)
    C = sum(b.shape[1] for b in blocks)
    out = np.zeros((R, C), dtype=np.float32)
    r = c = 0
    for b in blocks:
        out[r:r + b.shape[0], c:c + b.shape[1]] = b
        r += b.shape[0]
        c += b.shape[1]
    return out


def fuse_params(raw):
    """Pre-fuse the 4 shared towers + 3 small towers.  Weights -> bf16 (MXU
    operands), biases -> f32 (VPU adds).  W2 stays per-tower (4,256,128).
    Path order p = s*3 + t matches [out1_1, out1_2, out1_3, out2_1, ...]."""
    (w0, b0, ws1, bs1, ws2, bs2, ws3, bs3,
     wt1, bt1, wt2, bt2, wt3, bt3) = [np.asarray(p, np.float32) for p in raw]

    W0 = w0                                                      # (64, 512)
    B0 = b0.reshape(1, SHARED)

    # shared towers: layer1 concat on output dim; layer2 kept per-tower
    # (executed as 4 split dots); layer3 block-diagonal.
    W1 = np.concatenate([ws1[s] for s in range(N_SHARED)], axis=1)          # (512, 1024)
    B1 = np.concatenate([bs1[s] for s in range(N_SHARED)]).reshape(1, -1)
    W2 = ws2                                                                # (4, 256, 128)
    B2 = np.concatenate([bs2[s] for s in range(N_SHARED)]).reshape(1, -1)
    W3 = _block_diag([ws3[s] for s in range(N_SHARED)])                     # (512, 256)
    B3 = np.concatenate([bs3[s] for s in range(N_SHARED)]).reshape(1, -1)

    # small towers applied to every shared-tower output (12 paths)
    wt1_cat = np.concatenate([wt1[t] for t in range(N_SMALL)], axis=1)      # (64, 96)
    bt1_cat = np.concatenate([bt1[t] for t in range(N_SMALL)])              # (96,)
    W4 = _block_diag([wt1_cat] * N_SHARED)                                  # (256, 384)
    B4 = np.tile(bt1_cat, N_SHARED).reshape(1, -1)

    W5 = _block_diag([wt2[t] for t in range(N_SMALL)] * N_SHARED)           # (384, 192)
    B5 = np.tile(np.concatenate([bt2[t] for t in range(N_SMALL)]),
                 N_SHARED).reshape(1, -1)

    W6_narrow = _block_diag([wt3[t] for t in range(N_SMALL)] * N_SHARED)    # (192, 12)
    W6 = np.zeros((N_PATHS * H5, OUT_PAD), dtype=np.float32)                # (192, 128)
    W6[:, :N_PATHS] = W6_narrow
    B6 = np.zeros((1, OUT_PAD), dtype=np.float32)
    B6[0, :N_PATHS] = np.tile(np.concatenate([bt3[t] for t in range(N_SMALL)]),
                              N_SHARED)

    fused = (W0, B0, W1, B1, W2, B2, W3, B3, W4, B4, W5, B5, W6, B6)
    # even indices = weights (bf16 MXU operands), odd indices = biases (f32).
    return tuple(jnp.asarray(p, jnp.bfloat16) if i % 2 == 0
                 else jnp.asarray(p, jnp.float32)
                 for i, p in enumerate(fused))


# ----------------------------------------------------------------------------
# Wrapper
# ----------------------------------------------------------------------------
def _round_up(v, m):
    return ((v + m - 1) // m) * m


def _pick_block_b(B):
    """Cap 1024 (v7x-safe 64 MiB VMEM); 2048 on 128-MiB parts (v5e/v6e).
    Guarantee >=2 grid steps when possible so megacore shards on v7x."""
    cap = 1024
    try:
        if pltpu.get_tpu_info().vmem_capacity_bytes >= 96 * 1024 * 1024:
            cap = 2048
    except Exception:
        pass
    if B <= 8:
        return 8
    half = _round_up((B + 1) // 2, 8)        # ceil(B/2), sublane-aligned
    return max(8, min(cap, half))


def _weight_specs(fused, single_buffer):
    specs = []
    for p in fused:
        idx = lambda i, _nd=p.ndim: (0,) * _nd     # constant -> VMEM-resident
        if single_buffer:
            specs.append(pl.BlockSpec(p.shape, idx,
                                      pipeline_mode=pl.Buffered(1)))
        else:
            specs.append(pl.BlockSpec(p.shape, idx))
    return specs


def mtlnet_forward(x, fused, *, block_b=None):
    """Runs the fused Pallas kernel; returns 12 (B, 1) outputs (PyTorch order)."""
    B = x.shape[0]
    bt = _pick_block_b(B) if block_b is None else max(8, _round_up(block_b, 8))
    padded_B = _round_up(B, bt)
    x_pad = jnp.pad(x, ((0, padded_B - B), (0, 0))) if padded_B != B else x
    grid = (padded_B // bt,)

    x_spec = pl.BlockSpec((bt, FEATURE_SIZE), lambda i: (i, 0))
    out_spec = pl.BlockSpec((bt, OUT_PAD), lambda i: (i, 0))

    # Advisory cost estimate (dense/executed FLOPs of the fused layers).
    flops = 2 * padded_B * DENSE_MACS_PER_SAMPLE
    bytes_accessed = (4 * padded_B * FEATURE_SIZE
                      + sum(int(np.prod(p.shape)) * p.dtype.itemsize
                            for p in fused)
                      + 4 * padded_B * OUT_PAD)
    vmem_limit = 64 * 1024 * 1024 if bt > 1024 else 48 * 1024 * 1024

    def _run(single_buffer_weights):
        return pl.pallas_call(
            mtl_kernel,
            out_shape=jax.ShapeDtypeStruct((padded_B, OUT_PAD), jnp.float32),
            grid=grid,
            in_specs=[x_spec] + _weight_specs(fused, single_buffer_weights),
            out_specs=out_spec,
            compiler_params=pltpu.CompilerParams(
                dimension_semantics=("parallel",),
                vmem_limit_bytes=vmem_limit),
            cost_estimate=pl.CostEstimate(flops=flops, transcendentals=0,
                                          bytes_accessed=bytes_accessed),
        )(x_pad, *fused)

    try:
        out = _run(True)
    except Exception:
        # TODO(synk): pipeline_mode=pl.Buffered(1) not supported on this jax
        # build -- fall back to default (double-buffered) weight specs.
        out = _run(False)

    out = out[:B, :N_PATHS]
    return [out[:, i:i + 1] for i in range(N_PATHS)]


# ----------------------------------------------------------------------------
# Pure-JAX references
# ----------------------------------------------------------------------------
def reference_forward(x, raw):
    """Exact f32 forward, matching the PyTorch graph."""
    (w0, b0, ws1, bs1, ws2, bs2, ws3, bs3,
     wt1, bt1, wt2, bt2, wt3, bt3) = raw
    relu = lambda v: jnp.maximum(v, 0.0)
    h = relu(x @ w0 + b0)
    outs = []
    for s in range(N_SHARED):
        a = relu(h @ ws1[s] + bs1[s])
        a = relu(a @ ws2[s] + bs2[s])
        a = relu(a @ ws3[s] + bs3[s])
        for t in range(N_SMALL):
            c = relu(a @ wt1[t] + bt1[t])
            c = relu(c @ wt2[t] + bt2[t])
            outs.append(c @ wt3[t] + bt3[t])     # (B, 1)
    return outs


def reference_forward_bf16(x, raw):
    """Same graph, but with bf16 MXU operands / f32 accumulate, emulating the
    kernel's numerics (tight-tolerance check of the fusion + bf16 path)."""
    (w0, b0, ws1, bs1, ws2, bs2, ws3, bs3,
     wt1, bt1, wt2, bt2, wt3, bt3) = raw
    bf16, f32 = jnp.bfloat16, jnp.float32
    relu = lambda v: jnp.maximum(v, 0.0)
    dotb = lambda a, w: jnp.dot(a.astype(bf16), w.astype(bf16),
                                preferred_element_type=f32)
    h = relu(dotb(x, w0) + b0)
    outs = []
    for s in range(N_SHARED):
        a = relu(dotb(h, ws1[s]) + bs1[s])
        a = relu(dotb(a, ws2[s]) + bs2[s])
        a = relu(dotb(a, ws3[s]) + bs3[s])
        for t in range(N_SMALL):
            c = relu(dotb(a, wt1[t]) + bt1[t])
            c = relu(dotb(c, wt2[t]) + bt2[t])
            outs.append(dotb(c, wt3[t]) + bt3[t])
    return outs


if __name__ == "__main__":
    key = jax.random.PRNGKey(0)
    kx, kp = jax.random.split(key)

    raw = init_params(kp)
    fused = fuse_params(raw)

    # Small-shape check (single grid step).
    batch = 8
    x = jax.random.normal(kx, (batch, FEATURE_SIZE), dtype=jnp.float32)
    outs = jax.block_until_ready(mtlnet_forward(x, fused))
    refs_bf16 = reference_forward_bf16(x, raw)
    refs_f32 = reference_forward(x, raw)
    for o, rb, rf in zip(outs, refs_bf16, refs_f32):
        assert o.shape == (batch, 1)
        np.testing.assert_allclose(np.asarray(o), np.asarray(rb),
                                   rtol=2e-3, atol=2e-3)
        np.testing.assert_allclose(np.asarray(o), np.asarray(rf),
                                   rtol=5e-2, atol=5e-2)

    # Multi-step grid + batch-padding check (grid=(2,), padded 200 -> 256).
    batch2 = 200
    x2 = jax.random.normal(jax.random.PRNGKey(1), (batch2, FEATURE_SIZE),
                           dtype=jnp.float32)
    outs2 = jax.block_until_ready(mtlnet_forward(x2, fused, block_b=128))
    refs2_bf16 = reference_forward_bf16(x2, raw)
    refs2_f32 = reference_forward(x2, raw)
    for o, rb, rf in zip(outs2, refs2_bf16, refs2_f32):
        assert o.shape == (batch2, 1)
        np.testing.assert_allclose(np.asarray(o), np.asarray(rb),
                                   rtol=2e-3, atol=2e-3)
        np.testing.assert_allclose(np.asarray(o), np.asarray(rf),
                                   rtol=5e-2, atol=5e-2)

    print("KERNEL_OK")
</pallas_src>

<mosaic_0001>
module attributes {stable_mosaic.version = 11 : i64} {
  func.func @mtl_kernel(%arg0: i32, %arg1: memref<8x64xf32, #tpu.memory_space<vmem>>, %arg2: memref<64x512xbf16, #tpu.memory_space<vmem>>, %arg3: memref<1x512xf32, #tpu.memory_space<vmem>>, %arg4: memref<512x1024xbf16, #tpu.memory_space<vmem>>, %arg5: memref<1x1024xf32, #tpu.memory_space<vmem>>, %arg6: memref<4x256x128xbf16, #tpu.memory_space<vmem>>, %arg7: memref<1x512xf32, #tpu.memory_space<vmem>>, %arg8: memref<512x256xbf16, #tpu.memory_space<vmem>>, %arg9: memref<1x256xf32, #tpu.memory_space<vmem>>, %arg10: memref<256x384xbf16, #tpu.memory_space<vmem>>, %arg11: memref<1x384xf32, #tpu.memory_space<vmem>>, %arg12: memref<384x192xbf16, #tpu.memory_space<vmem>>, %arg13: memref<1x192xf32, #tpu.memory_space<vmem>>, %arg14: memref<192x128xbf16, #tpu.memory_space<vmem>>, %arg15: memref<1x128xf32, #tpu.memory_space<vmem>>, %arg16: memref<8x128xf32, #tpu.memory_space<vmem>>) attributes {dimension_semantics = [#tpu.dimension_semantics<parallel>], iteration_bounds = array<i64: 1>, scalar_prefetch = 0 : i64, scratch_operands = 0 : i64, tpu.core_type = #tpu.core_type<tc>, window_params = [{transform_indices = @transform_0, window_bounds = array<i64: 8, 64>}, {pipeline_mode = #tpu.pipeline_mode<synchronous>, transform_indices = @transform_1, window_bounds = array<i64: 64, 512>}, {pipeline_mode = #tpu.pipeline_mode<synchronous>, transform_indices = @transform_2, window_bounds = array<i64: 1, 512>}, {pipeline_mode = #tpu.pipeline_mode<synchronous>, transform_indices = @transform_3, window_bounds = array<i64: 512, 1024>}, {pipeline_mode = #tpu.pipeline_mode<synchronous>, transform_indices = @transform_4, window_bounds = array<i64: 1, 1024>}, {pipeline_mode = #tpu.pipeline_mode<synchronous>, transform_indices = @transform_5, window_bounds = array<i64: 4, 256, 128>}, {pipeline_mode = #tpu.pipeline_mode<synchronous>, transform_indices = @transform_6, window_bounds = array<i64: 1, 512>}, {pipeline_mode = #tpu.pipeline_mode<synchronous>, transform_indices = @transform_7, window_bounds = array<i64: 512, 256>}, {pipeline_mode = #tpu.pipeline_mode<synchronous>, transform_indices = @transform_8, window_bounds = array<i64: 1, 256>}, {pipeline_mode = #tpu.pipeline_mode<synchronous>, transform_indices = @transform_9, window_bounds = array<i64: 256, 384>}, {pipeline_mode = #tpu.pipeline_mode<synchronous>, transform_indices = @transform_10, window_bounds = array<i64: 1, 384>}, {pipeline_mode = #tpu.pipeline_mode<synchronous>, transform_indices = @transform_11, window_bounds = array<i64: 384, 192>}, {pipeline_mode = #tpu.pipeline_mode<synchronous>, transform_indices = @transform_12, window_bounds = array<i64: 1, 192>}, {pipeline_mode = #tpu.pipeline_mode<synchronous>, transform_indices = @transform_13, window_bounds = array<i64: 192, 128>}, {pipeline_mode = #tpu.pipeline_mode<synchronous>, transform_indices = @transform_14, window_bounds = array<i64: 1, 128>}, {transform_indices = @transform_15, window_bounds = array<i64: 8, 128>}]} {
    %c0 = arith.constant 0 : index
    %c0_0 = arith.constant 0 : index
    %0 = vector.load %arg1[%c0, %c0_0] : memref<8x64xf32, #tpu.memory_space<vmem>>, vector<8x64xf32>
    %1 = arith.truncf %0 : vector<8x64xf32> to vector<8x64xbf16>
    %c0_1 = arith.constant 0 : index
    %c0_2 = arith.constant 0 : index
    %2 = vector.load %arg2[%c0_1, %c0_2] : memref<64x512xbf16, #tpu.memory_space<vmem>>, vector<64x512xbf16>
    %cst = arith.constant dense<0.000000e+00> : vector<8x512xf32>
    %3 = tpu.matmul %1, %2, %cst {dimension_numbers = #tpu.dot_dimension_numbers<[1], [0], [0], [1], [0, 0, 1, 1], [], []>} : vector<8x64xbf16>, vector<64x512xbf16>, vector<8x512xf32> -> vector<8x512xf32>
    %c0_3 = arith.constant 0 : index
    %c0_4 = arith.constant 0 : index
    %4 = vector.load %arg3[%c0_3, %c0_4] : memref<1x512xf32, #tpu.memory_space<vmem>>, vector<1x512xf32>
    %5 = vector.broadcast %4 : vector<1x512xf32> to vector<8x512xf32>
    %6 = arith.addf %3, %5 : vector<8x512xf32>
    %cst_5 = arith.constant 0.000000e+00 : f32
    %7 = vector.broadcast %cst_5 : f32 to vector<8x512xf32>
    %8 = arith.maximumf %6, %7 : vector<8x512xf32>
    %9 = arith.truncf %8 : vector<8x512xf32> to vector<8x512xbf16>
    %c0_6 = arith.constant 0 : index
    %c0_7 = arith.constant 0 : index
    %10 = vector.load %arg4[%c0_6, %c0_7] : memref<512x1024xbf16, #tpu.memory_space<vmem>>, vector<512x1024xbf16>
    %cst_8 = arith.constant dense<0.000000e+00> : vector<8x1024xf32>
    %11 = tpu.matmul %9, %10, %cst_8 {dimension_numbers = #tpu.dot_dimension_numbers<[1], [0], [0], [1], [0, 0, 1, 1], [], []>} : vector<8x512xbf16>, vector<512x1024xbf16>, vector<8x1024xf32> -> vector<8x1024xf32>
    %c0_9 = arith.constant 0 : index
    %c0_10 = arith.constant 0 : index
    %12 = vector.load %arg5[%c0_9, %c0_10] : memref<1x1024xf32, #tpu.memory_space<vmem>>, vector<1x1024xf32>
    %13 = vector.broadcast %12 : vector<1x1024xf32> to vector<8x1024xf32>
    %14 = arith.addf %11, %13 : vector<8x1024xf32>
    %cst_11 = arith.constant 0.000000e+00 : f32
    %15 = vector.broadcast %cst_11 : f32 to vector<8x1024xf32>
    %16 = arith.maximumf %14, %15 : vector<8x1024xf32>
    %17 = arith.truncf %16 : vector<8x1024xf32> to vector<8x1024xbf16>
    %18 = vector.extract_strided_slice %17 {offsets = [0, 0], sizes = [8, 256], strides = [1, 1]} : vector<8x1024xbf16> to vector<8x256xbf16>
    %c0_12 = arith.constant 0 : index
    %c0_13 = arith.constant 0 : index
    %c0_14 = arith.constant 0 : index
    %19 = vector.load %arg6[%c0_12, %c0_13, %c0_14] : memref<4x256x128xbf16, #tpu.memory_space<vmem>>, vector<1x256x128xbf16>
    %20 = vector.shape_cast %19 : vector<1x256x128xbf16> to vector<256x128xbf16>
    %cst_15 = arith.constant dense<0.000000e+00> : vector<8x128xf32>
    %21 = tpu.matmul %18, %20, %cst_15 {dimension_numbers = #tpu.dot_dimension_numbers<[1], [0], [0], [1], [0, 0, 1, 1], [], []>} : vector<8x256xbf16>, vector<256x128xbf16>, vector<8x128xf32> -> vector<8x128xf32>
    %22 = vector.extract_strided_slice %17 {offsets = [0, 256], sizes = [8, 256], strides = [1, 1]} : vector<8x1024xbf16> to vector<8x256xbf16>
    %c1 = arith.constant 1 : index
    %c0_16 = arith.constant 0 : index
    %c0_17 = arith.constant 0 : index
    %23 = vector.load %arg6[%c1, %c0_16, %c0_17] : memref<4x256x128xbf16, #tpu.memory_space<vmem>>, vector<1x256x128xbf16>
    %24 = vector.shape_cast %23 : vector<1x256x128xbf16> to vector<256x128xbf16>
    %cst_18 = arith.constant dense<0.000000e+00> : vector<8x128xf32>
    %25 = tpu.matmul %22, %24, %cst_18 {dimension_numbers = #tpu.dot_dimension_numbers<[1], [0], [0], [1], [0, 0, 1, 1], [], []>} : vector<8x256xbf16>, vector<256x128xbf16>, vector<8x128xf32> -> vector<8x128xf32>
    %26 = vector.extract_strided_slice %17 {offsets = [0, 512], sizes = [8, 256], strides = [1, 1]} : vector<8x1024xbf16> to vector<8x256xbf16>
    %c2 = arith.constant 2 : index
    %c0_19 = arith.constant 0 : index
    %c0_20 = arith.constant 0 : index
    %27 = vector.load %arg6[%c2, %c0_19, %c0_20] : memref<4x256x128xbf16, #tpu.memory_space<vmem>>, vector<1x256x128xbf16>
    %28 = vector.shape_cast %27 : vector<1x256x128xbf16> to vector<256x128xbf16>
    %cst_21 = arith.constant dense<0.000000e+00> : vector<8x128xf32>
    %29 = tpu.matmul %26, %28, %cst_21 {dimension_numbers = #tpu.dot_dimension_numbers<[1], [0], [0], [1], [0, 0, 1, 1], [], []>} : vector<8x256xbf16>, vector<256x128xbf16>, vector<8x128xf32> -> vector<8x128xf32>
    %30 = vector.extract_strided_slice %17 {offsets = [0, 768], sizes = [8, 256], strides = [1, 1]} : vector<8x1024xbf16> to vector<8x256xbf16>
    %c3 = arith.constant 3 : index
    %c0_22 = arith.constant 0 : index
    %c0_23 = arith.constant 0 : index
    %31 = vector.load %arg6[%c3, %c0_22, %c0_23] : memref<4x256x128xbf16, #tpu.memory_space<vmem>>, vector<1x256x128xbf16>
    %32 = vector.shape_cast %31 : vector<1x256x128xbf16> to vector<256x128xbf16>
    %cst_24 = arith.constant dense<0.000000e+00> : vector<8x128xf32>
    %33 = tpu.matmul %30, %32, %cst_24 {dimension_numbers = #tpu.dot_dimension_numbers<[1], [0], [0], [1], [0, 0, 1, 1], [], []>} : vector<8x256xbf16>, vector<256x128xbf16>, vector<8x128xf32> -> vector<8x128xf32>
    %34 = tpu.concatenate %21, %25, %29, %33 in 1 : vector<8x128xf32>, vector<8x128xf32>, vector<8x128xf32>, vector<8x128xf32> -> vector<8x512xf32>
    %c0_25 = arith.constant 0 : index
    %c0_26 = arith.constant 0 : index
    %35 = vector.load %arg7[%c0_25, %c0_26] : memref<1x512xf32, #tpu.memory_space<vmem>>, vector<1x512xf32>
    %36 = vector.broadcast %35 : vector<1x512xf32> to vector<8x512xf32>
    %37 = arith.addf %34, %36 : vector<8x512xf32>
    %cst_27 = arith.constant 0.000000e+00 : f32
    %38 = vector.broadcast %cst_27 : f32 to vector<8x512xf32>
    %39 = arith.maximumf %37, %38 : vector<8x512xf32>
    %40 = arith.truncf %39 : vector<8x512xf32> to vector<8x512xbf16>
    %c0_28 = arith.constant 0 : index
    %c0_29 = arith.constant 0 : index
    %41 = vector.load %arg8[%c0_28, %c0_29] : memref<512x256xbf16, #tpu.memory_space<vmem>>, vector<512x256xbf16>
    %cst_30 = arith.constant dense<0.000000e+00> : vector<8x256xf32>
    %42 = tpu.matmul %40, %41, %cst_30 {dimension_numbers = #tpu.dot_dimension_numbers<[1], [0], [0], [1], [0, 0, 1, 1], [], []>} : vector<8x512xbf16>, vector<512x256xbf16>, vector<8x256xf32> -> vector<8x256xf32>
    %c0_31 = arith.constant 0 : index
    %c0_32 = arith.constant 0 : index
    %43 = vector.load %arg9[%c0_31, %c0_32] : memref<1x256xf32, #tpu.memory_space<vmem>>, vector<1x256xf32>
    %44 = vector.broadcast %43 : vector<1x256xf32> to vector<8x256xf32>
    %45 = arith.addf %42, %44 : vector<8x256xf32>
    %cst_33 = arith.constant 0.000000e+00 : f32
    %46 = vector.broadcast %cst_33 : f32 to vector<8x256xf32>
    %47 = arith.maximumf %45, %46 : vector<8x256xf32>
    %48 = arith.truncf %47 : vector<8x256xf32> to vector<8x256xbf16>
    %c0_34 = arith.constant 0 : index
    %c0_35 = arith.constant 0 : index
    %49 = vector.load %arg10[%c0_34, %c0_35] : memref<256x384xbf16, #tpu.memory_space<vmem>>, vector<256x384xbf16>
    %cst_36 = arith.constant dense<0.000000e+00> : vector<8x384xf32>
    %50 = tpu.matmul %48, %49, %cst_36 {dimension_numbers = #tpu.dot_dimension_numbers<[1], [0], [0], [1], [0, 0, 1, 1], [], []>} : vector<8x256xbf16>, vector<256x384xbf16>, vector<8x384xf32> -> vector<8x384xf32>
    %c0_37 = arith.constant 0 : index
    %c0_38 = arith.constant 0 : index
    %51 = vector.load %arg11[%c0_37, %c0_38] : memref<1x384xf32, #tpu.memory_space<vmem>>, vector<1x384xf32>
    %52 = vector.broadcast %51 : vector<1x384xf32> to vector<8x384xf32>
    %53 = arith.addf %50, %52 : vector<8x384xf32>
    %cst_39 = arith.constant 0.000000e+00 : f32
    %54 = vector.broadcast %cst_39 : f32 to vector<8x384xf32>
    %55 = arith.maximumf %53, %54 : vector<8x384xf32>
    %56 = arith.truncf %55 : vector<8x384xf32> to vector<8x384xbf16>
    %c0_40 = arith.constant 0 : index
    %c0_41 = arith.constant 0 : index
    %57 = vector.load %arg12[%c0_40, %c0_41] : memref<384x192xbf16, #tpu.memory_space<vmem>>, vector<384x192xbf16>
    %cst_42 = arith.constant dense<0.000000e+00> : vector<8x192xf32>
    %58 = tpu.matmul %56, %57, %cst_42 {dimension_numbers = #tpu.dot_dimension_numbers<[1], [0], [0], [1], [0, 0, 1, 1], [], []>} : vector<8x384xbf16>, vector<384x192xbf16>, vector<8x192xf32> -> vector<8x192xf32>
    %c0_43 = arith.constant 0 : index
    %c0_44 = arith.constant 0 : index
    %59 = vector.load %arg13[%c0_43, %c0_44] : memref<1x192xf32, #tpu.memory_space<vmem>>, vector<1x192xf32>
    %60 = vector.broadcast %59 : vector<1x192xf32> to vector<8x192xf32>
    %61 = arith.addf %58, %60 : vector<8x192xf32>
    %cst_45 = arith.constant 0.000000e+00 : f32
    %62 = vector.broadcast %cst_45 : f32 to vector<8x192xf32>
    %63 = arith.maximumf %61, %62 : vector<8x192xf32>
    %64 = arith.truncf %63 : vector<8x192xf32> to vector<8x192xbf16>
    %c0_46 = arith.constant 0 : index
    %c0_47 = arith.constant 0 : index
    %65 = vector.load %arg14[%c0_46, %c0_47] : memref<192x128xbf16, #tpu.memory_space<vmem>>, vector<192x128xbf16>
    %cst_48 = arith.constant dense<0.000000e+00> : vector<8x128xf32>
    %66 = tpu.matmul %64, %65, %cst_48 {dimension_numbers = #tpu.dot_dimension_numbers<[1], [0], [0], [1], [0, 0, 1, 1], [], []>} : vector<8x192xbf16>, vector<192x128xbf16>, vector<8x128xf32> -> vector<8x128xf32>
    %c0_49 = arith.constant 0 : index
    %c0_50 = arith.constant 0 : index
    %67 = vector.load %arg15[%c0_49, %c0_50] : memref<1x128xf32, #tpu.memory_space<vmem>>, vector<1x128xf32>
    %68 = vector.broadcast %67 : vector<1x128xf32> to vector<8x128xf32>
    %69 = arith.addf %66, %68 : vector<8x128xf32>
    %c0_51 = arith.constant 0 : index
    %c0_52 = arith.constant 0 : index
    %70 = vector.load %arg16[%c0_51, %c0_52] : memref<8x128xf32, #tpu.memory_space<vmem>>, vector<8x128xf32>
    tpu.vector_store %arg16[%c0_51, %c0_52], %69 {strides = array<i32>} : memref<8x128xf32, #tpu.memory_space<vmem>>, vector<8x128xf32>,
    return
  }
  func.func @transform_0(%arg0: i32) -> (i32, i32) {
    %c0_i32 = arith.constant 0 : i32
    %c0_i32_0 = arith.constant 0 : i32
    return %arg0, %c0_i32 : i32, i32
  }
  func.func @transform_1(%arg0: i32) -> (i32, i32) {
    %c0_i32 = arith.constant 0 : i32
    %c0_i32_0 = arith.constant 0 : i32
    %c0_i32_1 = arith.constant 0 : i32
    return %c0_i32, %c0_i32_0 : i32, i32
  }
  func.func @transform_2(%arg0: i32) -> (i32, i32) {
    %c0_i32 = arith.constant 0 : i32
    %c0_i32_0 = arith.constant 0 : i32
    %c0_i32_1 = arith.constant 0 : i32
    return %c0_i32, %c0_i32_0 : i32, i32
  }
  func.func @transform_3(%arg0: i32) -> (i32, i32) {
    %c0_i32 = arith.constant 0 : i32
    %c0_i32_0 = arith.constant 0 : i32
    %c0_i32_1 = arith.constant 0 : i32
    return %c0_i32, %c0_i32_0 : i32, i32
  }
  func.func @transform_4(%arg0: i32) -> (i32, i32) {
    %c0_i32 = arith.constant 0 : i32
    %c0_i32_0 = arith.constant 0 : i32
    %c0_i32_1 = arith.constant 0 : i32
    return %c0_i32, %c0_i32_0 : i32, i32
  }
  func.func @transform_5(%arg0: i32) -> (i32, i32, i32) {
    %c0_i32 = arith.constant 0 : i32
    %c0_i32_0 = arith.constant 0 : i32
    %c0_i32_1 = arith.constant 0 : i32
    %c0_i32_2 = arith.constant 0 : i32
    return %c0_i32, %c0_i32_0, %c0_i32_1 : i32, i32, i32
  }
  func.func @transform_6(%arg0: i32) -> (i32, i32) {
    %c0_i32 = arith.constant 0 : i32
    %c0_i32_0 = arith.constant 0 : i32
    %c0_i32_1 = arith.constant 0 : i32
    return %c0_i32, %c0_i32_0 : i32, i32
  }
  func.func @transform_7(%arg0: i32) -> (i32, i32) {
    %c0_i32 = arith.constant 0 : i32
    %c0_i32_0 = arith.constant 0 : i32
    %c0_i32_1 = arith.constant 0 : i32
    return %c0_i32, %c0_i32_0 : i32, i32
  }
  func.func @transform_8(%arg0: i32) -> (i32, i32) {
    %c0_i32 = arith.constant 0 : i32
    %c0_i32_0 = arith.constant 0 : i32
    %c0_i32_1 = arith.constant 0 : i32
    return %c0_i32, %c0_i32_0 : i32, i32
  }
  func.func @transform_9(%arg0: i32) -> (i32, i32) {
    %c0_i32 = arith.constant 0 : i32
    %c0_i32_0 = arith.constant 0 : i32
    %c0_i32_1 = arith.constant 0 : i32
    return %c0_i32, %c0_i32_0 : i32, i32
  }
  func.func @transform_10(%arg0: i32) -> (i32, i32) {
    %c0_i32 = arith.constant 0 : i32
    %c0_i32_0 = arith.constant 0 : i32
    %c0_i32_1 = arith.constant 0 : i32
    return %c0_i32, %c0_i32_0 : i32, i32
  }
  func.func @transform_11(%arg0: i32) -> (i32, i32) {
    %c0_i32 = arith.constant 0 : i32
    %c0_i32_0 = arith.constant 0 : i32
    %c0_i32_1 = arith.constant 0 : i32
    return %c0_i32, %c0_i32_0 : i32, i32
  }
  func.func @transform_12(%arg0: i32) -> (i32, i32) {
    %c0_i32 = arith.constant 0 : i32
    %c0_i32_0 = arith.constant 0 : i32
    %c0_i32_1 = arith.constant 0 : i32
    return %c0_i32, %c0_i32_0 : i32, i32
  }
  func.func @transform_13(%arg0: i32) -> (i32, i32) {
    %c0_i32 = arith.constant 0 : i32
    %c0_i32_0 = arith.constant 0 : i32
    %c0_i32_1 = arith.constant 0 : i32
    return %c0_i32, %c0_i32_0 : i32, i32
  }
  func.func @transform_14(%arg0: i32) -> (i32, i32) {
    %c0_i32 = arith.constant 0 : i32
    %c0_i32_0 = arith.constant 0 : i32
    %c0_i32_1 = arith.constant 0 : i32
    return %c0_i32, %c0_i32_0 : i32, i32
  }
  func.func @transform_15(%arg0: i32) -> (i32, i32) {
    %c0_i32 = arith.constant 0 : i32
    %c0_i32_0 = arith.constant 0 : i32
    return %arg0, %c0_i32 : i32, i32
  }
}

module attributes {stable_mosaic.version = 11 : i64} {
  func.func @mtl_kernel(%arg0: i32, %arg1: memref<8x64xf32, #tpu.memory_space<vmem>>, %arg2: memref<64x512xbf16, #tpu.memory_space<vmem>>, %arg3: memref<1x512xf32, #tpu.memory_space<vmem>>, %arg4: memref<512x1024xbf16, #tpu.memory_space<vmem>>, %arg5: memref<1x1024xf32, #tpu.memory_space<vmem>>, %arg6: memref<4x256x128xbf16, #tpu.memory_space<vmem>>, %arg7: memref<1x512xf32, #tpu.memory_space<vmem>>, %arg8: memref<512x256xbf16, #tpu.memory_space<vmem>>, %arg9: memref<1x256xf32, #tpu.memory_space<vmem>>, %arg10: memref<256x384xbf16, #tpu.memory_space<vmem>>, %arg11: memref<1x384xf32, #tpu.memory_space<vmem>>, %arg12: memref<384x192xbf16, #tpu.memory_space<vmem>>, %arg13: memref<1x192xf32, #tpu.memory_space<vmem>>, %arg14: memref<192x128xbf16, #tpu.memory_space<vmem>>, %arg15: memref<1x128xf32, #tpu.memory_space<vmem>>, %arg16: memref<8x128xf32, #tpu.memory_space<vmem>>) attributes {dimension_semantics = [#tpu.dimension_semantics<parallel>], iteration_bounds = array<i64: 1>, scalar_prefetch = 0 : i64, scratch_operands = 0 : i64, tpu.core_type = #tpu.core_type<tc>, window_params = [{transform_indices = @transform_0, window_bounds = array<i64: 8, 64>}, {pipeline_mode = #tpu.pipeline_mode<synchronous>, transform_indices = @transform_1, window_bounds = array<i64: 64, 512>}, {pipeline_mode = #tpu.pipeline_mode<synchronous>, transform_indices = @transform_2, window_bounds = array<i64: 1, 512>}, {pipeline_mode = #tpu.pipeline_mode<synchronous>, transform_indices = @transform_3, window_bounds = array<i64: 512, 1024>}, {pipeline_mode = #tpu.pipeline_mode<synchronous>, transform_indices = @transform_4, window_bounds = array<i64: 1, 1024>}, {pipeline_mode = #tpu.pipeline_mode<synchronous>, transform_indices = @transform_5, window_bounds = array<i64: 4, 256, 128>}, {pipeline_mode = #tpu.pipeline_mode<synchronous>, transform_indices = @transform_6, window_bounds = array<i64: 1, 512>}, {pipeline_mode = #tpu.pipeline_mode<synchronous>, transform_indices = @transform_7, window_bounds = array<i64: 512, 256>}, {pipeline_mode = #tpu.pipeline_mode<synchronous>, transform_indices = @transform_8, window_bounds = array<i64: 1, 256>}, {pipeline_mode = #tpu.pipeline_mode<synchronous>, transform_indices = @transform_9, window_bounds = array<i64: 256, 384>}, {pipeline_mode = #tpu.pipeline_mode<synchronous>, transform_indices = @transform_10, window_bounds = array<i64: 1, 384>}, {pipeline_mode = #tpu.pipeline_mode<synchronous>, transform_indices = @transform_11, window_bounds = array<i64: 384, 192>}, {pipeline_mode = #tpu.pipeline_mode<synchronous>, transform_indices = @transform_12, window_bounds = array<i64: 1, 192>}, {pipeline_mode = #tpu.pipeline_mode<synchronous>, transform_indices = @transform_13, window_bounds = array<i64: 192, 128>}, {pipeline_mode = #tpu.pipeline_mode<synchronous>, transform_indices = @transform_14, window_bounds = array<i64: 1, 128>}, {transform_indices = @transform_15, window_bounds = array<i64: 8, 128>}]} {
    %c0 = arith.constant 0 : index
    %c0_0 = arith.constant 0 : index
    %0 = vector.load %arg1[%c0, %c0_0] : memref<8x64xf32, #tpu.memory_space<vmem>>, vector<8x64xf32>
    %1 = arith.truncf %0 : vector<8x64xf32> to vector<8x64xbf16>
    %c0_1 = arith.constant 0 : index
    %c0_2 = arith.constant 0 : index
    %2 = vector.load %arg2[%c0_1, %c0_2] : memref<64x512xbf16, #tpu.memory_space<vmem>>, vector<64x512xbf16>
    %cst = arith.constant dense<0.000000e+00> : vector<8x512xf32>
    %3 = tpu.matmul %1, %2, %cst {dimension_numbers = #tpu.dot_dimension_numbers<[1], [0], [0], [1], [0, 0, 1, 1], [], []>} : vector<8x64xbf16>, vector<64x512xbf16>, vector<8x512xf32> -> vector<8x512xf32>
    %c0_3 = arith.constant 0 : index
    %c0_4 = arith.constant 0 : index
    %4 = vector.load %arg3[%c0_3, %c0_4] : memref<1x512xf32, #tpu.memory_space<vmem>>, vector<1x512xf32>
    %5 = vector.broadcast %4 : vector<1x512xf32> to vector<8x512xf32>
    %6 = arith.addf %3, %5 : vector<8x512xf32>
    %cst_5 = arith.constant 0.000000e+00 : f32
    %7 = vector.broadcast %cst_5 : f32 to vector<8x512xf32>
    %8 = arith.maximumf %6, %7 : vector<8x512xf32>
    %9 = arith.truncf %8 : vector<8x512xf32> to vector<8x512xbf16>
    %c0_6 = arith.constant 0 : index
    %c0_7 = arith.constant 0 : index
    %10 = vector.load %arg4[%c0_6, %c0_7] : memref<512x1024xbf16, #tpu.memory_space<vmem>>, vector<512x1024xbf16>
    %cst_8 = arith.constant dense<0.000000e+00> : vector<8x1024xf32>
    %11 = tpu.matmul %9, %10, %cst_8 {dimension_numbers = #tpu.dot_dimension_numbers<[1], [0], [0], [1], [0, 0, 1, 1], [], []>} : vector<8x512xbf16>, vector<512x1024xbf16>, vector<8x1024xf32> -> vector<8x1024xf32>
    %c0_9 = arith.constant 0 : index
    %c0_10 = arith.constant 0 : index
    %12 = vector.load %arg5[%c0_9, %c0_10] : memref<1x1024xf32, #tpu.memory_space<vmem>>, vector<1x1024xf32>
    %13 = vector.broadcast %12 : vector<1x1024xf32> to vector<8x1024xf32>
    %14 = arith.addf %11, %13 : vector<8x1024xf32>
    %cst_11 = arith.constant 0.000000e+00 : f32
    %15 = vector.broadcast %cst_11 : f32 to vector<8x1024xf32>
    %16 = arith.maximumf %14, %15 : vector<8x1024xf32>
    %17 = arith.truncf %16 : vector<8x1024xf32> to vector<8x1024xbf16>
    %18 = vector.extract_strided_slice %17 {offsets = [0, 0], sizes = [8, 256], strides = [1, 1]} : vector<8x1024xbf16> to vector<8x256xbf16>
    %c0_12 = arith.constant 0 : index
    %c0_13 = arith.constant 0 : index
    %c0_14 = arith.constant 0 : index
    %19 = vector.load %arg6[%c0_12, %c0_13, %c0_14] : memref<4x256x128xbf16, #tpu.memory_space<vmem>>, vector<1x256x128xbf16>
    %20 = vector.shape_cast %19 : vector<1x256x128xbf16> to vector<256x128xbf16>
    %cst_15 = arith.constant dense<0.000000e+00> : vector<8x128xf32>
    %21 = tpu.matmul %18, %20, %cst_15 {dimension_numbers = #tpu.dot_dimension_numbers<[1], [0], [0], [1], [0, 0, 1, 1], [], []>} : vector<8x256xbf16>, vector<256x128xbf16>, vector<8x128xf32> -> vector<8x128xf32>
    %22 = vector.extract_strided_slice %17 {offsets = [0, 256], sizes = [8, 256], strides = [1, 1]} : vector<8x1024xbf16> to vector<8x256xbf16>
    %c1 = arith.constant 1 : index
    %c0_16 = arith.constant 0 : index
    %c0_17 = arith.constant 0 : index
    %23 = vector.load %arg6[%c1, %c0_16, %c0_17] : memref<4x256x128xbf16, #tpu.memory_space<vmem>>, vector<1x256x128xbf16>
    %24 = vector.shape_cast %23 : vector<1x256x128xbf16> to vector<256x128xbf16>
    %cst_18 = arith.constant dense<0.000000e+00> : vector<8x128xf32>
    %25 = tpu.matmul %22, %24, %cst_18 {dimension_numbers = #tpu.dot_dimension_numbers<[1], [0], [0], [1], [0, 0, 1, 1], [], []>} : vector<8x256xbf16>, vector<256x128xbf16>, vector<8x128xf32> -> vector<8x128xf32>
    %26 = vector.extract_strided_slice %17 {offsets = [0, 512], sizes = [8, 256], strides = [1, 1]} : vector<8x1024xbf16> to vector<8x256xbf16>
    %c2 = arith.constant 2 : index
    %c0_19 = arith.constant 0 : index
    %c0_20 = arith.constant 0 : index
    %27 = vector.load %arg6[%c2, %c0_19, %c0_20] : memref<4x256x128xbf16, #tpu.memory_space<vmem>>, vector<1x256x128xbf16>
    %28 = vector.shape_cast %27 : vector<1x256x128xbf16> to vector<256x128xbf16>
    %cst_21 = arith.constant dense<0.000000e+00> : vector<8x128xf32>
    %29 = tpu.matmul %26, %28, %cst_21 {dimension_numbers = #tpu.dot_dimension_numbers<[1], [0], [0], [1], [0, 0, 1, 1], [], []>} : vector<8x256xbf16>, vector<256x128xbf16>, vector<8x128xf32> -> vector<8x128xf32>
    %30 = vector.extract_strided_slice %17 {offsets = [0, 768], sizes = [8, 256], strides = [1, 1]} : vector<8x1024xbf16> to vector<8x256xbf16>
    %c3 = arith.constant 3 : index
    %c0_22 = arith.constant 0 : index
    %c0_23 = arith.constant 0 : index
    %31 = vector.load %arg6[%c3, %c0_22, %c0_23] : memref<4x256x128xbf16, #tpu.memory_space<vmem>>, vector<1x256x128xbf16>
    %32 = vector.shape_cast %31 : vector<1x256x128xbf16> to vector<256x128xbf16>
    %cst_24 = arith.constant dense<0.000000e+00> : vector<8x128xf32>
    %33 = tpu.matmul %30, %32, %cst_24 {dimension_numbers = #tpu.dot_dimension_numbers<[1], [0], [0], [1], [0, 0, 1, 1], [], []>} : vector<8x256xbf16>, vector<256x128xbf16>, vector<8x128xf32> -> vector<8x128xf32>
    %34 = tpu.concatenate %21, %25, %29, %33 in 1 : vector<8x128xf32>, vector<8x128xf32>, vector<8x128xf32>, vector<8x128xf32> -> vector<8x512xf32>
    %c0_25 = arith.constant 0 : index
    %c0_26 = arith.constant 0 : index
    %35 = vector.load %arg7[%c0_25, %c0_26] : memref<1x512xf32, #tpu.memory_space<vmem>>, vector<1x512xf32>
    %36 = vector.broadcast %35 : vector<1x512xf32> to vector<8x512xf32>
    %37 = arith.addf %34, %36 : vector<8x512xf32>
    %cst_27 = arith.constant 0.000000e+00 : f32
    %38 = vector.broadcast %cst_27 : f32 to vector<8x512xf32>
    %39 = arith.maximumf %37, %38 : vector<8x512xf32>
    %40 = arith.truncf %39 : vector<8x512xf32> to vector<8x512xbf16>
    %c0_28 = arith.constant 0 : index
    %c0_29 = arith.constant 0 : index
    %41 = vector.load %arg8[%c0_28, %c0_29] : memref<512x256xbf16, #tpu.memory_space<vmem>>, vector<512x256xbf16>
    %cst_30 = arith.constant dense<0.000000e+00> : vector<8x256xf32>
    %42 = tpu.matmul %40, %41, %cst_30 {dimension_numbers = #tpu.dot_dimension_numbers<[1], [0], [0], [1], [0, 0, 1, 1], [], []>} : vector<8x512xbf16>, vector<512x256xbf16>, vector<8x256xf32> -> vector<8x256xf32>
    %c0_31 = arith.constant 0 : index
    %c0_32 = arith.constant 0 : index
    %43 = vector.load %arg9[%c0_31, %c0_32] : memref<1x256xf32, #tpu.memory_space<vmem>>, vector<1x256xf32>
    %44 = vector.broadcast %43 : vector<1x256xf32> to vector<8x256xf32>
    %45 = arith.addf %42, %44 : vector<8x256xf32>
    %cst_33 = arith.constant 0.000000e+00 : f32
    %46 = vector.broadcast %cst_33 : f32 to vector<8x256xf32>
    %47 = arith.maximumf %45, %46 : vector<8x256xf32>
    %48 = arith.truncf %47 : vector<8x256xf32> to vector<8x256xbf16>
    %c0_34 = arith.constant 0 : index
    %c0_35 = arith.constant 0 : index
    %49 = vector.load %arg10[%c0_34, %c0_35] : memref<256x384xbf16, #tpu.memory_space<vmem>>, vector<256x384xbf16>
    %cst_36 = arith.constant dense<0.000000e+00> : vector<8x384xf32>
    %50 = tpu.matmul %48, %49, %cst_36 {dimension_numbers = #tpu.dot_dimension_numbers<[1], [0], [0], [1], [0, 0, 1, 1], [], []>} : vector<8x256xbf16>, vector<256x384xbf16>, vector<8x384xf32> -> vector<8x384xf32>
    %c0_37 = arith.constant 0 : index
    %c0_38 = arith.constant 0 : index
    %51 = vector.load %arg11[%c0_37, %c0_38] : memref<1x384xf32, #tpu.memory_space<vmem>>, vector<1x384xf32>
    %52 = vector.broadcast %51 : vector<1x384xf32> to vector<8x384xf32>
    %53 = arith.addf %50, %52 : vector<8x384xf32>
    %cst_39 = arith.constant 0.000000e+00 : f32
    %54 = vector.broadcast %cst_39 : f32 to vector<8x384xf32>
    %55 = arith.maximumf %53, %54 : vector<8x384xf32>
    %56 = arith.truncf %55 : vector<8x384xf32> to vector<8x384xbf16>
    %c0_40 = arith.constant 0 : index
    %c0_41 = arith.constant 0 : index
    %57 = vector.load %arg12[%c0_40, %c0_41] : memref<384x192xbf16, #tpu.memory_space<vmem>>, vector<384x192xbf16>
    %cst_42 = arith.constant dense<0.000000e+00> : vector<8x192xf32>
    %58 = tpu.matmul %56, %57, %cst_42 {dimension_numbers = #tpu.dot_dimension_numbers<[1], [0], [0], [1], [0, 0, 1, 1], [], []>} : vector<8x384xbf16>, vector<384x192xbf16>, vector<8x192xf32> -> vector<8x192xf32>
    %c0_43 = arith.constant 0 : index
    %c0_44 = arith.constant 0 : index
    %59 = vector.load %arg13[%c0_43, %c0_44] : memref<1x192xf32, #tpu.memory_space<vmem>>, vector<1x192xf32>
    %60 = vector.broadcast %59 : vector<1x192xf32> to vector<8x192xf32>
    %61 = arith.addf %58, %60 : vector<8x192xf32>
    %cst_45 = arith.constant 0.000000e+00 : f32
    %62 = vector.broadcast %cst_45 : f32 to vector<8x192xf32>
    %63 = arith.maximumf %61, %62 : vector<8x192xf32>
    %64 = arith.truncf %63 : vector<8x192xf32> to vector<8x192xbf16>
    %c0_46 = arith.constant 0 : index
    %c0_47 = arith.constant 0 : index
    %65 = vector.load %arg14[%c0_46, %c0_47] : memref<192x128xbf16, #tpu.memory_space<vmem>>, vector<192x128xbf16>
    %cst_48 = arith.constant dense<0.000000e+00> : vector<8x128xf32>
    %66 = tpu.matmul %64, %65, %cst_48 {dimension_numbers = #tpu.dot_dimension_numbers<[1], [0], [0], [1], [0, 0, 1, 1], [], []>} : vector<8x192xbf16>, vector<192x128xbf16>, vector<8x128xf32> -> vector<8x128xf32>
    %c0_49 = arith.constant 0 : index
    %c0_50 = arith.constant 0 : index
    %67 = vector.load %arg15[%c0_49, %c0_50] : memref<1x128xf32, #tpu.memory_space<vmem>>, vector<1x128xf32>
    %68 = vector.broadcast %67 : vector<1x128xf32> to vector<8x128xf32>
    %69 = arith.addf %66, %68 : vector<8x128xf32>
    %c0_51 = arith.constant 0 : index
    %c0_52 = arith.constant 0 : index
    %70 = vector.load %arg16[%c0_51, %c0_52] : memref<8x128xf32, #tpu.memory_space<vmem>>, vector<8x128xf32>
    tpu.vector_store %arg16[%c0_51, %c0_52], %69 {strides = array<i32>} : memref<8x128xf32, #tpu.memory_space<vmem>>, vector<8x128xf32>,
    return
  }
  func.func @transform_0(%arg0: i32) -> (i32, i32) {
    %c0_i32 = arith.constant 0 : i32
    %c0_i32_0 = arith.constant 0 : i32
    return %arg0, %c0_i32 : i32, i32
  }
  func.func @transform_1(%arg0: i32) -> (i32, i32) {
    %c0_i32 = arith.constant 0 : i32
    %c0_i32_0 = arith.constant 0 : i32
    %c0_i32_1 = arith.constant 0 : i32
    return %c0_i32, %c0_i32_0 : i32, i32
  }
  func.func @transform_2(%arg0: i32) -> (i32, i32) {
    %c0_i32 = arith.constant 0 : i32
    %c0_i32_0 = arith.constant 0 : i32
    %c0_i32_1 = arith.constant 0 : i32
    return %c0_i32, %c0_i32_0 : i32, i32
  }
  func.func @transform_3(%arg0: i32) -> (i32, i32) {
    %c0_i32 = arith.constant 0 : i32
    %c0_i32_0 = arith.constant 0 : i32
    %c0_i32_1 = arith.constant 0 : i32
    return %c0_i32, %c0_i32_0 : i32, i32
  }
  func.func @transform_4(%arg0: i32) -> (i32, i32) {
    %c0_i32 = arith.constant 0 : i32
    %c0_i32_0 = arith.constant 0 : i32
    %c0_i32_1 = arith.constant 0 : i32
    return %c0_i32, %c0_i32_0 : i32, i32
  }
  func.func @transform_5(%arg0: i32) -> (i32, i32, i32) {
    %c0_i32 = arith.constant 0 : i32
    %c0_i32_0 = arith.constant 0 : i32
    %c0_i32_1 = arith.constant 0 : i32
    %c0_i32_2 = arith.constant 0 : i32
    return %c0_i32, %c0_i32_0, %c0_i32_1 : i32, i32, i32
  }
  func.func @transform_6(%arg0: i32) -> (i32, i32) {
    %c0_i32 = arith.constant 0 : i32
    %c0_i32_0 = arith.constant 0 : i32
    %c0_i32_1 = arith.constant 0 : i32
    return %c0_i32, %c0_i32_0 : i32, i32
  }
  func.func @transform_7(%arg0: i32) -> (i32, i32) {
    %c0_i32 = arith.constant 0 : i32
    %c0_i32_0 = arith.constant 0 : i32
    %c0_i32_1 = arith.constant 0 : i32
    return %c0_i32, %c0_i32_0 : i32, i32
  }
  func.func @transform_8(%arg0: i32) -> (i32, i32) {
    %c0_i32 = arith.constant 0 : i32
    %c0_i32_0 = arith.constant 0 : i32
    %c0_i32_1 = arith.constant 0 : i32
    return %c0_i32, %c0_i32_0 : i32, i32
  }
  func.func @transform_9(%arg0: i32) -> (i32, i32) {
    %c0_i32 = arith.constant 0 : i32
    %c0_i32_0 = arith.constant 0 : i32
    %c0_i32_1 = arith.constant 0 : i32
    return %c0_i32, %c0_i32_0 : i32, i32
  }
  func.func @transform_10(%arg0: i32) -> (i32, i32) {
    %c0_i32 = arith.constant 0 : i32
    %c0_i32_0 = arith.constant 0 : i32
    %c0_i32_1 = arith.constant 0 : i32
    return %c0_i32, %c0_i32_0 : i32, i32
  }
  func.func @transform_11(%arg0: i32) -> (i32, i32) {
    %c0_i32 = arith.constant 0 : i32
    %c0_i32_0 = arith.constant 0 : i32
    %c0_i32_1 = arith.constant 0 : i32
    return %c0_i32, %c0_i32_0 : i32, i32
  }
  func.func @transform_12(%arg0: i32) -> (i32, i32) {
    %c0_i32 = arith.constant 0 : i32
    %c0_i32_0 = arith.constant 0 : i32
    %c0_i32_1 = arith.constant 0 : i32
    return %c0_i32, %c0_i32_0 : i32, i32
  }
  func.func @transform_13(%arg0: i32) -> (i32, i32) {
    %c0_i32 = arith.constant 0 : i32
    %c0_i32_0 = arith.constant 0 : i32
    %c0_i32_1 = arith.constant 0 : i32
    return %c0_i32, %c0_i32_0 : i32, i32
  }
  func.func @transform_14(%arg0: i32) -> (i32, i32) {
    %c0_i32 = arith.constant 0 : i32
    %c0_i32_0 = arith.constant 0 : i32
    %c0_i32_1 = arith.constant 0 : i32
    return %c0_i32, %c0_i32_0 : i32, i32
  }
  func.func @transform_15(%arg0: i32) -> (i32, i32) {
    %c0_i32 = arith.constant 0 : i32
    %c0_i32_0 = arith.constant 0 : i32
    return %arg0, %c0_i32 : i32, i32
  }
}

</mosaic_0001>

<llo_original>
// kernel: tpu_custom_call.1
$region0: #{tpu_custom_call.1}
  #allocation0 [shape = 'u32[]', space=smem, size = 0x4, offset = 0x4, fixed_abs, tag = 'smem constant byte address 0x4 - core index']
  #allocation1 [shape = 'u32[144,128]{1,0:T(1,128)}', space=vmem, size = 0x12000, scoped, tag = 'internal scratch']
  %s0 = inlined_call_operand.vmem [shape: f32[8,64], index: 0, kind: input, shape index: {}]
  %s1 = inlined_call_operand.vmem [shape: bf16[64,512], index: 1, kind: input, shape index: {}]
  %s2 = inlined_call_operand.vmem [shape: f32[1,512], index: 2, kind: input, shape index: {}]
  %s3 = inlined_call_operand.hbm [shape: bf16[512,1024], index: 3, kind: input, shape index: {}]
  %s4 = inlined_call_operand.vmem [shape: f32[1,1024], index: 4, kind: input, shape index: {}]
  %s5 = inlined_call_operand.vmem [shape: bf16[4,256,128], index: 5, kind: input, shape index: {}]
  %s6 = inlined_call_operand.vmem [shape: f32[1,512], index: 6, kind: input, shape index: {}]
  %s7 = inlined_call_operand.hbm [shape: bf16[512,256], index: 7, kind: input, shape index: {}]
  %s8 = inlined_call_operand.vmem [shape: f32[1,256], index: 8, kind: input, shape index: {}]
  %s9 = inlined_call_operand.hbm [shape: bf16[256,384], index: 9, kind: input, shape index: {}]
  %s10 = inlined_call_operand.vmem [shape: f32[1,384], index: 10, kind: input, shape index: {}]
  %s11 = inlined_call_operand.vmem [shape: bf16[384,192], index: 11, kind: input, shape index: {}]
  %s12 = inlined_call_operand.vmem [shape: f32[1,192], index: 12, kind: input, shape index: {}]
  %s13 = inlined_call_operand.hbm [shape: bf16[192,128], index: 13, kind: input, shape index: {}]
  %s14 = inlined_call_operand.vmem [shape: f32[1,128], index: 14, kind: input, shape index: {}]
  %s15 = inlined_call_operand.hbm [shape: f32[8,128], index: 15, kind: output, shape index: {}]
  %s16 = sld [smem:[#allocation0]]
  $region86: #{tpu_custom_call.1} parent=0
    _
  %s18 = ssub.s32 1, %s16
  %s19 = scalar_select 0, %s18, %s16
  $region1: #{tpu_custom_call.1} parent=0
    #allocation2 [shape = 'u8[1048576]{0}', space=vmem, size = 0x100000, scoped, tag = 'input window, operand 3, single buffered']
    #allocation3 [shape = 's32[1]{0}', space=sflag, size = 0x4, scoped, tag = 'scoped memory for tpu_custom_call.1']
    #allocation4 [shape = 's32[1]{0}', space=sflag, size = 0x4, scoped, tag = 'scoped memory for tpu_custom_call.1']
    #allocation5 [shape = 'u8[262144]{0}', space=vmem, size = 0x40000, scoped, tag = 'input window, operand 7, single buffered']
    #allocation6 [shape = 's32[1]{0}', space=sflag, size = 0x4, scoped, tag = 'scoped memory for tpu_custom_call.1']
    #allocation7 [shape = 'u8[196608]{0}', space=vmem, size = 0x30000, scoped, tag = 'input window, operand 9, single buffered']
    #allocation8 [shape = 'u8[49152]{0}', space=vmem, size = 0xc000, scoped, tag = 'input window, operand 13, single buffered']
    #allocation9 [shape = 's32[1]{0}', space=sflag, size = 0x4, scoped, tag = 'scoped memory for tpu_custom_call.1']
    #allocation10 [shape = 'u8[4096]{0}', space=vmem, size = 0x1000, scoped, tag = 'output window, operand 0, single buffered']
    %20 = vsyncpa [#allocation3], 0
    %21 = vsyncpa [#allocation6], 0
    %22 = vsyncpa [#allocation9], 0
    %23 = vsyncpa [#allocation4], 0
    // Predicated region
    $region2: #{tpu_custom_call.1} parent=1 // pred_check
      _
    $region3: #{tpu_custom_call.1} parent=1 // pred_check_branch
      %25 = sbr.rel (0) target = $region5
    $region4: #{tpu_custom_call.1} parent=1 // pred_region
      _
    $region5: #{tpu_custom_call.1} parent=1 // pred_fallthru
      _
    // Predicated region
    $region6: #{tpu_custom_call.1} parent=1 // pred_check
      _
    $region7: #{tpu_custom_call.1} parent=1 // pred_check_branch
      %27 = sbr.rel (0) target = $region9
    $region8: #{tpu_custom_call.1} parent=1 // pred_region
      _
    $region9: #{tpu_custom_call.1} parent=1 // pred_fallthru
      _
    // Predicated region
    $region10: #{tpu_custom_call.1} parent=1 // pred_check
      _
    $region11: #{tpu_custom_call.1} parent=1 // pred_check_branch
      %29 = sbr.rel (0) target = $region13
    $region12: #{tpu_custom_call.1} parent=1 // pred_region
      _
    $region13: #{tpu_custom_call.1} parent=1 // pred_fallthru
      _
    // Predicated region
    $region14: #{tpu_custom_call.1} parent=1 // pred_check
      _
    $region15: #{tpu_custom_call.1} parent=1 // pred_check_branch
      %31 = sbr.rel (0) target = $region17
    $region16: #{tpu_custom_call.1} parent=1 // pred_region
      %s33 = ssub.s32 32768, 32768
      %34 = vsyncadd [#allocation3], %s33
      %s35 = sshll.u32 [#allocation2], 4
      %s36 = int_to_ptr.vmem [resolvable:$true] %s35
      %41 = dma.hbm_to_vmem [thread:$0]  %s3, 32768, %s36, [#allocation3], 512, 512, 32
    $region17: #{tpu_custom_call.1} parent=1 // pred_fallthru
      _
    // Predicated region
    $region18: #{tpu_custom_call.1} parent=1 // pred_check
      _
    $region19: #{tpu_custom_call.1} parent=1 // pred_check_branch
      %43 = sbr.rel (0) target = $region21
    $region20: #{tpu_custom_call.1} parent=1 // pred_region
      _
    $region21: #{tpu_custom_call.1} parent=1 // pred_fallthru
      _
    // Predicated region
    $region22: #{tpu_custom_call.1} parent=1 // pred_check
      _
    $region23: #{tpu_custom_call.1} parent=1 // pred_check_branch
      %45 = sbr.rel (0) target = $region25
    $region24: #{tpu_custom_call.1} parent=1 // pred_region
      _
    $region25: #{tpu_custom_call.1} parent=1 // pred_fallthru
      _
    // Predicated region
    $region26: #{tpu_custom_call.1} parent=1 // pred_check
      _
    $region27: #{tpu_custom_call.1} parent=1 // pred_check_branch
      %47 = sbr.rel (0) target = $region29
    $region28: #{tpu_custom_call.1} parent=1 // pred_region
      _
    $region29: #{tpu_custom_call.1} parent=1 // pred_fallthru
      _
    // Predicated region
    $region30: #{tpu_custom_call.1} parent=1 // pred_check
      _
    $region31: #{tpu_custom_call.1} parent=1 // pred_check_branch
      %49 = sbr.rel (0) target = $region33
    $region32: #{tpu_custom_call.1} parent=1 // pred_region
      %s51 = ssub.s32 8192, 8192
      %52 = vsyncadd [#allocation6], %s51
      %s53 = sshll.u32 [#allocation5], 4
      %s54 = int_to_ptr.vmem [resolvable:$true] %s53
      %59 = dma.hbm_to_vmem [thread:$0]  %s7, 8192, %s54, [#allocation6], 128, 128, 8
    $region33: #{tpu_custom_call.1} parent=1 // pred_fallthru
      _
    // Predicated region
    $region34: #{tpu_custom_call.1} parent=1 // pred_check
      _
    $region35: #{tpu_custom_call.1} parent=1 // pred_check_branch
      %61 = sbr.rel (0) target = $region37
    $region36: #{tpu_custom_call.1} parent=1 // pred_region
      _
    $region37: #{tpu_custom_call.1} parent=1 // pred_fallthru
      _
    // Predicated region
    $region38: #{tpu_custom_call.1} parent=1 // pred_check
      _
    $region39: #{tpu_custom_call.1} parent=1 // pred_check_branch
      %63 = sbr.rel (0) target = $region41
    $region40: #{tpu_custom_call.1} parent=1 // pred_region
      %s65 = ssub.s32 6144, 6144
      %66 = vsyncadd [#allocation6], %s65
      %s67 = sshll.u32 [#allocation7], 4
      %s68 = int_to_ptr.vmem [resolvable:$true] %s67
      %73 = dma.hbm_to_vmem [thread:$0]  %s9, 6144, %s68, [#allocation6], 192, 192, 12
    $region41: #{tpu_custom_call.1} parent=1 // pred_fallthru
      _
    // Predicated region
    $region42: #{tpu_custom_call.1} parent=1 // pred_check
      _
    $region43: #{tpu_custom_call.1} parent=1 // pred_check_branch
      %75 = sbr.rel (0) target = $region45
    $region44: #{tpu_custom_call.1} parent=1 // pred_region
      _
    $region45: #{tpu_custom_call.1} parent=1 // pred_fallthru
      _
    // Predicated region
    $region46: #{tpu_custom_call.1} parent=1 // pred_check
      _
    $region47: #{tpu_custom_call.1} parent=1 // pred_check_branch
      %77 = sbr.rel (0) target = $region49
    $region48: #{tpu_custom_call.1} parent=1 // pred_region
      _
    $region49: #{tpu_custom_call.1} parent=1 // pred_fallthru
      _
    // Predicated region
    $region50: #{tpu_custom_call.1} parent=1 // pred_check
      _
    $region51: #{tpu_custom_call.1} parent=1 // pred_check_branch
      %79 = sbr.rel (0) target = $region53
    $region52: #{tpu_custom_call.1} parent=1 // pred_region
      _
    $region53: #{tpu_custom_call.1} parent=1 // pred_fallthru
      _
    // Predicated region
    $region54: #{tpu_custom_call.1} parent=1 // pred_check
      _
    $region55: #{tpu_custom_call.1} parent=1 // pred_check_branch
      %81 = sbr.rel (0) target = $region57
    $region56: #{tpu_custom_call.1} parent=1 // pred_region
      %s83 = ssub.s32 1536, 1536
      %84 = vsyncadd [#allocation9], %s83
      %s85 = sshll.u32 [#allocation8], 4
      %s86 = int_to_ptr.vmem [resolvable:$true] %s85
      %91 = dma.hbm_to_vmem [thread:$0]  %s13, 1536, %s86, [#allocation9], 64, 64, 4
    $region57: #{tpu_custom_call.1} parent=1 // pred_fallthru
      _
    // Predicated region
    $region58: #{tpu_custom_call.1} parent=1 // pred_check
      _
    $region59: #{tpu_custom_call.1} parent=1 // pred_check_branch
      %93 = sbr.rel (0) target = $region61
    $region60: #{tpu_custom_call.1} parent=1 // pred_region
      _
    $region61: #{tpu_custom_call.1} parent=1 // pred_fallthru
      _
    // Predicated region
    $region62: #{tpu_custom_call.1} parent=1 // pred_check
      _
    $region63: #{tpu_custom_call.1} parent=1 // pred_check_branch
      %95 = sbr.rel (0) target = $region65
    $region64: #{tpu_custom_call.1} parent=1 // pred_region
      %96 = dma.done [#allocation3], 32768
    $region65: #{tpu_custom_call.1} parent=1 // pred_fallthru
      _
    // Predicated region
    $region66: #{tpu_custom_call.1} parent=1 // pred_check
      _
    $region67: #{tpu_custom_call.1} parent=1 // pred_check_branch
      %98 = sbr.rel (0) target = $region69
    $region68: #{tpu_custom_call.1} parent=1 // pred_region
      %99 = dma.done [#allocation6], 8192
    $region69: #{tpu_custom_call.1} parent=1 // pred_fallthru
      _
    // Predicated region
    $region70: #{tpu_custom_call.1} parent=1 // pred_check
      _
    $region71: #{tpu_custom_call.1} parent=1 // pred_check_branch
      %101 = sbr.rel (0) target = $region73
    $region72: #{tpu_custom_call.1} parent=1 // pred_region
      %102 = dma.done [#allocation6], 6144
    $region73: #{tpu_custom_call.1} parent=1 // pred_fallthru
      _
    // Predicated region
    $region74: #{tpu_custom_call.1} parent=1 // pred_check
      _
    $region75: #{tpu_custom_call.1} parent=1 // pred_check_branch
      %104 = sbr.rel (0) target = $region77
    $region76: #{tpu_custom_call.1} parent=1 // pred_region
      %105 = dma.done [#allocation9], 1536
    $region77: #{tpu_custom_call.1} parent=1 // pred_fallthru
      _
    %v107 = vld [vmem:[%s0] sm:$0xff]
    %v108 = vpack.c.bf16 %v107, %v107
    %v109 = vld [vmem:[%s1] sm:$0xff]
    %v110 = vld [vmem:[%s1 + $0x8] sm:$0xff]
    %v111 = vld [vmem:[%s1 + $0x10] sm:$0xff]
    %v112 = vld [vmem:[%s1 + $0x18] sm:$0xff]
    %v113 = vld [vmem:[%s1 + $0x20] sm:$0xff]
    %v114 = vld [vmem:[%s1 + $0x28] sm:$0xff]
    %v115 = vld [vmem:[%s1 + $0x30] sm:$0xff]
    %v116 = vld [vmem:[%s1 + $0x38] sm:$0xff]
    %v117 = vld [vmem:[%s1 + $0x40] sm:$0xff]
    %v118 = vld [vmem:[%s1 + $0x48] sm:$0xff]
    %v119 = vld [vmem:[%s1 + $0x50] sm:$0xff]
    %v120 = vld [vmem:[%s1 + $0x58] sm:$0xff]
    %v121 = vld [vmem:[%s1 + $0x60] sm:$0xff]
    %v122 = vld [vmem:[%s1 + $0x68] sm:$0xff]
    %v123 = vld [vmem:[%s1 + $0x70] sm:$0xff]
    %v124 = vld [vmem:[%s1 + $0x78] sm:$0xff]
    %v125 = vld [vmem:[%s2] sm:$0xf]
    %v127 = vlaneseq
    %v128 = vshrl.u32 %v127, 7
    %v129 = vsub.s32 0, %v128
    %v130 = vrot.slane %v125, %v129
    %v131 = vlaneseq
    %v132 = vshrl.u32 %v131, 7
    %v133 = vsub.s32 1, %v132
    %v134 = vrot.slane %v125, %v133
    %v135 = vlaneseq
    %v136 = vshrl.u32 %v135, 7
    %v137 = vsub.s32 2, %v136
    %v138 = vrot.slane %v125, %v137
    %v139 = vlaneseq
    %v140 = vshrl.u32 %v139, 7
    %v141 = vsub.s32 3, %v140
    %v142 = vrot.slane %v125, %v141
    %v163 = vunpack.c.l.b16 %v109
    %v164 = vunpack.c.h.b16 %v109
    %v165 = vunpack.c.l.b16 %v110
    %v166 = vunpack.c.h.b16 %v110
    %v167 = vunpack.c.l.b16 %v111
    %v168 = vunpack.c.h.b16 %v111
    %v169 = vunpack.c.l.b16 %v112
    %v170 = vunpack.c.h.b16 %v112
    %v171 = vunpack.c.l.b16 %v113
    %v172 = vunpack.c.h.b16 %v113
    %v173 = vunpack.c.l.b16 %v114
    %v174 = vunpack.c.h.b16 %v114
    %v175 = vunpack.c.l.b16 %v115
    %v176 = vunpack.c.h.b16 %v115
    %v177 = vunpack.c.l.b16 %v116
    %v178 = vunpack.c.h.b16 %v116
    %v179 = vunpack.c.l.b16 %v117
    %v180 = vunpack.c.h.b16 %v117
    %v181 = vunpack.c.l.b16 %v118
    %v182 = vunpack.c.h.b16 %v118
    %v183 = vunpack.c.l.b16 %v119
    %v184 = vunpack.c.h.b16 %v119
    %v185 = vunpack.c.l.b16 %v120
    %v186 = vunpack.c.h.b16 %v120
    %v187 = vunpack.c.l.b16 %v121
    %v188 = vunpack.c.h.b16 %v121
    %v189 = vunpack.c.l.b16 %v122
    %v190 = vunpack.c.h.b16 %v122
    %v191 = vunpack.c.l.b16 %v123
    %v192 = vunpack.c.h.b16 %v123
    %v193 = vunpack.c.l.b16 %v124
    %v194 = vunpack.c.h.b16 %v124
    %v195 = vpack.c.b16 %v167, %v163
    %v196 = vpack.c.b16 %v168, %v164
    %v197 = vpack.c.b16 %v169, %v165
    %v198 = vpack.c.b16 %v170, %v166
    %v199 = vpack.c.b16 %v175, %v171
    %v200 = vpack.c.b16 %v176, %v172
    %v201 = vpack.c.b16 %v177, %v173
    %v202 = vpack.c.b16 %v178, %v174
    %v203 = vpack.c.b16 %v183, %v179
    %v204 = vpack.c.b16 %v184, %v180
    %v205 = vpack.c.b16 %v185, %v181
    %v206 = vpack.c.b16 %v186, %v182
    %v207 = vpack.c.b16 %v191, %v187
    %v208 = vpack.c.b16 %v192, %v188
    %v209 = vpack.c.b16 %v193, %v189
    %v210 = vpack.c.b16 %v194, %v190
    %vm227 = vcmask 523264
    %v229 = vsel %vm227, %v108, 0
    %231 = vmatprep.subr.bf16.mxu0 %v196
    %232 = vmatpush1.bf16.msra.mxu0 %v195
    %233 = vmatprep.subr.bf16.mxu0 %v200
    %234 = vmatpush1.bf16.msra.mxu0 %v199
    %235 = vmatprep.subr.bf16.mxu0 %v204
    %236 = vmatpush1.bf16.msra.mxu0 %v203
    %237 = vmatprep.subr.bf16.mxu0 %v208
    %238 = vmatpush1.bf16.msra.mxu0 %v207
    %239 = vmatprep.subr.bf16.mxu0 0
    %240 = vmatpush1.bf16.msra.mxu0 0
    %241 = vmatprep.subr.bf16.mxu0 0
    %242 = vmatpush1.bf16.msra.mxu0 0
    %243 = vmatprep.subr.bf16.mxu0 0
    %244 = vmatpush1.bf16.msra.mxu0 0
    %245 = vmatprep.subr.bf16.mxu0 0
    %246 = vmatpush1.bf16.msra.mxu0 0
    %247 = vmatprep.subr.bf16.mxu0 0
    %248 = vmatpush1.bf16.msra.mxu0 0
    %249 = vmatprep.subr.bf16.mxu0 0
    %250 = vmatpush1.bf16.msra.mxu0 0
    %251 = vmatprep.subr.bf16.mxu0 0
    %252 = vmatpush1.bf16.msra.mxu0 0
    %253 = vmatprep.subr.bf16.mxu0 0
    %254 = vmatpush1.bf16.msra.mxu0 0
    %255 = vmatprep.subr.bf16.mxu0 0
    %256 = vmatpush1.bf16.msra.mxu0 0
    %257 = vmatprep.subr.bf16.mxu0 0
    %258 = vmatpush1.bf16.msra.mxu0 0
    %259 = vmatprep.subr.bf16.mxu0 0
    %260 = vmatpush1.bf16.msra.mxu0 0
    %261 = vmatprep.subr.bf16.mxu0 0
    %262 = vmatpush1.bf16.msra.mxu0 0
    %263 = vmatprep.mubr.bf16.mxu0 0
    %264 = vmatmul.mubr.bf16.gmra.mrb[0].mxu0 %v229
    %v265 = vpop.f32.mrb[0].mxu0
    %v266 = vadd.f32 %v130, %v265
    %v267 = vpop.f32.mrb[0].mxu0
    %v268 = vadd.f32 %v134, %v267
    %v269 = vpop.f32.mrb[0].mxu0
    %v270 = vpop.f32.mrb[0].mxu0
    %271 = vdwg.mxu0
    %272 = vmatprep.subr.bf16.mxu0 %v198
    %273 = vmatpush1.bf16.msra.mxu0 %v197
    %274 = vmatprep.subr.bf16.mxu0 %v202
    %275 = vmatpush1.bf16.msra.mxu0 %v201
    %276 = vmatprep.subr.bf16.mxu0 %v206
    %277 = vmatpush1.bf16.msra.mxu0 %v205
    %278 = vmatprep.subr.bf16.mxu0 %v210
    %279 = vmatpush1.bf16.msra.mxu0 %v209
    %280 = vmatprep.subr.bf16.mxu0 0
    %281 = vmatpush1.bf16.msra.mxu0 0
    %282 = vmatprep.subr.bf16.mxu0 0
    %283 = vmatpush1.bf16.msra.mxu0 0
    %284 = vmatprep.subr.bf16.mxu0 0
    %285 = vmatpush1.bf16.msra.mxu0 0
    %286 = vmatprep.subr.bf16.mxu0 0
    %287 = vmatpush1.bf16.msra.mxu0 0
    %288 = vmatprep.subr.bf16.mxu0 0
    %289 = vmatpush1.bf16.msra.mxu0 0
    %290 = vmatprep.subr.bf16.mxu0 0
    %291 = vmatpush1.bf16.msra.mxu0 0
    %292 = vmatprep.subr.bf16.mxu0 0
    %293 = vmatpush1.bf16.msra.mxu0 0
    %294 = vmatprep.subr.bf16.mxu0 0
    %295 = vmatpush1.bf16.msra.mxu0 0
    %296 = vmatprep.subr.bf16.mxu0 0
    %297 = vmatpush1.bf16.msra.mxu0 0
    %298 = vmatprep.subr.bf16.mxu0 0
    %299 = vmatpush1.bf16.msra.mxu0 0
    %300 = vmatprep.subr.bf16.mxu0 0
    %301 = vmatpush1.bf16.msra.mxu0 0
    %302 = vmatprep.subr.bf16.mxu0 0
    %303 = vmatpush1.bf16.msra.mxu0 0
    %304 = vmatprep.mubr.bf16.mxu0 0
    %305 = vmatmul.mubr.bf16.gmra.mrb[0].mxu0 %v229
    %v306 = vpop.f32.mrb[0].mxu0
    %v307 = vadd.f32 %v138, %v306
    %v308 = vpop.f32.mrb[0].mxu0
    %v309 = vadd.f32 %v142, %v308
    %v310 = vpop.f32.mrb[0].mxu0
    %v311 = vpop.f32.mrb[0].mxu0
    %312 = vdwg.mxu0
    %v313 = vmax.f32 %v266, 0.0
    %v314 = vmax.f32 %v268, 0.0
    %v315 = vmax.f32 %v307, 0.0
    %v316 = vmax.f32 %v309, 0.0
    %v317 = vpack.c.bf16 %v313, %v313
    %v318 = vpack.c.bf16 %v314, %v314
    %v319 = vpack.c.bf16 %v315, %v315
    %v320 = vpack.c.bf16 %v316, %v316
    %v321 = vld [vmem:[#allocation2] sm:$0xff]
    %v322 = vld [vmem:[#allocation2 + $0x8] sm:$0xff]
    %v323 = vld [vmem:[#allocation2 + $0x10] sm:$0xff]
    %v324 = vld [vmem:[#allocation2 + $0x18] sm:$0xff]
    %v325 = vld [vmem:[#allocation2 + $0x20] sm:$0xff]
    %v326 = vld [vmem:[#allocation2 + $0x28] sm:$0xff]
    %v327 = vld [vmem:[#allocation2 + $0x30] sm:$0xff]
    %v328 = vld [vmem:[#allocation2 + $0x38] sm:$0xff]
    %v329 = vld [vmem:[#allocation2 + $0x40] sm:$0xff]
    %v330 = vld [vmem:[#allocation2 + $0x48] sm:$0xff]
    %v331 = vld [vmem:[#allocation2 + $0x50] sm:$0xff]
    %v332 = vld [vmem:[#allocation2 + $0x58] sm:$0xff]
    %v333 = vld [vmem:[#allocation2 + $0x60] sm:$0xff]
    %v334 = vld [vmem:[#allocation2 + $0x68] sm:$0xff]
    %v335 = vld [vmem:[#allocation2 + $0x70] sm:$0xff]
    %v336 = vld [vmem:[#allocation2 + $0x78] sm:$0xff]
    %v337 = vld [vmem:[#allocation2 + $0x80] sm:$0xff]
    %v338 = vld [vmem:[#allocation2 + $0x88] sm:$0xff]
    %v339 = vld [vmem:[#allocation2 + $0x90] sm:$0xff]
    %v340 = vld [vmem:[#allocation2 + $0x98] sm:$0xff]
    %v341 = vld [vmem:[#allocation2 + $0xa0] sm:$0xff]
    %v342 = vld [vmem:[#allocation2 + $0xa8] sm:$0xff]
    %v343 = vld [vmem:[#allocation2 + $0xb0] sm:$0xff]
    %v344 = vld [vmem:[#allocation2 + $0xb8] sm:$0xff]
    %v345 = vld [vmem:[#allocation2 + $0xc0] sm:$0xff]
    %v346 = vld [vmem:[#allocation2 + $0xc8] sm:$0xff]
    %v347 = vld [vmem:[#allocation2 + $0xd0] sm:$0xff]
    %v348 = vld [vmem:[#allocation2 + $0xd8] sm:$0xff]
    %v349 = vld [vmem:[#allocation2 + $0xe0] sm:$0xff]
    %v350 = vld [vmem:[#allocation2 + $0xe8] sm:$0xff]
    %v351 = vld [vmem:[#allocation2 + $0xf0] sm:$0xff]
    %v352 = vld [vmem:[#allocation2 + $0xf8] sm:$0xff]
    %v353 = vld [vmem:[#allocation2 + $0x100] sm:$0xff]
    %v354 = vld [vmem:[#allocation2 + $0x108] sm:$0xff]
    %v355 = vld [vmem:[#allocation2 + $0x110] sm:$0xff]
    %v356 = vld [vmem:[#allocation2 + $0x118] sm:$0xff]
    %v357 = vld [vmem:[#allocation2 + $0x120] sm:$0xff]
    %v358 = vld [vmem:[#allocation2 + $0x128] sm:$0xff]
    %v359 = vld [vmem:[#allocation2 + $0x130] sm:$0xff]
    %v360 = vld [vmem:[#allocation2 + $0x138] sm:$0xff]
    %v361 = vld [vmem:[#allocation2 + $0x140] sm:$0xff]
    %v362 = vld [vmem:[#allocation2 + $0x148] sm:$0xff]
    %v363 = vld [vmem:[#allocation2 + $0x150] sm:$0xff]
    %v364 = vld [vmem:[#allocation2 + $0x158] sm:$0xff]
    %v365 = vld [vmem:[#allocation2 + $0x160] sm:$0xff]
    %v366 = vld [vmem:[#allocation2 + $0x168] sm:$0xff]
    %v367 = vld [vmem:[#allocation2 + $0x170] sm:$0xff]
    %v368 = vld [vmem:[#allocation2 + $0x178] sm:$0xff]
    %v369 = vld [vmem:[#allocation2 + $0x180] sm:$0xff]
    %v370 = vld [vmem:[#allocation2 + $0x188] sm:$0xff]
    %v371 = vld [vmem:[#allocation2 + $0x190] sm:$0xff]
    %v372 = vld [vmem:[#allocation2 + $0x198] sm:$0xff]
    %v373 = vld [vmem:[#allocation2 + $0x1a0] sm:$0xff]
    %v374 = vld [vmem:[#allocation2 + $0x1a8] sm:$0xff]
    %v375 = vld [vmem:[#allocation2 + $0x1b0] sm:$0xff]
    %v376 = vld [vmem:[#allocation2 + $0x1b8] sm:$0xff]
    %v377 = vld [vmem:[#allocation2 + $0x1c0] sm:$0xff]
    %v378 = vld [vmem:[#allocation2 + $0x1c8] sm:$0xff]
    %v379 = vld [vmem:[#allocation2 + $0x1d0] sm:$0xff]
    %v380 = vld [vmem:[#allocation2 + $0x1d8] sm:$0xff]
    %v381 = vld [vmem:[#allocation2 + $0x1e0] sm:$0xff]
    %v382 = vld [vmem:[#allocation2 + $0x1e8] sm:$0xff]
    %v383 = vld [vmem:[#allocation2 + $0x1f0] sm:$0xff]
    %v384 = vld [vmem:[#allocation2 + $0x1f8] sm:$0xff]
    %v385 = vld [vmem:[#allocation2 + $0x200] sm:$0xff]
    %v386 = vld [vmem:[#allocation2 + $0x208] sm:$0xff]
    %v387 = vld [vmem:[#allocation2 + $0x210] sm:$0xff]
    %v388 = vld [vmem:[#allocation2 + $0x218] sm:$0xff]
    %v389 = vld [vmem:[#allocation2 + $0x220] sm:$0xff]
    %v390 = vld [vmem:[#allocation2 + $0x228] sm:$0xff]
    %v391 = vld [vmem:[#allocation2 + $0x230] sm:$0xff]
    %v392 = vld [vmem:[#allocation2 + $0x238] sm:$0xff]
    %v393 = vld [vmem:[#allocation2 + $0x240] sm:$0xff]
    %v394 = vld [vmem:[#allocation2 + $0x248] sm:$0xff]
    %v395 = vld [vmem:[#allocation2 + $0x250] sm:$0xff]
    %v396 = vld [vmem:[#allocation2 + $0x258] sm:$0xff]
    %v397 = vld [vmem:[#allocation2 + $0x260] sm:$0xff]
    %v398 = vld [vmem:[#allocation2 + $0x268] sm:$0xff]
    %v399 = vld [vmem:[#allocation2 + $0x270] sm:$0xff]
    %v400 = vld [vmem:[#allocation2 + $0x278] sm:$0xff]
    %v401 = vld [vmem:[#allocation2 + $0x280] sm:$0xff]
    %v402 = vld [vmem:[#allocation2 + $0x288] sm:$0xff]
    %v403 = vld [vmem:[#allocation2 + $0x290] sm:$0xff]
    %v404 = vld [vmem:[#allocation2 + $0x298] sm:$0xff]
    %v405 = vld [vmem:[#allocation2 + $0x2a0] sm:$0xff]
    %v406 = vld [vmem:[#allocation2 + $0x2a8] sm:$0xff]
    %v407 = vld [vmem:[#allocation2 + $0x2b0] sm:$0xff]
    %v408 = vld [vmem:[#allocation2 + $0x2b8] sm:$0xff]
    %v409 = vld [vmem:[#allocation2 + $0x2c0] sm:$0xff]
    %v410 = vld [vmem:[#allocation2 + $0x2c8] sm:$0xff]
    %v411 = vld [vmem:[#allocation2 + $0x2d0] sm:$0xff]
    %v412 = vld [vmem:[#allocation2 + $0x2d8] sm:$0xff]
    %v413 = vld [vmem:[#allocation2 + $0x2e0] sm:$0xff]
    %v414 = vld [vmem:[#allocation2 + $0x2e8] sm:$0xff]
    %v415 = vld [vmem:[#allocation2 + $0x2f0] sm:$0xff]
    %v416 = vld [vmem:[#allocation2 + $0x2f8] sm:$0xff]
    %v417 = vld [vmem:[#allocation2 + $0x300] sm:$0xff]
    %v418 = vld [vmem:[#allocation2 + $0x308] sm:$0xff]
    %v419 = vld [vmem:[#allocation2 + $0x310] sm:$0xff]
    %v420 = vld [vmem:[#allocation2 + $0x318] sm:$0xff]
    %v421 = vld [vmem:[#allocation2 + $0x320] sm:$0xff]
    %v422 = vld [vmem:[#allocation2 + $0x328] sm:$0xff]
    %v423 = vld [vmem:[#allocation2 + $0x330] sm:$0xff]
    %v424 = vld [vmem:[#allocation2 + $0x338] sm:$0xff]
    %v425 = vld [vmem:[#allocation2 + $0x340] sm:$0xff]
    %v426 = vld [vmem:[#allocation2 + $0x348] sm:$0xff]
    %v427 = vld [vmem:[#allocation2 + $0x350] sm:$0xff]
    %v428 = vld [vmem:[#allocation2 + $0x358] sm:$0xff]
    %v429 = vld [vmem:[#allocation2 + $0x360] sm:$0xff]
    %v430 = vld [vmem:[#allocation2 + $0x368] sm:$0xff]
    %v431 = vld [vmem:[#allocation2 + $0x370] sm:$0xff]
    %v432 = vld [vmem:[#allocation2 + $0x378] sm:$0xff]
    %v433 = vld [vmem:[#allocation2 + $0x380] sm:$0xff]
    %v434 = vld [vmem:[#allocation2 + $0x388] sm:$0xff]
    %v435 = vld [vmem:[#allocation2 + $0x390] sm:$0xff]
    %v436 = vld [vmem:[#allocation2 + $0x398] sm:$0xff]
    %v437 = vld [vmem:[#allocation2 + $0x3a0] sm:$0xff]
    %v438 = vld [vmem:[#allocation2 + $0x3a8] sm:$0xff]
    %v439 = vld [vmem:[#allocation2 + $0x3b0] sm:$0xff]
    %v440 = vld [vmem:[#allocation2 + $0x3b8] sm:$0xff]
    %v441 = vld [vmem:[#allocation2 + $0x3c0] sm:$0xff]
    %v442 = vld [vmem:[#allocation2 + $0x3c8] sm:$0xff]
    %v443 = vld [vmem:[#allocation2 + $0x3d0] sm:$0xff]
    %v444 = vld [vmem:[#allocation2 + $0x3d8] sm:$0xff]
    %v445 = vld [vmem:[#allocation2 + $0x3e0] sm:$0xff]
    %v446 = vld [vmem:[#allocation2 + $0x3e8] sm:$0xff]
    %v447 = vld [vmem:[#allocation2 + $0x3f0] sm:$0xff]
    %v448 = vld [vmem:[#allocation2 + $0x3f8] sm:$0xff]
    %v449 = vld [vmem:[#allocation2 + $0x400] sm:$0xff]
    %v450 = vld [vmem:[#allocation2 + $0x408] sm:$0xff]
    %v451 = vld [vmem:[#allocation2 + $0x410] sm:$0xff]
    %v452 = vld [vmem:[#allocation2 + $0x418] sm:$0xff]
    %v453 = vld [vmem:[#allocation2 + $0x420] sm:$0xff]
    %v454 = vld [vmem:[#allocation2 + $0x428] sm:$0xff]
    %v455 = vld [vmem:[#allocation2 + $0x430] sm:$0xff]
    %v456 = vld [vmem:[#allocation2 + $0x438] sm:$0xff]
    %v457 = vld [vmem:[#allocation2 + $0x440] sm:$0xff]
    %v458 = vld [vmem:[#allocation2 + $0x448] sm:$0xff]
    %v459 = vld [vmem:[#allocation2 + $0x450] sm:$0xff]
    %v460 = vld [vmem:[#allocation2 + $0x458] sm:$0xff]
    %v461 = vld [vmem:[#allocation2 + $0x460] sm:$0xff]
    %v462 = vld [vmem:[#allocation2 + $0x468] sm:$0xff]
    %v463 = vld [vmem:[#allocation2 + $0x470] sm:$0xff]
    %v464 = vld [vmem:[#allocation2 + $0x478] sm:$0xff]
    %v465 = vld [vmem:[#allocation2 + $0x480] sm:$0xff]
    %v466 = vld [vmem:[#allocation2 + $0x488] sm:$0xff]
    %v467 = vld [vmem:[#allocation2 + $0x490] sm:$0xff]
    %v468 = vld [vmem:[#allocation2 + $0x498] sm:$0xff]
    %v469 = vld [vmem:[#allocation2 + $0x4a0] sm:$0xff]
    %v470 = vld [vmem:[#allocation2 + $0x4a8] sm:$0xff]
    %v471 = vld [vmem:[#allocation2 + $0x4b0] sm:$0xff]
    %v472 = vld [vmem:[#allocation2 + $0x4b8] sm:$0xff]
    %v473 = vld [vmem:[#allocation2 + $0x4c0] sm:$0xff]
    %v474 = vld [vmem:[#allocation2 + $0x4c8] sm:$0xff]
    %v475 = vld [vmem:[#allocation2 + $0x4d0] sm:$0xff]
    %v476 = vld [vmem:[#allocation2 + $0x4d8] sm:$0xff]
    %v477 = vld [vmem:[#allocation2 + $0x4e0] sm:$0xff]
    %v478 = vld [vmem:[#allocation2 + $0x4e8] sm:$0xff]
    %v479 = vld [vmem:[#allocation2 + $0x4f0] sm:$0xff]
    %v480 = vld [vmem:[#allocation2 + $0x4f8] sm:$0xff]
    %v481 = vld [vmem:[#allocation2 + $0x500] sm:$0xff]
    %v482 = vld [vmem:[#allocation2 + $0x508] sm:$0xff]
    %v483 = vld [vmem:[#allocation2 + $0x510] sm:$0xff]
    %v484 = vld [vmem:[#allocation2 + $0x518] sm:$0xff]
    %v485 = vld [vmem:[#allocation2 + $0x520] sm:$0xff]
    %v486 = vld [vmem:[#allocation2 + $0x528] sm:$0xff]
    %v487 = vld [vmem:[#allocation2 + $0x530] sm:$0xff]
    %v488 = vld [vmem:[#allocation2 + $0x538] sm:$0xff]
    %v489 = vld [vmem:[#allocation2 + $0x540] sm:$0xff]
    %v490 = vld [vmem:[#allocation2 + $0x548] sm:$0xff]
    %v491 = vld [vmem:[#allocation2 + $0x550] sm:$0xff]
    %v492 = vld [vmem:[#allocation2 + $0x558] sm:$0xff]
    %v493 = vld [vmem:[#allocation2 + $0x560] sm:$0xff]
    %v494 = vld [vmem:[#allocation2 + $0x568] sm:$0xff]
    %v495 = vld [vmem:[#allocation2 + $0x570] sm:$0xff]
    %v496 = vld [vmem:[#allocation2 + $0x578] sm:$0xff]
    %v497 = vld [vmem:[#allocation2 + $0x580] sm:$0xff]
    %v498 = vld [vmem:[#allocation2 + $0x588] sm:$0xff]
    %v499 = vld [vmem:[#allocation2 + $0x590] sm:$0xff]
    %v500 = vld [vmem:[#allocation2 + $0x598] sm:$0xff]
    %v501 = vld [vmem:[#allocation2 + $0x5a0] sm:$0xff]
    %v502 = vld [vmem:[#allocation2 + $0x5a8] sm:$0xff]
    %v503 = vld [vmem:[#allocation2 + $0x5b0] sm:$0xff]
    %v504 = vld [vmem:[#allocation2 + $0x5b8] sm:$0xff]
    %v505 = vld [vmem:[#allocation2 + $0x5c0] sm:$0xff]
    %v506 = vld [vmem:[#allocation2 + $0x5c8] sm:$0xff]
    %v507 = vld [vmem:[#allocation2 + $0x5d0] sm:$0xff]
    %v508 = vld [vmem:[#allocation2 + $0x5d8] sm:$0xff]
    %v509 = vld [vmem:[#allocation2 + $0x5e0] sm:$0xff]
    %v510 = vld [vmem:[#allocation2 + $0x5e8] sm:$0xff]
    %v511 = vld [vmem:[#allocation2 + $0x5f0] sm:$0xff]
    %v512 = vld [vmem:[#allocation2 + $0x5f8] sm:$0xff]
    %v513 = vld [vmem:[#allocation2 + $0x600] sm:$0xff]
    %v514 = vld [vmem:[#allocation2 + $0x608] sm:$0xff]
    %v515 = vld [vmem:[#allocation2 + $0x610] sm:$0xff]
    %v516 = vld [vmem:[#allocation2 + $0x618] sm:$0xff]
    %v517 = vld [vmem:[#allocation2 + $0x620] sm:$0xff]
    %v518 = vld [vmem:[#allocation2 + $0x628] sm:$0xff]
    %v519 = vld [vmem:[#allocation2 + $0x630] sm:$0xff]
    %v520 = vld [vmem:[#allocation2 + $0x638] sm:$0xff]
    %v521 = vld [vmem:[#allocation2 + $0x640] sm:$0xff]
    %v522 = vld [vmem:[#allocation2 + $0x648] sm:$0xff]
    %v523 = vld [vmem:[#allocation2 + $0x650] sm:$0xff]
    %v524 = vld [vmem:[#allocation2 + $0x658] sm:$0xff]
    %v525 = vld [vmem:[#allocation2 + $0x660] sm:$0xff]
    %v526 = vld [vmem:[#allocation2 + $0x668] sm:$0xff]
    %v527 = vld [vmem:[#allocation2 + $0x670] sm:$0xff]
    %v528 = vld [vmem:[#allocation2 + $0x678] sm:$0xff]
    %v529 = vld [vmem:[#allocation2 + $0x680] sm:$0xff]
    %v530 = vld [vmem:[#allocation2 + $0x688] sm:$0xff]
    %v531 = vld [vmem:[#allocation2 + $0x690] sm:$0xff]
    %v532 = vld [vmem:[#allocation2 + $0x698] sm:$0xff]
    %v533 = vld [vmem:[#allocation2 + $0x6a0] sm:$0xff]
    %v534 = vld [vmem:[#allocation2 + $0x6a8] sm:$0xff]
    %v535 = vld [vmem:[#allocation2 + $0x6b0] sm:$0xff]
    %v536 = vld [vmem:[#allocation2 + $0x6b8] sm:$0xff]
    %v537 = vld [vmem:[#allocation2 + $0x6c0] sm:$0xff]
    %v538 = vld [vmem:[#allocation2 + $0x6c8] sm:$0xff]
    %v539 = vld [vmem:[#allocation2 + $0x6d0] sm:$0xff]
    %v540 = vld [vmem:[#allocation2 + $0x6d8] sm:$0xff]
    %v541 = vld [vmem:[#allocation2 + $0x6e0] sm:$0xff]
    %v542 = vld [vmem:[#allocation2 + $0x6e8] sm:$0xff]
    %v543 = vld [vmem:[#allocation2 + $0x6f0] sm:$0xff]
    %v544 = vld [vmem:[#allocation2 + $0x6f8] sm:$0xff]
    %v545 = vld [vmem:[#allocation2 + $0x700] sm:$0xff]
    %v546 = vld [vmem:[#allocation2 + $0x708] sm:$0xff]
    %v547 = vld [vmem:[#allocation2 + $0x710] sm:$0xff]
    %v548 = vld [vmem:[#allocation2 + $0x718] sm:$0xff]
    %v549 = vld [vmem:[#allocation2 + $0x720] sm:$0xff]
    %v550 = vld [vmem:[#allocation2 + $0x728] sm:$0xff]
    %v551 = vld [vmem:[#allocation2 + $0x730] sm:$0xff]
    %v552 = vld [vmem:[#allocation2 + $0x738] sm:$0xff]
    %v553 = vld [vmem:[#allocation2 + $0x740] sm:$0xff]
    %v554 = vld [vmem:[#allocation2 + $0x748] sm:$0xff]
    %v555 = vld [vmem:[#allocation2 + $0x750] sm:$0xff]
    %v556 = vld [vmem:[#allocation2 + $0x758] sm:$0xff]
    %v557 = vld [vmem:[#allocation2 + $0x760] sm:$0xff]
    %v558 = vld [vmem:[#allocation2 + $0x768] sm:$0xff]
    %v559 = vld [vmem:[#allocation2 + $0x770] sm:$0xff]
    %v560 = vld [vmem:[#allocation2 + $0x778] sm:$0xff]
    %v561 = vld [vmem:[#allocation2 + $0x780] sm:$0xff]
    %v562 = vld [vmem:[#allocation2 + $0x788] sm:$0xff]
    %v563 = vld [vmem:[#allocation2 + $0x790] sm:$0xff]
    %v564 = vld [vmem:[#allocation2 + $0x798] sm:$0xff]
    %v565 = vld [vmem:[#allocation2 + $0x7a0] sm:$0xff]
    %v566 = vld [vmem:[#allocation2 + $0x7a8] sm:$0xff]
    %v567 = vld [vmem:[#allocation2 + $0x7b0] sm:$0xff]
    %v568 = vld [vmem:[#allocation2 + $0x7b8] sm:$0xff]
    %v569 = vld [vmem:[#allocation2 + $0x7c0] sm:$0xff]
    %v570 = vld [vmem:[#allocation2 + $0x7c8] sm:$0xff]
    %v571 = vld [vmem:[#allocation2 + $0x7d0] sm:$0xff]
    %v572 = vld [vmem:[#allocation2 + $0x7d8] sm:$0xff]
    %v573 = vld [vmem:[#allocation2 + $0x7e0] sm:$0xff]
    %v574 = vld [vmem:[#allocation2 + $0x7e8] sm:$0xff]
    %v575 = vld [vmem:[#allocation2 + $0x7f0] sm:$0xff]
    %v576 = vld [vmem:[#allocation2 + $0x7f8] sm:$0xff]
    %v577 = vld [vmem:[%s4] sm:$0xff]
    %v579 = vlaneseq
    %v580 = vshrl.u32 %v579, 7
    %v581 = vsub.s32 0, %v580
    %v582 = vrot.slane %v577, %v581
    %v583 = vlaneseq
    %v584 = vshrl.u32 %v583, 7
    %v585 = vsub.s32 1, %v584
    %v586 = vrot.slane %v577, %v585
    %v587 = vlaneseq
    %v588 = vshrl.u32 %v587, 7
    %v589 = vsub.s32 2, %v588
    %v590 = vrot.slane %v577, %v589
    %v591 = vlaneseq
    %v592 = vshrl.u32 %v591, 7
    %v593 = vsub.s32 3, %v592
    %v594 = vrot.slane %v577, %v593
    %v595 = vlaneseq
    %v596 = vshrl.u32 %v595, 7
    %v597 = vsub.s32 4, %v596
    %v598 = vrot.slane %v577, %v597
    %v599 = vlaneseq
    %v600 = vshrl.u32 %v599, 7
    %v601 = vsub.s32 5, %v600
    %v602 = vrot.slane %v577, %v601
    %v603 = vlaneseq
    %v604 = vshrl.u32 %v603, 7
    %v605 = vsub.s32 6, %v604
    %v606 = vrot.slane %v577, %v605
    %v607 = vlaneseq
    %v608 = vshrl.u32 %v607, 7
    %v609 = vsub.s32 7, %v608
    %v610 = vrot.slane %v577, %v609
    %v875 = vunpack.c.l.b16 %v321
    %v876 = vunpack.c.h.b16 %v321
    %v877 = vunpack.c.l.b16 %v322
    %v878 = vunpack.c.h.b16 %v322
    %v879 = vunpack.c.l.b16 %v323
    %v880 = vunpack.c.h.b16 %v323
    %v881 = vunpack.c.l.b16 %v324
    %v882 = vunpack.c.h.b16 %v324
    %v883 = vunpack.c.l.b16 %v325
    %v884 = vunpack.c.h.b16 %v325
    %v885 = vunpack.c.l.b16 %v326
    %v886 = vunpack.c.h.b16 %v326
    %v887 = vunpack.c.l.b16 %v327
    %v888 = vunpack.c.h.b16 %v327
    %v889 = vunpack.c.l.b16 %v328
    %v890 = vunpack.c.h.b16 %v328
    %v891 = vunpack.c.l.b16 %v329
    %v892 = vunpack.c.h.b16 %v329
    %v893 = vunpack.c.l.b16 %v330
    %v894 = vunpack.c.h.b16 %v330
    %v895 = vunpack.c.l.b16 %v331
    %v896 = vunpack.c.h.b16 %v331
    %v897 = vunpack.c.l.b16 %v332
    %v898 = vunpack.c.h.b16 %v332
    %v899 = vunpack.c.l.b16 %v333
    %v900 = vunpack.c.h.b16 %v333
    %v901 = vunpack.c.l.b16 %v334
    %v902 = vunpack.c.h.b16 %v334
    %v903 = vunpack.c.l.b16 %v335
    %v904 = vunpack.c.h.b16 %v335
    %v905 = vunpack.c.l.b16 %v336
    %v906 = vunpack.c.h.b16 %v336
    %v907 = vunpack.c.l.b16 %v337
    %v908 = vunpack.c.h.b16 %v337
    %v909 = vunpack.c.l.b16 %v338
    %v910 = vunpack.c.h.b16 %v338
    %v911 = vunpack.c.l.b16 %v339
    %v912 = vunpack.c.h.b16 %v339
    %v913 = vunpack.c.l.b16 %v340
    %v914 = vunpack.c.h.b16 %v340
    %v915 = vunpack.c.l.b16 %v341
    %v916 = vunpack.c.h.b16 %v341
    %v917 = vunpack.c.l.b16 %v342
    %v918 = vunpack.c.h.b16 %v342
    %v919 = vunpack.c.l.b16 %v343
    %v920 = vunpack.c.h.b16 %v343
    %v921 = vunpack.c.l.b16 %v344
    %v922 = vunpack.c.h.b16 %v344
    %v923 = vunpack.c.l.b16 %v345
    %v924 = vunpack.c.h.b16 %v345
    %v925 = vunpack.c.l.b16 %v346
    %v926 = vunpack.c.h.b16 %v346
    %v927 = vunpack.c.l.b16 %v347
    %v928 = vunpack.c.h.b16 %v347
    %v929 = vunpack.c.l.b16 %v348
    %v930 = vunpack.c.h.b16 %v348
    %v931 = vunpack.c.l.b16 %v349
    %v932 = vunpack.c.h.b16 %v349
    %v933 = vunpack.c.l.b16 %v350
    %v934 = vunpack.c.h.b16 %v350
    %v935 = vunpack.c.l.b16 %v351
    %v936 = vunpack.c.h.b16 %v351
    %v937 = vunpack.c.l.b16 %v352
    %v938 = vunpack.c.h.b16 %v352
    %v939 = vunpack.c.l.b16 %v353
    %v940 = vunpack.c.h.b16 %v353
    %v941 = vunpack.c.l.b16 %v354
    %v942 = vunpack.c.h.b16 %v354
    %v943 = vunpack.c.l.b16 %v355
    %v944 = vunpack.c.h.b16 %v355
    %v945 = vunpack.c.l.b16 %v356
    %v946 = vunpack.c.h.b16 %v356
    %v947 = vunpack.c.l.b16 %v357
    %v948 = vunpack.c.h.b16 %v357
    %v949 = vunpack.c.l.b16 %v358
    %v950 = vunpack.c.h.b16 %v358
    %v951 = vunpack.c.l.b16 %v359
    %v952 = vunpack.c.h.b16 %v359
    %v953 = vunpack.c.l.b16 %v360
    %v954 = vunpack.c.h.b16 %v360
    %v955 = vunpack.c.l.b16 %v361
    %v956 = vunpack.c.h.b16 %v361
    %v957 = vunpack.c.l.b16 %v362
    %v958 = vunpack.c.h.b16 %v362
    %v959 = vunpack.c.l.b16 %v363
    %v960 = vunpack.c.h.b16 %v363
    %v961 = vunpack.c.l.b16 %v364
    %v962 = vunpack.c.h.b16 %v364
    %v963 = vunpack.c.l.b16 %v365
    %v964 = vunpack.c.h.b16 %v365
    %v965 = vunpack.c.l.b16 %v366
    %v966 = vunpack.c.h.b16 %v366
    %v967 = vunpack.c.l.b16 %v367
    %v968 = vunpack.c.h.b16 %v367
    %v969 = vunpack.c.l.b16 %v368
    %v970 = vunpack.c.h.b16 %v368
    %v971 = vunpack.c.l.b16 %v369
    %v972 = vunpack.c.h.b16 %v369
    %v973 = vunpack.c.l.b16 %v370
    %v974 = vunpack.c.h.b16 %v370
    %v975 = vunpack.c.l.b16 %v371
    %v976 = vunpack.c.h.b16 %v371
    %v977 = vunpack.c.l.b16 %v372
    %v978 = vunpack.c.h.b16 %v372
    %v979 = vunpack.c.l.b16 %v373
    %v980 = vunpack.c.h.b16 %v373
    %v981 = vunpack.c.l.b16 %v374
    %v982 = vunpack.c.h.b16 %v374
    %v983 = vunpack.c.l.b16 %v375
    %v984 = vunpack.c.h.b16 %v375
    %v985 = vunpack.c.l.b16 %v376
    %v986 = vunpack.c.h.b16 %v376
    %v987 = vunpack.c.l.b16 %v377
    %v988 = vunpack.c.h.b16 %v377
    %v989 = vunpack.c.l.b16 %v378
    %v990 = vunpack.c.h.b16 %v378
    %v991 = vunpack.c.l.b16 %v379
    %v992 = vunpack.c.h.b16 %v379
    %v993 = vunpack.c.l.b16 %v380
    %v994 = vunpack.c.h.b16 %v380
    %v995 = vunpack.c.l.b16 %v381
    %v996 = vunpack.c.h.b16 %v381
    %v997 = vunpack.c.l.b16 %v382
    %v998 = vunpack.c.h.b16 %v382
    %v999 = vunpack.c.l.b16 %v383
    %v1000 = vunpack.c.h.b16 %v383
    %v1001 = vunpack.c.l.b16 %v384
    %v1002 = vunpack.c.h.b16 %v384
    %v1003 = vunpack.c.l.b16 %v385
    %v1004 = vunpack.c.h.b16 %v385
    %v1005 = vunpack.c.l.b16 %v386
    %v1006 = vunpack.c.h.b16 %v386
    %v1007 = vunpack.c.l.b16 %v387
    %v1008 = vunpack.c.h.b16 %v387
    %v1009 = vunpack.c.l.b16 %v388
    %v1010 = vunpack.c.h.b16 %v388
    %v1011 = vunpack.c.l.b16 %v389
    %v1012 = vunpack.c.h.b16 %v389
    %v1013 = vunpack.c.l.b16 %v390
    %v1014 = vunpack.c.h.b16 %v390
    %v1015 = vunpack.c.l.b16 %v391
    %v1016 = vunpack.c.h.b16 %v391
    %v1017 = vunpack.c.l.b16 %v392
    %v1018 = vunpack.c.h.b16 %v392
    %v1019 = vunpack.c.l.b16 %v393
    %v1020 = vunpack.c.h.b16 %v393
    %v1021 = vunpack.c.l.b16 %v394
    %v1022 = vunpack.c.h.b16 %v394
    %v1023 = vunpack.c.l.b16 %v395
    %v1024 = vunpack.c.h.b16 %v395
    %v1025 = vunpack.c.l.b16 %v396
    %v1026 = vunpack.c.h.b16 %v396
    %v1027 = vunpack.c.l.b16 %v397
    %v1028 = vunpack.c.h.b16 %v397
    %v1029 = vunpack.c.l.b16 %v398
    %v1030 = vunpack.c.h.b16 %v398
    %v1031 = vunpack.c.l.b16 %v399
    %v1032 = vunpack.c.h.b16 %v399
    %v1033 = vunpack.c.l.b16 %v400
    %v1034 = vunpack.c.h.b16 %v400
    %v1035 = vunpack.c.l.b16 %v401
    %v1036 = vunpack.c.h.b16 %v401
    %v1037 = vunpack.c.l.b16 %v402
    %v1038 = vunpack.c.h.b16 %v402
    %v1039 = vunpack.c.l.b16 %v403
    %v1040 = vunpack.c.h.b16 %v403
    %v1041 = vunpack.c.l.b16 %v404
    %v1042 = vunpack.c.h.b16 %v404
    %v1043 = vunpack.c.l.b16 %v405
    %v1044 = vunpack.c.h.b16 %v405
    %v1045 = vunpack.c.l.b16 %v406
    %v1046 = vunpack.c.h.b16 %v406
    %v1047 = vunpack.c.l.b16 %v407
    %v1048 = vunpack.c.h.b16 %v407
    %v1049 = vunpack.c.l.b16 %v408
    %v1050 = vunpack.c.h.b16 %v408
    %v1051 = vunpack.c.l.b16 %v409
    %v1052 = vunpack.c.h.b16 %v409
    %v1053 = vunpack.c.l.b16 %v410
    %v1054 = vunpack.c.h.b16 %v410
    %v1055 = vunpack.c.l.b16 %v411
    %v1056 = vunpack.c.h.b16 %v411
    %v1057 = vunpack.c.l.b16 %v412
    %v1058 = vunpack.c.h.b16 %v412
    %v1059 = vunpack.c.l.b16 %v413
    %v1060 = vunpack.c.h.b16 %v413
    %v1061 = vunpack.c.l.b16 %v414
    %v1062 = vunpack.c.h.b16 %v414
    %v1063 = vunpack.c.l.b16 %v415
    %v1064 = vunpack.c.h.b16 %v415
    %v1065 = vunpack.c.l.b16 %v416
    %v1066 = vunpack.c.h.b16 %v416
    %v1067 = vunpack.c.l.b16 %v417
    %v1068 = vunpack.c.h.b16 %v417
    %v1069 = vunpack.c.l.b16 %v418
    %v1070 = vunpack.c.h.b16 %v418
    %v1071 = vunpack.c.l.b16 %v419
    %v1072 = vunpack.c.h.b16 %v419
    %v1073 = vunpack.c.l.b16 %v420
    %v1074 = vunpack.c.h.b16 %v420
    %v1075 = vunpack.c.l.b16 %v421
    %v1076 = vunpack.c.h.b16 %v421
    %v1077 = vunpack.c.l.b16 %v422
    %v1078 = vunpack.c.h.b16 %v422
    %v1079 = vunpack.c.l.b16 %v423
    %v1080 = vunpack.c.h.b16 %v423
    %v1081 = vunpack.c.l.b16 %v424
    %v1082 = vunpack.c.h.b16 %v424
    %v1083 = vunpack.c.l.b16 %v425
    %v1084 = vunpack.c.h.b16 %v425
    %v1085 = vunpack.c.l.b16 %v426
    %v1086 = vunpack.c.h.b16 %v426
    %v1087 = vunpack.c.l.b16 %v427
    %v1088 = vunpack.c.h.b16 %v427
    %v1089 = vunpack.c.l.b16 %v428
    %v1090 = vunpack.c.h.b16 %v428
    %v1091 = vunpack.c.l.b16 %v429
    %v1092 = vunpack.c.h.b16 %v429
    %v1093 = vunpack.c.l.b16 %v430
    %v1094 = vunpack.c.h.b16 %v430
    %v1095 = vunpack.c.l.b16 %v431
    %v1096 = vunpack.c.h.b16 %v431
    %v1097 = vunpack.c.l.b16 %v432
    %v1098 = vunpack.c.h.b16 %v432
    %v1099 = vunpack.c.l.b16 %v433
    %v1100 = vunpack.c.h.b16 %v433
    %v1101 = vunpack.c.l.b16 %v434
    %v1102 = vunpack.c.h.b16 %v434
    %v1103 = vunpack.c.l.b16 %v435
    %v1104 = vunpack.c.h.b16 %v435
    %v1105 = vunpack.c.l.b16 %v436
    %v1106 = vunpack.c.h.b16 %v436
    %v1107 = vunpack.c.l.b16 %v437
    %v1108 = vunpack.c.h.b16 %v437
    %v1109 = vunpack.c.l.b16 %v438
    %v1110 = vunpack.c.h.b16 %v438
    %v1111 = vunpack.c.l.b16 %v439
    %v1112 = vunpack.c.h.b16 %v439
    %v1113 = vunpack.c.l.b16 %v440
    %v1114 = vunpack.c.h.b16 %v440
    %v1115 = vunpack.c.l.b16 %v441
    %v1116 = vunpack.c.h.b16 %v441
    %v1117 = vunpack.c.l.b16 %v442
    %v1118 = vunpack.c.h.b16 %v442
    %v1119 = vunpack.c.l.b16 %v443
    %v1120 = vunpack.c.h.b16 %v443
    %v1121 = vunpack.c.l.b16 %v444
    %v1122 = vunpack.c.h.b16 %v444
    %v1123 = vunpack.c.l.b16 %v445
    %v1124 = vunpack.c.h.b16 %v445
    %v1125 = vunpack.c.l.b16 %v446
    %v1126 = vunpack.c.h.b16 %v446
    %v1127 = vunpack.c.l.b16 %v447
    %v1128 = vunpack.c.h.b16 %v447
    %v1129 = vunpack.c.l.b16 %v448
    %v1130 = vunpack.c.h.b16 %v448
    %v1131 = vunpack.c.l.b16 %v449
    %v1132 = vunpack.c.h.b16 %v449
    %v1133 = vunpack.c.l.b16 %v450
    %v1134 = vunpack.c.h.b16 %v450
    %v1135 = vunpack.c.l.b16 %v451
    %v1136 = vunpack.c.h.b16 %v451
    %v1137 = vunpack.c.l.b16 %v452
    %v1138 = vunpack.c.h.b16 %v452
    %v1139 = vunpack.c.l.b16 %v453
    %v1140 = vunpack.c.h.b16 %v453
    %v1141 = vunpack.c.l.b16 %v454
    %v1142 = vunpack.c.h.b16 %v454
    %v1143 = vunpack.c.l.b16 %v455
    %v1144 = vunpack.c.h.b16 %v455
    %v1145 = vunpack.c.l.b16 %v456
    %v1146 = vunpack.c.h.b16 %v456
    %v1147 = vunpack.c.l.b16 %v457
    %v1148 = vunpack.c.h.b16 %v457
    %v1149 = vunpack.c.l.b16 %v458
    %v1150 = vunpack.c.h.b16 %v458
    %v1151 = vunpack.c.l.b16 %v459
    %v1152 = vunpack.c.h.b16 %v459
    %v1153 = vunpack.c.l.b16 %v460
    %v1154 = vunpack.c.h.b16 %v460
    %v1155 = vunpack.c.l.b16 %v461
    %v1156 = vunpack.c.h.b16 %v461
    %v1157 = vunpack.c.l.b16 %v462
    %v1158 = vunpack.c.h.b16 %v462
    %v1159 = vunpack.c.l.b16 %v463
    %v1160 = vunpack.c.h.b16 %v463
    %v1161 = vunpack.c.l.b16 %v464
    %v1162 = vunpack.c.h.b16 %v464
    %v1163 = vunpack.c.l.b16 %v465
    %v1164 = vunpack.c.h.b16 %v465
    %v1165 = vunpack.c.l.b16 %v466
    %v1166 = vunpack.c.h.b16 %v466
    %v1167 = vunpack.c.l.b16 %v467
    %v1168 = vunpack.c.h.b16 %v467
    %v1169 = vunpack.c.l.b16 %v468
    %v1170 = vunpack.c.h.b16 %v468
    %v1171 = vunpack.c.l.b16 %v469
    %v1172 = vunpack.c.h.b16 %v469
    %v1173 = vunpack.c.l.b16 %v470
    %v1174 = vunpack.c.h.b16 %v470
    %v1175 = vunpack.c.l.b16 %v471
    %v1176 = vunpack.c.h.b16 %v471
    %v1177 = vunpack.c.l.b16 %v472
    %v1178 = vunpack.c.h.b16 %v472
    %v1179 = vunpack.c.l.b16 %v473
    %v1180 = vunpack.c.h.b16 %v473
    %v1181 = vunpack.c.l.b16 %v474
    %v1182 = vunpack.c.h.b16 %v474
    %v1183 = vunpack.c.l.b16 %v475
    %v1184 = vunpack.c.h.b16 %v475
    %v1185 = vunpack.c.l.b16 %v476
    %v1186 = vunpack.c.h.b16 %v476
    %v1187 = vunpack.c.l.b16 %v477
    %v1188 = vunpack.c.h.b16 %v477
    %v1189 = vunpack.c.l.b16 %v478
    %v1190 = vunpack.c.h.b16 %v478
    %v1191 = vunpack.c.l.b16 %v479
    %v1192 = vunpack.c.h.b16 %v479
    %v1193 = vunpack.c.l.b16 %v480
    %v1194 = vunpack.c.h.b16 %v480
    %v1195 = vunpack.c.l.b16 %v481
    %v1196 = vunpack.c.h.b16 %v481
    %v1197 = vunpack.c.l.b16 %v482
    %v1198 = vunpack.c.h.b16 %v482
    %v1199 = vunpack.c.l.b16 %v483
    %v1200 = vunpack.c.h.b16 %v483
    %v1201 = vunpack.c.l.b16 %v484
    %v1202 = vunpack.c.h.b16 %v484
    %v1203 = vunpack.c.l.b16 %v485
    %v1204 = vunpack.c.h.b16 %v485
    %v1205 = vunpack.c.l.b16 %v486
    %v1206 = vunpack.c.h.b16 %v486
    %v1207 = vunpack.c.l.b16 %v487
    %v1208 = vunpack.c.h.b16 %v487
    %v1209 = vunpack.c.l.b16 %v488
    %v1210 = vunpack.c.h.b16 %v488
    %v1211 = vunpack.c.l.b16 %v489
    %v1212 = vunpack.c.h.b16 %v489
    %v1213 = vunpack.c.l.b16 %v490
    %v1214 = vunpack.c.h.b16 %v490
    %v1215 = vunpack.c.l.b16 %v491
    %v1216 = vunpack.c.h.b16 %v491
    %v1217 = vunpack.c.l.b16 %v492
    %v1218 = vunpack.c.h.b16 %v492
    %v1219 = vunpack.c.l.b16 %v493
    %v1220 = vunpack.c.h.b16 %v493
    %v1221 = vunpack.c.l.b16 %v494
    %v1222 = vunpack.c.h.b16 %v494
    %v1223 = vunpack.c.l.b16 %v495
    %v1224 = vunpack.c.h.b16 %v495
    %v1225 = vunpack.c.l.b16 %v496
    %v1226 = vunpack.c.h.b16 %v496
    %v1227 = vunpack.c.l.b16 %v497
    %v1228 = vunpack.c.h.b16 %v497
    %v1229 = vunpack.c.l.b16 %v498
    %v1230 = vunpack.c.h.b16 %v498
    %v1231 = vunpack.c.l.b16 %v499
    %v1232 = vunpack.c.h.b16 %v499
    %v1233 = vunpack.c.l.b16 %v500
    %v1234 = vunpack.c.h.b16 %v500
    %v1235 = vunpack.c.l.b16 %v501
    %v1236 = vunpack.c.h.b16 %v501
    %v1237 = vunpack.c.l.b16 %v502
    %v1238 = vunpack.c.h.b16 %v502
    %v1239 = vunpack.c.l.b16 %v503
    %v1240 = vunpack.c.h.b16 %v503
    %v1241 = vunpack.c.l.b16 %v504
    %v1242 = vunpack.c.h.b16 %v504
    %v1243 = vunpack.c.l.b16 %v505
    %v1244 = vunpack.c.h.b16 %v505
    %v1245 = vunpack.c.l.b16 %v506
    %v1246 = vunpack.c.h.b16 %v506
    %v1247 = vunpack.c.l.b16 %v507
    %v1248 = vunpack.c.h.b16 %v507
    %v1249 = vunpack.c.l.b16 %v508
    %v1250 = vunpack.c.h.b16 %v508
    %v1251 = vunpack.c.l.b16 %v509
    %v1252 = vunpack.c.h.b16 %v509
    %v1253 = vunpack.c.l.b16 %v510
    %v1254 = vunpack.c.h.b16 %v510
    %v1255 = vunpack.c.l.b16 %v511
    %v1256 = vunpack.c.h.b16 %v511
    %v1257 = vunpack.c.l.b16 %v512
    %v1258 = vunpack.c.h.b16 %v512
    %v1259 = vunpack.c.l.b16 %v513
    %v1260 = vunpack.c.h.b16 %v513
    %v1261 = vunpack.c.l.b16 %v514
    %v1262 = vunpack.c.h.b16 %v514
    %v1263 = vunpack.c.l.b16 %v515
    %v1264 = vunpack.c.h.b16 %v515
    %v1265 = vunpack.c.l.b16 %v516
    %v1266 = vunpack.c.h.b16 %v516
    %v1267 = vunpack.c.l.b16 %v517
    %v1268 = vunpack.c.h.b16 %v517
    %v1269 = vunpack.c.l.b16 %v518
    %v1270 = vunpack.c.h.b16 %v518
    %v1271 = vunpack.c.l.b16 %v519
    %v1272 = vunpack.c.h.b16 %v519
    %v1273 = vunpack.c.l.b16 %v520
    %v1274 = vunpack.c.h.b16 %v520
    %v1275 = vunpack.c.l.b16 %v521
    %v1276 = vunpack.c.h.b16 %v521
    %v1277 = vunpack.c.l.b16 %v522
    %v1278 = vunpack.c.h.b16 %v522
    %v1279 = vunpack.c.l.b16 %v523
    %v1280 = vunpack.c.h.b16 %v523
    %v1281 = vunpack.c.l.b16 %v524
    %v1282 = vunpack.c.h.b16 %v524
    %v1283 = vunpack.c.l.b16 %v525
    %v1284 = vunpack.c.h.b16 %v525
    %v1285 = vunpack.c.l.b16 %v526
    %v1286 = vunpack.c.h.b16 %v526
    %v1287 = vunpack.c.l.b16 %v527
    %v1288 = vunpack.c.h.b16 %v527
    %v1289 = vunpack.c.l.b16 %v528
    %v1290 = vunpack.c.h.b16 %v528
    %v1291 = vunpack.c.l.b16 %v529
    %v1292 = vunpack.c.h.b16 %v529
    %v1293 = vunpack.c.l.b16 %v530
    %v1294 = vunpack.c.h.b16 %v530
    %v1295 = vunpack.c.l.b16 %v531
    %v1296 = vunpack.c.h.b16 %v531
    %v1297 = vunpack.c.l.b16 %v532
    %v1298 = vunpack.c.h.b16 %v532
    %v1299 = vunpack.c.l.b16 %v533
    %v1300 = vunpack.c.h.b16 %v533
    %v1301 = vunpack.c.l.b16 %v534
    %v1302 = vunpack.c.h.b16 %v534
    %v1303 = vunpack.c.l.b16 %v535
    %v1304 = vunpack.c.h.b16 %v535
    %v1305 = vunpack.c.l.b16 %v536
    %v1306 = vunpack.c.h.b16 %v536
    %v1307 = vunpack.c.l.b16 %v537
    %v1308 = vunpack.c.h.b16 %v537
    %v1309 = vunpack.c.l.b16 %v538
    %v1310 = vunpack.c.h.b16 %v538
    %v1311 = vunpack.c.l.b16 %v539
    %v1312 = vunpack.c.h.b16 %v539
    %v1313 = vunpack.c.l.b16 %v540
    %v1314 = vunpack.c.h.b16 %v540
    %v1315 = vunpack.c.l.b16 %v541
    %v1316 = vunpack.c.h.b16 %v541
    %v1317 = vunpack.c.l.b16 %v542
    %v1318 = vunpack.c.h.b16 %v542
    %v1319 = vunpack.c.l.b16 %v543
    %v1320 = vunpack.c.h.b16 %v543
    %v1321 = vunpack.c.l.b16 %v544
    %v1322 = vunpack.c.h.b16 %v544
    %v1323 = vunpack.c.l.b16 %v545
    %v1324 = vunpack.c.h.b16 %v545
    %v1325 = vunpack.c.l.b16 %v546
    %v1326 = vunpack.c.h.b16 %v546
    %v1327 = vunpack.c.l.b16 %v547
    %v1328 = vunpack.c.h.b16 %v547
    %v1329 = vunpack.c.l.b16 %v548
    %v1330 = vunpack.c.h.b16 %v548
    %v1331 = vunpack.c.l.b16 %v549
    %v1332 = vunpack.c.h.b16 %v549
    %v1333 = vunpack.c.l.b16 %v550
    %v1334 = vunpack.c.h.b16 %v550
    %v1335 = vunpack.c.l.b16 %v551
    %v1336 = vunpack.c.h.b16 %v551
    %v1337 = vunpack.c.l.b16 %v552
    %v1338 = vunpack.c.h.b16 %v552
    %v1339 = vunpack.c.l.b16 %v553
    %v1340 = vunpack.c.h.b16 %v553
    %v1341 = vunpack.c.l.b16 %v554
    %v1342 = vunpack.c.h.b16 %v554
    %v1343 = vunpack.c.l.b16 %v555
    %v1344 = vunpack.c.h.b16 %v555
    %v1345 = vunpack.c.l.b16 %v556
    %v1346 = vunpack.c.h.b16 %v556
    %v1347 = vunpack.c.l.b16 %v557
    %v1348 = vunpack.c.h.b16 %v557
    %v1349 = vunpack.c.l.b16 %v558
    %v1350 = vunpack.c.h.b16 %v558
    %v1351 = vunpack.c.l.b16 %v559
    %v1352 = vunpack.c.h.b16 %v559
    %v1353 = vunpack.c.l.b16 %v560
    %v1354 = vunpack.c.h.b16 %v560
    %v1355 = vunpack.c.l.b16 %v561
    %v1356 = vunpack.c.h.b16 %v561
    %v1357 = vunpack.c.l.b16 %v562
    %v1358 = vunpack.c.h.b16 %v562
    %v1359 = vunpack.c.l.b16 %v563
    %v1360 = vunpack.c.h.b16 %v563
    %v1361 = vunpack.c.l.b16 %v564
    %v1362 = vunpack.c.h.b16 %v564
    %v1363 = vunpack.c.l.b16 %v565
    %v1364 = vunpack.c.h.b16 %v565
    %v1365 = vunpack.c.l.b16 %v566
    %v1366 = vunpack.c.h.b16 %v566
    %v1367 = vunpack.c.l.b16 %v567
    %v1368 = vunpack.c.h.b16 %v567
    %v1369 = vunpack.c.l.b16 %v568
    %v1370 = vunpack.c.h.b16 %v568
    %v1371 = vunpack.c.l.b16 %v569
    %v1372 = vunpack.c.h.b16 %v569
    %v1373 = vunpack.c.l.b16 %v570
    %v1374 = vunpack.c.h.b16 %v570
    %v1375 = vunpack.c.l.b16 %v571
    %v1376 = vunpack.c.h.b16 %v571
    %v1377 = vunpack.c.l.b16 %v572
    %v1378 = vunpack.c.h.b16 %v572
    %v1379 = vunpack.c.l.b16 %v573
    %v1380 = vunpack.c.h.b16 %v573
    %v1381 = vunpack.c.l.b16 %v574
    %v1382 = vunpack.c.h.b16 %v574
    %v1383 = vunpack.c.l.b16 %v575
    %v1384 = vunpack.c.h.b16 %v575
    %v1385 = vunpack.c.l.b16 %v576
    %v1386 = vunpack.c.h.b16 %v576
    %v1387 = vpack.c.b16 %v883, %v875
    %v1388 = vpack.c.b16 %v884, %v876
    %v1389 = vpack.c.b16 %v885, %v877
    %v1390 = vpack.c.b16 %v886, %v878
    %v1391 = vpack.c.b16 %v887, %v879
    %v1392 = vpack.c.b16 %v888, %v880
    %v1393 = vpack.c.b16 %v889, %v881
    %v1394 = vpack.c.b16 %v890, %v882
    %v1395 = vpack.c.b16 %v899, %v891
    %v1396 = vpack.c.b16 %v900, %v892
    %v1397 = vpack.c.b16 %v901, %v893
    %v1398 = vpack.c.b16 %v902, %v894
    %v1399 = vpack.c.b16 %v903, %v895
    %v1400 = vpack.c.b16 %v904, %v896
    %v1401 = vpack.c.b16 %v905, %v897
    %v1402 = vpack.c.b16 %v906, %v898
    %v1403 = vpack.c.b16 %v915, %v907
    %v1404 = vpack.c.b16 %v916, %v908
    %v1405 = vpack.c.b16 %v917, %v909
    %v1406 = vpack.c.b16 %v918, %v910
    %v1407 = vpack.c.b16 %v919, %v911
    %v1408 = vpack.c.b16 %v920, %v912
    %v1409 = vpack.c.b16 %v921, %v913
    %v1410 = vpack.c.b16 %v922, %v914
    %v1411 = vpack.c.b16 %v931, %v923
    %v1412 = vpack.c.b16 %v932, %v924
    %v1413 = vpack.c.b16 %v933, %v925
    %v1414 = vpack.c.b16 %v934, %v926
    %v1415 = vpack.c.b16 %v935, %v927
    %v1416 = vpack.c.b16 %v936, %v928
    %v1417 = vpack.c.b16 %v937, %v929
    %v1418 = vpack.c.b16 %v938, %v930
    %v1419 = vpack.c.b16 %v947, %v939
    %v1420 = vpack.c.b16 %v948, %v940
    %v1421 = vpack.c.b16 %v949, %v941
    %v1422 = vpack.c.b16 %v950, %v942
    %v1423 = vpack.c.b16 %v951, %v943
    %v1424 = vpack.c.b16 %v952, %v944
    %v1425 = vpack.c.b16 %v953, %v945
    %v1426 = vpack.c.b16 %v954, %v946
    %v1427 = vpack.c.b16 %v963, %v955
    %v1428 = vpack.c.b16 %v964, %v956
    %v1429 = vpack.c.b16 %v965, %v957
    %v1430 = vpack.c.b16 %v966, %v958
    %v1431 = vpack.c.b16 %v967, %v959
    %v1432 = vpack.c.b16 %v968, %v960
    %v1433 = vpack.c.b16 %v969, %v961
    %v1434 = vpack.c.b16 %v970, %v962
    %v1435 = vpack.c.b16 %v979, %v971
    %v1436 = vpack.c.b16 %v980, %v972
    %v1437 = vpack.c.b16 %v981, %v973
    %v1438 = vpack.c.b16 %v982, %v974
    %v1439 = vpack.c.b16 %v983, %v975
    %v1440 = vpack.c.b16 %v984, %v976
    %v1441 = vpack.c.b16 %v985, %v977
    %v1442 = vpack.c.b16 %v986, %v978
    %v1443 = vpack.c.b16 %v995, %v987
    %v1444 = vpack.c.b16 %v996, %v988
    %v1445 = vpack.c.b16 %v997, %v989
    %v1446 = vpack.c.b16 %v998, %v990
    %v1447 = vpack.c.b16 %v999, %v991
    %v1448 = vpack.c.b16 %v1000, %v992
    %v1449 = vpack.c.b16 %v1001, %v993
    %v1450 = vpack.c.b16 %v1002, %v994
    %v1451 = vpack.c.b16 %v1011, %v1003
    %v1452 = vpack.c.b16 %v1012, %v1004
    %v1453 = vpack.c.b16 %v1013, %v1005
    %v1454 = vpack.c.b16 %v1014, %v1006
    %v1455 = vpack.c.b16 %v1015, %v1007
    %v1456 = vpack.c.b16 %v1016, %v1008
    %v1457 = vpack.c.b16 %v1017, %v1009
    %v1458 = vpack.c.b16 %v1018, %v1010
    %v1459 = vpack.c.b16 %v1027, %v1019
    %v1460 = vpack.c.b16 %v1028, %v1020
    %v1461 = vpack.c.b16 %v1029, %v1021
    %v1462 = vpack.c.b16 %v1030, %v1022
    %v1463 = vpack.c.b16 %v1031, %v1023
    %v1464 = vpack.c.b16 %v1032, %v1024
    %v1465 = vpack.c.b16 %v1033, %v1025
    %v1466 = vpack.c.b16 %v1034, %v1026
    %v1467 = vpack.c.b16 %v1043, %v1035
    %v1468 = vpack.c.b16 %v1044, %v1036
    %v1469 = vpack.c.b16 %v1045, %v1037
    %v1470 = vpack.c.b16 %v1046, %v1038
    %v1471 = vpack.c.b16 %v1047, %v1039
    %v1472 = vpack.c.b16 %v1048, %v1040
    %v1473 = vpack.c.b16 %v1049, %v1041
    %v1474 = vpack.c.b16 %v1050, %v1042
    %v1475 = vpack.c.b16 %v1059, %v1051
    %v1476 = vpack.c.b16 %v1060, %v1052
    %v1477 = vpack.c.b16 %v1061, %v1053
    %v1478 = vpack.c.b16 %v1062, %v1054
    %v1479 = vpack.c.b16 %v1063, %v1055
    %v1480 = vpack.c.b16 %v1064, %v1056
    %v1481 = vpack.c.b16 %v1065, %v1057
    %v1482 = vpack.c.b16 %v1066, %v1058
    %v1483 = vpack.c.b16 %v1075, %v1067
    %v1484 = vpack.c.b16 %v1076, %v1068
    %v1485 = vpack.c.b16 %v1077, %v1069
    %v1486 = vpack.c.b16 %v1078, %v1070
    %v1487 = vpack.c.b16 %v1079, %v1071
    %v1488 = vpack.c.b16 %v1080, %v1072
    %v1489 = vpack.c.b16 %v1081, %v1073
    %v1490 = vpack.c.b16 %v1082, %v1074
    %v1491 = vpack.c.b16 %v1091, %v1083
    %v1492 = vpack.c.b16 %v1092, %v1084
    %v1493 = vpack.c.b16 %v1093, %v1085
    %v1494 = vpack.c.b16 %v1094, %v1086
    %v1495 = vpack.c.b16 %v1095, %v1087
    %v1496 = vpack.c.b16 %v1096, %v1088
    %v1497 = vpack.c.b16 %v1097, %v1089
    %v1498 = vpack.c.b16 %v1098, %v1090
    %v1499 = vpack.c.b16 %v1107, %v1099
    %v1500 = vpack.c.b16 %v1108, %v1100
    %v1501 = vpack.c.b16 %v1109, %v1101
    %v1502 = vpack.c.b16 %v1110, %v1102
    %v1503 = vpack.c.b16 %v1111, %v1103
    %v1504 = vpack.c.b16 %v1112, %v1104
    %v1505 = vpack.c.b16 %v1113, %v1105
    %v1506 = vpack.c.b16 %v1114, %v1106
    %v1507 = vpack.c.b16 %v1123, %v1115
    %v1508 = vpack.c.b16 %v1124, %v1116
    %v1509 = vpack.c.b16 %v1125, %v1117
    %v1510 = vpack.c.b16 %v1126, %v1118
    %v1511 = vpack.c.b16 %v1127, %v1119
    %v1512 = vpack.c.b16 %v1128, %v1120
    %v1513 = vpack.c.b16 %v1129, %v1121
    %v1514 = vpack.c.b16 %v1130, %v1122
    %v1515 = vpack.c.b16 %v1139, %v1131
    %v1516 = vpack.c.b16 %v1140, %v1132
    %v1517 = vpack.c.b16 %v1141, %v1133
    %v1518 = vpack.c.b16 %v1142, %v1134
    %v1519 = vpack.c.b16 %v1143, %v1135
    %v1520 = vpack.c.b16 %v1144, %v1136
    %v1521 = vpack.c.b16 %v1145, %v1137
    %v1522 = vpack.c.b16 %v1146, %v1138
    %v1523 = vpack.c.b16 %v1155, %v1147
    %v1524 = vpack.c.b16 %v1156, %v1148
    %v1525 = vpack.c.b16 %v1157, %v1149
    %v1526 = vpack.c.b16 %v1158, %v1150
    %v1527 = vpack.c.b16 %v1159, %v1151
    %v1528 = vpack.c.b16 %v1160, %v1152
    %v1529 = vpack.c.b16 %v1161, %v1153
    %v1530 = vpack.c.b16 %v1162, %v1154
    %v1531 = vpack.c.b16 %v1171, %v1163
    %v1532 = vpack.c.b16 %v1172, %v1164
    %v1533 = vpack.c.b16 %v1173, %v1165
    %v1534 = vpack.c.b16 %v1174, %v1166
    %v1535 = vpack.c.b16 %v1175, %v1167
    %v1536 = vpack.c.b16 %v1176, %v1168
    %v1537 = vpack.c.b16 %v1177, %v1169
    %v1538 = vpack.c.b16 %v1178, %v1170
    %v1539 = vpack.c.b16 %v1187, %v1179
    %v1540 = vpack.c.b16 %v1188, %v1180
    %v1541 = vpack.c.b16 %v1189, %v1181
    %v1542 = vpack.c.b16 %v1190, %v1182
    %v1543 = vpack.c.b16 %v1191, %v1183
    %v1544 = vpack.c.b16 %v1192, %v1184
    %v1545 = vpack.c.b16 %v1193, %v1185
    %v1546 = vpack.c.b16 %v1194, %v1186
    %v1547 = vpack.c.b16 %v1203, %v1195
    %v1548 = vpack.c.b16 %v1204, %v1196
    %v1549 = vpack.c.b16 %v1205, %v1197
    %v1550 = vpack.c.b16 %v1206, %v1198
    %v1551 = vpack.c.b16 %v1207, %v1199
    %v1552 = vpack.c.b16 %v1208, %v1200
    %v1553 = vpack.c.b16 %v1209, %v1201
    %v1554 = vpack.c.b16 %v1210, %v1202
    %v1555 = vpack.c.b16 %v1219, %v1211
    %v1556 = vpack.c.b16 %v1220, %v1212
    %v1557 = vpack.c.b16 %v1221, %v1213
    %v1558 = vpack.c.b16 %v1222, %v1214
    %v1559 = vpack.c.b16 %v1223, %v1215
    %v1560 = vpack.c.b16 %v1224, %v1216
    %v1561 = vpack.c.b16 %v1225, %v1217
    %v1562 = vpack.c.b16 %v1226, %v1218
    %v1563 = vpack.c.b16 %v1235, %v1227
    %v1564 = vpack.c.b16 %v1236, %v1228
    %v1565 = vpack.c.b16 %v1237, %v1229
    %v1566 = vpack.c.b16 %v1238, %v1230
    %v1567 = vpack.c.b16 %v1239, %v1231
    %v1568 = vpack.c.b16 %v1240, %v1232
    %v1569 = vpack.c.b16 %v1241, %v1233
    %v1570 = vpack.c.b16 %v1242, %v1234
    %v1571 = vpack.c.b16 %v1251, %v1243
    %v1572 = vpack.c.b16 %v1252, %v1244
    %v1573 = vpack.c.b16 %v1253, %v1245
    %v1574 = vpack.c.b16 %v1254, %v1246
    %v1575 = vpack.c.b16 %v1255, %v1247
    %v1576 = vpack.c.b16 %v1256, %v1248
    %v1577 = vpack.c.b16 %v1257, %v1249
    %v1578 = vpack.c.b16 %v1258, %v1250
    %v1579 = vpack.c.b16 %v1267, %v1259
    %v1580 = vpack.c.b16 %v1268, %v1260
    %v1581 = vpack.c.b16 %v1269, %v1261
    %v1582 = vpack.c.b16 %v1270, %v1262
    %v1583 = vpack.c.b16 %v1271, %v1263
    %v1584 = vpack.c.b16 %v1272, %v1264
    %v1585 = vpack.c.b16 %v1273, %v1265
    %v1586 = vpack.c.b16 %v1274, %v1266
    %v1587 = vpack.c.b16 %v1283, %v1275
    %v1588 = vpack.c.b16 %v1284, %v1276
    %v1589 = vpack.c.b16 %v1285, %v1277
    %v1590 = vpack.c.b16 %v1286, %v1278
    %v1591 = vpack.c.b16 %v1287, %v1279
    %v1592 = vpack.c.b16 %v1288, %v1280
    %v1593 = vpack.c.b16 %v1289, %v1281
    %v1594 = vpack.c.b16 %v1290, %v1282
    %v1595 = vpack.c.b16 %v1299, %v1291
    %v1596 = vpack.c.b16 %v1300, %v1292
    %v1597 = vpack.c.b16 %v1301, %v1293
    %v1598 = vpack.c.b16 %v1302, %v1294
    %v1599 = vpack.c.b16 %v1303, %v1295
    %v1600 = vpack.c.b16 %v1304, %v1296
    %v1601 = vpack.c.b16 %v1305, %v1297
    %v1602 = vpack.c.b16 %v1306, %v1298
    %v1603 = vpack.c.b16 %v1315, %v1307
    %v1604 = vpack.c.b16 %v1316, %v1308
    %v1605 = vpack.c.b16 %v1317, %v1309
    %v1606 = vpack.c.b16 %v1318, %v1310
    %v1607 = vpack.c.b16 %v1319, %v1311
    %v1608 = vpack.c.b16 %v1320, %v1312
    %v1609 = vpack.c.b16 %v1321, %v1313
    %v1610 = vpack.c.b16 %v1322, %v1314
    %v1611 = vpack.c.b16 %v1331, %v1323
    %v1612 = vpack.c.b16 %v1332, %v1324
    %v1613 = vpack.c.b16 %v1333, %v1325
    %v1614 = vpack.c.b16 %v1334, %v1326
    %v1615 = vpack.c.b16 %v1335, %v1327
    %v1616 = vpack.c.b16 %v1336, %v1328
    %v1617 = vpack.c.b16 %v1337, %v1329
    %v1618 = vpack.c.b16 %v1338, %v1330
    %v1619 = vpack.c.b16 %v1347, %v1339
    %v1620 = vpack.c.b16 %v1348, %v1340
    %v1621 = vpack.c.b16 %v1349, %v1341
    %v1622 = vpack.c.b16 %v1350, %v1342
    %v1623 = vpack.c.b16 %v1351, %v1343
    %v1624 = vpack.c.b16 %v1352, %v1344
    %v1625 = vpack.c.b16 %v1353, %v1345
    %v1626 = vpack.c.b16 %v1354, %v1346
    %v1627 = vpack.c.b16 %v1363, %v1355
    %v1628 = vpack.c.b16 %v1364, %v1356
    %v1629 = vpack.c.b16 %v1365, %v1357
    %v1630 = vpack.c.b16 %v1366, %v1358
    %v1631 = vpack.c.b16 %v1367, %v1359
    %v1632 = vpack.c.b16 %v1368, %v1360
    %v1633 = vpack.c.b16 %v1369, %v1361
    %v1634 = vpack.c.b16 %v1370, %v1362
    %v1635 = vpack.c.b16 %v1379, %v1371
    %v1636 = vpack.c.b16 %v1380, %v1372
    %v1637 = vpack.c.b16 %v1381, %v1373
    %v1638 = vpack.c.b16 %v1382, %v1374
    %v1639 = vpack.c.b16 %v1383, %v1375
    %v1640 = vpack.c.b16 %v1384, %v1376
    %v1641 = vpack.c.b16 %v1385, %v1377
    %v1642 = vpack.c.b16 %v1386, %v1378
    %1899 = vmatprep.subr.bf16.mxu0 %v1388
    %1900 = vmatpush1.bf16.msra.mxu0 %v1387
    %1901 = vmatprep.subr.bf16.mxu0 %v1396
    %1902 = vmatpush1.bf16.msra.mxu0 %v1395
    %1903 = vmatprep.subr.bf16.mxu0 %v1404
    %1904 = vmatpush1.bf16.msra.mxu0 %v1403
    %1905 = vmatprep.subr.bf16.mxu0 %v1412
    %1906 = vmatpush1.bf16.msra.mxu0 %v1411
    %1907 = vmatprep.subr.bf16.mxu0 %v1420
    %1908 = vmatpush1.bf16.msra.mxu0 %v1419
    %1909 = vmatprep.subr.bf16.mxu0 %v1428
    %1910 = vmatpush1.bf16.msra.mxu0 %v1427
    %1911 = vmatprep.subr.bf16.mxu0 %v1436
    %1912 = vmatpush1.bf16.msra.mxu0 %v1435
    %1913 = vmatprep.subr.bf16.mxu0 %v1444
    %1914 = vmatpush1.bf16.msra.mxu0 %v1443
    %1915 = vmatprep.subr.bf16.mxu0 %v1452
    %1916 = vmatpush1.bf16.msra.mxu0 %v1451
    %1917 = vmatprep.subr.bf16.mxu0 %v1460
    %1918 = vmatpush1.bf16.msra.mxu0 %v1459
    %1919 = vmatprep.subr.bf16.mxu0 %v1468
    %1920 = vmatpush1.bf16.msra.mxu0 %v1467
    %1921 = vmatprep.subr.bf16.mxu0 %v1476
    %1922 = vmatpush1.bf16.msra.mxu0 %v1475
    %1923 = vmatprep.subr.bf16.mxu0 %v1484
    %1924 = vmatpush1.bf16.msra.mxu0 %v1483
    %1925 = vmatprep.subr.bf16.mxu0 %v1492
    %1926 = vmatpush1.bf16.msra.mxu0 %v1491
    %1927 = vmatprep.subr.bf16.mxu0 %v1500
    %1928 = vmatpush1.bf16.msra.mxu0 %v1499
    %1929 = vmatprep.subr.bf16.mxu0 %v1508
    %1930 = vmatpush1.bf16.msra.mxu0 %v1507
    %1931 = vmatprep.mubr.bf16.mxu0 %v318
    %1932 = vmatmul.mubr.bf16.gmra.mrb[0].mxu0 %v317
    %v1933 = vpop.f32.mrb[0].mxu0
    %v1934 = vadd.f32 %v582, %v1933
    %v1935 = vpop.f32.mrb[0].mxu0
    %v1936 = vadd.f32 %v586, %v1935
    %v1937 = vpop.f32.mrb[0].mxu0
    %v1938 = vpop.f32.mrb[0].mxu0
    %1939 = vdwg.mxu0
    %1940 = vmatprep.subr.bf16.mxu0 %v1516
    %1941 = vmatpush1.bf16.msra.mxu0 %v1515
    %1942 = vmatprep.subr.bf16.mxu0 %v1524
    %1943 = vmatpush1.bf16.msra.mxu0 %v1523
    %1944 = vmatprep.subr.bf16.mxu0 %v1532
    %1945 = vmatpush1.bf16.msra.mxu0 %v1531
    %1946 = vmatprep.subr.bf16.mxu0 %v1540
    %1947 = vmatpush1.bf16.msra.mxu0 %v1539
    %1948 = vmatprep.subr.bf16.mxu0 %v1548
    %1949 = vmatpush1.bf16.msra.mxu0 %v1547
    %1950 = vmatprep.subr.bf16.mxu0 %v1556
    %1951 = vmatpush1.bf16.msra.mxu0 %v1555
    %1952 = vmatprep.subr.bf16.mxu0 %v1564
    %1953 = vmatpush1.bf16.msra.mxu0 %v1563
    %1954 = vmatprep.subr.bf16.mxu0 %v1572
    %1955 = vmatpush1.bf16.msra.mxu0 %v1571
    %1956 = vmatprep.subr.bf16.mxu0 %v1580
    %1957 = vmatpush1.bf16.msra.mxu0 %v1579
    %1958 = vmatprep.subr.bf16.mxu0 %v1588
    %1959 = vmatpush1.bf16.msra.mxu0 %v1587
    %1960 = vmatprep.subr.bf16.mxu0 %v1596
    %1961 = vmatpush1.bf16.msra.mxu0 %v1595
    %1962 = vmatprep.subr.bf16.mxu0 %v1604
    %1963 = vmatpush1.bf16.msra.mxu0 %v1603
    %1964 = vmatprep.subr.bf16.mxu0 %v1612
    %1965 = vmatpush1.bf16.msra.mxu0 %v1611
    %1966 = vmatprep.subr.bf16.mxu0 %v1620
    %1967 = vmatpush1.bf16.msra.mxu0 %v1619
    %1968 = vmatprep.subr.bf16.mxu0 %v1628
    %1969 = vmatpush1.bf16.msra.mxu0 %v1627
    %1970 = vmatprep.subr.bf16.mxu0 %v1636
    %1971 = vmatpush1.bf16.msra.mxu0 %v1635
    %1972 = vmatprep.mubr.bf16.mxu0 %v320
    %1973 = vmatmul.mubr.bf16.gmra.mrb[0].mxu0 %v319
    %v1974 = vpop.f32.mrb[0].mxu0
    %v1975 = vadd.f32 %v1934, %v1974
    %v1976 = vpop.f32.mrb[0].mxu0
    %v1977 = vadd.f32 %v1936, %v1976
    %v1978 = vpop.f32.mrb[0].mxu0
    %v1979 = vpop.f32.mrb[0].mxu0
    %1980 = vdwg.mxu0
    %1981 = vmatprep.subr.bf16.mxu0 %v1390
    %1982 = vmatpush1.bf16.msra.mxu0 %v1389
    %1983 = vmatprep.subr.bf16.mxu0 %v1398
    %1984 = vmatpush1.bf16.msra.mxu0 %v1397
    %1985 = vmatprep.subr.bf16.mxu0 %v1406
    %1986 = vmatpush1.bf16.msra.mxu0 %v1405
    %1987 = vmatprep.subr.bf16.mxu0 %v1414
    %1988 = vmatpush1.bf16.msra.mxu0 %v1413
    %1989 = vmatprep.subr.bf16.mxu0 %v1422
    %1990 = vmatpush1.bf16.msra.mxu0 %v1421
    %1991 = vmatprep.subr.bf16.mxu0 %v1430
    %1992 = vmatpush1.bf16.msra.mxu0 %v1429
    %1993 = vmatprep.subr.bf16.mxu0 %v1438
    %1994 = vmatpush1.bf16.msra.mxu0 %v1437
    %1995 = vmatprep.subr.bf16.mxu0 %v1446
    %1996 = vmatpush1.bf16.msra.mxu0 %v1445
    %1997 = vmatprep.subr.bf16.mxu0 %v1454
    %1998 = vmatpush1.bf16.msra.mxu0 %v1453
    %1999 = vmatprep.subr.bf16.mxu0 %v1462
    %2000 = vmatpush1.bf16.msra.mxu0 %v1461
    %2001 = vmatprep.subr.bf16.mxu0 %v1470
    %2002 = vmatpush1.bf16.msra.mxu0 %v1469
    %2003 = vmatprep.subr.bf16.mxu0 %v1478
    %2004 = vmatpush1.bf16.msra.mxu0 %v1477
    %2005 = vmatprep.subr.bf16.mxu0 %v1486
    %2006 = vmatpush1.bf16.msra.mxu0 %v1485
    %2007 = vmatprep.subr.bf16.mxu0 %v1494
    %2008 = vmatpush1.bf16.msra.mxu0 %v1493
    %2009 = vmatprep.subr.bf16.mxu0 %v1502
    %2010 = vmatpush1.bf16.msra.mxu0 %v1501
    %2011 = vmatprep.subr.bf16.mxu0 %v1510
    %2012 = vmatpush1.bf16.msra.mxu0 %v1509
    %2013 = vmatprep.mubr.bf16.mxu0 %v318
    %2014 = vmatmul.mubr.bf16.gmra.mrb[0].mxu0 %v317
    %v2015 = vpop.f32.mrb[0].mxu0
    %v2016 = vadd.f32 %v590, %v2015
    %v2017 = vpop.f32.mrb[0].mxu0
    %v2018 = vadd.f32 %v594, %v2017
    %v2019 = vpop.f32.mrb[0].mxu0
    %v2020 = vpop.f32.mrb[0].mxu0
    %2021 = vdwg.mxu0
    %2022 = vmatprep.subr.bf16.mxu0 %v1518
    %2023 = vmatpush1.bf16.msra.mxu0 %v1517
    %2024 = vmatprep.subr.bf16.mxu0 %v1526
    %2025 = vmatpush1.bf16.msra.mxu0 %v1525
    %2026 = vmatprep.subr.bf16.mxu0 %v1534
    %2027 = vmatpush1.bf16.msra.mxu0 %v1533
    %2028 = vmatprep.subr.bf16.mxu0 %v1542
    %2029 = vmatpush1.bf16.msra.mxu0 %v1541
    %2030 = vmatprep.subr.bf16.mxu0 %v1550
    %2031 = vmatpush1.bf16.msra.mxu0 %v1549
    %2032 = vmatprep.subr.bf16.mxu0 %v1558
    %2033 = vmatpush1.bf16.msra.mxu0 %v1557
    %2034 = vmatprep.subr.bf16.mxu0 %v1566
    %2035 = vmatpush1.bf16.msra.mxu0 %v1565
    %2036 = vmatprep.subr.bf16.mxu0 %v1574
    %2037 = vmatpush1.bf16.msra.mxu0 %v1573
    %2038 = vmatprep.subr.bf16.mxu0 %v1582
    %2039 = vmatpush1.bf16.msra.mxu0 %v1581
    %2040 = vmatprep.subr.bf16.mxu0 %v1590
    %2041 = vmatpush1.bf16.msra.mxu0 %v1589
    %2042 = vmatprep.subr.bf16.mxu0 %v1598
    %2043 = vmatpush1.bf16.msra.mxu0 %v1597
    %2044 = vmatprep.subr.bf16.mxu0 %v1606
    %2045 = vmatpush1.bf16.msra.mxu0 %v1605
    %2046 = vmatprep.subr.bf16.mxu0 %v1614
    %2047 = vmatpush1.bf16.msra.mxu0 %v1613
    %2048 = vmatprep.subr.bf16.mxu0 %v1622
    %2049 = vmatpush1.bf16.msra.mxu0 %v1621
    %2050 = vmatprep.subr.bf16.mxu0 %v1630
    %2051 = vmatpush1.bf16.msra.mxu0 %v1629
    %2052 = vmatprep.subr.bf16.mxu0 %v1638
    %2053 = vmatpush1.bf16.msra.mxu0 %v1637
    %2054 = vmatprep.mubr.bf16.mxu0 %v320
    %2055 = vmatmul.mubr.bf16.gmra.mrb[0].mxu0 %v319
    %v2056 = vpop.f32.mrb[0].mxu0
    %v2057 = vadd.f32 %v2016, %v2056
    %v2058 = vpop.f32.mrb[0].mxu0
    %v2059 = vadd.f32 %v2018, %v2058
    %v2060 = vpop.f32.mrb[0].mxu0
    %v2061 = vpop.f32.mrb[0].mxu0
    %2062 = vdwg.mxu0
    %2063 = vmatprep.subr.bf16.mxu0 %v1392
    %2064 = vmatpush1.bf16.msra.mxu0 %v1391
    %2065 = vmatprep.subr.bf16.mxu0 %v1400
    %2066 = vmatpush1.bf16.msra.mxu0 %v1399
    %2067 = vmatprep.subr.bf16.mxu0 %v1408
    %2068 = vmatpush1.bf16.msra.mxu0 %v1407
    %2069 = vmatprep.subr.bf16.mxu0 %v1416
    %2070 = vmatpush1.bf16.msra.mxu0 %v1415
    %2071 = vmatprep.subr.bf16.mxu0 %v1424
    %2072 = vmatpush1.bf16.msra.mxu0 %v1423
    %2073 = vmatprep.subr.bf16.mxu0 %v1432
    %2074 = vmatpush1.bf16.msra.mxu0 %v1431
    %2075 = vmatprep.subr.bf16.mxu0 %v1440
    %2076 = vmatpush1.bf16.msra.mxu0 %v1439
    %2077 = vmatprep.subr.bf16.mxu0 %v1448
    %2078 = vmatpush1.bf16.msra.mxu0 %v1447
    %2079 = vmatprep.subr.bf16.mxu0 %v1456
    %2080 = vmatpush1.bf16.msra.mxu0 %v1455
    %2081 = vmatprep.subr.bf16.mxu0 %v1464
    %2082 = vmatpush1.bf16.msra.mxu0 %v1463
    %2083 = vmatprep.subr.bf16.mxu0 %v1472
    %2084 = vmatpush1.bf16.msra.mxu0 %v1471
    %2085 = vmatprep.subr.bf16.mxu0 %v1480
    %2086 = vmatpush1.bf16.msra.mxu0 %v1479
    %2087 = vmatprep.subr.bf16.mxu0 %v1488
    %2088 = vmatpush1.bf16.msra.mxu0 %v1487
    %2089 = vmatprep.subr.bf16.mxu0 %v1496
    %2090 = vmatpush1.bf16.msra.mxu0 %v1495
    %2091 = vmatprep.subr.bf16.mxu0 %v1504
    %2092 = vmatpush1.bf16.msra.mxu0 %v1503
    %2093 = vmatprep.subr.bf16.mxu0 %v1512
    %2094 = vmatpush1.bf16.msra.mxu0 %v1511
    %2095 = vmatprep.mubr.bf16.mxu0 %v318
    %2096 = vmatmul.mubr.bf16.gmra.mrb[0].mxu0 %v317
    %v2097 = vpop.f32.mrb[0].mxu0
    %v2098 = vadd.f32 %v598, %v2097
    %v2099 = vpop.f32.mrb[0].mxu0
    %v2100 = vadd.f32 %v602, %v2099
    %v2101 = vpop.f32.mrb[0].mxu0
    %v2102 = vpop.f32.mrb[0].mxu0
    %2103 = vdwg.mxu0
    %2104 = vmatprep.subr.bf16.mxu0 %v1520
    %2105 = vmatpush1.bf16.msra.mxu0 %v1519
    %2106 = vmatprep.subr.bf16.mxu0 %v1528
    %2107 = vmatpush1.bf16.msra.mxu0 %v1527
    %2108 = vmatprep.subr.bf16.mxu0 %v1536
    %2109 = vmatpush1.bf16.msra.mxu0 %v1535
    %2110 = vmatprep.subr.bf16.mxu0 %v1544
    %2111 = vmatpush1.bf16.msra.mxu0 %v1543
    %2112 = vmatprep.subr.bf16.mxu0 %v1552
    %2113 = vmatpush1.bf16.msra.mxu0 %v1551
    %2114 = vmatprep.subr.bf16.mxu0 %v1560
    %2115 = vmatpush1.bf16.msra.mxu0 %v1559
    %2116 = vmatprep.subr.bf16.mxu0 %v1568
    %2117 = vmatpush1.bf16.msra.mxu0 %v1567
    %2118 = vmatprep.subr.bf16.mxu0 %v1576
    %2119 = vmatpush1.bf16.msra.mxu0 %v1575
    %2120 = vmatprep.subr.bf16.mxu0 %v1584
    %2121 = vmatpush1.bf16.msra.mxu0 %v1583
    %2122 = vmatprep.subr.bf16.mxu0 %v1592
    %2123 = vmatpush1.bf16.msra.mxu0 %v1591
    %2124 = vmatprep.subr.bf16.mxu0 %v1600
    %2125 = vmatpush1.bf16.msra.mxu0 %v1599
    %2126 = vmatprep.subr.bf16.mxu0 %v1608
    %2127 = vmatpush1.bf16.msra.mxu0 %v1607
    %2128 = vmatprep.subr.bf16.mxu0 %v1616
    %2129 = vmatpush1.bf16.msra.mxu0 %v1615
    %2130 = vmatprep.subr.bf16.mxu0 %v1624
    %2131 = vmatpush1.bf16.msra.mxu0 %v1623
    %2132 = vmatprep.subr.bf16.mxu0 %v1632
    %2133 = vmatpush1.bf16.msra.mxu0 %v1631
    %2134 = vmatprep.subr.bf16.mxu0 %v1640
    %2135 = vmatpush1.bf16.msra.mxu0 %v1639
    %2136 = vmatprep.mubr.bf16.mxu0 %v320
    %2137 = vmatmul.mubr.bf16.gmra.mrb[0].mxu0 %v319
    %v2138 = vpop.f32.mrb[0].mxu0
    %v2139 = vadd.f32 %v2098, %v2138
    %v2140 = vpop.f32.mrb[0].mxu0
    %v2141 = vadd.f32 %v2100, %v2140
    %v2142 = vpop.f32.mrb[0].mxu0
    %v2143 = vpop.f32.mrb[0].mxu0
    %2144 = vdwg.mxu0
    %2145 = vmatprep.subr.bf16.mxu0 %v1394
    %2146 = vmatpush1.bf16.msra.mxu0 %v1393
    %2147 = vmatprep.subr.bf16.mxu0 %v1402
    %2148 = vmatpush1.bf16.msra.mxu0 %v1401
    %2149 = vmatprep.subr.bf16.mxu0 %v1410
    %2150 = vmatpush1.bf16.msra.mxu0 %v1409
    %2151 = vmatprep.subr.bf16.mxu0 %v1418
    %2152 = vmatpush1.bf16.msra.mxu0 %v1417
    %2153 = vmatprep.subr.bf16.mxu0 %v1426
    %2154 = vmatpush1.bf16.msra.mxu0 %v1425
    %2155 = vmatprep.subr.bf16.mxu0 %v1434
    %2156 = vmatpush1.bf16.msra.mxu0 %v1433
    %2157 = vmatprep.subr.bf16.mxu0 %v1442
    %2158 = vmatpush1.bf16.msra.mxu0 %v1441
    %2159 = vmatprep.subr.bf16.mxu0 %v1450
    %2160 = vmatpush1.bf16.msra.mxu0 %v1449
    %2161 = vmatprep.subr.bf16.mxu0 %v1458
    %2162 = vmatpush1.bf16.msra.mxu0 %v1457
    %2163 = vmatprep.subr.bf16.mxu0 %v1466
    %2164 = vmatpush1.bf16.msra.mxu0 %v1465
    %2165 = vmatprep.subr.bf16.mxu0 %v1474
    %2166 = vmatpush1.bf16.msra.mxu0 %v1473
    %2167 = vmatprep.subr.bf16.mxu0 %v1482
    %2168 = vmatpush1.bf16.msra.mxu0 %v1481
    %2169 = vmatprep.subr.bf16.mxu0 %v1490
    %2170 = vmatpush1.bf16.msra.mxu0 %v1489
    %2171 = vmatprep.subr.bf16.mxu0 %v1498
    %2172 = vmatpush1.bf16.msra.mxu0 %v1497
    %2173 = vmatprep.subr.bf16.mxu0 %v1506
    %2174 = vmatpush1.bf16.msra.mxu0 %v1505
    %2175 = vmatprep.subr.bf16.mxu0 %v1514
    %2176 = vmatpush1.bf16.msra.mxu0 %v1513
    %2177 = vmatprep.mubr.bf16.mxu0 %v318
    %2178 = vmatmul.mubr.bf16.gmra.mrb[0].mxu0 %v317
    %v2179 = vpop.f32.mrb[0].mxu0
    %v2180 = vadd.f32 %v606, %v2179
    %v2181 = vpop.f32.mrb[0].mxu0
    %v2182 = vadd.f32 %v610, %v2181
    %v2183 = vpop.f32.mrb[0].mxu0
    %v2184 = vpop.f32.mrb[0].mxu0
    %2185 = vdwg.mxu0
    %2186 = vmatprep.subr.bf16.mxu0 %v1522
    %2187 = vmatpush1.bf16.msra.mxu0 %v1521
    %2188 = vmatprep.subr.bf16.mxu0 %v1530
    %2189 = vmatpush1.bf16.msra.mxu0 %v1529
    %2190 = vmatprep.subr.bf16.mxu0 %v1538
    %2191 = vmatpush1.bf16.msra.mxu0 %v1537
    %2192 = vmatprep.subr.bf16.mxu0 %v1546
    %2193 = vmatpush1.bf16.msra.mxu0 %v1545
    %2194 = vmatprep.subr.bf16.mxu0 %v1554
    %2195 = vmatpush1.bf16.msra.mxu0 %v1553
    %2196 = vmatprep.subr.bf16.mxu0 %v1562
    %2197 = vmatpush1.bf16.msra.mxu0 %v1561
    %2198 = vmatprep.subr.bf16.mxu0 %v1570
    %2199 = vmatpush1.bf16.msra.mxu0 %v1569
    %2200 = vmatprep.subr.bf16.mxu0 %v1578
    %2201 = vmatpush1.bf16.msra.mxu0 %v1577
    %2202 = vmatprep.subr.bf16.mxu0 %v1586
    %2203 = vmatpush1.bf16.msra.mxu0 %v1585
    %2204 = vmatprep.subr.bf16.mxu0 %v1594
    %2205 = vmatpush1.bf16.msra.mxu0 %v1593
    %2206 = vmatprep.subr.bf16.mxu0 %v1602
    %2207 = vmatpush1.bf16.msra.mxu0 %v1601
    %2208 = vmatprep.subr.bf16.mxu0 %v1610
    %2209 = vmatpush1.bf16.msra.mxu0 %v1609
    %2210 = vmatprep.subr.bf16.mxu0 %v1618
    %2211 = vmatpush1.bf16.msra.mxu0 %v1617
    %2212 = vmatprep.subr.bf16.mxu0 %v1626
    %2213 = vmatpush1.bf16.msra.mxu0 %v1625
    %2214 = vmatprep.subr.bf16.mxu0 %v1634
    %2215 = vmatpush1.bf16.msra.mxu0 %v1633
    %2216 = vmatprep.subr.bf16.mxu0 %v1642
    %2217 = vmatpush1.bf16.msra.mxu0 %v1641
    %2218 = vmatprep.mubr.bf16.mxu0 %v320
    %2219 = vmatmul.mubr.bf16.gmra.mrb[0].mxu0 %v319
    %v2220 = vpop.f32.mrb[0].mxu0
    %v2221 = vadd.f32 %v2180, %v2220
    %v2222 = vpop.f32.mrb[0].mxu0
    %v2223 = vadd.f32 %v2182, %v2222
    %v2224 = vpop.f32.mrb[0].mxu0
    %v2225 = vpop.f32.mrb[0].mxu0
    %2226 = vdwg.mxu0
    %v2227 = vmax.f32 %v1975, 0.0
    %v2228 = vmax.f32 %v1977, 0.0
    %v2229 = vmax.f32 %v2057, 0.0
    %v2230 = vmax.f32 %v2059, 0.0
    %v2231 = vmax.f32 %v2139, 0.0
    %v2232 = vmax.f32 %v2141, 0.0
    %v2233 = vmax.f32 %v2221, 0.0
    %v2234 = vmax.f32 %v2223, 0.0
    %v2235 = vpack.c.bf16 %v2227, %v2227
    %v2236 = vpack.c.bf16 %v2228, %v2228
    %v2237 = vpack.c.bf16 %v2229, %v2229
    %v2238 = vpack.c.bf16 %v2230, %v2230
    %v2239 = vpack.c.bf16 %v2231, %v2231
    %v2240 = vpack.c.bf16 %v2232, %v2232
    %v2241 = vpack.c.bf16 %v2233, %v2233
    %v2242 = vpack.c.bf16 %v2234, %v2234
    %v2243 = vld [vmem:[%s5] sm:$0xf]
    %v2244 = vld [vmem:[%s5 + $0x4] sm:$0xf]
    %v2245 = vld [vmem:[%s5 + $0x8] sm:$0xf]
    %v2246 = vld [vmem:[%s5 + $0xc] sm:$0xf]
    %v2247 = vld [vmem:[%s5 + $0x10] sm:$0xf]
    %v2248 = vld [vmem:[%s5 + $0x14] sm:$0xf]
    %v2249 = vld [vmem:[%s5 + $0x18] sm:$0xf]
    %v2250 = vld [vmem:[%s5 + $0x1c] sm:$0xf]
    %v2251 = vld [vmem:[%s5 + $0x20] sm:$0xf]
    %v2252 = vld [vmem:[%s5 + $0x24] sm:$0xf]
    %v2253 = vld [vmem:[%s5 + $0x28] sm:$0xf]
    %v2254 = vld [vmem:[%s5 + $0x2c] sm:$0xf]
    %v2255 = vld [vmem:[%s5 + $0x30] sm:$0xf]
    %v2256 = vld [vmem:[%s5 + $0x34] sm:$0xf]
    %v2257 = vld [vmem:[%s5 + $0x38] sm:$0xf]
    %v2258 = vld [vmem:[%s5 + $0x3c] sm:$0xf]
    %v2259 = vld [vmem:[%s5 + $0x40] sm:$0xf]
    %v2260 = vld [vmem:[%s5 + $0x44] sm:$0xf]
    %v2261 = vld [vmem:[%s5 + $0x48] sm:$0xf]
    %v2262 = vld [vmem:[%s5 + $0x4c] sm:$0xf]
    %v2263 = vld [vmem:[%s5 + $0x50] sm:$0xf]
    %v2264 = vld [vmem:[%s5 + $0x54] sm:$0xf]
    %v2265 = vld [vmem:[%s5 + $0x58] sm:$0xf]
    %v2266 = vld [vmem:[%s5 + $0x5c] sm:$0xf]
    %v2267 = vld [vmem:[%s5 + $0x60] sm:$0xf]
    %v2268 = vld [vmem:[%s5 + $0x64] sm:$0xf]
    %v2269 = vld [vmem:[%s5 + $0x68] sm:$0xf]
    %v2270 = vld [vmem:[%s5 + $0x6c] sm:$0xf]
    %v2271 = vld [vmem:[%s5 + $0x70] sm:$0xf]
    %v2272 = vld [vmem:[%s5 + $0x74] sm:$0xf]
    %v2273 = vld [vmem:[%s5 + $0x78] sm:$0xf]
    %v2274 = vld [vmem:[%s5 + $0x7c] sm:$0xf]
    %v2307 = vunpack.c.l.b16 %v2243
    %v2308 = vunpack.c.l.b16 %v2244
    %v2309 = vunpack.c.l.b16 %v2245
    %v2310 = vunpack.c.l.b16 %v2246
    %v2311 = vunpack.c.l.b16 %v2247
    %v2312 = vunpack.c.l.b16 %v2248
    %v2313 = vunpack.c.l.b16 %v2249
    %v2314 = vunpack.c.l.b16 %v2250
    %v2315 = vunpack.c.l.b16 %v2251
    %v2316 = vunpack.c.l.b16 %v2252
    %v2317 = vunpack.c.l.b16 %v2253
    %v2318 = vunpack.c.l.b16 %v2254
    %v2319 = vunpack.c.l.b16 %v2255
    %v2320 = vunpack.c.l.b16 %v2256
    %v2321 = vunpack.c.l.b16 %v2257
    %v2322 = vunpack.c.l.b16 %v2258
    %v2323 = vunpack.c.l.b16 %v2259
    %v2324 = vunpack.c.l.b16 %v2260
    %v2325 = vunpack.c.l.b16 %v2261
    %v2326 = vunpack.c.l.b16 %v2262
    %v2327 = vunpack.c.l.b16 %v2263
    %v2328 = vunpack.c.l.b16 %v2264
    %v2329 = vunpack.c.l.b16 %v2265
    %v2330 = vunpack.c.l.b16 %v2266
    %v2331 = vunpack.c.l.b16 %v2267
    %v2332 = vunpack.c.l.b16 %v2268
    %v2333 = vunpack.c.l.b16 %v2269
    %v2334 = vunpack.c.l.b16 %v2270
    %v2335 = vunpack.c.l.b16 %v2271
    %v2336 = vunpack.c.l.b16 %v2272
    %v2337 = vunpack.c.l.b16 %v2273
    %v2338 = vunpack.c.l.b16 %v2274
    %v2339 = vpack.c.b16 %v2308, %v2307
    %v2340 = vpack.c.b16 %v2310, %v2309
    %v2341 = vpack.c.b16 %v2312, %v2311
    %v2342 = vpack.c.b16 %v2314, %v2313
    %v2343 = vpack.c.b16 %v2316, %v2315
    %v2344 = vpack.c.b16 %v2318, %v2317
    %v2345 = vpack.c.b16 %v2320, %v2319
    %v2346 = vpack.c.b16 %v2322, %v2321
    %v2347 = vpack.c.b16 %v2324, %v2323
    %v2348 = vpack.c.b16 %v2326, %v2325
    %v2349 = vpack.c.b16 %v2328, %v2327
    %v2350 = vpack.c.b16 %v2330, %v2329
    %v2351 = vpack.c.b16 %v2332, %v2331
    %v2352 = vpack.c.b16 %v2334, %v2333
    %v2353 = vpack.c.b16 %v2336, %v2335
    %v2354 = vpack.c.b16 %v2338, %v2337
    %2371 = vmatprep.subr.bf16.mxu0 0
    %2372 = vmatpush1.bf16.msra.mxu0 %v2339
    %2373 = vmatprep.subr.bf16.mxu0 0
    %2374 = vmatpush1.bf16.msra.mxu0 %v2340
    %2375 = vmatprep.subr.bf16.mxu0 0
    %2376 = vmatpush1.bf16.msra.mxu0 %v2341
    %2377 = vmatprep.subr.bf16.mxu0 0
    %2378 = vmatpush1.bf16.msra.mxu0 %v2342
    %2379 = vmatprep.subr.bf16.mxu0 0
    %2380 = vmatpush1.bf16.msra.mxu0 %v2343
    %2381 = vmatprep.subr.bf16.mxu0 0
    %2382 = vmatpush1.bf16.msra.mxu0 %v2344
    %2383 = vmatprep.subr.bf16.mxu0 0
    %2384 = vmatpush1.bf16.msra.mxu0 %v2345
    %2385 = vmatprep.subr.bf16.mxu0 0
    %2386 = vmatpush1.bf16.msra.mxu0 %v2346
    %2387 = vmatprep.subr.bf16.mxu0 0
    %2388 = vmatpush1.bf16.msra.mxu0 %v2347
    %2389 = vmatprep.subr.bf16.mxu0 0
    %2390 = vmatpush1.bf16.msra.mxu0 %v2348
    %2391 = vmatprep.subr.bf16.mxu0 0
    %2392 = vmatpush1.bf16.msra.mxu0 %v2349
    %2393 = vmatprep.subr.bf16.mxu0 0
    %2394 = vmatpush1.bf16.msra.mxu0 %v2350
    %2395 = vmatprep.subr.bf16.mxu0 0
    %2396 = vmatpush1.bf16.msra.mxu0 %v2351
    %2397 = vmatprep.subr.bf16.mxu0 0
    %2398 = vmatpush1.bf16.msra.mxu0 %v2352
    %2399 = vmatprep.subr.bf16.mxu0 0
    %2400 = vmatpush1.bf16.msra.mxu0 %v2353
    %2401 = vmatprep.subr.bf16.mxu0 0
    %2402 = vmatpush1.bf16.msra.mxu0 %v2354
    %2403 = vmatprep.mubr.bf16.mxu0 %v2236
    %2404 = vmatmul.mubr.bf16.gmra.mrb[0].mxu0 %v2235
    %v2405 = vpop.f32.mrb[0].mxu0
    %v2406 = vadd.f32 0.0, %v2405
    %v2407 = vpop.f32.mrb[0].mxu0
    %v2408 = vpop.f32.mrb[0].mxu0
    %v2409 = vpop.f32.mrb[0].mxu0
    %2410 = vdwg.mxu0
    %s2411 = scalar_lea.vmem %s5, 128
    %v2412 = vld [vmem:[%s2411] sm:$0xf]
    %v2413 = vld [vmem:[%s2411 + $0x4] sm:$0xf]
    %v2414 = vld [vmem:[%s2411 + $0x8] sm:$0xf]
    %v2415 = vld [vmem:[%s2411 + $0xc] sm:$0xf]
    %v2416 = vld [vmem:[%s2411 + $0x10] sm:$0xf]
    %v2417 = vld [vmem:[%s2411 + $0x14] sm:$0xf]
    %v2418 = vld [vmem:[%s2411 + $0x18] sm:$0xf]
    %v2419 = vld [vmem:[%s2411 + $0x1c] sm:$0xf]
    %v2420 = vld [vmem:[%s2411 + $0x20] sm:$0xf]
    %v2421 = vld [vmem:[%s2411 + $0x24] sm:$0xf]
    %v2422 = vld [vmem:[%s2411 + $0x28] sm:$0xf]
    %v2423 = vld [vmem:[%s2411 + $0x2c] sm:$0xf]
    %v2424 = vld [vmem:[%s2411 + $0x30] sm:$0xf]
    %v2425 = vld [vmem:[%s2411 + $0x34] sm:$0xf]
    %v2426 = vld [vmem:[%s2411 + $0x38] sm:$0xf]
    %v2427 = vld [vmem:[%s2411 + $0x3c] sm:$0xf]
    %v2428 = vld [vmem:[%s2411 + $0x40] sm:$0xf]
    %v2429 = vld [vmem:[%s2411 + $0x44] sm:$0xf]
    %v2430 = vld [vmem:[%s2411 + $0x48] sm:$0xf]
    %v2431 = vld [vmem:[%s2411 + $0x4c] sm:$0xf]
    %v2432 = vld [vmem:[%s2411 + $0x50] sm:$0xf]
    %v2433 = vld [vmem:[%s2411 + $0x54] sm:$0xf]
    %v2434 = vld [vmem:[%s2411 + $0x58] sm:$0xf]
    %v2435 = vld [vmem:[%s2411 + $0x5c] sm:$0xf]
    %v2436 = vld [vmem:[%s2411 + $0x60] sm:$0xf]
    %v2437 = vld [vmem:[%s2411 + $0x64] sm:$0xf]
    %v2438 = vld [vmem:[%s2411 + $0x68] sm:$0xf]
    %v2439 = vld [vmem:[%s2411 + $0x6c] sm:$0xf]
    %v2440 = vld [vmem:[%s2411 + $0x70] sm:$0xf]
    %v2441 = vld [vmem:[%s2411 + $0x74] sm:$0xf]
    %v2442 = vld [vmem:[%s2411 + $0x78] sm:$0xf]
    %v2443 = vld [vmem:[%s2411 + $0x7c] sm:$0xf]
    %v2476 = vunpack.c.l.b16 %v2412
    %v2477 = vunpack.c.l.b16 %v2413
    %v2478 = vunpack.c.l.b16 %v2414
    %v2479 = vunpack.c.l.b16 %v2415
    %v2480 = vunpack.c.l.b16 %v2416
    %v2481 = vunpack.c.l.b16 %v2417
    %v2482 = vunpack.c.l.b16 %v2418
    %v2483 = vunpack.c.l.b16 %v2419
    %v2484 = vunpack.c.l.b16 %v2420
    %v2485 = vunpack.c.l.b16 %v2421
    %v2486 = vunpack.c.l.b16 %v2422
    %v2487 = vunpack.c.l.b16 %v2423
    %v2488 = vunpack.c.l.b16 %v2424
    %v2489 = vunpack.c.l.b16 %v2425
    %v2490 = vunpack.c.l.b16 %v2426
    %v2491 = vunpack.c.l.b16 %v2427
    %v2492 = vunpack.c.l.b16 %v2428
    %v2493 = vunpack.c.l.b16 %v2429
    %v2494 = vunpack.c.l.b16 %v2430
    %v2495 = vunpack.c.l.b16 %v2431
    %v2496 = vunpack.c.l.b16 %v2432
    %v2497 = vunpack.c.l.b16 %v2433
    %v2498 = vunpack.c.l.b16 %v2434
    %v2499 = vunpack.c.l.b16 %v2435
    %v2500 = vunpack.c.l.b16 %v2436
    %v2501 = vunpack.c.l.b16 %v2437
    %v2502 = vunpack.c.l.b16 %v2438
    %v2503 = vunpack.c.l.b16 %v2439
    %v2504 = vunpack.c.l.b16 %v2440
    %v2505 = vunpack.c.l.b16 %v2441
    %v2506 = vunpack.c.l.b16 %v2442
    %v2507 = vunpack.c.l.b16 %v2443
    %v2508 = vpack.c.b16 %v2477, %v2476
    %v2509 = vpack.c.b16 %v2479, %v2478
    %v2510 = vpack.c.b16 %v2481, %v2480
    %v2511 = vpack.c.b16 %v2483, %v2482
    %v2512 = vpack.c.b16 %v2485, %v2484
    %v2513 = vpack.c.b16 %v2487, %v2486
    %v2514 = vpack.c.b16 %v2489, %v2488
    %v2515 = vpack.c.b16 %v2491, %v2490
    %v2516 = vpack.c.b16 %v2493, %v2492
    %v2517 = vpack.c.b16 %v2495, %v2494
    %v2518 = vpack.c.b16 %v2497, %v2496
    %v2519 = vpack.c.b16 %v2499, %v2498
    %v2520 = vpack.c.b16 %v2501, %v2500
    %v2521 = vpack.c.b16 %v2503, %v2502
    %v2522 = vpack.c.b16 %v2505, %v2504
    %v2523 = vpack.c.b16 %v2507, %v2506
    %2540 = vmatprep.subr.bf16.mxu0 0
    %2541 = vmatpush1.bf16.msra.mxu0 %v2508
    %2542 = vmatprep.subr.bf16.mxu0 0
    %2543 = vmatpush1.bf16.msra.mxu0 %v2509
    %2544 = vmatprep.subr.bf16.mxu0 0
    %2545 = vmatpush1.bf16.msra.mxu0 %v2510
    %2546 = vmatprep.subr.bf16.mxu0 0
    %2547 = vmatpush1.bf16.msra.mxu0 %v2511
    %2548 = vmatprep.subr.bf16.mxu0 0
    %2549 = vmatpush1.bf16.msra.mxu0 %v2512
    %2550 = vmatprep.subr.bf16.mxu0 0
    %2551 = vmatpush1.bf16.msra.mxu0 %v2513
    %2552 = vmatprep.subr.bf16.mxu0 0
    %2553 = vmatpush1.bf16.msra.mxu0 %v2514
    %2554 = vmatprep.subr.bf16.mxu0 0
    %2555 = vmatpush1.bf16.msra.mxu0 %v2515
    %2556 = vmatprep.subr.bf16.mxu0 0
    %2557 = vmatpush1.bf16.msra.mxu0 %v2516
    %2558 = vmatprep.subr.bf16.mxu0 0
    %2559 = vmatpush1.bf16.msra.mxu0 %v2517
    %2560 = vmatprep.subr.bf16.mxu0 0
    %2561 = vmatpush1.bf16.msra.mxu0 %v2518
    %2562 = vmatprep.subr.bf16.mxu0 0
    %2563 = vmatpush1.bf16.msra.mxu0 %v2519
    %2564 = vmatprep.subr.bf16.mxu0 0
    %2565 = vmatpush1.bf16.msra.mxu0 %v2520
    %2566 = vmatprep.subr.bf16.mxu0 0
    %2567 = vmatpush1.bf16.msra.mxu0 %v2521
    %2568 = vmatprep.subr.bf16.mxu0 0
    %2569 = vmatpush1.bf16.msra.mxu0 %v2522
    %2570 = vmatprep.subr.bf16.mxu0 0
    %2571 = vmatpush1.bf16.msra.mxu0 %v2523
    %2572 = vmatprep.mubr.bf16.mxu0 %v2238
    %2573 = vmatmul.mubr.bf16.gmra.mrb[0].mxu0 %v2237
    %v2574 = vpop.f32.mrb[0].mxu0
    %v2575 = vadd.f32 0.0, %v2574
    %v2576 = vpop.f32.mrb[0].mxu0
    %v2577 = vpop.f32.mrb[0].mxu0
    %v2578 = vpop.f32.mrb[0].mxu0
    %2579 = vdwg.mxu0
    %s2580 = scalar_lea.vmem %s5, 256
    %v2581 = vld [vmem:[%s2580] sm:$0xf]
    %v2582 = vld [vmem:[%s2580 + $0x4] sm:$0xf]
    %v2583 = vld [vmem:[%s2580 + $0x8] sm:$0xf]
    %v2584 = vld [vmem:[%s2580 + $0xc] sm:$0xf]
    %v2585 = vld [vmem:[%s2580 + $0x10] sm:$0xf]
    %v2586 = vld [vmem:[%s2580 + $0x14] sm:$0xf]
    %v2587 = vld [vmem:[%s2580 + $0x18] sm:$0xf]
    %v2588 = vld [vmem:[%s2580 + $0x1c] sm:$0xf]
    %v2589 = vld [vmem:[%s2580 + $0x20] sm:$0xf]
    %v2590 = vld [vmem:[%s2580 + $0x24] sm:$0xf]
    %v2591 = vld [vmem:[%s2580 + $0x28] sm:$0xf]
    %v2592 = vld [vmem:[%s2580 + $0x2c] sm:$0xf]
    %v2593 = vld [vmem:[%s2580 + $0x30] sm:$0xf]
    %v2594 = vld [vmem:[%s2580 + $0x34] sm:$0xf]
    %v2595 = vld [vmem:[%s2580 + $0x38] sm:$0xf]
    %v2596 = vld [vmem:[%s2580 + $0x3c] sm:$0xf]
    %v2597 = vld [vmem:[%s2580 + $0x40] sm:$0xf]
    %v2598 = vld [vmem:[%s2580 + $0x44] sm:$0xf]
    %v2599 = vld [vmem:[%s2580 + $0x48] sm:$0xf]
    %v2600 = vld [vmem:[%s2580 + $0x4c] sm:$0xf]
    %v2601 = vld [vmem:[%s2580 + $0x50] sm:$0xf]
    %v2602 = vld [vmem:[%s2580 + $0x54] sm:$0xf]
    %v2603 = vld [vmem:[%s2580 + $0x58] sm:$0xf]
    %v2604 = vld [vmem:[%s2580 + $0x5c] sm:$0xf]
    %v2605 = vld [vmem:[%s2580 + $0x60] sm:$0xf]
    %v2606 = vld [vmem:[%s2580 + $0x64] sm:$0xf]
    %v2607 = vld [vmem:[%s2580 + $0x68] sm:$0xf]
    %v2608 = vld [vmem:[%s2580 + $0x6c] sm:$0xf]
    %v2609 = vld [vmem:[%s2580 + $0x70] sm:$0xf]
    %v2610 = vld [vmem:[%s2580 + $0x74] sm:$0xf]
    %v2611 = vld [vmem:[%s2580 + $0x78] sm:$0xf]
    %v2612 = vld [vmem:[%s2580 + $0x7c] sm:$0xf]
    %v2645 = vunpack.c.l.b16 %v2581
    %v2646 = vunpack.c.l.b16 %v2582
    %v2647 = vunpack.c.l.b16 %v2583
    %v2648 = vunpack.c.l.b16 %v2584
    %v2649 = vunpack.c.l.b16 %v2585
    %v2650 = vunpack.c.l.b16 %v2586
    %v2651 = vunpack.c.l.b16 %v2587
    %v2652 = vunpack.c.l.b16 %v2588
    %v2653 = vunpack.c.l.b16 %v2589
    %v2654 = vunpack.c.l.b16 %v2590
    %v2655 = vunpack.c.l.b16 %v2591
    %v2656 = vunpack.c.l.b16 %v2592
    %v2657 = vunpack.c.l.b16 %v2593
    %v2658 = vunpack.c.l.b16 %v2594
    %v2659 = vunpack.c.l.b16 %v2595
    %v2660 = vunpack.c.l.b16 %v2596
    %v2661 = vunpack.c.l.b16 %v2597
    %v2662 = vunpack.c.l.b16 %v2598
    %v2663 = vunpack.c.l.b16 %v2599
    %v2664 = vunpack.c.l.b16 %v2600
    %v2665 = vunpack.c.l.b16 %v2601
    %v2666 = vunpack.c.l.b16 %v2602
    %v2667 = vunpack.c.l.b16 %v2603
    %v2668 = vunpack.c.l.b16 %v2604
    %v2669 = vunpack.c.l.b16 %v2605
    %v2670 = vunpack.c.l.b16 %v2606
    %v2671 = vunpack.c.l.b16 %v2607
    %v2672 = vunpack.c.l.b16 %v2608
    %v2673 = vunpack.c.l.b16 %v2609
    %v2674 = vunpack.c.l.b16 %v2610
    %v2675 = vunpack.c.l.b16 %v2611
    %v2676 = vunpack.c.l.b16 %v2612
    %v2677 = vpack.c.b16 %v2646, %v2645
    %v2678 = vpack.c.b16 %v2648, %v2647
    %v2679 = vpack.c.b16 %v2650, %v2649
    %v2680 = vpack.c.b16 %v2652, %v2651
    %v2681 = vpack.c.b16 %v2654, %v2653
    %v2682 = vpack.c.b16 %v2656, %v2655
    %v2683 = vpack.c.b16 %v2658, %v2657
    %v2684 = vpack.c.b16 %v2660, %v2659
    %v2685 = vpack.c.b16 %v2662, %v2661
    %v2686 = vpack.c.b16 %v2664, %v2663
    %v2687 = vpack.c.b16 %v2666, %v2665
    %v2688 = vpack.c.b16 %v2668, %v2667
    %v2689 = vpack.c.b16 %v2670, %v2669
    %v2690 = vpack.c.b16 %v2672, %v2671
    %v2691 = vpack.c.b16 %v2674, %v2673
    %v2692 = vpack.c.b16 %v2676, %v2675
    %2709 = vmatprep.subr.bf16.mxu0 0
    %2710 = vmatpush1.bf16.msra.mxu0 %v2677
    %2711 = vmatprep.subr.bf16.mxu0 0
    %2712 = vmatpush1.bf16.msra.mxu0 %v2678
    %2713 = vmatprep.subr.bf16.mxu0 0
    %2714 = vmatpush1.bf16.msra.mxu0 %v2679
    %2715 = vmatprep.subr.bf16.mxu0 0
    %2716 = vmatpush1.bf16.msra.mxu0 %v2680
    %2717 = vmatprep.subr.bf16.mxu0 0
    %2718 = vmatpush1.bf16.msra.mxu0 %v2681
    %2719 = vmatprep.subr.bf16.mxu0 0
    %2720 = vmatpush1.bf16.msra.mxu0 %v2682
    %2721 = vmatprep.subr.bf16.mxu0 0
    %2722 = vmatpush1.bf16.msra.mxu0 %v2683
    %2723 = vmatprep.subr.bf16.mxu0 0
    %2724 = vmatpush1.bf16.msra.mxu0 %v2684
    %2725 = vmatprep.subr.bf16.mxu0 0
    %2726 = vmatpush1.bf16.msra.mxu0 %v2685
    %2727 = vmatprep.subr.bf16.mxu0 0
    %2728 = vmatpush1.bf16.msra.mxu0 %v2686
    %2729 = vmatprep.subr.bf16.mxu0 0
    %2730 = vmatpush1.bf16.msra.mxu0 %v2687
    %2731 = vmatprep.subr.bf16.mxu0 0
    %2732 = vmatpush1.bf16.msra.mxu0 %v2688
    %2733 = vmatprep.subr.bf16.mxu0 0
    %2734 = vmatpush1.bf16.msra.mxu0 %v2689
    %2735 = vmatprep.subr.bf16.mxu0 0
    %2736 = vmatpush1.bf16.msra.mxu0 %v2690
    %2737 = vmatprep.subr.bf16.mxu0 0
    %2738 = vmatpush1.bf16.msra.mxu0 %v2691
    %2739 = vmatprep.subr.bf16.mxu0 0
    %2740 = vmatpush1.bf16.msra.mxu0 %v2692
    %2741 = vmatprep.mubr.bf16.mxu0 %v2240
    %2742 = vmatmul.mubr.bf16.gmra.mrb[0].mxu0 %v2239
    %v2743 = vpop.f32.mrb[0].mxu0
    %v2744 = vadd.f32 0.0, %v2743
    %v2745 = vpop.f32.mrb[0].mxu0
    %v2746 = vpop.f32.mrb[0].mxu0
    %v2747 = vpop.f32.mrb[0].mxu0
    %2748 = vdwg.mxu0
    %s2749 = scalar_lea.vmem %s5, 384
    %v2750 = vld [vmem:[%s2749] sm:$0xf]
    %v2751 = vld [vmem:[%s2749 + $0x4] sm:$0xf]
    %v2752 = vld [vmem:[%s2749 + $0x8] sm:$0xf]
    %v2753 = vld [vmem:[%s2749 + $0xc] sm:$0xf]
    %v2754 = vld [vmem:[%s2749 + $0x10] sm:$0xf]
    %v2755 = vld [vmem:[%s2749 + $0x14] sm:$0xf]
    %v2756 = vld [vmem:[%s2749 + $0x18] sm:$0xf]
    %v2757 = vld [vmem:[%s2749 + $0x1c] sm:$0xf]
    %v2758 = vld [vmem:[%s2749 + $0x20] sm:$0xf]
    %v2759 = vld [vmem:[%s2749 + $0x24] sm:$0xf]
    %v2760 = vld [vmem:[%s2749 + $0x28] sm:$0xf]
    %v2761 = vld [vmem:[%s2749 + $0x2c] sm:$0xf]
    %v2762 = vld [vmem:[%s2749 + $0x30] sm:$0xf]
    %v2763 = vld [vmem:[%s2749 + $0x34] sm:$0xf]
    %v2764 = vld [vmem:[%s2749 + $0x38] sm:$0xf]
    %v2765 = vld [vmem:[%s2749 + $0x3c] sm:$0xf]
    %v2766 = vld [vmem:[%s2749 + $0x40] sm:$0xf]
    %v2767 = vld [vmem:[%s2749 + $0x44] sm:$0xf]
    %v2768 = vld [vmem:[%s2749 + $0x48] sm:$0xf]
    %v2769 = vld [vmem:[%s2749 + $0x4c] sm:$0xf]
    %v2770 = vld [vmem:[%s2749 + $0x50] sm:$0xf]
    %v2771 = vld [vmem:[%s2749 + $0x54] sm:$0xf]
    %v2772 = vld [vmem:[%s2749 + $0x58] sm:$0xf]
    %v2773 = vld [vmem:[%s2749 + $0x5c] sm:$0xf]
    %v2774 = vld [vmem:[%s2749 + $0x60] sm:$0xf]
    %v2775 = vld [vmem:[%s2749 + $0x64] sm:$0xf]
    %v2776 = vld [vmem:[%s2749 + $0x68] sm:$0xf]
    %v2777 = vld [vmem:[%s2749 + $0x6c] sm:$0xf]
    %v2778 = vld [vmem:[%s2749 + $0x70] sm:$0xf]
    %v2779 = vld [vmem:[%s2749 + $0x74] sm:$0xf]
    %v2780 = vld [vmem:[%s2749 + $0x78] sm:$0xf]
    %v2781 = vld [vmem:[%s2749 + $0x7c] sm:$0xf]
    %v2814 = vunpack.c.l.b16 %v2750
    %v2815 = vunpack.c.l.b16 %v2751
    %v2816 = vunpack.c.l.b16 %v2752
    %v2817 = vunpack.c.l.b16 %v2753
    %v2818 = vunpack.c.l.b16 %v2754
    %v2819 = vunpack.c.l.b16 %v2755
    %v2820 = vunpack.c.l.b16 %v2756
    %v2821 = vunpack.c.l.b16 %v2757
    %v2822 = vunpack.c.l.b16 %v2758
    %v2823 = vunpack.c.l.b16 %v2759
    %v2824 = vunpack.c.l.b16 %v2760
    %v2825 = vunpack.c.l.b16 %v2761
    %v2826 = vunpack.c.l.b16 %v2762
    %v2827 = vunpack.c.l.b16 %v2763
    %v2828 = vunpack.c.l.b16 %v2764
    %v2829 = vunpack.c.l.b16 %v2765
    %v2830 = vunpack.c.l.b16 %v2766
    %v2831 = vunpack.c.l.b16 %v2767
    %v2832 = vunpack.c.l.b16 %v2768
    %v2833 = vunpack.c.l.b16 %v2769
    %v2834 = vunpack.c.l.b16 %v2770
    %v2835 = vunpack.c.l.b16 %v2771
    %v2836 = vunpack.c.l.b16 %v2772
    %v2837 = vunpack.c.l.b16 %v2773
    %v2838 = vunpack.c.l.b16 %v2774
    %v2839 = vunpack.c.l.b16 %v2775
    %v2840 = vunpack.c.l.b16 %v2776
    %v2841 = vunpack.c.l.b16 %v2777
    %v2842 = vunpack.c.l.b16 %v2778
    %v2843 = vunpack.c.l.b16 %v2779
    %v2844 = vunpack.c.l.b16 %v2780
    %v2845 = vunpack.c.l.b16 %v2781
    %v2846 = vpack.c.b16 %v2815, %v2814
    %v2847 = vpack.c.b16 %v2817, %v2816
    %v2848 = vpack.c.b16 %v2819, %v2818
    %v2849 = vpack.c.b16 %v2821, %v2820
    %v2850 = vpack.c.b16 %v2823, %v2822
    %v2851 = vpack.c.b16 %v2825, %v2824
    %v2852 = vpack.c.b16 %v2827, %v2826
    %v2853 = vpack.c.b16 %v2829, %v2828
    %v2854 = vpack.c.b16 %v2831, %v2830
    %v2855 = vpack.c.b16 %v2833, %v2832
    %v2856 = vpack.c.b16 %v2835, %v2834
    %v2857 = vpack.c.b16 %v2837, %v2836
    %v2858 = vpack.c.b16 %v2839, %v2838
    %v2859 = vpack.c.b16 %v2841, %v2840
    %v2860 = vpack.c.b16 %v2843, %v2842
    %v2861 = vpack.c.b16 %v2845, %v2844
    %2878 = vmatprep.subr.bf16.mxu0 0
    %2879 = vmatpush1.bf16.msra.mxu0 %v2846
    %2880 = vmatprep.subr.bf16.mxu0 0
    %2881 = vmatpush1.bf16.msra.mxu0 %v2847
    %2882 = vmatprep.subr.bf16.mxu0 0
    %2883 = vmatpush1.bf16.msra.mxu0 %v2848
    %2884 = vmatprep.subr.bf16.mxu0 0
    %2885 = vmatpush1.bf16.msra.mxu0 %v2849
    %2886 = vmatprep.subr.bf16.mxu0 0
    %2887 = vmatpush1.bf16.msra.mxu0 %v2850
    %2888 = vmatprep.subr.bf16.mxu0 0
    %2889 = vmatpush1.bf16.msra.mxu0 %v2851
    %2890 = vmatprep.subr.bf16.mxu0 0
    %2891 = vmatpush1.bf16.msra.mxu0 %v2852
    %2892 = vmatprep.subr.bf16.mxu0 0
    %2893 = vmatpush1.bf16.msra.mxu0 %v2853
    %2894 = vmatprep.subr.bf16.mxu0 0
    %2895 = vmatpush1.bf16.msra.mxu0 %v2854
    %2896 = vmatprep.subr.bf16.mxu0 0
    %2897 = vmatpush1.bf16.msra.mxu0 %v2855
    %2898 = vmatprep.subr.bf16.mxu0 0
    %2899 = vmatpush1.bf16.msra.mxu0 %v2856
    %2900 = vmatprep.subr.bf16.mxu0 0
    %2901 = vmatpush1.bf16.msra.mxu0 %v2857
    %2902 = vmatprep.subr.bf16.mxu0 0
    %2903 = vmatpush1.bf16.msra.mxu0 %v2858
    %2904 = vmatprep.subr.bf16.mxu0 0
    %2905 = vmatpush1.bf16.msra.mxu0 %v2859
    %2906 = vmatprep.subr.bf16.mxu0 0
    %2907 = vmatpush1.bf16.msra.mxu0 %v2860
    %2908 = vmatprep.subr.bf16.mxu0 0
    %2909 = vmatpush1.bf16.msra.mxu0 %v2861
    %2910 = vmatprep.mubr.bf16.mxu0 %v2242
    %2911 = vmatmul.mubr.bf16.gmra.mrb[0].mxu0 %v2241
    %v2912 = vpop.f32.mrb[0].mxu0
    %v2913 = vadd.f32 0.0, %v2912
    %v2914 = vpop.f32.mrb[0].mxu0
    %v2915 = vpop.f32.mrb[0].mxu0
    %v2916 = vpop.f32.mrb[0].mxu0
    %2917 = vdwg.mxu0
    %v2918 = vld [vmem:[%s6] sm:$0xf]
    %v2920 = vlaneseq
    %v2921 = vshrl.u32 %v2920, 7
    %v2922 = vsub.s32 0, %v2921
    %v2923 = vrot.slane %v2918, %v2922
    %v2924 = vlaneseq
    %v2925 = vshrl.u32 %v2924, 7
    %v2926 = vsub.s32 1, %v2925
    %v2927 = vrot.slane %v2918, %v2926
    %v2928 = vlaneseq
    %v2929 = vshrl.u32 %v2928, 7
    %v2930 = vsub.s32 2, %v2929
    %v2931 = vrot.slane %v2918, %v2930
    %v2932 = vlaneseq
    %v2933 = vshrl.u32 %v2932, 7
    %v2934 = vsub.s32 3, %v2933
    %v2935 = vrot.slane %v2918, %v2934
    %v2940 = vadd.f32 %v2406, %v2923
    %v2941 = vadd.f32 %v2575, %v2927
    %v2942 = vadd.f32 %v2744, %v2931
    %v2943 = vadd.f32 %v2913, %v2935
    %v2944 = vmax.f32 %v2940, 0.0
    %v2945 = vmax.f32 %v2941, 0.0
    %v2946 = vmax.f32 %v2942, 0.0
    %v2947 = vmax.f32 %v2943, 0.0
    %v2948 = vpack.c.bf16 %v2944, %v2944
    %v2949 = vpack.c.bf16 %v2945, %v2945
    %v2950 = vpack.c.bf16 %v2946, %v2946
    %v2951 = vpack.c.bf16 %v2947, %v2947
    %v2952 = vld [vmem:[#allocation5] sm:$0xff]
    %v2953 = vld [vmem:[#allocation5 + $0x8] sm:$0xff]
    %v2954 = vld [vmem:[#allocation5 + $0x10] sm:$0xff]
    %v2955 = vld [vmem:[#allocation5 + $0x18] sm:$0xff]
    %v2956 = vld [vmem:[#allocation5 + $0x20] sm:$0xff]
    %v2957 = vld [vmem:[#allocation5 + $0x28] sm:$0xff]
    %v2958 = vld [vmem:[#allocation5 + $0x30] sm:$0xff]
    %v2959 = vld [vmem:[#allocation5 + $0x38] sm:$0xff]
    %v2960 = vld [vmem:[#allocation5 + $0x40] sm:$0xff]
    %v2961 = vld [vmem:[#allocation5 + $0x48] sm:$0xff]
    %v2962 = vld [vmem:[#allocation5 + $0x50] sm:$0xff]
    %v2963 = vld [vmem:[#allocation5 + $0x58] sm:$0xff]
    %v2964 = vld [vmem:[#allocation5 + $0x60] sm:$0xff]
    %v2965 = vld [vmem:[#allocation5 + $0x68] sm:$0xff]
    %v2966 = vld [vmem:[#allocation5 + $0x70] sm:$0xff]
    %v2967 = vld [vmem:[#allocation5 + $0x78] sm:$0xff]
    %v2968 = vld [vmem:[#allocation5 + $0x80] sm:$0xff]
    %v2969 = vld [vmem:[#allocation5 + $0x88] sm:$0xff]
    %v2970 = vld [vmem:[#allocation5 + $0x90] sm:$0xff]
    %v2971 = vld [vmem:[#allocation5 + $0x98] sm:$0xff]
    %v2972 = vld [vmem:[#allocation5 + $0xa0] sm:$0xff]
    %v2973 = vld [vmem:[#allocation5 + $0xa8] sm:$0xff]
    %v2974 = vld [vmem:[#allocation5 + $0xb0] sm:$0xff]
    %v2975 = vld [vmem:[#allocation5 + $0xb8] sm:$0xff]
    %v2976 = vld [vmem:[#allocation5 + $0xc0] sm:$0xff]
    %v2977 = vld [vmem:[#allocation5 + $0xc8] sm:$0xff]
    %v2978 = vld [vmem:[#allocation5 + $0xd0] sm:$0xff]
    %v2979 = vld [vmem:[#allocation5 + $0xd8] sm:$0xff]
    %v2980 = vld [vmem:[#allocation5 + $0xe0] sm:$0xff]
    %v2981 = vld [vmem:[#allocation5 + $0xe8] sm:$0xff]
    %v2982 = vld [vmem:[#allocation5 + $0xf0] sm:$0xff]
    %v2983 = vld [vmem:[#allocation5 + $0xf8] sm:$0xff]
    %v2984 = vld [vmem:[#allocation5 + $0x100] sm:$0xff]
    %v2985 = vld [vmem:[#allocation5 + $0x108] sm:$0xff]
    %v2986 = vld [vmem:[#allocation5 + $0x110] sm:$0xff]
    %v2987 = vld [vmem:[#allocation5 + $0x118] sm:$0xff]
    %v2988 = vld [vmem:[#allocation5 + $0x120] sm:$0xff]
    %v2989 = vld [vmem:[#allocation5 + $0x128] sm:$0xff]
    %v2990 = vld [vmem:[#allocation5 + $0x130] sm:$0xff]
    %v2991 = vld [vmem:[#allocation5 + $0x138] sm:$0xff]
    %v2992 = vld [vmem:[#allocation5 + $0x140] sm:$0xff]
    %v2993 = vld [vmem:[#allocation5 + $0x148] sm:$0xff]
    %v2994 = vld [vmem:[#allocation5 + $0x150] sm:$0xff]
    %v2995 = vld [vmem:[#allocation5 + $0x158] sm:$0xff]
    %v2996 = vld [vmem:[#allocation5 + $0x160] sm:$0xff]
    %v2997 = vld [vmem:[#allocation5 + $0x168] sm:$0xff]
    %v2998 = vld [vmem:[#allocation5 + $0x170] sm:$0xff]
    %v2999 = vld [vmem:[#allocation5 + $0x178] sm:$0xff]
    %v3000 = vld [vmem:[#allocation5 + $0x180] sm:$0xff]
    %v3001 = vld [vmem:[#allocation5 + $0x188] sm:$0xff]
    %v3002 = vld [vmem:[#allocation5 + $0x190] sm:$0xff]
    %v3003 = vld [vmem:[#allocation5 + $0x198] sm:$0xff]
    %v3004 = vld [vmem:[#allocation5 + $0x1a0] sm:$0xff]
    %v3005 = vld [vmem:[#allocation5 + $0x1a8] sm:$0xff]
    %v3006 = vld [vmem:[#allocation5 + $0x1b0] sm:$0xff]
    %v3007 = vld [vmem:[#allocation5 + $0x1b8] sm:$0xff]
    %v3008 = vld [vmem:[#allocation5 + $0x1c0] sm:$0xff]
    %v3009 = vld [vmem:[#allocation5 + $0x1c8] sm:$0xff]
    %v3010 = vld [vmem:[#allocation5 + $0x1d0] sm:$0xff]
    %v3011 = vld [vmem:[#allocation5 + $0x1d8] sm:$0xff]
    %v3012 = vld [vmem:[#allocation5 + $0x1e0] sm:$0xff]
    %v3013 = vld [vmem:[#allocation5 + $0x1e8] sm:$0xff]
    %v3014 = vld [vmem:[#allocation5 + $0x1f0] sm:$0xff]
    %v3015 = vld [vmem:[#allocation5 + $0x1f8] sm:$0xff]
    %v3016 = vld [vmem:[%s8] sm:$0x3]
    %v3018 = vlaneseq
    %v3019 = vshrl.u32 %v3018, 7
    %v3020 = vsub.s32 0, %v3019
    %v3021 = vrot.slane %v3016, %v3020
    %v3022 = vlaneseq
    %v3023 = vshrl.u32 %v3022, 7
    %v3024 = vsub.s32 1, %v3023
    %v3025 = vrot.slane %v3016, %v3024
    %v3092 = vunpack.c.l.b16 %v2952
    %v3093 = vunpack.c.h.b16 %v2952
    %v3094 = vunpack.c.l.b16 %v2953
    %v3095 = vunpack.c.h.b16 %v2953
    %v3096 = vunpack.c.l.b16 %v2954
    %v3097 = vunpack.c.h.b16 %v2954
    %v3098 = vunpack.c.l.b16 %v2955
    %v3099 = vunpack.c.h.b16 %v2955
    %v3100 = vunpack.c.l.b16 %v2956
    %v3101 = vunpack.c.h.b16 %v2956
    %v3102 = vunpack.c.l.b16 %v2957
    %v3103 = vunpack.c.h.b16 %v2957
    %v3104 = vunpack.c.l.b16 %v2958
    %v3105 = vunpack.c.h.b16 %v2958
    %v3106 = vunpack.c.l.b16 %v2959
    %v3107 = vunpack.c.h.b16 %v2959
    %v3108 = vunpack.c.l.b16 %v2960
    %v3109 = vunpack.c.h.b16 %v2960
    %v3110 = vunpack.c.l.b16 %v2961
    %v3111 = vunpack.c.h.b16 %v2961
    %v3112 = vunpack.c.l.b16 %v2962
    %v3113 = vunpack.c.h.b16 %v2962
    %v3114 = vunpack.c.l.b16 %v2963
    %v3115 = vunpack.c.h.b16 %v2963
    %v3116 = vunpack.c.l.b16 %v2964
    %v3117 = vunpack.c.h.b16 %v2964
    %v3118 = vunpack.c.l.b16 %v2965
    %v3119 = vunpack.c.h.b16 %v2965
    %v3120 = vunpack.c.l.b16 %v2966
    %v3121 = vunpack.c.h.b16 %v2966
    %v3122 = vunpack.c.l.b16 %v2967
    %v3123 = vunpack.c.h.b16 %v2967
    %v3124 = vunpack.c.l.b16 %v2968
    %v3125 = vunpack.c.h.b16 %v2968
    %v3126 = vunpack.c.l.b16 %v2969
    %v3127 = vunpack.c.h.b16 %v2969
    %v3128 = vunpack.c.l.b16 %v2970
    %v3129 = vunpack.c.h.b16 %v2970
    %v3130 = vunpack.c.l.b16 %v2971
    %v3131 = vunpack.c.h.b16 %v2971
    %v3132 = vunpack.c.l.b16 %v2972
    %v3133 = vunpack.c.h.b16 %v2972
    %v3134 = vunpack.c.l.b16 %v2973
    %v3135 = vunpack.c.h.b16 %v2973
    %v3136 = vunpack.c.l.b16 %v2974
    %v3137 = vunpack.c.h.b16 %v2974
    %v3138 = vunpack.c.l.b16 %v2975
    %v3139 = vunpack.c.h.b16 %v2975
    %v3140 = vunpack.c.l.b16 %v2976
    %v3141 = vunpack.c.h.b16 %v2976
    %v3142 = vunpack.c.l.b16 %v2977
    %v3143 = vunpack.c.h.b16 %v2977
    %v3144 = vunpack.c.l.b16 %v2978
    %v3145 = vunpack.c.h.b16 %v2978
    %v3146 = vunpack.c.l.b16 %v2979
    %v3147 = vunpack.c.h.b16 %v2979
    %v3148 = vunpack.c.l.b16 %v2980
    %v3149 = vunpack.c.h.b16 %v2980
    %v3150 = vunpack.c.l.b16 %v2981
    %v3151 = vunpack.c.h.b16 %v2981
    %v3152 = vunpack.c.l.b16 %v2982
    %v3153 = vunpack.c.h.b16 %v2982
    %v3154 = vunpack.c.l.b16 %v2983
    %v3155 = vunpack.c.h.b16 %v2983
    %v3156 = vunpack.c.l.b16 %v2984
    %v3157 = vunpack.c.h.b16 %v2984
    %v3158 = vunpack.c.l.b16 %v2985
    %v3159 = vunpack.c.h.b16 %v2985
    %v3160 = vunpack.c.l.b16 %v2986
    %v3161 = vunpack.c.h.b16 %v2986
    %v3162 = vunpack.c.l.b16 %v2987
    %v3163 = vunpack.c.h.b16 %v2987
    %v3164 = vunpack.c.l.b16 %v2988
    %v3165 = vunpack.c.h.b16 %v2988
    %v3166 = vunpack.c.l.b16 %v2989
    %v3167 = vunpack.c.h.b16 %v2989
    %v3168 = vunpack.c.l.b16 %v2990
    %v3169 = vunpack.c.h.b16 %v2990
    %v3170 = vunpack.c.l.b16 %v2991
    %v3171 = vunpack.c.h.b16 %v2991
    %v3172 = vunpack.c.l.b16 %v2992
    %v3173 = vunpack.c.h.b16 %v2992
    %v3174 = vunpack.c.l.b16 %v2993
    %v3175 = vunpack.c.h.b16 %v2993
    %v3176 = vunpack.c.l.b16 %v2994
    %v3177 = vunpack.c.h.b16 %v2994
    %v3178 = vunpack.c.l.b16 %v2995
    %v3179 = vunpack.c.h.b16 %v2995
    %v3180 = vunpack.c.l.b16 %v2996
    %v3181 = vunpack.c.h.b16 %v2996
    %v3182 = vunpack.c.l.b16 %v2997
    %v3183 = vunpack.c.h.b16 %v2997
    %v3184 = vunpack.c.l.b16 %v2998
    %v3185 = vunpack.c.h.b16 %v2998
    %v3186 = vunpack.c.l.b16 %v2999
    %v3187 = vunpack.c.h.b16 %v2999
    %v3188 = vunpack.c.l.b16 %v3000
    %v3189 = vunpack.c.h.b16 %v3000
    %v3190 = vunpack.c.l.b16 %v3001
    %v3191 = vunpack.c.h.b16 %v3001
    %v3192 = vunpack.c.l.b16 %v3002
    %v3193 = vunpack.c.h.b16 %v3002
    %v3194 = vunpack.c.l.b16 %v3003
    %v3195 = vunpack.c.h.b16 %v3003
    %v3196 = vunpack.c.l.b16 %v3004
    %v3197 = vunpack.c.h.b16 %v3004
    %v3198 = vunpack.c.l.b16 %v3005
    %v3199 = vunpack.c.h.b16 %v3005
    %v3200 = vunpack.c.l.b16 %v3006
    %v3201 = vunpack.c.h.b16 %v3006
    %v3202 = vunpack.c.l.b16 %v3007
    %v3203 = vunpack.c.h.b16 %v3007
    %v3204 = vunpack.c.l.b16 %v3008
    %v3205 = vunpack.c.h.b16 %v3008
    %v3206 = vunpack.c.l.b16 %v3009
    %v3207 = vunpack.c.h.b16 %v3009
    %v3208 = vunpack.c.l.b16 %v3010
    %v3209 = vunpack.c.h.b16 %v3010
    %v3210 = vunpack.c.l.b16 %v3011
    %v3211 = vunpack.c.h.b16 %v3011
    %v3212 = vunpack.c.l.b16 %v3012
    %v3213 = vunpack.c.h.b16 %v3012
    %v3214 = vunpack.c.l.b16 %v3013
    %v3215 = vunpack.c.h.b16 %v3013
    %v3216 = vunpack.c.l.b16 %v3014
    %v3217 = vunpack.c.h.b16 %v3014
    %v3218 = vunpack.c.l.b16 %v3015
    %v3219 = vunpack.c.h.b16 %v3015
    %v3220 = vpack.c.b16 %v3094, %v3092
    %v3221 = vpack.c.b16 %v3095, %v3093
    %v3222 = vpack.c.b16 %v3098, %v3096
    %v3223 = vpack.c.b16 %v3099, %v3097
    %v3224 = vpack.c.b16 %v3102, %v3100
    %v3225 = vpack.c.b16 %v3103, %v3101
    %v3226 = vpack.c.b16 %v3106, %v3104
    %v3227 = vpack.c.b16 %v3107, %v3105
    %v3228 = vpack.c.b16 %v3110, %v3108
    %v3229 = vpack.c.b16 %v3111, %v3109
    %v3230 = vpack.c.b16 %v3114, %v3112
    %v3231 = vpack.c.b16 %v3115, %v3113
    %v3232 = vpack.c.b16 %v3118, %v3116
    %v3233 = vpack.c.b16 %v3119, %v3117
    %v3234 = vpack.c.b16 %v3122, %v3120
    %v3235 = vpack.c.b16 %v3123, %v3121
    %v3236 = vpack.c.b16 %v3126, %v3124
    %v3237 = vpack.c.b16 %v3127, %v3125
    %v3238 = vpack.c.b16 %v3130, %v3128
    %v3239 = vpack.c.b16 %v3131, %v3129
    %v3240 = vpack.c.b16 %v3134, %v3132
    %v3241 = vpack.c.b16 %v3135, %v3133
    %v3242 = vpack.c.b16 %v3138, %v3136
    %v3243 = vpack.c.b16 %v3139, %v3137
    %v3244 = vpack.c.b16 %v3142, %v3140
    %v3245 = vpack.c.b16 %v3143, %v3141
    %v3246 = vpack.c.b16 %v3146, %v3144
    %v3247 = vpack.c.b16 %v3147, %v3145
    %v3248 = vpack.c.b16 %v3150, %v3148
    %v3249 = vpack.c.b16 %v3151, %v3149
    %v3250 = vpack.c.b16 %v3154, %v3152
    %v3251 = vpack.c.b16 %v3155, %v3153
    %v3252 = vpack.c.b16 %v3158, %v3156
    %v3253 = vpack.c.b16 %v3159, %v3157
    %v3254 = vpack.c.b16 %v3162, %v3160
    %v3255 = vpack.c.b16 %v3163, %v3161
    %v3256 = vpack.c.b16 %v3166, %v3164
    %v3257 = vpack.c.b16 %v3167, %v3165
    %v3258 = vpack.c.b16 %v3170, %v3168
    %v3259 = vpack.c.b16 %v3171, %v3169
    %v3260 = vpack.c.b16 %v3174, %v3172
    %v3261 = vpack.c.b16 %v3175, %v3173
    %v3262 = vpack.c.b16 %v3178, %v3176
    %v3263 = vpack.c.b16 %v3179, %v3177
    %v3264 = vpack.c.b16 %v3182, %v3180
    %v3265 = vpack.c.b16 %v3183, %v3181
    %v3266 = vpack.c.b16 %v3186, %v3184
    %v3267 = vpack.c.b16 %v3187, %v3185
    %v3268 = vpack.c.b16 %v3190, %v3188
    %v3269 = vpack.c.b16 %v3191, %v3189
    %v3270 = vpack.c.b16 %v3194, %v3192
    %v3271 = vpack.c.b16 %v3195, %v3193
    %v3272 = vpack.c.b16 %v3198, %v3196
    %v3273 = vpack.c.b16 %v3199, %v3197
    %v3274 = vpack.c.b16 %v3202, %v3200
    %v3275 = vpack.c.b16 %v3203, %v3201
    %v3276 = vpack.c.b16 %v3206, %v3204
    %v3277 = vpack.c.b16 %v3207, %v3205
    %v3278 = vpack.c.b16 %v3210, %v3208
    %v3279 = vpack.c.b16 %v3211, %v3209
    %v3280 = vpack.c.b16 %v3214, %v3212
    %v3281 = vpack.c.b16 %v3215, %v3213
    %v3282 = vpack.c.b16 %v3218, %v3216
    %v3283 = vpack.c.b16 %v3219, %v3217
    %3348 = vmatprep.subr.bf16.mxu0 %v3221
    %3349 = vmatpush1.bf16.msra.mxu0 %v3220
    %3350 = vmatprep.subr.bf16.mxu0 %v3223
    %3351 = vmatpush1.bf16.msra.mxu0 %v3222
    %3352 = vmatprep.subr.bf16.mxu0 %v3225
    %3353 = vmatpush1.bf16.msra.mxu0 %v3224
    %3354 = vmatprep.subr.bf16.mxu0 %v3227
    %3355 = vmatpush1.bf16.msra.mxu0 %v3226
    %3356 = vmatprep.subr.bf16.mxu0 %v3229
    %3357 = vmatpush1.bf16.msra.mxu0 %v3228
    %3358 = vmatprep.subr.bf16.mxu0 %v3231
    %3359 = vmatpush1.bf16.msra.mxu0 %v3230
    %3360 = vmatprep.subr.bf16.mxu0 %v3233
    %3361 = vmatpush1.bf16.msra.mxu0 %v3232
    %3362 = vmatprep.subr.bf16.mxu0 %v3235
    %3363 = vmatpush1.bf16.msra.mxu0 %v3234
    %3364 = vmatprep.subr.bf16.mxu0 %v3237
    %3365 = vmatpush1.bf16.msra.mxu0 %v3236
    %3366 = vmatprep.subr.bf16.mxu0 %v3239
    %3367 = vmatpush1.bf16.msra.mxu0 %v3238
    %3368 = vmatprep.subr.bf16.mxu0 %v3241
    %3369 = vmatpush1.bf16.msra.mxu0 %v3240
    %3370 = vmatprep.subr.bf16.mxu0 %v3243
    %3371 = vmatpush1.bf16.msra.mxu0 %v3242
    %3372 = vmatprep.subr.bf16.mxu0 %v3245
    %3373 = vmatpush1.bf16.msra.mxu0 %v3244
    %3374 = vmatprep.subr.bf16.mxu0 %v3247
    %3375 = vmatpush1.bf16.msra.mxu0 %v3246
    %3376 = vmatprep.subr.bf16.mxu0 %v3249
    %3377 = vmatpush1.bf16.msra.mxu0 %v3248
    %3378 = vmatprep.subr.bf16.mxu0 %v3251
    %3379 = vmatpush1.bf16.msra.mxu0 %v3250
    %3380 = vmatprep.mubr.bf16.mxu0 %v2949
    %3381 = vmatmul.mubr.bf16.gmra.mrb[0].mxu0 %v2948
    %v3382 = vpop.f32.mrb[0].mxu0
    %v3383 = vadd.f32 %v3021, %v3382
    %v3384 = vpop.f32.mrb[0].mxu0
    %v3385 = vadd.f32 %v3025, %v3384
    %v3386 = vpop.f32.mrb[0].mxu0
    %v3387 = vpop.f32.mrb[0].mxu0
    %3388 = vdwg.mxu0
    %3389 = vmatprep.subr.bf16.mxu0 %v3253
    %3390 = vmatpush1.bf16.msra.mxu0 %v3252
    %3391 = vmatprep.subr.bf16.mxu0 %v3255
    %3392 = vmatpush1.bf16.msra.mxu0 %v3254
    %3393 = vmatprep.subr.bf16.mxu0 %v3257
    %3394 = vmatpush1.bf16.msra.mxu0 %v3256
    %3395 = vmatprep.subr.bf16.mxu0 %v3259
    %3396 = vmatpush1.bf16.msra.mxu0 %v3258
    %3397 = vmatprep.subr.bf16.mxu0 %v3261
    %3398 = vmatpush1.bf16.msra.mxu0 %v3260
    %3399 = vmatprep.subr.bf16.mxu0 %v3263
    %3400 = vmatpush1.bf16.msra.mxu0 %v3262
    %3401 = vmatprep.subr.bf16.mxu0 %v3265
    %3402 = vmatpush1.bf16.msra.mxu0 %v3264
    %3403 = vmatprep.subr.bf16.mxu0 %v3267
    %3404 = vmatpush1.bf16.msra.mxu0 %v3266
    %3405 = vmatprep.subr.bf16.mxu0 %v3269
    %3406 = vmatpush1.bf16.msra.mxu0 %v3268
    %3407 = vmatprep.subr.bf16.mxu0 %v3271
    %3408 = vmatpush1.bf16.msra.mxu0 %v3270
    %3409 = vmatprep.subr.bf16.mxu0 %v3273
    %3410 = vmatpush1.bf16.msra.mxu0 %v3272
    %3411 = vmatprep.subr.bf16.mxu0 %v3275
    %3412 = vmatpush1.bf16.msra.mxu0 %v3274
    %3413 = vmatprep.subr.bf16.mxu0 %v3277
    %3414 = vmatpush1.bf16.msra.mxu0 %v3276
    %3415 = vmatprep.subr.bf16.mxu0 %v3279
    %3416 = vmatpush1.bf16.msra.mxu0 %v3278
    %3417 = vmatprep.subr.bf16.mxu0 %v3281
    %3418 = vmatpush1.bf16.msra.mxu0 %v3280
    %3419 = vmatprep.subr.bf16.mxu0 %v3283
    %3420 = vmatpush1.bf16.msra.mxu0 %v3282
    %3421 = vmatprep.mubr.bf16.mxu0 %v2951
    %3422 = vmatmul.mubr.bf16.gmra.mrb[0].mxu0 %v2950
    %v3423 = vpop.f32.mrb[0].mxu0
    %v3424 = vadd.f32 %v3383, %v3423
    %v3425 = vpop.f32.mrb[0].mxu0
    %v3426 = vadd.f32 %v3385, %v3425
    %v3427 = vpop.f32.mrb[0].mxu0
    %v3428 = vpop.f32.mrb[0].mxu0
    %3429 = vdwg.mxu0
    %v3430 = vmax.f32 %v3424, 0.0
    %v3431 = vmax.f32 %v3426, 0.0
    %v3432 = vpack.c.bf16 %v3430, %v3430
    %v3433 = vpack.c.bf16 %v3431, %v3431
    %v3434 = vld [vmem:[#allocation7] sm:$0xff]
    %v3435 = vld [vmem:[#allocation7 + $0x8] sm:$0xf]
    %v3436 = vld [vmem:[#allocation7 + $0xc] sm:$0xff]
    %v3437 = vld [vmem:[#allocation7 + $0x14] sm:$0xf]
    %v3438 = vld [vmem:[#allocation7 + $0x18] sm:$0xff]
    %v3439 = vld [vmem:[#allocation7 + $0x20] sm:$0xf]
    %v3440 = vld [vmem:[#allocation7 + $0x24] sm:$0xff]
    %v3441 = vld [vmem:[#allocation7 + $0x2c] sm:$0xf]
    %v3442 = vld [vmem:[#allocation7 + $0x30] sm:$0xff]
    %v3443 = vld [vmem:[#allocation7 + $0x38] sm:$0xf]
    %v3444 = vld [vmem:[#allocation7 + $0x3c] sm:$0xff]
    %v3445 = vld [vmem:[#allocation7 + $0x44] sm:$0xf]
    %v3446 = vld [vmem:[#allocation7 + $0x48] sm:$0xff]
    %v3447 = vld [vmem:[#allocation7 + $0x50] sm:$0xf]
    %v3448 = vld [vmem:[#allocation7 + $0x54] sm:$0xff]
    %v3449 = vld [vmem:[#allocation7 + $0x5c] sm:$0xf]
    %v3450 = vld [vmem:[#allocation7 + $0x60] sm:$0xff]
    %v3451 = vld [vmem:[#allocation7 + $0x68] sm:$0xf]
    %v3452 = vld [vmem:[#allocation7 + $0x6c] sm:$0xff]
    %v3453 = vld [vmem:[#allocation7 + $0x74] sm:$0xf]
    %v3454 = vld [vmem:[#allocation7 + $0x78] sm:$0xff]
    %v3455 = vld [vmem:[#allocation7 + $0x80] sm:$0xf]
    %v3456 = vld [vmem:[#allocation7 + $0x84] sm:$0xff]
    %v3457 = vld [vmem:[#allocation7 + $0x8c] sm:$0xf]
    %v3458 = vld [vmem:[#allocation7 + $0x90] sm:$0xff]
    %v3459 = vld [vmem:[#allocation7 + $0x98] sm:$0xf]
    %v3460 = vld [vmem:[#allocation7 + $0x9c] sm:$0xff]
    %v3461 = vld [vmem:[#allocation7 + $0xa4] sm:$0xf]
    %v3462 = vld [vmem:[#allocation7 + $0xa8] sm:$0xff]
    %v3463 = vld [vmem:[#allocation7 + $0xb0] sm:$0xf]
    %v3464 = vld [vmem:[#allocation7 + $0xb4] sm:$0xff]
    %v3465 = vld [vmem:[#allocation7 + $0xbc] sm:$0xf]
    %v3466 = vld [vmem:[#allocation7 + $0xc0] sm:$0xff]
    %v3467 = vld [vmem:[#allocation7 + $0xc8] sm:$0xf]
    %v3468 = vld [vmem:[#allocation7 + $0xcc] sm:$0xff]
    %v3469 = vld [vmem:[#allocation7 + $0xd4] sm:$0xf]
    %v3470 = vld [vmem:[#allocation7 + $0xd8] sm:$0xff]
    %v3471 = vld [vmem:[#allocation7 + $0xe0] sm:$0xf]
    %v3472 = vld [vmem:[#allocation7 + $0xe4] sm:$0xff]
    %v3473 = vld [vmem:[#allocation7 + $0xec] sm:$0xf]
    %v3474 = vld [vmem:[#allocation7 + $0xf0] sm:$0xff]
    %v3475 = vld [vmem:[#allocation7 + $0xf8] sm:$0xf]
    %v3476 = vld [vmem:[#allocation7 + $0xfc] sm:$0xff]
    %v3477 = vld [vmem:[#allocation7 + $0x104] sm:$0xf]
    %v3478 = vld [vmem:[#allocation7 + $0x108] sm:$0xff]
    %v3479 = vld [vmem:[#allocation7 + $0x110] sm:$0xf]
    %v3480 = vld [vmem:[#allocation7 + $0x114] sm:$0xff]
    %v3481 = vld [vmem:[#allocation7 + $0x11c] sm:$0xf]
    %v3482 = vld [vmem:[#allocation7 + $0x120] sm:$0xff]
    %v3483 = vld [vmem:[#allocation7 + $0x128] sm:$0xf]
    %v3484 = vld [vmem:[#allocation7 + $0x12c] sm:$0xff]
    %v3485 = vld [vmem:[#allocation7 + $0x134] sm:$0xf]
    %v3486 = vld [vmem:[#allocation7 + $0x138] sm:$0xff]
    %v3487 = vld [vmem:[#allocation7 + $0x140] sm:$0xf]
    %v3488 = vld [vmem:[#allocation7 + $0x144] sm:$0xff]
    %v3489 = vld [vmem:[#allocation7 + $0x14c] sm:$0xf]
    %v3490 = vld [vmem:[#allocation7 + $0x150] sm:$0xff]
    %v3491 = vld [vmem:[#allocation7 + $0x158] sm:$0xf]
    %v3492 = vld [vmem:[#allocation7 + $0x15c] sm:$0xff]
    %v3493 = vld [vmem:[#allocation7 + $0x164] sm:$0xf]
    %v3494 = vld [vmem:[#allocation7 + $0x168] sm:$0xff]
    %v3495 = vld [vmem:[#allocation7 + $0x170] sm:$0xf]
    %v3496 = vld [vmem:[#allocation7 + $0x174] sm:$0xff]
    %v3497 = vld [vmem:[#allocation7 + $0x17c] sm:$0xf]
    %v3498 = vld [vmem:[%s10] sm:$0x7]
    %v3500 = vlaneseq
    %v3501 = vshrl.u32 %v3500, 7
    %v3502 = vsub.s32 0, %v3501
    %v3503 = vrot.slane %v3498, %v3502
    %v3504 = vlaneseq
    %v3505 = vshrl.u32 %v3504, 7
    %v3506 = vsub.s32 1, %v3505
    %v3507 = vrot.slane %v3498, %v3506
    %v3508 = vlaneseq
    %v3509 = vshrl.u32 %v3508, 7
    %v3510 = vsub.s32 2, %v3509
    %v3511 = vrot.slane %v3498, %v3510
    %v3579 = vunpack.c.l.b16 %v3434
    %v3580 = vunpack.c.h.b16 %v3434
    %v3581 = vunpack.c.l.b16 %v3435
    %v3582 = vunpack.c.l.b16 %v3436
    %v3583 = vunpack.c.h.b16 %v3436
    %v3584 = vunpack.c.l.b16 %v3437
    %v3585 = vunpack.c.l.b16 %v3438
    %v3586 = vunpack.c.h.b16 %v3438
    %v3587 = vunpack.c.l.b16 %v3439
    %v3588 = vunpack.c.l.b16 %v3440
    %v3589 = vunpack.c.h.b16 %v3440
    %v3590 = vunpack.c.l.b16 %v3441
    %v3591 = vunpack.c.l.b16 %v3442
    %v3592 = vunpack.c.h.b16 %v3442
    %v3593 = vunpack.c.l.b16 %v3443
    %v3594 = vunpack.c.l.b16 %v3444
    %v3595 = vunpack.c.h.b16 %v3444
    %v3596 = vunpack.c.l.b16 %v3445
    %v3597 = vunpack.c.l.b16 %v3446
    %v3598 = vunpack.c.h.b16 %v3446
    %v3599 = vunpack.c.l.b16 %v3447
    %v3600 = vunpack.c.l.b16 %v3448
    %v3601 = vunpack.c.h.b16 %v3448
    %v3602 = vunpack.c.l.b16 %v3449
    %v3603 = vunpack.c.l.b16 %v3450
    %v3604 = vunpack.c.h.b16 %v3450
    %v3605 = vunpack.c.l.b16 %v3451
    %v3606 = vunpack.c.l.b16 %v3452
    %v3607 = vunpack.c.h.b16 %v3452
    %v3608 = vunpack.c.l.b16 %v3453
    %v3609 = vunpack.c.l.b16 %v3454
    %v3610 = vunpack.c.h.b16 %v3454
    %v3611 = vunpack.c.l.b16 %v3455
    %v3612 = vunpack.c.l.b16 %v3456
    %v3613 = vunpack.c.h.b16 %v3456
    %v3614 = vunpack.c.l.b16 %v3457
    %v3615 = vunpack.c.l.b16 %v3458
    %v3616 = vunpack.c.h.b16 %v3458
    %v3617 = vunpack.c.l.b16 %v3459
    %v3618 = vunpack.c.l.b16 %v3460
    %v3619 = vunpack.c.h.b16 %v3460
    %v3620 = vunpack.c.l.b16 %v3461
    %v3621 = vunpack.c.l.b16 %v3462
    %v3622 = vunpack.c.h.b16 %v3462
    %v3623 = vunpack.c.l.b16 %v3463
    %v3624 = vunpack.c.l.b16 %v3464
    %v3625 = vunpack.c.h.b16 %v3464
    %v3626 = vunpack.c.l.b16 %v3465
    %v3627 = vunpack.c.l.b16 %v3466
    %v3628 = vunpack.c.h.b16 %v3466
    %v3629 = vunpack.c.l.b16 %v3467
    %v3630 = vunpack.c.l.b16 %v3468
    %v3631 = vunpack.c.h.b16 %v3468
    %v3632 = vunpack.c.l.b16 %v3469
    %v3633 = vunpack.c.l.b16 %v3470
    %v3634 = vunpack.c.h.b16 %v3470
    %v3635 = vunpack.c.l.b16 %v3471
    %v3636 = vunpack.c.l.b16 %v3472
    %v3637 = vunpack.c.h.b16 %v3472
    %v3638 = vunpack.c.l.b16 %v3473
    %v3639 = vunpack.c.l.b16 %v3474
    %v3640 = vunpack.c.h.b16 %v3474
    %v3641 = vunpack.c.l.b16 %v3475
    %v3642 = vunpack.c.l.b16 %v3476
    %v3643 = vunpack.c.h.b16 %v3476
    %v3644 = vunpack.c.l.b16 %v3477
    %v3645 = vunpack.c.l.b16 %v3478
    %v3646 = vunpack.c.h.b16 %v3478
    %v3647 = vunpack.c.l.b16 %v3479
    %v3648 = vunpack.c.l.b16 %v3480
    %v3649 = vunpack.c.h.b16 %v3480
    %v3650 = vunpack.c.l.b16 %v3481
    %v3651 = vunpack.c.l.b16 %v3482
    %v3652 = vunpack.c.h.b16 %v3482
    %v3653 = vunpack.c.l.b16 %v3483
    %v3654 = vunpack.c.l.b16 %v3484
    %v3655 = vunpack.c.h.b16 %v3484
    %v3656 = vunpack.c.l.b16 %v3485
    %v3657 = vunpack.c.l.b16 %v3486
    %v3658 = vunpack.c.h.b16 %v3486
    %v3659 = vunpack.c.l.b16 %v3487
    %v3660 = vunpack.c.l.b16 %v3488
    %v3661 = vunpack.c.h.b16 %v3488
    %v3662 = vunpack.c.l.b16 %v3489
    %v3663 = vunpack.c.l.b16 %v3490
    %v3664 = vunpack.c.h.b16 %v3490
    %v3665 = vunpack.c.l.b16 %v3491
    %v3666 = vunpack.c.l.b16 %v3492
    %v3667 = vunpack.c.h.b16 %v3492
    %v3668 = vunpack.c.l.b16 %v3493
    %v3669 = vunpack.c.l.b16 %v3494
    %v3670 = vunpack.c.h.b16 %v3494
    %v3671 = vunpack.c.l.b16 %v3495
    %v3672 = vunpack.c.l.b16 %v3496
    %v3673 = vunpack.c.h.b16 %v3496
    %v3674 = vunpack.c.l.b16 %v3497
    %v3675 = vpack.c.b16 %v3582, %v3579
    %v3676 = vpack.c.b16 %v3583, %v3580
    %v3677 = vpack.c.b16 %v3584, %v3581
    %v3678 = vpack.c.b16 %v3588, %v3585
    %v3679 = vpack.c.b16 %v3589, %v3586
    %v3680 = vpack.c.b16 %v3590, %v3587
    %v3681 = vpack.c.b16 %v3594, %v3591
    %v3682 = vpack.c.b16 %v3595, %v3592
    %v3683 = vpack.c.b16 %v3596, %v3593
    %v3684 = vpack.c.b16 %v3600, %v3597
    %v3685 = vpack.c.b16 %v3601, %v3598
    %v3686 = vpack.c.b16 %v3602, %v3599
    %v3687 = vpack.c.b16 %v3606, %v3603
    %v3688 = vpack.c.b16 %v3607, %v3604
    %v3689 = vpack.c.b16 %v3608, %v3605
    %v3690 = vpack.c.b16 %v3612, %v3609
    %v3691 = vpack.c.b16 %v3613, %v3610
    %v3692 = vpack.c.b16 %v3614, %v3611
    %v3693 = vpack.c.b16 %v3618, %v3615
    %v3694 = vpack.c.b16 %v3619, %v3616
    %v3695 = vpack.c.b16 %v3620, %v3617
    %v3696 = vpack.c.b16 %v3624, %v3621
    %v3697 = vpack.c.b16 %v3625, %v3622
    %v3698 = vpack.c.b16 %v3626, %v3623
    %v3699 = vpack.c.b16 %v3630, %v3627
    %v3700 = vpack.c.b16 %v3631, %v3628
    %v3701 = vpack.c.b16 %v3632, %v3629
    %v3702 = vpack.c.b16 %v3636, %v3633
    %v3703 = vpack.c.b16 %v3637, %v3634
    %v3704 = vpack.c.b16 %v3638, %v3635
    %v3705 = vpack.c.b16 %v3642, %v3639
    %v3706 = vpack.c.b16 %v3643, %v3640
    %v3707 = vpack.c.b16 %v3644, %v3641
    %v3708 = vpack.c.b16 %v3648, %v3645
    %v3709 = vpack.c.b16 %v3649, %v3646
    %v3710 = vpack.c.b16 %v3650, %v3647
    %v3711 = vpack.c.b16 %v3654, %v3651
    %v3712 = vpack.c.b16 %v3655, %v3652
    %v3713 = vpack.c.b16 %v3656, %v3653
    %v3714 = vpack.c.b16 %v3660, %v3657
    %v3715 = vpack.c.b16 %v3661, %v3658
    %v3716 = vpack.c.b16 %v3662, %v3659
    %v3717 = vpack.c.b16 %v3666, %v3663
    %v3718 = vpack.c.b16 %v3667, %v3664
    %v3719 = vpack.c.b16 %v3668, %v3665
    %v3720 = vpack.c.b16 %v3672, %v3669
    %v3721 = vpack.c.b16 %v3673, %v3670
    %v3722 = vpack.c.b16 %v3674, %v3671
    %3771 = vmatprep.subr.bf16.mxu0 %v3676
    %3772 = vmatpush1.bf16.msra.mxu0 %v3675
    %3773 = vmatprep.subr.bf16.mxu0 %v3679
    %3774 = vmatpush1.bf16.msra.mxu0 %v3678
    %3775 = vmatprep.subr.bf16.mxu0 %v3682
    %3776 = vmatpush1.bf16.msra.mxu0 %v3681
    %3777 = vmatprep.subr.bf16.mxu0 %v3685
    %3778 = vmatpush1.bf16.msra.mxu0 %v3684
    %3779 = vmatprep.subr.bf16.mxu0 %v3688
    %3780 = vmatpush1.bf16.msra.mxu0 %v3687
    %3781 = vmatprep.subr.bf16.mxu0 %v3691
    %3782 = vmatpush1.bf16.msra.mxu0 %v3690
    %3783 = vmatprep.subr.bf16.mxu0 %v3694
    %3784 = vmatpush1.bf16.msra.mxu0 %v3693
    %3785 = vmatprep.subr.bf16.mxu0 %v3697
    %3786 = vmatpush1.bf16.msra.mxu0 %v3696
    %3787 = vmatprep.subr.bf16.mxu0 %v3700
    %3788 = vmatpush1.bf16.msra.mxu0 %v3699
    %3789 = vmatprep.subr.bf16.mxu0 %v3703
    %3790 = vmatpush1.bf16.msra.mxu0 %v3702
    %3791 = vmatprep.subr.bf16.mxu0 %v3706
    %3792 = vmatpush1.bf16.msra.mxu0 %v3705
    %3793 = vmatprep.subr.bf16.mxu0 %v3709
    %3794 = vmatpush1.bf16.msra.mxu0 %v3708
    %3795 = vmatprep.subr.bf16.mxu0 %v3712
    %3796 = vmatpush1.bf16.msra.mxu0 %v3711
    %3797 = vmatprep.subr.bf16.mxu0 %v3715
    %3798 = vmatpush1.bf16.msra.mxu0 %v3714
    %3799 = vmatprep.subr.bf16.mxu0 %v3718
    %3800 = vmatpush1.bf16.msra.mxu0 %v3717
    %3801 = vmatprep.subr.bf16.mxu0 %v3721
    %3802 = vmatpush1.bf16.msra.mxu0 %v3720
    %3803 = vmatprep.mubr.bf16.mxu0 %v3433
    %3804 = vmatmul.mubr.bf16.gmra.mrb[0].mxu0 %v3432
    %v3805 = vpop.f32.mrb[0].mxu0
    %v3806 = vadd.f32 %v3503, %v3805
    %v3807 = vpop.f32.mrb[0].mxu0
    %v3808 = vadd.f32 %v3507, %v3807
    %v3809 = vpop.f32.mrb[0].mxu0
    %v3810 = vpop.f32.mrb[0].mxu0
    %3811 = vdwg.mxu0
    %3812 = vmatprep.subr.bf16.mxu0 0
    %3813 = vmatpush1.bf16.msra.mxu0 %v3677
    %3814 = vmatprep.subr.bf16.mxu0 0
    %3815 = vmatpush1.bf16.msra.mxu0 %v3680
    %3816 = vmatprep.subr.bf16.mxu0 0
    %3817 = vmatpush1.bf16.msra.mxu0 %v3683
    %3818 = vmatprep.subr.bf16.mxu0 0
    %3819 = vmatpush1.bf16.msra.mxu0 %v3686
    %3820 = vmatprep.subr.bf16.mxu0 0
    %3821 = vmatpush1.bf16.msra.mxu0 %v3689
    %3822 = vmatprep.subr.bf16.mxu0 0
    %3823 = vmatpush1.bf16.msra.mxu0 %v3692
    %3824 = vmatprep.subr.bf16.mxu0 0
    %3825 = vmatpush1.bf16.msra.mxu0 %v3695
    %3826 = vmatprep.subr.bf16.mxu0 0
    %3827 = vmatpush1.bf16.msra.mxu0 %v3698
    %3828 = vmatprep.subr.bf16.mxu0 0
    %3829 = vmatpush1.bf16.msra.mxu0 %v3701
    %3830 = vmatprep.subr.bf16.mxu0 0
    %3831 = vmatpush1.bf16.msra.mxu0 %v3704
    %3832 = vmatprep.subr.bf16.mxu0 0
    %3833 = vmatpush1.bf16.msra.mxu0 %v3707
    %3834 = vmatprep.subr.bf16.mxu0 0
    %3835 = vmatpush1.bf16.msra.mxu0 %v3710
    %3836 = vmatprep.subr.bf16.mxu0 0
    %3837 = vmatpush1.bf16.msra.mxu0 %v3713
    %3838 = vmatprep.subr.bf16.mxu0 0
    %3839 = vmatpush1.bf16.msra.mxu0 %v3716
    %3840 = vmatprep.subr.bf16.mxu0 0
    %3841 = vmatpush1.bf16.msra.mxu0 %v3719
    %3842 = vmatprep.subr.bf16.mxu0 0
    %3843 = vmatpush1.bf16.msra.mxu0 %v3722
    %3844 = vmatprep.mubr.bf16.mxu0 %v3433
    %3845 = vmatmul.mubr.bf16.gmra.mrb[0].mxu0 %v3432
    %v3846 = vpop.f32.mrb[0].mxu0
    %v3847 = vadd.f32 %v3511, %v3846
    %v3848 = vpop.f32.mrb[0].mxu0
    %v3849 = vpop.f32.mrb[0].mxu0
    %v3850 = vpop.f32.mrb[0].mxu0
    %3851 = vdwg.mxu0
    %v3852 = vmax.f32 %v3806, 0.0
    %v3853 = vmax.f32 %v3808, 0.0
    %v3854 = vmax.f32 %v3847, 0.0
    %v3855 = vpack.c.bf16 %v3852, %v3852
    %v3856 = vpack.c.bf16 %v3853, %v3853
    %v3857 = vpack.c.bf16 %v3854, %v3854
    %v3858 = vld [vmem:[%s11] sm:$0xff]
    %v3859 = vld [vmem:[%s11 + $0x8] sm:$0xff]
    %v3860 = vld [vmem:[%s11 + $0x10] sm:$0xff]
    %v3861 = vld [vmem:[%s11 + $0x18] sm:$0xff]
    %v3862 = vld [vmem:[%s11 + $0x20] sm:$0xff]
    %v3863 = vld [vmem:[%s11 + $0x28] sm:$0xff]
    %v3864 = vld [vmem:[%s11 + $0x30] sm:$0xff]
    %v3865 = vld [vmem:[%s11 + $0x38] sm:$0xff]
    %v3866 = vld [vmem:[%s11 + $0x40] sm:$0xff]
    %v3867 = vld [vmem:[%s11 + $0x48] sm:$0xff]
    %v3868 = vld [vmem:[%s11 + $0x50] sm:$0xff]
    %v3869 = vld [vmem:[%s11 + $0x58] sm:$0xff]
    %v3870 = vld [vmem:[%s11 + $0x60] sm:$0xff]
    %v3871 = vld [vmem:[%s11 + $0x68] sm:$0xff]
    %v3872 = vld [vmem:[%s11 + $0x70] sm:$0xff]
    %v3873 = vld [vmem:[%s11 + $0x78] sm:$0xff]
    %v3874 = vld [vmem:[%s11 + $0x80] sm:$0xff]
    %v3875 = vld [vmem:[%s11 + $0x88] sm:$0xff]
    %v3876 = vld [vmem:[%s11 + $0x90] sm:$0xff]
    %v3877 = vld [vmem:[%s11 + $0x98] sm:$0xff]
    %v3878 = vld [vmem:[%s11 + $0xa0] sm:$0xff]
    %v3879 = vld [vmem:[%s11 + $0xa8] sm:$0xff]
    %v3880 = vld [vmem:[%s11 + $0xb0] sm:$0xff]
    %v3881 = vld [vmem:[%s11 + $0xb8] sm:$0xff]
    %v3882 = vld [vmem:[%s11 + $0xc0] sm:$0xff]
    %v3883 = vld [vmem:[%s11 + $0xc8] sm:$0xff]
    %v3884 = vld [vmem:[%s11 + $0xd0] sm:$0xff]
    %v3885 = vld [vmem:[%s11 + $0xd8] sm:$0xff]
    %v3886 = vld [vmem:[%s11 + $0xe0] sm:$0xff]
    %v3887 = vld [vmem:[%s11 + $0xe8] sm:$0xff]
    %v3888 = vld [vmem:[%s11 + $0xf0] sm:$0xff]
    %v3889 = vld [vmem:[%s11 + $0xf8] sm:$0xff]
    %v3890 = vld [vmem:[%s11 + $0x100] sm:$0xff]
    %v3891 = vld [vmem:[%s11 + $0x108] sm:$0xff]
    %v3892 = vld [vmem:[%s11 + $0x110] sm:$0xff]
    %v3893 = vld [vmem:[%s11 + $0x118] sm:$0xff]
    %v3894 = vld [vmem:[%s11 + $0x120] sm:$0xff]
    %v3895 = vld [vmem:[%s11 + $0x128] sm:$0xff]
    %v3896 = vld [vmem:[%s11 + $0x130] sm:$0xff]
    %v3897 = vld [vmem:[%s11 + $0x138] sm:$0xff]
    %v3898 = vld [vmem:[%s11 + $0x140] sm:$0xff]
    %v3899 = vld [vmem:[%s11 + $0x148] sm:$0xff]
    %v3900 = vld [vmem:[%s11 + $0x150] sm:$0xff]
    %v3901 = vld [vmem:[%s11 + $0x158] sm:$0xff]
    %v3902 = vld [vmem:[%s11 + $0x160] sm:$0xff]
    %v3903 = vld [vmem:[%s11 + $0x168] sm:$0xff]
    %v3904 = vld [vmem:[%s11 + $0x170] sm:$0xff]
    %v3905 = vld [vmem:[%s11 + $0x178] sm:$0xff]
    %v3906 = vld [vmem:[%s12] sm:$0x3]
    %v3908 = vlaneseq
    %v3909 = vshrl.u32 %v3908, 7
    %v3910 = vsub.s32 0, %v3909
    %v3911 = vrot.slane %v3906, %v3910
    %v3912 = vlaneseq
    %v3913 = vshrl.u32 %v3912, 7
    %v3914 = vsub.s32 1, %v3913
    %v3915 = vrot.slane %v3906, %v3914
    %v3966 = vunpack.c.l.b16 %v3858
    %v3967 = vunpack.c.h.b16 %v3858
    %v3968 = vunpack.c.l.b16 %v3859
    %v3969 = vunpack.c.h.b16 %v3859
    %v3970 = vunpack.c.l.b16 %v3860
    %v3971 = vunpack.c.h.b16 %v3860
    %v3972 = vunpack.c.l.b16 %v3861
    %v3973 = vunpack.c.h.b16 %v3861
    %v3974 = vunpack.c.l.b16 %v3862
    %v3975 = vunpack.c.h.b16 %v3862
    %v3976 = vunpack.c.l.b16 %v3863
    %v3977 = vunpack.c.h.b16 %v3863
    %v3978 = vunpack.c.l.b16 %v3864
    %v3979 = vunpack.c.h.b16 %v3864
    %v3980 = vunpack.c.l.b16 %v3865
    %v3981 = vunpack.c.h.b16 %v3865
    %v3982 = vunpack.c.l.b16 %v3866
    %v3983 = vunpack.c.h.b16 %v3866
    %v3984 = vunpack.c.l.b16 %v3867
    %v3985 = vunpack.c.h.b16 %v3867
    %v3986 = vunpack.c.l.b16 %v3868
    %v3987 = vunpack.c.h.b16 %v3868
    %v3988 = vunpack.c.l.b16 %v3869
    %v3989 = vunpack.c.h.b16 %v3869
    %v3990 = vunpack.c.l.b16 %v3870
    %v3991 = vunpack.c.h.b16 %v3870
    %v3992 = vunpack.c.l.b16 %v3871
    %v3993 = vunpack.c.h.b16 %v3871
    %v3994 = vunpack.c.l.b16 %v3872
    %v3995 = vunpack.c.h.b16 %v3872
    %v3996 = vunpack.c.l.b16 %v3873
    %v3997 = vunpack.c.h.b16 %v3873
    %v3998 = vunpack.c.l.b16 %v3874
    %v3999 = vunpack.c.h.b16 %v3874
    %v4000 = vunpack.c.l.b16 %v3875
    %v4001 = vunpack.c.h.b16 %v3875
    %v4002 = vunpack.c.l.b16 %v3876
    %v4003 = vunpack.c.h.b16 %v3876
    %v4004 = vunpack.c.l.b16 %v3877
    %v4005 = vunpack.c.h.b16 %v3877
    %v4006 = vunpack.c.l.b16 %v3878
    %v4007 = vunpack.c.h.b16 %v3878
    %v4008 = vunpack.c.l.b16 %v3879
    %v4009 = vunpack.c.h.b16 %v3879
    %v4010 = vunpack.c.l.b16 %v3880
    %v4011 = vunpack.c.h.b16 %v3880
    %v4012 = vunpack.c.l.b16 %v3881
    %v4013 = vunpack.c.h.b16 %v3881
    %v4014 = vunpack.c.l.b16 %v3882
    %v4015 = vunpack.c.h.b16 %v3882
    %v4016 = vunpack.c.l.b16 %v3883
    %v4017 = vunpack.c.h.b16 %v3883
    %v4018 = vunpack.c.l.b16 %v3884
    %v4019 = vunpack.c.h.b16 %v3884
    %v4020 = vunpack.c.l.b16 %v3885
    %v4021 = vunpack.c.h.b16 %v3885
    %v4022 = vunpack.c.l.b16 %v3886
    %v4023 = vunpack.c.h.b16 %v3886
    %v4024 = vunpack.c.l.b16 %v3887
    %v4025 = vunpack.c.h.b16 %v3887
    %v4026 = vunpack.c.l.b16 %v3888
    %v4027 = vunpack.c.h.b16 %v3888
    %v4028 = vunpack.c.l.b16 %v3889
    %v4029 = vunpack.c.h.b16 %v3889
    %v4030 = vunpack.c.l.b16 %v3890
    %v4031 = vunpack.c.h.b16 %v3890
    %v4032 = vunpack.c.l.b16 %v3891
    %v4033 = vunpack.c.h.b16 %v3891
    %v4034 = vunpack.c.l.b16 %v3892
    %v4035 = vunpack.c.h.b16 %v3892
    %v4036 = vunpack.c.l.b16 %v3893
    %v4037 = vunpack.c.h.b16 %v3893
    %v4038 = vunpack.c.l.b16 %v3894
    %v4039 = vunpack.c.h.b16 %v3894
    %v4040 = vunpack.c.l.b16 %v3895
    %v4041 = vunpack.c.h.b16 %v3895
    %v4042 = vunpack.c.l.b16 %v3896
    %v4043 = vunpack.c.h.b16 %v3896
    %v4044 = vunpack.c.l.b16 %v3897
    %v4045 = vunpack.c.h.b16 %v3897
    %v4046 = vunpack.c.l.b16 %v3898
    %v4047 = vunpack.c.h.b16 %v3898
    %v4048 = vunpack.c.l.b16 %v3899
    %v4049 = vunpack.c.h.b16 %v3899
    %v4050 = vunpack.c.l.b16 %v3900
    %v4051 = vunpack.c.h.b16 %v3900
    %v4052 = vunpack.c.l.b16 %v3901
    %v4053 = vunpack.c.h.b16 %v3901
    %v4054 = vunpack.c.l.b16 %v3902
    %v4055 = vunpack.c.h.b16 %v3902
    %v4056 = vunpack.c.l.b16 %v3903
    %v4057 = vunpack.c.h.b16 %v3903
    %v4058 = vunpack.c.l.b16 %v3904
    %v4059 = vunpack.c.h.b16 %v3904
    %v4060 = vunpack.c.l.b16 %v3905
    %v4061 = vunpack.c.h.b16 %v3905
    %v4062 = vpack.c.b16 %v3968, %v3966
    %v4063 = vpack.c.b16 %v3969, %v3967
    %v4064 = vpack.c.b16 %v3972, %v3970
    %v4065 = vpack.c.b16 %v3973, %v3971
    %v4066 = vpack.c.b16 %v3976, %v3974
    %v4067 = vpack.c.b16 %v3977, %v3975
    %v4068 = vpack.c.b16 %v3980, %v3978
    %v4069 = vpack.c.b16 %v3981, %v3979
    %v4070 = vpack.c.b16 %v3984, %v3982
    %v4071 = vpack.c.b16 %v3985, %v3983
    %v4072 = vpack.c.b16 %v3988, %v3986
    %v4073 = vpack.c.b16 %v3989, %v3987
    %v4074 = vpack.c.b16 %v3992, %v3990
    %v4075 = vpack.c.b16 %v3993, %v3991
    %v4076 = vpack.c.b16 %v3996, %v3994
    %v4077 = vpack.c.b16 %v3997, %v3995
    %v4078 = vpack.c.b16 %v4000, %v3998
    %v4079 = vpack.c.b16 %v4001, %v3999
    %v4080 = vpack.c.b16 %v4004, %v4002
    %v4081 = vpack.c.b16 %v4005, %v4003
    %v4082 = vpack.c.b16 %v4008, %v4006
    %v4083 = vpack.c.b16 %v4009, %v4007
    %v4084 = vpack.c.b16 %v4012, %v4010
    %v4085 = vpack.c.b16 %v4013, %v4011
    %v4086 = vpack.c.b16 %v4016, %v4014
    %v4087 = vpack.c.b16 %v4017, %v4015
    %v4088 = vpack.c.b16 %v4020, %v4018
    %v4089 = vpack.c.b16 %v4021, %v4019
    %v4090 = vpack.c.b16 %v4024, %v4022
    %v4091 = vpack.c.b16 %v4025, %v4023
    %v4092 = vpack.c.b16 %v4028, %v4026
    %v4093 = vpack.c.b16 %v4029, %v4027
    %v4094 = vpack.c.b16 %v4032, %v4030
    %v4095 = vpack.c.b16 %v4033, %v4031
    %v4096 = vpack.c.b16 %v4036, %v4034
    %v4097 = vpack.c.b16 %v4037, %v4035
    %v4098 = vpack.c.b16 %v4040, %v4038
    %v4099 = vpack.c.b16 %v4041, %v4039
    %v4100 = vpack.c.b16 %v4044, %v4042
    %v4101 = vpack.c.b16 %v4045, %v4043
    %v4102 = vpack.c.b16 %v4048, %v4046
    %v4103 = vpack.c.b16 %v4049, %v4047
    %v4104 = vpack.c.b16 %v4052, %v4050
    %v4105 = vpack.c.b16 %v4053, %v4051
    %v4106 = vpack.c.b16 %v4056, %v4054
    %v4107 = vpack.c.b16 %v4057, %v4055
    %v4108 = vpack.c.b16 %v4060, %v4058
    %v4109 = vpack.c.b16 %v4061, %v4059
    %4158 = vmatprep.subr.bf16.mxu0 %v4063
    %4159 = vmatpush1.bf16.msra.mxu0 %v4062
    %4160 = vmatprep.subr.bf16.mxu0 %v4065
    %4161 = vmatpush1.bf16.msra.mxu0 %v4064
    %4162 = vmatprep.subr.bf16.mxu0 %v4067
    %4163 = vmatpush1.bf16.msra.mxu0 %v4066
    %4164 = vmatprep.subr.bf16.mxu0 %v4069
    %4165 = vmatpush1.bf16.msra.mxu0 %v4068
    %4166 = vmatprep.subr.bf16.mxu0 %v4071
    %4167 = vmatpush1.bf16.msra.mxu0 %v4070
    %4168 = vmatprep.subr.bf16.mxu0 %v4073
    %4169 = vmatpush1.bf16.msra.mxu0 %v4072
    %4170 = vmatprep.subr.bf16.mxu0 %v4075
    %4171 = vmatpush1.bf16.msra.mxu0 %v4074
    %4172 = vmatprep.subr.bf16.mxu0 %v4077
    %4173 = vmatpush1.bf16.msra.mxu0 %v4076
    %4174 = vmatprep.subr.bf16.mxu0 %v4079
    %4175 = vmatpush1.bf16.msra.mxu0 %v4078
    %4176 = vmatprep.subr.bf16.mxu0 %v4081
    %4177 = vmatpush1.bf16.msra.mxu0 %v4080
    %4178 = vmatprep.subr.bf16.mxu0 %v4083
    %4179 = vmatpush1.bf16.msra.mxu0 %v4082
    %4180 = vmatprep.subr.bf16.mxu0 %v4085
    %4181 = vmatpush1.bf16.msra.mxu0 %v4084
    %4182 = vmatprep.subr.bf16.mxu0 %v4087
    %4183 = vmatpush1.bf16.msra.mxu0 %v4086
    %4184 = vmatprep.subr.bf16.mxu0 %v4089
    %4185 = vmatpush1.bf16.msra.mxu0 %v4088
    %4186 = vmatprep.subr.bf16.mxu0 %v4091
    %4187 = vmatpush1.bf16.msra.mxu0 %v4090
    %4188 = vmatprep.subr.bf16.mxu0 %v4093
    %4189 = vmatpush1.bf16.msra.mxu0 %v4092
    %4190 = vmatprep.mubr.bf16.mxu0 %v3856
    %4191 = vmatmul.mubr.bf16.gmra.mrb[0].mxu0 %v3855
    %v4192 = vpop.f32.mrb[0].mxu0
    %v4193 = vadd.f32 %v3911, %v4192
    %v4194 = vpop.f32.mrb[0].mxu0
    %v4195 = vadd.f32 %v3915, %v4194
    %v4196 = vpop.f32.mrb[0].mxu0
    %v4197 = vpop.f32.mrb[0].mxu0
    %4198 = vdwg.mxu0
    %4199 = vmatprep.subr.bf16.mxu0 %v4095
    %4200 = vmatpush1.bf16.msra.mxu0 %v4094
    %4201 = vmatprep.subr.bf16.mxu0 %v4097
    %4202 = vmatpush1.bf16.msra.mxu0 %v4096
    %4203 = vmatprep.subr.bf16.mxu0 %v4099
    %4204 = vmatpush1.bf16.msra.mxu0 %v4098
    %4205 = vmatprep.subr.bf16.mxu0 %v4101
    %4206 = vmatpush1.bf16.msra.mxu0 %v4100
    %4207 = vmatprep.subr.bf16.mxu0 %v4103
    %4208 = vmatpush1.bf16.msra.mxu0 %v4102
    %4209 = vmatprep.subr.bf16.mxu0 %v4105
    %4210 = vmatpush1.bf16.msra.mxu0 %v4104
    %4211 = vmatprep.subr.bf16.mxu0 %v4107
    %4212 = vmatpush1.bf16.msra.mxu0 %v4106
    %4213 = vmatprep.subr.bf16.mxu0 %v4109
    %4214 = vmatpush1.bf16.msra.mxu0 %v4108
    %4215 = vmatprep.subr.bf16.mxu0 0
    %4216 = vmatpush1.bf16.msra.mxu0 0
    %4217 = vmatprep.subr.bf16.mxu0 0
    %4218 = vmatpush1.bf16.msra.mxu0 0
    %4219 = vmatprep.subr.bf16.mxu0 0
    %4220 = vmatpush1.bf16.msra.mxu0 0
    %4221 = vmatprep.subr.bf16.mxu0 0
    %4222 = vmatpush1.bf16.msra.mxu0 0
    %4223 = vmatprep.subr.bf16.mxu0 0
    %4224 = vmatpush1.bf16.msra.mxu0 0
    %4225 = vmatprep.subr.bf16.mxu0 0
    %4226 = vmatpush1.bf16.msra.mxu0 0
    %4227 = vmatprep.subr.bf16.mxu0 0
    %4228 = vmatpush1.bf16.msra.mxu0 0
    %4229 = vmatprep.subr.bf16.mxu0 0
    %4230 = vmatpush1.bf16.msra.mxu0 0
    %4231 = vmatprep.mubr.bf16.mxu0 0
    %4232 = vmatmul.mubr.bf16.gmra.mrb[0].mxu0 %v3857
    %v4233 = vpop.f32.mrb[0].mxu0
    %v4234 = vadd.f32 %v4193, %v4233
    %v4235 = vpop.f32.mrb[0].mxu0
    %v4236 = vadd.f32 %v4195, %v4235
    %v4237 = vpop.f32.mrb[0].mxu0
    %v4238 = vpop.f32.mrb[0].mxu0
    %4239 = vdwg.mxu0
    %v4240 = vmax.f32 %v4234, 0.0
    %v4241 = vmax.f32 %v4236, 0.0
    %v4242 = vpack.c.bf16 %v4240, %v4240
    %v4243 = vpack.c.bf16 %v4241, %v4241
    %v4244 = vld [vmem:[#allocation8] sm:$0xf]
    %v4245 = vld [vmem:[#allocation8 + $0x4] sm:$0xf]
    %v4246 = vld [vmem:[#allocation8 + $0x8] sm:$0xf]
    %v4247 = vld [vmem:[#allocation8 + $0xc] sm:$0xf]
    %v4248 = vld [vmem:[#allocation8 + $0x10] sm:$0xf]
    %v4249 = vld [vmem:[#allocation8 + $0x14] sm:$0xf]
    %v4250 = vld [vmem:[#allocation8 + $0x18] sm:$0xf]
    %v4251 = vld [vmem:[#allocation8 + $0x1c] sm:$0xf]
    %v4252 = vld [vmem:[#allocation8 + $0x20] sm:$0xf]
    %v4253 = vld [vmem:[#allocation8 + $0x24] sm:$0xf]
    %v4254 = vld [vmem:[#allocation8 + $0x28] sm:$0xf]
    %v4255 = vld [vmem:[#allocation8 + $0x2c] sm:$0xf]
    %v4256 = vld [vmem:[#allocation8 + $0x30] sm:$0xf]
    %v4257 = vld [vmem:[#allocation8 + $0x34] sm:$0xf]
    %v4258 = vld [vmem:[#allocation8 + $0x38] sm:$0xf]
    %v4259 = vld [vmem:[#allocation8 + $0x3c] sm:$0xf]
    %v4260 = vld [vmem:[#allocation8 + $0x40] sm:$0xf]
    %v4261 = vld [vmem:[#allocation8 + $0x44] sm:$0xf]
    %v4262 = vld [vmem:[#allocation8 + $0x48] sm:$0xf]
    %v4263 = vld [vmem:[#allocation8 + $0x4c] sm:$0xf]
    %v4264 = vld [vmem:[#allocation8 + $0x50] sm:$0xf]
    %v4265 = vld [vmem:[#allocation8 + $0x54] sm:$0xf]
    %v4266 = vld [vmem:[#allocation8 + $0x58] sm:$0xf]
    %v4267 = vld [vmem:[#allocation8 + $0x5c] sm:$0xf]
    %v4268 = vld [vmem:[%s14] sm:$0x1]
    %v4270 = vlaneseq
    %v4271 = vshrl.u32 %v4270, 7
    %v4272 = vsub.s32 0, %v4271
    %v4273 = vrot.slane %v4268, %v4272
    %v4299 = vunpack.c.l.b16 %v4244
    %v4300 = vunpack.c.l.b16 %v4245
    %v4301 = vunpack.c.l.b16 %v4246
    %v4302 = vunpack.c.l.b16 %v4247
    %v4303 = vunpack.c.l.b16 %v4248
    %v4304 = vunpack.c.l.b16 %v4249
    %v4305 = vunpack.c.l.b16 %v4250
    %v4306 = vunpack.c.l.b16 %v4251
    %v4307 = vunpack.c.l.b16 %v4252
    %v4308 = vunpack.c.l.b16 %v4253
    %v4309 = vunpack.c.l.b16 %v4254
    %v4310 = vunpack.c.l.b16 %v4255
    %v4311 = vunpack.c.l.b16 %v4256
    %v4312 = vunpack.c.l.b16 %v4257
    %v4313 = vunpack.c.l.b16 %v4258
    %v4314 = vunpack.c.l.b16 %v4259
    %v4315 = vunpack.c.l.b16 %v4260
    %v4316 = vunpack.c.l.b16 %v4261
    %v4317 = vunpack.c.l.b16 %v4262
    %v4318 = vunpack.c.l.b16 %v4263
    %v4319 = vunpack.c.l.b16 %v4264
    %v4320 = vunpack.c.l.b16 %v4265
    %v4321 = vunpack.c.l.b16 %v4266
    %v4322 = vunpack.c.l.b16 %v4267
    %v4323 = vpack.c.b16 %v4300, %v4299
    %v4324 = vpack.c.b16 %v4302, %v4301
    %v4325 = vpack.c.b16 %v4304, %v4303
    %v4326 = vpack.c.b16 %v4306, %v4305
    %v4327 = vpack.c.b16 %v4308, %v4307
    %v4328 = vpack.c.b16 %v4310, %v4309
    %v4329 = vpack.c.b16 %v4312, %v4311
    %v4330 = vpack.c.b16 %v4314, %v4313
    %v4331 = vpack.c.b16 %v4316, %v4315
    %v4332 = vpack.c.b16 %v4318, %v4317
    %v4333 = vpack.c.b16 %v4320, %v4319
    %v4334 = vpack.c.b16 %v4322, %v4321
    %v4348 = vsel %vm227, %v4243, 0
    %4350 = vmatprep.subr.bf16.mxu0 0
    %4351 = vmatpush1.bf16.msra.mxu0 %v4323
    %4352 = vmatprep.subr.bf16.mxu0 0
    %4353 = vmatpush1.bf16.msra.mxu0 %v4324
    %4354 = vmatprep.subr.bf16.mxu0 0
    %4355 = vmatpush1.bf16.msra.mxu0 %v4325
    %4356 = vmatprep.subr.bf16.mxu0 0
    %4357 = vmatpush1.bf16.msra.mxu0 %v4326
    %4358 = vmatprep.subr.bf16.mxu0 0
    %4359 = vmatpush1.bf16.msra.mxu0 %v4327
    %4360 = vmatprep.subr.bf16.mxu0 0
    %4361 = vmatpush1.bf16.msra.mxu0 %v4328
    %4362 = vmatprep.subr.bf16.mxu0 0
    %4363 = vmatpush1.bf16.msra.mxu0 %v4329
    %4364 = vmatprep.subr.bf16.mxu0 0
    %4365 = vmatpush1.bf16.msra.mxu0 %v4330
    %4366 = vmatprep.subr.bf16.mxu0 0
    %4367 = vmatpush1.bf16.msra.mxu0 %v4331
    %4368 = vmatprep.subr.bf16.mxu0 0
    %4369 = vmatpush1.bf16.msra.mxu0 %v4332
    %4370 = vmatprep.subr.bf16.mxu0 0
    %4371 = vmatpush1.bf16.msra.mxu0 %v4333
    %4372 = vmatprep.subr.bf16.mxu0 0
    %4373 = vmatpush1.bf16.msra.mxu0 %v4334
    %4374 = vmatprep.subr.bf16.mxu0 0
    %4375 = vmatpush1.bf16.msra.mxu0 0
    %4376 = vmatprep.subr.bf16.mxu0 0
    %4377 = vmatpush1.bf16.msra.mxu0 0
    %4378 = vmatprep.subr.bf16.mxu0 0
    %4379 = vmatpush1.bf16.msra.mxu0 0
    %4380 = vmatprep.subr.bf16.mxu0 0
    %4381 = vmatpush1.bf16.msra.mxu0 0
    %4382 = vmatprep.mubr.bf16.mxu0 %v4348
    %4383 = vmatmul.mubr.bf16.gmra.mrb[0].mxu0 %v4242
    %v4384 = vpop.f32.mrb[0].mxu0
    %v4385 = vadd.f32 %v4273, %v4384
    %v4386 = vpop.f32.mrb[0].mxu0
    %v4387 = vpop.f32.mrb[0].mxu0
    %v4388 = vpop.f32.mrb[0].mxu0
    %4389 = vdwg.mxu0
    %4390 = vst [vmem:[#allocation10] sm:$0xff] %v4385
    // Predicated region
    $region78: #{tpu_custom_call.1} parent=1 // pred_check
      _
    $region79: #{tpu_custom_call.1} parent=1 // pred_check_branch
      %4392 = sbr.rel (0) target = $region81
    $region80: #{tpu_custom_call.1} parent=1 // pred_region
      %s4394 = ssub.s32 128, 128
      %4395 = vsyncadd [#allocation4], %s4394
      %s4397 = sshll.u32 [#allocation10], 4
      %s4398 = int_to_ptr.vmem [resolvable:$true] %s4397
      %4400 = dma.vmem_to_hbm [thread:$0]  %s4398, 128, %s15, [#allocation4]
    $region81: #{tpu_custom_call.1} parent=1 // pred_fallthru
      _
    // Predicated region
    $region82: #{tpu_custom_call.1} parent=1 // pred_check
      _
    $region83: #{tpu_custom_call.1} parent=1 // pred_check_branch
      %4402 = sbr.rel (0) target = $region85
    $region84: #{tpu_custom_call.1} parent=1 // pred_region
      %4403 = dma.done [#allocation4], 128
    $region85: #{tpu_custom_call.1} parent=1 // pred_fallthru
      _
    %4404 = vsyncpa [#allocation3], 1
    %4405 = vsyncpa [#allocation6], 1
    %4406 = vsyncpa [#allocation9], 1
    %4407 = vsyncpa [#allocation4], 1

// kernel: tpu_custom_call.1
$region0: #{tpu_custom_call.1}
  #allocation0 [shape = 'u32[]', space=smem, size = 0x4, offset = 0x4, fixed_abs, tag = 'smem constant byte address 0x4 - core index']
  #allocation1 [shape = 'u32[144,128]{1,0:T(1,128)}', space=vmem, size = 0x12000, scoped, tag = 'internal scratch']
  %s0 = inlined_call_operand.vmem [shape: f32[8,64], index: 0, kind: input, shape index: {}]
  %s1 = inlined_call_operand.vmem [shape: bf16[64,512], index: 1, kind: input, shape index: {}]
  %s2 = inlined_call_operand.vmem [shape: f32[1,512], index: 2, kind: input, shape index: {}]
  %s3 = inlined_call_operand.hbm [shape: bf16[512,1024], index: 3, kind: input, shape index: {}]
  %s4 = inlined_call_operand.vmem [shape: f32[1,1024], index: 4, kind: input, shape index: {}]
  %s5 = inlined_call_operand.vmem [shape: bf16[4,256,128], index: 5, kind: input, shape index: {}]
  %s6 = inlined_call_operand.vmem [shape: f32[1,512], index: 6, kind: input, shape index: {}]
  %s7 = inlined_call_operand.hbm [shape: bf16[512,256], index: 7, kind: input, shape index: {}]
  %s8 = inlined_call_operand.vmem [shape: f32[1,256], index: 8, kind: input, shape index: {}]
  %s9 = inlined_call_operand.hbm [shape: bf16[256,384], index: 9, kind: input, shape index: {}]
  %s10 = inlined_call_operand.vmem [shape: f32[1,384], index: 10, kind: input, shape index: {}]
  %s11 = inlined_call_operand.vmem [shape: bf16[384,192], index: 11, kind: input, shape index: {}]
  %s12 = inlined_call_operand.vmem [shape: f32[1,192], index: 12, kind: input, shape index: {}]
  %s13 = inlined_call_operand.hbm [shape: bf16[192,128], index: 13, kind: input, shape index: {}]
  %s14 = inlined_call_operand.vmem [shape: f32[1,128], index: 14, kind: input, shape index: {}]
  %s15 = inlined_call_operand.hbm [shape: f32[8,128], index: 15, kind: output, shape index: {}]
  %s16 = sld [smem:[#allocation0]]
  $region86: #{tpu_custom_call.1} parent=0
    _
  %s18 = ssub.s32 1, %s16
  %s19 = scalar_select 0, %s18, %s16
  $region1: #{tpu_custom_call.1} parent=0
    #allocation2 [shape = 'u8[1048576]{0}', space=vmem, size = 0x100000, scoped, tag = 'input window, operand 3, single buffered']
    #allocation3 [shape = 's32[1]{0}', space=sflag, size = 0x4, scoped, tag = 'scoped memory for tpu_custom_call.1']
    #allocation4 [shape = 's32[1]{0}', space=sflag, size = 0x4, scoped, tag = 'scoped memory for tpu_custom_call.1']
    #allocation5 [shape = 'u8[262144]{0}', space=vmem, size = 0x40000, scoped, tag = 'input window, operand 7, single buffered']
    #allocation6 [shape = 's32[1]{0}', space=sflag, size = 0x4, scoped, tag = 'scoped memory for tpu_custom_call.1']
    #allocation7 [shape = 'u8[196608]{0}', space=vmem, size = 0x30000, scoped, tag = 'input window, operand 9, single buffered']
    #allocation8 [shape = 'u8[49152]{0}', space=vmem, size = 0xc000, scoped, tag = 'input window, operand 13, single buffered']
    #allocation9 [shape = 's32[1]{0}', space=sflag, size = 0x4, scoped, tag = 'scoped memory for tpu_custom_call.1']
    #allocation10 [shape = 'u8[4096]{0}', space=vmem, size = 0x1000, scoped, tag = 'output window, operand 0, single buffered']
    %20 = vsyncpa [#allocation3], 0
    %21 = vsyncpa [#allocation6], 0
    %22 = vsyncpa [#allocation9], 0
    %23 = vsyncpa [#allocation4], 0
    // Predicated region
    $region2: #{tpu_custom_call.1} parent=1 // pred_check
      _
    $region3: #{tpu_custom_call.1} parent=1 // pred_check_branch
      %25 = sbr.rel (0) target = $region5
    $region4: #{tpu_custom_call.1} parent=1 // pred_region
      _
    $region5: #{tpu_custom_call.1} parent=1 // pred_fallthru
      _
    // Predicated region
    $region6: #{tpu_custom_call.1} parent=1 // pred_check
      _
    $region7: #{tpu_custom_call.1} parent=1 // pred_check_branch
      %27 = sbr.rel (0) target = $region9
    $region8: #{tpu_custom_call.1} parent=1 // pred_region
      _
    $region9: #{tpu_custom_call.1} parent=1 // pred_fallthru
      _
    // Predicated region
    $region10: #{tpu_custom_call.1} parent=1 // pred_check
      _
    $region11: #{tpu_custom_call.1} parent=1 // pred_check_branch
      %29 = sbr.rel (0) target = $region13
    $region12: #{tpu_custom_call.1} parent=1 // pred_region
      _
    $region13: #{tpu_custom_call.1} parent=1 // pred_fallthru
      _
    // Predicated region
    $region14: #{tpu_custom_call.1} parent=1 // pred_check
      _
    $region15: #{tpu_custom_call.1} parent=1 // pred_check_branch
      %31 = sbr.rel (0) target = $region17
    $region16: #{tpu_custom_call.1} parent=1 // pred_region
      %s33 = ssub.s32 32768, 32768
      %34 = vsyncadd [#allocation3], %s33
      %s35 = sshll.u32 [#allocation2], 4
      %s36 = int_to_ptr.vmem [resolvable:$true] %s35
      %41 = dma.hbm_to_vmem [thread:$0]  %s3, 32768, %s36, [#allocation3], 512, 512, 32
    $region17: #{tpu_custom_call.1} parent=1 // pred_fallthru
      _
    // Predicated region
    $region18: #{tpu_custom_call.1} parent=1 // pred_check
      _
    $region19: #{tpu_custom_call.1} parent=1 // pred_check_branch
      %43 = sbr.rel (0) target = $region21
    $region20: #{tpu_custom_call.1} parent=1 // pred_region
      _
    $region21: #{tpu_custom_call.1} parent=1 // pred_fallthru
      _
    // Predicated region
    $region22: #{tpu_custom_call.1} parent=1 // pred_check
      _
    $region23: #{tpu_custom_call.1} parent=1 // pred_check_branch
      %45 = sbr.rel (0) target = $region25
    $region24: #{tpu_custom_call.1} parent=1 // pred_region
      _
    $region25: #{tpu_custom_call.1} parent=1 // pred_fallthru
      _
    // Predicated region
    $region26: #{tpu_custom_call.1} parent=1 // pred_check
      _
    $region27: #{tpu_custom_call.1} parent=1 // pred_check_branch
      %47 = sbr.rel (0) target = $region29
    $region28: #{tpu_custom_call.1} parent=1 // pred_region
      _
    $region29: #{tpu_custom_call.1} parent=1 // pred_fallthru
      _
    // Predicated region
    $region30: #{tpu_custom_call.1} parent=1 // pred_check
      _
    $region31: #{tpu_custom_call.1} parent=1 // pred_check_branch
      %49 = sbr.rel (0) target = $region33
    $region32: #{tpu_custom_call.1} parent=1 // pred_region
      %s51 = ssub.s32 8192, 8192
      %52 = vsyncadd [#allocation6], %s51
      %s53 = sshll.u32 [#allocation5], 4
      %s54 = int_to_ptr.vmem [resolvable:$true] %s53
      %59 = dma.hbm_to_vmem [thread:$0]  %s7, 8192, %s54, [#allocation6], 128, 128, 8
    $region33: #{tpu_custom_call.1} parent=1 // pred_fallthru
      _
    // Predicated region
    $region34: #{tpu_custom_call.1} parent=1 // pred_check
      _
    $region35: #{tpu_custom_call.1} parent=1 // pred_check_branch
      %61 = sbr.rel (0) target = $region37
    $region36: #{tpu_custom_call.1} parent=1 // pred_region
      _
    $region37: #{tpu_custom_call.1} parent=1 // pred_fallthru
      _
    // Predicated region
    $region38: #{tpu_custom_call.1} parent=1 // pred_check
      _
    $region39: #{tpu_custom_call.1} parent=1 // pred_check_branch
      %63 = sbr.rel (0) target = $region41
    $region40: #{tpu_custom_call.1} parent=1 // pred_region
      %s65 = ssub.s32 6144, 6144
      %66 = vsyncadd [#allocation6], %s65
      %s67 = sshll.u32 [#allocation7], 4
      %s68 = int_to_ptr.vmem [resolvable:$true] %s67
      %73 = dma.hbm_to_vmem [thread:$0]  %s9, 6144, %s68, [#allocation6], 192, 192, 12
    $region41: #{tpu_custom_call.1} parent=1 // pred_fallthru
      _
    // Predicated region
    $region42: #{tpu_custom_call.1} parent=1 // pred_check
      _
    $region43: #{tpu_custom_call.1} parent=1 // pred_check_branch
      %75 = sbr.rel (0) target = $region45
    $region44: #{tpu_custom_call.1} parent=1 // pred_region
      _
    $region45: #{tpu_custom_call.1} parent=1 // pred_fallthru
      _
    // Predicated region
    $region46: #{tpu_custom_call.1} parent=1 // pred_check
      _
    $region47: #{tpu_custom_call.1} parent=1 // pred_check_branch
      %77 = sbr.rel (0) target = $region49
    $region48: #{tpu_custom_call.1} parent=1 // pred_region
      _
    $region49: #{tpu_custom_call.1} parent=1 // pred_fallthru
      _
    // Predicated region
    $region50: #{tpu_custom_call.1} parent=1 // pred_check
      _
    $region51: #{tpu_custom_call.1} parent=1 // pred_check_branch
      %79 = sbr.rel (0) target = $region53
    $region52: #{tpu_custom_call.1} parent=1 // pred_region
      _
    $region53: #{tpu_custom_call.1} parent=1 // pred_fallthru
      _
    // Predicated region
    $region54: #{tpu_custom_call.1} parent=1 // pred_check
      _
    $region55: #{tpu_custom_call.1} parent=1 // pred_check_branch
      %81 = sbr.rel (0) target = $region57
    $region56: #{tpu_custom_call.1} parent=1 // pred_region
      %s83 = ssub.s32 1536, 1536
      %84 = vsyncadd [#allocation9], %s83
      %s85 = sshll.u32 [#allocation8], 4
      %s86 = int_to_ptr.vmem [resolvable:$true] %s85
      %91 = dma.hbm_to_vmem [thread:$0]  %s13, 1536, %s86, [#allocation9], 64, 64, 4
    $region57: #{tpu_custom_call.1} parent=1 // pred_fallthru
      _
    // Predicated region
    $region58: #{tpu_custom_call.1} parent=1 // pred_check
      _
    $region59: #{tpu_custom_call.1} parent=1 // pred_check_branch
      %93 = sbr.rel (0) target = $region61
    $region60: #{tpu_custom_call.1} parent=1 // pred_region
      _
    $region61: #{tpu_custom_call.1} parent=1 // pred_fallthru
      _
    // Predicated region
    $region62: #{tpu_custom_call.1} parent=1 // pred_check
      _
    $region63: #{tpu_custom_call.1} parent=1 // pred_check_branch
      %95 = sbr.rel (0) target = $region65
    $region64: #{tpu_custom_call.1} parent=1 // pred_region
      %96 = dma.done [#allocation3], 32768
    $region65: #{tpu_custom_call.1} parent=1 // pred_fallthru
      _
    // Predicated region
    $region66: #{tpu_custom_call.1} parent=1 // pred_check
      _
    $region67: #{tpu_custom_call.1} parent=1 // pred_check_branch
      %98 = sbr.rel (0) target = $region69
    $region68: #{tpu_custom_call.1} parent=1 // pred_region
      %99 = dma.done [#allocation6], 8192
    $region69: #{tpu_custom_call.1} parent=1 // pred_fallthru
      _
    // Predicated region
    $region70: #{tpu_custom_call.1} parent=1 // pred_check
      _
    $region71: #{tpu_custom_call.1} parent=1 // pred_check_branch
      %101 = sbr.rel (0) target = $region73
    $region72: #{tpu_custom_call.1} parent=1 // pred_region
      %102 = dma.done [#allocation6], 6144
    $region73: #{tpu_custom_call.1} parent=1 // pred_fallthru
      _
    // Predicated region
    $region74: #{tpu_custom_call.1} parent=1 // pred_check
      _
    $region75: #{tpu_custom_call.1} parent=1 // pred_check_branch
      %104 = sbr.rel (0) target = $region77
    $region76: #{tpu_custom_call.1} parent=1 // pred_region
      %105 = dma.done [#allocation9], 1536
    $region77: #{tpu_custom_call.1} parent=1 // pred_fallthru
      _
    %v107 = vld [vmem:[%s0] sm:$0xff]
    %v108 = vpack.c.bf16 %v107, %v107
    %v109 = vld [vmem:[%s1] sm:$0xff]
    %v110 = vld [vmem:[%s1 + $0x8] sm:$0xff]
    %v111 = vld [vmem:[%s1 + $0x10] sm:$0xff]
    %v112 = vld [vmem:[%s1 + $0x18] sm:$0xff]
    %v113 = vld [vmem:[%s1 + $0x20] sm:$0xff]
    %v114 = vld [vmem:[%s1 + $0x28] sm:$0xff]
    %v115 = vld [vmem:[%s1 + $0x30] sm:$0xff]
    %v116 = vld [vmem:[%s1 + $0x38] sm:$0xff]
    %v117 = vld [vmem:[%s1 + $0x40] sm:$0xff]
    %v118 = vld [vmem:[%s1 + $0x48] sm:$0xff]
    %v119 = vld [vmem:[%s1 + $0x50] sm:$0xff]
    %v120 = vld [vmem:[%s1 + $0x58] sm:$0xff]
    %v121 = vld [vmem:[%s1 + $0x60] sm:$0xff]
    %v122 = vld [vmem:[%s1 + $0x68] sm:$0xff]
    %v123 = vld [vmem:[%s1 + $0x70] sm:$0xff]
    %v124 = vld [vmem:[%s1 + $0x78] sm:$0xff]
    %v125 = vld [vmem:[%s2] sm:$0xf]
    %v127 = vlaneseq
    %v128 = vshrl.u32 %v127, 7
    %v129 = vsub.s32 0, %v128
    %v130 = vrot.slane %v125, %v129
    %v131 = vlaneseq
    %v132 = vshrl.u32 %v131, 7
    %v133 = vsub.s32 1, %v132
    %v134 = vrot.slane %v125, %v133
    %v135 = vlaneseq
    %v136 = vshrl.u32 %v135, 7
    %v137 = vsub.s32 2, %v136
    %v138 = vrot.slane %v125, %v137
    %v139 = vlaneseq
    %v140 = vshrl.u32 %v139, 7
    %v141 = vsub.s32 3, %v140
    %v142 = vrot.slane %v125, %v141
    %v163 = vunpack.c.l.b16 %v109
    %v164 = vunpack.c.h.b16 %v109
    %v165 = vunpack.c.l.b16 %v110
    %v166 = vunpack.c.h.b16 %v110
    %v167 = vunpack.c.l.b16 %v111
    %v168 = vunpack.c.h.b16 %v111
    %v169 = vunpack.c.l.b16 %v112
    %v170 = vunpack.c.h.b16 %v112
    %v171 = vunpack.c.l.b16 %v113
    %v172 = vunpack.c.h.b16 %v113
    %v173 = vunpack.c.l.b16 %v114
    %v174 = vunpack.c.h.b16 %v114
    %v175 = vunpack.c.l.b16 %v115
    %v176 = vunpack.c.h.b16 %v115
    %v177 = vunpack.c.l.b16 %v116
    %v178 = vunpack.c.h.b16 %v116
    %v179 = vunpack.c.l.b16 %v117
    %v180 = vunpack.c.h.b16 %v117
    %v181 = vunpack.c.l.b16 %v118
    %v182 = vunpack.c.h.b16 %v118
    %v183 = vunpack.c.l.b16 %v119
    %v184 = vunpack.c.h.b16 %v119
    %v185 = vunpack.c.l.b16 %v120
    %v186 = vunpack.c.h.b16 %v120
    %v187 = vunpack.c.l.b16 %v121
    %v188 = vunpack.c.h.b16 %v121
    %v189 = vunpack.c.l.b16 %v122
    %v190 = vunpack.c.h.b16 %v122
    %v191 = vunpack.c.l.b16 %v123
    %v192 = vunpack.c.h.b16 %v123
    %v193 = vunpack.c.l.b16 %v124
    %v194 = vunpack.c.h.b16 %v124
    %v195 = vpack.c.b16 %v167, %v163
    %v196 = vpack.c.b16 %v168, %v164
    %v197 = vpack.c.b16 %v169, %v165
    %v198 = vpack.c.b16 %v170, %v166
    %v199 = vpack.c.b16 %v175, %v171
    %v200 = vpack.c.b16 %v176, %v172
    %v201 = vpack.c.b16 %v177, %v173
    %v202 = vpack.c.b16 %v178, %v174
    %v203 = vpack.c.b16 %v183, %v179
    %v204 = vpack.c.b16 %v184, %v180
    %v205 = vpack.c.b16 %v185, %v181
    %v206 = vpack.c.b16 %v186, %v182
    %v207 = vpack.c.b16 %v191, %v187
    %v208 = vpack.c.b16 %v192, %v188
    %v209 = vpack.c.b16 %v193, %v189
    %v210 = vpack.c.b16 %v194, %v190
    %vm227 = vcmask 523264
    %v229 = vsel %vm227, %v108, 0
    %231 = vmatprep.subr.bf16.mxu0 %v196
    %232 = vmatpush1.bf16.msra.mxu0 %v195
    %233 = vmatprep.subr.bf16.mxu0 %v200
    %234 = vmatpush1.bf16.msra.mxu0 %v199
    %235 = vmatprep.subr.bf16.mxu0 %v204
    %236 = vmatpush1.bf16.msra.mxu0 %v203
    %237 = vmatprep.subr.bf16.mxu0 %v208
    %238 = vmatpush1.bf16.msra.mxu0 %v207
    %239 = vmatprep.subr.bf16.mxu0 0
    %240 = vmatpush1.bf16.msra.mxu0 0
    %241 = vmatprep.subr.bf16.mxu0 0
    %242 = vmatpush1.bf16.msra.mxu0 0
    %243 = vmatprep.subr.bf16.mxu0 0
    %244 = vmatpush1.bf16.msra.mxu0 0
    %245 = vmatprep.subr.bf16.mxu0 0
    %246 = vmatpush1.bf16.msra.mxu0 0
    %247 = vmatprep.subr.bf16.mxu0 0
    %248 = vmatpush1.bf16.msra.mxu0 0
    %249 = vmatprep.subr.bf16.mxu0 0
    %250 = vmatpush1.bf16.msra.mxu0 0
    %251 = vmatprep.subr.bf16.mxu0 0
    %252 = vmatpush1.bf16.msra.mxu0 0
    %253 = vmatprep.subr.bf16.mxu0 0
    %254 = vmatpush1.bf16.msra.mxu0 0
    %255 = vmatprep.subr.bf16.mxu0 0
    %256 = vmatpush1.bf16.msra.mxu0 0
    %257 = vmatprep.subr.bf16.mxu0 0
    %258 = vmatpush1.bf16.msra.mxu0 0
    %259 = vmatprep.subr.bf16.mxu0 0
    %260 = vmatpush1.bf16.msra.mxu0 0
    %261 = vmatprep.subr.bf16.mxu0 0
    %262 = vmatpush1.bf16.msra.mxu0 0
    %263 = vmatprep.mubr.bf16.mxu0 0
    %264 = vmatmul.mubr.bf16.gmra.mrb[0].mxu0 %v229
    %v265 = vpop.f32.mrb[0].mxu0
    %v266 = vadd.f32 %v130, %v265
    %v267 = vpop.f32.mrb[0].mxu0
    %v268 = vadd.f32 %v134, %v267
    %v269 = vpop.f32.mrb[0].mxu0
    %v270 = vpop.f32.mrb[0].mxu0
    %271 = vdwg.mxu0
    %272 = vmatprep.subr.bf16.mxu0 %v198
    %273 = vmatpush1.bf16.msra.mxu0 %v197
    %274 = vmatprep.subr.bf16.mxu0 %v202
    %275 = vmatpush1.bf16.msra.mxu0 %v201
    %276 = vmatprep.subr.bf16.mxu0 %v206
    %277 = vmatpush1.bf16.msra.mxu0 %v205
    %278 = vmatprep.subr.bf16.mxu0 %v210
    %279 = vmatpush1.bf16.msra.mxu0 %v209
    %280 = vmatprep.subr.bf16.mxu0 0
    %281 = vmatpush1.bf16.msra.mxu0 0
    %282 = vmatprep.subr.bf16.mxu0 0
    %283 = vmatpush1.bf16.msra.mxu0 0
    %284 = vmatprep.subr.bf16.mxu0 0
    %285 = vmatpush1.bf16.msra.mxu0 0
    %286 = vmatprep.subr.bf16.mxu0 0
    %287 = vmatpush1.bf16.msra.mxu0 0
    %288 = vmatprep.subr.bf16.mxu0 0
    %289 = vmatpush1.bf16.msra.mxu0 0
    %290 = vmatprep.subr.bf16.mxu0 0
    %291 = vmatpush1.bf16.msra.mxu0 0
    %292 = vmatprep.subr.bf16.mxu0 0
    %293 = vmatpush1.bf16.msra.mxu0 0
    %294 = vmatprep.subr.bf16.mxu0 0
    %295 = vmatpush1.bf16.msra.mxu0 0
    %296 = vmatprep.subr.bf16.mxu0 0
    %297 = vmatpush1.bf16.msra.mxu0 0
    %298 = vmatprep.subr.bf16.mxu0 0
    %299 = vmatpush1.bf16.msra.mxu0 0
    %300 = vmatprep.subr.bf16.mxu0 0
    %301 = vmatpush1.bf16.msra.mxu0 0
    %302 = vmatprep.subr.bf16.mxu0 0
    %303 = vmatpush1.bf16.msra.mxu0 0
    %304 = vmatprep.mubr.bf16.mxu0 0
    %305 = vmatmul.mubr.bf16.gmra.mrb[0].mxu0 %v229
    %v306 = vpop.f32.mrb[0].mxu0
    %v307 = vadd.f32 %v138, %v306
    %v308 = vpop.f32.mrb[0].mxu0
    %v309 = vadd.f32 %v142, %v308
    %v310 = vpop.f32.mrb[0].mxu0
    %v311 = vpop.f32.mrb[0].mxu0
    %312 = vdwg.mxu0
    %v313 = vmax.f32 %v266, 0.0
    %v314 = vmax.f32 %v268, 0.0
    %v315 = vmax.f32 %v307, 0.0
    %v316 = vmax.f32 %v309, 0.0
    %v317 = vpack.c.bf16 %v313, %v313
    %v318 = vpack.c.bf16 %v314, %v314
    %v319 = vpack.c.bf16 %v315, %v315
    %v320 = vpack.c.bf16 %v316, %v316
    %v321 = vld [vmem:[#allocation2] sm:$0xff]
    %v322 = vld [vmem:[#allocation2 + $0x8] sm:$0xff]
    %v323 = vld [vmem:[#allocation2 + $0x10] sm:$0xff]
    %v324 = vld [vmem:[#allocation2 + $0x18] sm:$0xff]
    %v325 = vld [vmem:[#allocation2 + $0x20] sm:$0xff]
    %v326 = vld [vmem:[#allocation2 + $0x28] sm:$0xff]
    %v327 = vld [vmem:[#allocation2 + $0x30] sm:$0xff]
    %v328 = vld [vmem:[#allocation2 + $0x38] sm:$0xff]
    %v329 = vld [vmem:[#allocation2 + $0x40] sm:$0xff]
    %v330 = vld [vmem:[#allocation2 + $0x48] sm:$0xff]
    %v331 = vld [vmem:[#allocation2 + $0x50] sm:$0xff]
    %v332 = vld [vmem:[#allocation2 + $0x58] sm:$0xff]
    %v333 = vld [vmem:[#allocation2 + $0x60] sm:$0xff]
    %v334 = vld [vmem:[#allocation2 + $0x68] sm:$0xff]
    %v335 = vld [vmem:[#allocation2 + $0x70] sm:$0xff]
    %v336 = vld [vmem:[#allocation2 + $0x78] sm:$0xff]
    %v337 = vld [vmem:[#allocation2 + $0x80] sm:$0xff]
    %v338 = vld [vmem:[#allocation2 + $0x88] sm:$0xff]
    %v339 = vld [vmem:[#allocation2 + $0x90] sm:$0xff]
    %v340 = vld [vmem:[#allocation2 + $0x98] sm:$0xff]
    %v341 = vld [vmem:[#allocation2 + $0xa0] sm:$0xff]
    %v342 = vld [vmem:[#allocation2 + $0xa8] sm:$0xff]
    %v343 = vld [vmem:[#allocation2 + $0xb0] sm:$0xff]
    %v344 = vld [vmem:[#allocation2 + $0xb8] sm:$0xff]
    %v345 = vld [vmem:[#allocation2 + $0xc0] sm:$0xff]
    %v346 = vld [vmem:[#allocation2 + $0xc8] sm:$0xff]
    %v347 = vld [vmem:[#allocation2 + $0xd0] sm:$0xff]
    %v348 = vld [vmem:[#allocation2 + $0xd8] sm:$0xff]
    %v349 = vld [vmem:[#allocation2 + $0xe0] sm:$0xff]
    %v350 = vld [vmem:[#allocation2 + $0xe8] sm:$0xff]
    %v351 = vld [vmem:[#allocation2 + $0xf0] sm:$0xff]
    %v352 = vld [vmem:[#allocation2 + $0xf8] sm:$0xff]
    %v353 = vld [vmem:[#allocation2 + $0x100] sm:$0xff]
    %v354 = vld [vmem:[#allocation2 + $0x108] sm:$0xff]
    %v355 = vld [vmem:[#allocation2 + $0x110] sm:$0xff]
    %v356 = vld [vmem:[#allocation2 + $0x118] sm:$0xff]
    %v357 = vld [vmem:[#allocation2 + $0x120] sm:$0xff]
    %v358 = vld [vmem:[#allocation2 + $0x128] sm:$0xff]
    %v359 = vld [vmem:[#allocation2 + $0x130] sm:$0xff]
    %v360 = vld [vmem:[#allocation2 + $0x138] sm:$0xff]
    %v361 = vld [vmem:[#allocation2 + $0x140] sm:$0xff]
    %v362 = vld [vmem:[#allocation2 + $0x148] sm:$0xff]
    %v363 = vld [vmem:[#allocation2 + $0x150] sm:$0xff]
    %v364 = vld [vmem:[#allocation2 + $0x158] sm:$0xff]
    %v365 = vld [vmem:[#allocation2 + $0x160] sm:$0xff]
    %v366 = vld [vmem:[#allocation2 + $0x168] sm:$0xff]
    %v367 = vld [vmem:[#allocation2 + $0x170] sm:$0xff]
    %v368 = vld [vmem:[#allocation2 + $0x178] sm:$0xff]
    %v369 = vld [vmem:[#allocation2 + $0x180] sm:$0xff]
    %v370 = vld [vmem:[#allocation2 + $0x188] sm:$0xff]
    %v371 = vld [vmem:[#allocation2 + $0x190] sm:$0xff]
    %v372 = vld [vmem:[#allocation2 + $0x198] sm:$0xff]
    %v373 = vld [vmem:[#allocation2 + $0x1a0] sm:$0xff]
    %v374 = vld [vmem:[#allocation2 + $0x1a8] sm:$0xff]
    %v375 = vld [vmem:[#allocation2 + $0x1b0] sm:$0xff]
    %v376 = vld [vmem:[#allocation2 + $0x1b8] sm:$0xff]
    %v377 = vld [vmem:[#allocation2 + $0x1c0] sm:$0xff]
    %v378 = vld [vmem:[#allocation2 + $0x1c8] sm:$0xff]
    %v379 = vld [vmem:[#allocation2 + $0x1d0] sm:$0xff]
    %v380 = vld [vmem:[#allocation2 + $0x1d8] sm:$0xff]
    %v381 = vld [vmem:[#allocation2 + $0x1e0] sm:$0xff]
    %v382 = vld [vmem:[#allocation2 + $0x1e8] sm:$0xff]
    %v383 = vld [vmem:[#allocation2 + $0x1f0] sm:$0xff]
    %v384 = vld [vmem:[#allocation2 + $0x1f8] sm:$0xff]
    %v385 = vld [vmem:[#allocation2 + $0x200] sm:$0xff]
    %v386 = vld [vmem:[#allocation2 + $0x208] sm:$0xff]
    %v387 = vld [vmem:[#allocation2 + $0x210] sm:$0xff]
    %v388 = vld [vmem:[#allocation2 + $0x218] sm:$0xff]
    %v389 = vld [vmem:[#allocation2 + $0x220] sm:$0xff]
    %v390 = vld [vmem:[#allocation2 + $0x228] sm:$0xff]
    %v391 = vld [vmem:[#allocation2 + $0x230] sm:$0xff]
    %v392 = vld [vmem:[#allocation2 + $0x238] sm:$0xff]
    %v393 = vld [vmem:[#allocation2 + $0x240] sm:$0xff]
    %v394 = vld [vmem:[#allocation2 + $0x248] sm:$0xff]
    %v395 = vld [vmem:[#allocation2 + $0x250] sm:$0xff]
    %v396 = vld [vmem:[#allocation2 + $0x258] sm:$0xff]
    %v397 = vld [vmem:[#allocation2 + $0x260] sm:$0xff]
    %v398 = vld [vmem:[#allocation2 + $0x268] sm:$0xff]
    %v399 = vld [vmem:[#allocation2 + $0x270] sm:$0xff]
    %v400 = vld [vmem:[#allocation2 + $0x278] sm:$0xff]
    %v401 = vld [vmem:[#allocation2 + $0x280] sm:$0xff]
    %v402 = vld [vmem:[#allocation2 + $0x288] sm:$0xff]
    %v403 = vld [vmem:[#allocation2 + $0x290] sm:$0xff]
    %v404 = vld [vmem:[#allocation2 + $0x298] sm:$0xff]
    %v405 = vld [vmem:[#allocation2 + $0x2a0] sm:$0xff]
    %v406 = vld [vmem:[#allocation2 + $0x2a8] sm:$0xff]
    %v407 = vld [vmem:[#allocation2 + $0x2b0] sm:$0xff]
    %v408 = vld [vmem:[#allocation2 + $0x2b8] sm:$0xff]
    %v409 = vld [vmem:[#allocation2 + $0x2c0] sm:$0xff]
    %v410 = vld [vmem:[#allocation2 + $0x2c8] sm:$0xff]
    %v411 = vld [vmem:[#allocation2 + $0x2d0] sm:$0xff]
    %v412 = vld [vmem:[#allocation2 + $0x2d8] sm:$0xff]
    %v413 = vld [vmem:[#allocation2 + $0x2e0] sm:$0xff]
    %v414 = vld [vmem:[#allocation2 + $0x2e8] sm:$0xff]
    %v415 = vld [vmem:[#allocation2 + $0x2f0] sm:$0xff]
    %v416 = vld [vmem:[#allocation2 + $0x2f8] sm:$0xff]
    %v417 = vld [vmem:[#allocation2 + $0x300] sm:$0xff]
    %v418 = vld [vmem:[#allocation2 + $0x308] sm:$0xff]
    %v419 = vld [vmem:[#allocation2 + $0x310] sm:$0xff]
    %v420 = vld [vmem:[#allocation2 + $0x318] sm:$0xff]
    %v421 = vld [vmem:[#allocation2 + $0x320] sm:$0xff]
    %v422 = vld [vmem:[#allocation2 + $0x328] sm:$0xff]
    %v423 = vld [vmem:[#allocation2 + $0x330] sm:$0xff]
    %v424 = vld [vmem:[#allocation2 + $0x338] sm:$0xff]
    %v425 = vld [vmem:[#allocation2 + $0x340] sm:$0xff]
    %v426 = vld [vmem:[#allocation2 + $0x348] sm:$0xff]
    %v427 = vld [vmem:[#allocation2 + $0x350] sm:$0xff]
    %v428 = vld [vmem:[#allocation2 + $0x358] sm:$0xff]
    %v429 = vld [vmem:[#allocation2 + $0x360] sm:$0xff]
    %v430 = vld [vmem:[#allocation2 + $0x368] sm:$0xff]
    %v431 = vld [vmem:[#allocation2 + $0x370] sm:$0xff]
    %v432 = vld [vmem:[#allocation2 + $0x378] sm:$0xff]
    %v433 = vld [vmem:[#allocation2 + $0x380] sm:$0xff]
    %v434 = vld [vmem:[#allocation2 + $0x388] sm:$0xff]
    %v435 = vld [vmem:[#allocation2 + $0x390] sm:$0xff]
    %v436 = vld [vmem:[#allocation2 + $0x398] sm:$0xff]
    %v437 = vld [vmem:[#allocation2 + $0x3a0] sm:$0xff]
    %v438 = vld [vmem:[#allocation2 + $0x3a8] sm:$0xff]
    %v439 = vld [vmem:[#allocation2 + $0x3b0] sm:$0xff]
    %v440 = vld [vmem:[#allocation2 + $0x3b8] sm:$0xff]
    %v441 = vld [vmem:[#allocation2 + $0x3c0] sm:$0xff]
    %v442 = vld [vmem:[#allocation2 + $0x3c8] sm:$0xff]
    %v443 = vld [vmem:[#allocation2 + $0x3d0] sm:$0xff]
    %v444 = vld [vmem:[#allocation2 + $0x3d8] sm:$0xff]
    %v445 = vld [vmem:[#allocation2 + $0x3e0] sm:$0xff]
    %v446 = vld [vmem:[#allocation2 + $0x3e8] sm:$0xff]
    %v447 = vld [vmem:[#allocation2 + $0x3f0] sm:$0xff]
    %v448 = vld [vmem:[#allocation2 + $0x3f8] sm:$0xff]
    %v449 = vld [vmem:[#allocation2 + $0x400] sm:$0xff]
    %v450 = vld [vmem:[#allocation2 + $0x408] sm:$0xff]
    %v451 = vld [vmem:[#allocation2 + $0x410] sm:$0xff]
    %v452 = vld [vmem:[#allocation2 + $0x418] sm:$0xff]
    %v453 = vld [vmem:[#allocation2 + $0x420] sm:$0xff]
    %v454 = vld [vmem:[#allocation2 + $0x428] sm:$0xff]
    %v455 = vld [vmem:[#allocation2 + $0x430] sm:$0xff]
    %v456 = vld [vmem:[#allocation2 + $0x438] sm:$0xff]
    %v457 = vld [vmem:[#allocation2 + $0x440] sm:$0xff]
    %v458 = vld [vmem:[#allocation2 + $0x448] sm:$0xff]
    %v459 = vld [vmem:[#allocation2 + $0x450] sm:$0xff]
    %v460 = vld [vmem:[#allocation2 + $0x458] sm:$0xff]
    %v461 = vld [vmem:[#allocation2 + $0x460] sm:$0xff]
    %v462 = vld [vmem:[#allocation2 + $0x468] sm:$0xff]
    %v463 = vld [vmem:[#allocation2 + $0x470] sm:$0xff]
    %v464 = vld [vmem:[#allocation2 + $0x478] sm:$0xff]
    %v465 = vld [vmem:[#allocation2 + $0x480] sm:$0xff]
    %v466 = vld [vmem:[#allocation2 + $0x488] sm:$0xff]
    %v467 = vld [vmem:[#allocation2 + $0x490] sm:$0xff]
    %v468 = vld [vmem:[#allocation2 + $0x498] sm:$0xff]
    %v469 = vld [vmem:[#allocation2 + $0x4a0] sm:$0xff]
    %v470 = vld [vmem:[#allocation2 + $0x4a8] sm:$0xff]
    %v471 = vld [vmem:[#allocation2 + $0x4b0] sm:$0xff]
    %v472 = vld [vmem:[#allocation2 + $0x4b8] sm:$0xff]
    %v473 = vld [vmem:[#allocation2 + $0x4c0] sm:$0xff]
    %v474 = vld [vmem:[#allocation2 + $0x4c8] sm:$0xff]
    %v475 = vld [vmem:[#allocation2 + $0x4d0] sm:$0xff]
    %v476 = vld [vmem:[#allocation2 + $0x4d8] sm:$0xff]
    %v477 = vld [vmem:[#allocation2 + $0x4e0] sm:$0xff]
    %v478 = vld [vmem:[#allocation2 + $0x4e8] sm:$0xff]
    %v479 = vld [vmem:[#allocation2 + $0x4f0] sm:$0xff]
    %v480 = vld [vmem:[#allocation2 + $0x4f8] sm:$0xff]
    %v481 = vld [vmem:[#allocation2 + $0x500] sm:$0xff]
    %v482 = vld [vmem:[#allocation2 + $0x508] sm:$0xff]
    %v483 = vld [vmem:[#allocation2 + $0x510] sm:$0xff]
    %v484 = vld [vmem:[#allocation2 + $0x518] sm:$0xff]
    %v485 = vld [vmem:[#allocation2 + $0x520] sm:$0xff]
    %v486 = vld [vmem:[#allocation2 + $0x528] sm:$0xff]
    %v487 = vld [vmem:[#allocation2 + $0x530] sm:$0xff]
    %v488 = vld [vmem:[#allocation2 + $0x538] sm:$0xff]
    %v489 = vld [vmem:[#allocation2 + $0x540] sm:$0xff]
    %v490 = vld [vmem:[#allocation2 + $0x548] sm:$0xff]
    %v491 = vld [vmem:[#allocation2 + $0x550] sm:$0xff]
    %v492 = vld [vmem:[#allocation2 + $0x558] sm:$0xff]
    %v493 = vld [vmem:[#allocation2 + $0x560] sm:$0xff]
    %v494 = vld [vmem:[#allocation2 + $0x568] sm:$0xff]
    %v495 = vld [vmem:[#allocation2 + $0x570] sm:$0xff]
    %v496 = vld [vmem:[#allocation2 + $0x578] sm:$0xff]
    %v497 = vld [vmem:[#allocation2 + $0x580] sm:$0xff]
    %v498 = vld [vmem:[#allocation2 + $0x588] sm:$0xff]
    %v499 = vld [vmem:[#allocation2 + $0x590] sm:$0xff]
    %v500 = vld [vmem:[#allocation2 + $0x598] sm:$0xff]
    %v501 = vld [vmem:[#allocation2 + $0x5a0] sm:$0xff]
    %v502 = vld [vmem:[#allocation2 + $0x5a8] sm:$0xff]
    %v503 = vld [vmem:[#allocation2 + $0x5b0] sm:$0xff]
    %v504 = vld [vmem:[#allocation2 + $0x5b8] sm:$0xff]
    %v505 = vld [vmem:[#allocation2 + $0x5c0] sm:$0xff]
    %v506 = vld [vmem:[#allocation2 + $0x5c8] sm:$0xff]
    %v507 = vld [vmem:[#allocation2 + $0x5d0] sm:$0xff]
    %v508 = vld [vmem:[#allocation2 + $0x5d8] sm:$0xff]
    %v509 = vld [vmem:[#allocation2 + $0x5e0] sm:$0xff]
    %v510 = vld [vmem:[#allocation2 + $0x5e8] sm:$0xff]
    %v511 = vld [vmem:[#allocation2 + $0x5f0] sm:$0xff]
    %v512 = vld [vmem:[#allocation2 + $0x5f8] sm:$0xff]
    %v513 = vld [vmem:[#allocation2 + $0x600] sm:$0xff]
    %v514 = vld [vmem:[#allocation2 + $0x608] sm:$0xff]
    %v515 = vld [vmem:[#allocation2 + $0x610] sm:$0xff]
    %v516 = vld [vmem:[#allocation2 + $0x618] sm:$0xff]
    %v517 = vld [vmem:[#allocation2 + $0x620] sm:$0xff]
    %v518 = vld [vmem:[#allocation2 + $0x628] sm:$0xff]
    %v519 = vld [vmem:[#allocation2 + $0x630] sm:$0xff]
    %v520 = vld [vmem:[#allocation2 + $0x638] sm:$0xff]
    %v521 = vld [vmem:[#allocation2 + $0x640] sm:$0xff]
    %v522 = vld [vmem:[#allocation2 + $0x648] sm:$0xff]
    %v523 = vld [vmem:[#allocation2 + $0x650] sm:$0xff]
    %v524 = vld [vmem:[#allocation2 + $0x658] sm:$0xff]
    %v525 = vld [vmem:[#allocation2 + $0x660] sm:$0xff]
    %v526 = vld [vmem:[#allocation2 + $0x668] sm:$0xff]
    %v527 = vld [vmem:[#allocation2 + $0x670] sm:$0xff]
    %v528 = vld [vmem:[#allocation2 + $0x678] sm:$0xff]
    %v529 = vld [vmem:[#allocation2 + $0x680] sm:$0xff]
    %v530 = vld [vmem:[#allocation2 + $0x688] sm:$0xff]
    %v531 = vld [vmem:[#allocation2 + $0x690] sm:$0xff]
    %v532 = vld [vmem:[#allocation2 + $0x698] sm:$0xff]
    %v533 = vld [vmem:[#allocation2 + $0x6a0] sm:$0xff]
    %v534 = vld [vmem:[#allocation2 + $0x6a8] sm:$0xff]
    %v535 = vld [vmem:[#allocation2 + $0x6b0] sm:$0xff]
    %v536 = vld [vmem:[#allocation2 + $0x6b8] sm:$0xff]
    %v537 = vld [vmem:[#allocation2 + $0x6c0] sm:$0xff]
    %v538 = vld [vmem:[#allocation2 + $0x6c8] sm:$0xff]
    %v539 = vld [vmem:[#allocation2 + $0x6d0] sm:$0xff]
    %v540 = vld [vmem:[#allocation2 + $0x6d8] sm:$0xff]
    %v541 = vld [vmem:[#allocation2 + $0x6e0] sm:$0xff]
    %v542 = vld [vmem:[#allocation2 + $0x6e8] sm:$0xff]
    %v543 = vld [vmem:[#allocation2 + $0x6f0] sm:$0xff]
    %v544 = vld [vmem:[#allocation2 + $0x6f8] sm:$0xff]
    %v545 = vld [vmem:[#allocation2 + $0x700] sm:$0xff]
    %v546 = vld [vmem:[#allocation2 + $0x708] sm:$0xff]
    %v547 = vld [vmem:[#allocation2 + $0x710] sm:$0xff]
    %v548 = vld [vmem:[#allocation2 + $0x718] sm:$0xff]
    %v549 = vld [vmem:[#allocation2 + $0x720] sm:$0xff]
    %v550 = vld [vmem:[#allocation2 + $0x728] sm:$0xff]
    %v551 = vld [vmem:[#allocation2 + $0x730] sm:$0xff]
    %v552 = vld [vmem:[#allocation2 + $0x738] sm:$0xff]
    %v553 = vld [vmem:[#allocation2 + $0x740] sm:$0xff]
    %v554 = vld [vmem:[#allocation2 + $0x748] sm:$0xff]
    %v555 = vld [vmem:[#allocation2 + $0x750] sm:$0xff]
    %v556 = vld [vmem:[#allocation2 + $0x758] sm:$0xff]
    %v557 = vld [vmem:[#allocation2 + $0x760] sm:$0xff]
    %v558 = vld [vmem:[#allocation2 + $0x768] sm:$0xff]
    %v559 = vld [vmem:[#allocation2 + $0x770] sm:$0xff]
    %v560 = vld [vmem:[#allocation2 + $0x778] sm:$0xff]
    %v561 = vld [vmem:[#allocation2 + $0x780] sm:$0xff]
    %v562 = vld [vmem:[#allocation2 + $0x788] sm:$0xff]
    %v563 = vld [vmem:[#allocation2 + $0x790] sm:$0xff]
    %v564 = vld [vmem:[#allocation2 + $0x798] sm:$0xff]
    %v565 = vld [vmem:[#allocation2 + $0x7a0] sm:$0xff]
    %v566 = vld [vmem:[#allocation2 + $0x7a8] sm:$0xff]
    %v567 = vld [vmem:[#allocation2 + $0x7b0] sm:$0xff]
    %v568 = vld [vmem:[#allocation2 + $0x7b8] sm:$0xff]
    %v569 = vld [vmem:[#allocation2 + $0x7c0] sm:$0xff]
    %v570 = vld [vmem:[#allocation2 + $0x7c8] sm:$0xff]
    %v571 = vld [vmem:[#allocation2 + $0x7d0] sm:$0xff]
    %v572 = vld [vmem:[#allocation2 + $0x7d8] sm:$0xff]
    %v573 = vld [vmem:[#allocation2 + $0x7e0] sm:$0xff]
    %v574 = vld [vmem:[#allocation2 + $0x7e8] sm:$0xff]
    %v575 = vld [vmem:[#allocation2 + $0x7f0] sm:$0xff]
    %v576 = vld [vmem:[#allocation2 + $0x7f8] sm:$0xff]
    %v577 = vld [vmem:[%s4] sm:$0xff]
    %v579 = vlaneseq
    %v580 = vshrl.u32 %v579, 7
    %v581 = vsub.s32 0, %v580
    %v582 = vrot.slane %v577, %v581
    %v583 = vlaneseq
    %v584 = vshrl.u32 %v583, 7
    %v585 = vsub.s32 1, %v584
    %v586 = vrot.slane %v577, %v585
    %v587 = vlaneseq
    %v588 = vshrl.u32 %v587, 7
    %v589 = vsub.s32 2, %v588
    %v590 = vrot.slane %v577, %v589
    %v591 = vlaneseq
    %v592 = vshrl.u32 %v591, 7
    %v593 = vsub.s32 3, %v592
    %v594 = vrot.slane %v577, %v593
    %v595 = vlaneseq
    %v596 = vshrl.u32 %v595, 7
    %v597 = vsub.s32 4, %v596
    %v598 = vrot.slane %v577, %v597
    %v599 = vlaneseq
    %v600 = vshrl.u32 %v599, 7
    %v601 = vsub.s32 5, %v600
    %v602 = vrot.slane %v577, %v601
    %v603 = vlaneseq
    %v604 = vshrl.u32 %v603, 7
    %v605 = vsub.s32 6, %v604
    %v606 = vrot.slane %v577, %v605
    %v607 = vlaneseq
    %v608 = vshrl.u32 %v607, 7
    %v609 = vsub.s32 7, %v608
    %v610 = vrot.slane %v577, %v609
    %v875 = vunpack.c.l.b16 %v321
    %v876 = vunpack.c.h.b16 %v321
    %v877 = vunpack.c.l.b16 %v322
    %v878 = vunpack.c.h.b16 %v322
    %v879 = vunpack.c.l.b16 %v323
    %v880 = vunpack.c.h.b16 %v323
    %v881 = vunpack.c.l.b16 %v324
    %v882 = vunpack.c.h.b16 %v324
    %v883 = vunpack.c.l.b16 %v325
    %v884 = vunpack.c.h.b16 %v325
    %v885 = vunpack.c.l.b16 %v326
    %v886 = vunpack.c.h.b16 %v326
    %v887 = vunpack.c.l.b16 %v327
    %v888 = vunpack.c.h.b16 %v327
    %v889 = vunpack.c.l.b16 %v328
    %v890 = vunpack.c.h.b16 %v328
    %v891 = vunpack.c.l.b16 %v329
    %v892 = vunpack.c.h.b16 %v329
    %v893 = vunpack.c.l.b16 %v330
    %v894 = vunpack.c.h.b16 %v330
    %v895 = vunpack.c.l.b16 %v331
    %v896 = vunpack.c.h.b16 %v331
    %v897 = vunpack.c.l.b16 %v332
    %v898 = vunpack.c.h.b16 %v332
    %v899 = vunpack.c.l.b16 %v333
    %v900 = vunpack.c.h.b16 %v333
    %v901 = vunpack.c.l.b16 %v334
    %v902 = vunpack.c.h.b16 %v334
    %v903 = vunpack.c.l.b16 %v335
    %v904 = vunpack.c.h.b16 %v335
    %v905 = vunpack.c.l.b16 %v336
    %v906 = vunpack.c.h.b16 %v336
    %v907 = vunpack.c.l.b16 %v337
    %v908 = vunpack.c.h.b16 %v337
    %v909 = vunpack.c.l.b16 %v338
    %v910 = vunpack.c.h.b16 %v338
    %v911 = vunpack.c.l.b16 %v339
    %v912 = vunpack.c.h.b16 %v339
    %v913 = vunpack.c.l.b16 %v340
    %v914 = vunpack.c.h.b16 %v340
    %v915 = vunpack.c.l.b16 %v341
    %v916 = vunpack.c.h.b16 %v341
    %v917 = vunpack.c.l.b16 %v342
    %v918 = vunpack.c.h.b16 %v342
    %v919 = vunpack.c.l.b16 %v343
    %v920 = vunpack.c.h.b16 %v343
    %v921 = vunpack.c.l.b16 %v344
    %v922 = vunpack.c.h.b16 %v344
    %v923 = vunpack.c.l.b16 %v345
    %v924 = vunpack.c.h.b16 %v345
    %v925 = vunpack.c.l.b16 %v346
    %v926 = vunpack.c.h.b16 %v346
    %v927 = vunpack.c.l.b16 %v347
    %v928 = vunpack.c.h.b16 %v347
    %v929 = vunpack.c.l.b16 %v348
    %v930 = vunpack.c.h.b16 %v348
    %v931 = vunpack.c.l.b16 %v349
    %v932 = vunpack.c.h.b16 %v349
    %v933 = vunpack.c.l.b16 %v350
    %v934 = vunpack.c.h.b16 %v350
    %v935 = vunpack.c.l.b16 %v351
    %v936 = vunpack.c.h.b16 %v351
    %v937 = vunpack.c.l.b16 %v352
    %v938 = vunpack.c.h.b16 %v352
    %v939 = vunpack.c.l.b16 %v353
    %v940 = vunpack.c.h.b16 %v353
    %v941 = vunpack.c.l.b16 %v354
    %v942 = vunpack.c.h.b16 %v354
    %v943 = vunpack.c.l.b16 %v355
    %v944 = vunpack.c.h.b16 %v355
    %v945 = vunpack.c.l.b16 %v356
    %v946 = vunpack.c.h.b16 %v356
    %v947 = vunpack.c.l.b16 %v357
    %v948 = vunpack.c.h.b16 %v357
    %v949 = vunpack.c.l.b16 %v358
    %v950 = vunpack.c.h.b16 %v358
    %v951 = vunpack.c.l.b16 %v359
    %v952 = vunpack.c.h.b16 %v359
    %v953 = vunpack.c.l.b16 %v360
    %v954 = vunpack.c.h.b16 %v360
    %v955 = vunpack.c.l.b16 %v361
    %v956 = vunpack.c.h.b16 %v361
    %v957 = vunpack.c.l.b16 %v362
    %v958 = vunpack.c.h.b16 %v362
    %v959 = vunpack.c.l.b16 %v363
    %v960 = vunpack.c.h.b16 %v363
    %v961 = vunpack.c.l.b16 %v364
    %v962 = vunpack.c.h.b16 %v364
    %v963 = vunpack.c.l.b16 %v365
    %v964 = vunpack.c.h.b16 %v365
    %v965 = vunpack.c.l.b16 %v366
    %v966 = vunpack.c.h.b16 %v366
    %v967 = vunpack.c.l.b16 %v367
    %v968 = vunpack.c.h.b16 %v367
    %v969 = vunpack.c.l.b16 %v368
    %v970 = vunpack.c.h.b16 %v368
    %v971 = vunpack.c.l.b16 %v369
    %v972 = vunpack.c.h.b16 %v369
    %v973 = vunpack.c.l.b16 %v370
    %v974 = vunpack.c.h.b16 %v370
    %v975 = vunpack.c.l.b16 %v371
    %v976 = vunpack.c.h.b16 %v371
    %v977 = vunpack.c.l.b16 %v372
    %v978 = vunpack.c.h.b16 %v372
    %v979 = vunpack.c.l.b16 %v373
    %v980 = vunpack.c.h.b16 %v373
    %v981 = vunpack.c.l.b16 %v374
    %v982 = vunpack.c.h.b16 %v374
    %v983 = vunpack.c.l.b16 %v375
    %v984 = vunpack.c.h.b16 %v375
    %v985 = vunpack.c.l.b16 %v376
    %v986 = vunpack.c.h.b16 %v376
    %v987 = vunpack.c.l.b16 %v377
    %v988 = vunpack.c.h.b16 %v377
    %v989 = vunpack.c.l.b16 %v378
    %v990 = vunpack.c.h.b16 %v378
    %v991 = vunpack.c.l.b16 %v379
    %v992 = vunpack.c.h.b16 %v379
    %v993 = vunpack.c.l.b16 %v380
    %v994 = vunpack.c.h.b16 %v380
    %v995 = vunpack.c.l.b16 %v381
    %v996 = vunpack.c.h.b16 %v381
    %v997 = vunpack.c.l.b16 %v382
    %v998 = vunpack.c.h.b16 %v382
    %v999 = vunpack.c.l.b16 %v383
    %v1000 = vunpack.c.h.b16 %v383
    %v1001 = vunpack.c.l.b16 %v384
    %v1002 = vunpack.c.h.b16 %v384
    %v1003 = vunpack.c.l.b16 %v385
    %v1004 = vunpack.c.h.b16 %v385
    %v1005 = vunpack.c.l.b16 %v386
    %v1006 = vunpack.c.h.b16 %v386
    %v1007 = vunpack.c.l.b16 %v387
    %v1008 = vunpack.c.h.b16 %v387
    %v1009 = vunpack.c.l.b16 %v388
    %v1010 = vunpack.c.h.b16 %v388
    %v1011 = vunpack.c.l.b16 %v389
    %v1012 = vunpack.c.h.b16 %v389
    %v1013 = vunpack.c.l.b16 %v390
    %v1014 = vunpack.c.h.b16 %v390
    %v1015 = vunpack.c.l.b16 %v391
    %v1016 = vunpack.c.h.b16 %v391
    %v1017 = vunpack.c.l.b16 %v392
    %v1018 = vunpack.c.h.b16 %v392
    %v1019 = vunpack.c.l.b16 %v393
    %v1020 = vunpack.c.h.b16 %v393
    %v1021 = vunpack.c.l.b16 %v394
    %v1022 = vunpack.c.h.b16 %v394
    %v1023 = vunpack.c.l.b16 %v395
    %v1024 = vunpack.c.h.b16 %v395
    %v1025 = vunpack.c.l.b16 %v396
    %v1026 = vunpack.c.h.b16 %v396
    %v1027 = vunpack.c.l.b16 %v397
    %v1028 = vunpack.c.h.b16 %v397
    %v1029 = vunpack.c.l.b16 %v398
    %v1030 = vunpack.c.h.b16 %v398
    %v1031 = vunpack.c.l.b16 %v399
    %v1032 = vunpack.c.h.b16 %v399
    %v1033 = vunpack.c.l.b16 %v400
    %v1034 = vunpack.c.h.b16 %v400
    %v1035 = vunpack.c.l.b16 %v401
    %v1036 = vunpack.c.h.b16 %v401
    %v1037 = vunpack.c.l.b16 %v402
    %v1038 = vunpack.c.h.b16 %v402
    %v1039 = vunpack.c.l.b16 %v403
    %v1040 = vunpack.c.h.b16 %v403
    %v1041 = vunpack.c.l.b16 %v404
    %v1042 = vunpack.c.h.b16 %v404
    %v1043 = vunpack.c.l.b16 %v405
    %v1044 = vunpack.c.h.b16 %v405
    %v1045 = vunpack.c.l.b16 %v406
    %v1046 = vunpack.c.h.b16 %v406
    %v1047 = vunpack.c.l.b16 %v407
    %v1048 = vunpack.c.h.b16 %v407
    %v1049 = vunpack.c.l.b16 %v408
    %v1050 = vunpack.c.h.b16 %v408
    %v1051 = vunpack.c.l.b16 %v409
    %v1052 = vunpack.c.h.b16 %v409
    %v1053 = vunpack.c.l.b16 %v410
    %v1054 = vunpack.c.h.b16 %v410
    %v1055 = vunpack.c.l.b16 %v411
    %v1056 = vunpack.c.h.b16 %v411
    %v1057 = vunpack.c.l.b16 %v412
    %v1058 = vunpack.c.h.b16 %v412
    %v1059 = vunpack.c.l.b16 %v413
    %v1060 = vunpack.c.h.b16 %v413
    %v1061 = vunpack.c.l.b16 %v414
    %v1062 = vunpack.c.h.b16 %v414
    %v1063 = vunpack.c.l.b16 %v415
    %v1064 = vunpack.c.h.b16 %v415
    %v1065 = vunpack.c.l.b16 %v416
    %v1066 = vunpack.c.h.b16 %v416
    %v1067 = vunpack.c.l.b16 %v417
    %v1068 = vunpack.c.h.b16 %v417
    %v1069 = vunpack.c.l.b16 %v418
    %v1070 = vunpack.c.h.b16 %v418
    %v1071 = vunpack.c.l.b16 %v419
    %v1072 = vunpack.c.h.b16 %v419
    %v1073 = vunpack.c.l.b16 %v420
    %v1074 = vunpack.c.h.b16 %v420
    %v1075 = vunpack.c.l.b16 %v421
    %v1076 = vunpack.c.h.b16 %v421
    %v1077 = vunpack.c.l.b16 %v422
    %v1078 = vunpack.c.h.b16 %v422
    %v1079 = vunpack.c.l.b16 %v423
    %v1080 = vunpack.c.h.b16 %v423
    %v1081 = vunpack.c.l.b16 %v424
    %v1082 = vunpack.c.h.b16 %v424
    %v1083 = vunpack.c.l.b16 %v425
    %v1084 = vunpack.c.h.b16 %v425
    %v1085 = vunpack.c.l.b16 %v426
    %v1086 = vunpack.c.h.b16 %v426
    %v1087 = vunpack.c.l.b16 %v427
    %v1088 = vunpack.c.h.b16 %v427
    %v1089 = vunpack.c.l.b16 %v428
    %v1090 = vunpack.c.h.b16 %v428
    %v1091 = vunpack.c.l.b16 %v429
    %v1092 = vunpack.c.h.b16 %v429
    %v1093 = vunpack.c.l.b16 %v430
    %v1094 = vunpack.c.h.b16 %v430
    %v1095 = vunpack.c.l.b16 %v431
    %v1096 = vunpack.c.h.b16 %v431
    %v1097 = vunpack.c.l.b16 %v432
    %v1098 = vunpack.c.h.b16 %v432
    %v1099 = vunpack.c.l.b16 %v433
    %v1100 = vunpack.c.h.b16 %v433
    %v1101 = vunpack.c.l.b16 %v434
    %v1102 = vunpack.c.h.b16 %v434
    %v1103 = vunpack.c.l.b16 %v435
    %v1104 = vunpack.c.h.b16 %v435
    %v1105 = vunpack.c.l.b16 %v436
    %v1106 = vunpack.c.h.b16 %v436
    %v1107 = vunpack.c.l.b16 %v437
    %v1108 = vunpack.c.h.b16 %v437
    %v1109 = vunpack.c.l.b16 %v438
    %v1110 = vunpack.c.h.b16 %v438
    %v1111 = vunpack.c.l.b16 %v439
    %v1112 = vunpack.c.h.b16 %v439
    %v1113 = vunpack.c.l.b16 %v440
    %v1114 = vunpack.c.h.b16 %v440
    %v1115 = vunpack.c.l.b16 %v441
    %v1116 = vunpack.c.h.b16 %v441
    %v1117 = vunpack.c.l.b16 %v442
    %v1118 = vunpack.c.h.b16 %v442
    %v1119 = vunpack.c.l.b16 %v443
    %v1120 = vunpack.c.h.b16 %v443
    %v1121 = vunpack.c.l.b16 %v444
    %v1122 = vunpack.c.h.b16 %v444
    %v1123 = vunpack.c.l.b16 %v445
    %v1124 = vunpack.c.h.b16 %v445
    %v1125 = vunpack.c.l.b16 %v446
    %v1126 = vunpack.c.h.b16 %v446
    %v1127 = vunpack.c.l.b16 %v447
    %v1128 = vunpack.c.h.b16 %v447
    %v1129 = vunpack.c.l.b16 %v448
    %v1130 = vunpack.c.h.b16 %v448
    %v1131 = vunpack.c.l.b16 %v449
    %v1132 = vunpack.c.h.b16 %v449
    %v1133 = vunpack.c.l.b16 %v450
    %v1134 = vunpack.c.h.b16 %v450
    %v1135 = vunpack.c.l.b16 %v451
    %v1136 = vunpack.c.h.b16 %v451
    %v1137 = vunpack.c.l.b16 %v452
    %v1138 = vunpack.c.h.b16 %v452
    %v1139 = vunpack.c.l.b16 %v453
    %v1140 = vunpack.c.h.b16 %v453
    %v1141 = vunpack.c.l.b16 %v454
    %v1142 = vunpack.c.h.b16 %v454
    %v1143 = vunpack.c.l.b16 %v455
    %v1144 = vunpack.c.h.b16 %v455
    %v1145 = vunpack.c.l.b16 %v456
    %v1146 = vunpack.c.h.b16 %v456
    %v1147 = vunpack.c.l.b16 %v457
    %v1148 = vunpack.c.h.b16 %v457
    %v1149 = vunpack.c.l.b16 %v458
    %v1150 = vunpack.c.h.b16 %v458
    %v1151 = vunpack.c.l.b16 %v459
    %v1152 = vunpack.c.h.b16 %v459
    %v1153 = vunpack.c.l.b16 %v460
    %v1154 = vunpack.c.h.b16 %v460
    %v1155 = vunpack.c.l.b16 %v461
    %v1156 = vunpack.c.h.b16 %v461
    %v1157 = vunpack.c.l.b16 %v462
    %v1158 = vunpack.c.h.b16 %v462
    %v1159 = vunpack.c.l.b16 %v463
    %v1160 = vunpack.c.h.b16 %v463
    %v1161 = vunpack.c.l.b16 %v464
    %v1162 = vunpack.c.h.b16 %v464
    %v1163 = vunpack.c.l.b16 %v465
    %v1164 = vunpack.c.h.b16 %v465
    %v1165 = vunpack.c.l.b16 %v466
    %v1166 = vunpack.c.h.b16 %v466
    %v1167 = vunpack.c.l.b16 %v467
    %v1168 = vunpack.c.h.b16 %v467
    %v1169 = vunpack.c.l.b16 %v468
    %v1170 = vunpack.c.h.b16 %v468
    %v1171 = vunpack.c.l.b16 %v469
    %v1172 = vunpack.c.h.b16 %v469
    %v1173 = vunpack.c.l.b16 %v470
    %v1174 = vunpack.c.h.b16 %v470
    %v1175 = vunpack.c.l.b16 %v471
    %v1176 = vunpack.c.h.b16 %v471
    %v1177 = vunpack.c.l.b16 %v472
    %v1178 = vunpack.c.h.b16 %v472
    %v1179 = vunpack.c.l.b16 %v473
    %v1180 = vunpack.c.h.b16 %v473
    %v1181 = vunpack.c.l.b16 %v474
    %v1182 = vunpack.c.h.b16 %v474
    %v1183 = vunpack.c.l.b16 %v475
    %v1184 = vunpack.c.h.b16 %v475
    %v1185 = vunpack.c.l.b16 %v476
    %v1186 = vunpack.c.h.b16 %v476
    %v1187 = vunpack.c.l.b16 %v477
    %v1188 = vunpack.c.h.b16 %v477
    %v1189 = vunpack.c.l.b16 %v478
    %v1190 = vunpack.c.h.b16 %v478
    %v1191 = vunpack.c.l.b16 %v479
    %v1192 = vunpack.c.h.b16 %v479
    %v1193 = vunpack.c.l.b16 %v480
    %v1194 = vunpack.c.h.b16 %v480
    %v1195 = vunpack.c.l.b16 %v481
    %v1196 = vunpack.c.h.b16 %v481
    %v1197 = vunpack.c.l.b16 %v482
    %v1198 = vunpack.c.h.b16 %v482
    %v1199 = vunpack.c.l.b16 %v483
    %v1200 = vunpack.c.h.b16 %v483
    %v1201 = vunpack.c.l.b16 %v484
    %v1202 = vunpack.c.h.b16 %v484
    %v1203 = vunpack.c.l.b16 %v485
    %v1204 = vunpack.c.h.b16 %v485
    %v1205 = vunpack.c.l.b16 %v486
    %v1206 = vunpack.c.h.b16 %v486
    %v1207 = vunpack.c.l.b16 %v487
    %v1208 = vunpack.c.h.b16 %v487
    %v1209 = vunpack.c.l.b16 %v488
    %v1210 = vunpack.c.h.b16 %v488
    %v1211 = vunpack.c.l.b16 %v489
    %v1212 = vunpack.c.h.b16 %v489
    %v1213 = vunpack.c.l.b16 %v490
    %v1214 = vunpack.c.h.b16 %v490
    %v1215 = vunpack.c.l.b16 %v491
    %v1216 = vunpack.c.h.b16 %v491
    %v1217 = vunpack.c.l.b16 %v492
    %v1218 = vunpack.c.h.b16 %v492
    %v1219 = vunpack.c.l.b16 %v493
    %v1220 = vunpack.c.h.b16 %v493
    %v1221 = vunpack.c.l.b16 %v494
    %v1222 = vunpack.c.h.b16 %v494
    %v1223 = vunpack.c.l.b16 %v495
    %v1224 = vunpack.c.h.b16 %v495
    %v1225 = vunpack.c.l.b16 %v496
    %v1226 = vunpack.c.h.b16 %v496
    %v1227 = vunpack.c.l.b16 %v497
    %v1228 = vunpack.c.h.b16 %v497
    %v1229 = vunpack.c.l.b16 %v498
    %v1230 = vunpack.c.h.b16 %v498
    %v1231 = vunpack.c.l.b16 %v499
    %v1232 = vunpack.c.h.b16 %v499
    %v1233 = vunpack.c.l.b16 %v500
    %v1234 = vunpack.c.h.b16 %v500
    %v1235 = vunpack.c.l.b16 %v501
    %v1236 = vunpack.c.h.b16 %v501
    %v1237 = vunpack.c.l.b16 %v502
    %v1238 = vunpack.c.h.b16 %v502
    %v1239 = vunpack.c.l.b16 %v503
    %v1240 = vunpack.c.h.b16 %v503
    %v1241 = vunpack.c.l.b16 %v504
    %v1242 = vunpack.c.h.b16 %v504
    %v1243 = vunpack.c.l.b16 %v505
    %v1244 = vunpack.c.h.b16 %v505
    %v1245 = vunpack.c.l.b16 %v506
    %v1246 = vunpack.c.h.b16 %v506
    %v1247 = vunpack.c.l.b16 %v507
    %v1248 = vunpack.c.h.b16 %v507
    %v1249 = vunpack.c.l.b16 %v508
    %v1250 = vunpack.c.h.b16 %v508
    %v1251 = vunpack.c.l.b16 %v509
    %v1252 = vunpack.c.h.b16 %v509
    %v1253 = vunpack.c.l.b16 %v510
    %v1254 = vunpack.c.h.b16 %v510
    %v1255 = vunpack.c.l.b16 %v511
    %v1256 = vunpack.c.h.b16 %v511
    %v1257 = vunpack.c.l.b16 %v512
    %v1258 = vunpack.c.h.b16 %v512
    %v1259 = vunpack.c.l.b16 %v513
    %v1260 = vunpack.c.h.b16 %v513
    %v1261 = vunpack.c.l.b16 %v514
    %v1262 = vunpack.c.h.b16 %v514
    %v1263 = vunpack.c.l.b16 %v515
    %v1264 = vunpack.c.h.b16 %v515
    %v1265 = vunpack.c.l.b16 %v516
    %v1266 = vunpack.c.h.b16 %v516
    %v1267 = vunpack.c.l.b16 %v517
    %v1268 = vunpack.c.h.b16 %v517
    %v1269 = vunpack.c.l.b16 %v518
    %v1270 = vunpack.c.h.b16 %v518
    %v1271 = vunpack.c.l.b16 %v519
    %v1272 = vunpack.c.h.b16 %v519
    %v1273 = vunpack.c.l.b16 %v520
    %v1274 = vunpack.c.h.b16 %v520
    %v1275 = vunpack.c.l.b16 %v521
    %v1276 = vunpack.c.h.b16 %v521
    %v1277 = vunpack.c.l.b16 %v522
    %v1278 = vunpack.c.h.b16 %v522
    %v1279 = vunpack.c.l.b16 %v523
    %v1280 = vunpack.c.h.b16 %v523
    %v1281 = vunpack.c.l.b16 %v524
    %v1282 = vunpack.c.h.b16 %v524
    %v1283 = vunpack.c.l.b16 %v525
    %v1284 = vunpack.c.h.b16 %v525
    %v1285 = vunpack.c.l.b16 %v526
    %v1286 = vunpack.c.h.b16 %v526
    %v1287 = vunpack.c.l.b16 %v527
    %v1288 = vunpack.c.h.b16 %v527
    %v1289 = vunpack.c.l.b16 %v528
    %v1290 = vunpack.c.h.b16 %v528
    %v1291 = vunpack.c.l.b16 %v529
    %v1292 = vunpack.c.h.b16 %v529
    %v1293 = vunpack.c.l.b16 %v530
    %v1294 = vunpack.c.h.b16 %v530
    %v1295 = vunpack.c.l.b16 %v531
    %v1296 = vunpack.c.h.b16 %v531
    %v1297 = vunpack.c.l.b16 %v532
    %v1298 = vunpack.c.h.b16 %v532
    %v1299 = vunpack.c.l.b16 %v533
    %v1300 = vunpack.c.h.b16 %v533
    %v1301 = vunpack.c.l.b16 %v534
    %v1302 = vunpack.c.h.b16 %v534
    %v1303 = vunpack.c.l.b16 %v535
    %v1304 = vunpack.c.h.b16 %v535
    %v1305 = vunpack.c.l.b16 %v536
    %v1306 = vunpack.c.h.b16 %v536
    %v1307 = vunpack.c.l.b16 %v537
    %v1308 = vunpack.c.h.b16 %v537
    %v1309 = vunpack.c.l.b16 %v538
    %v1310 = vunpack.c.h.b16 %v538
    %v1311 = vunpack.c.l.b16 %v539
    %v1312 = vunpack.c.h.b16 %v539
    %v1313 = vunpack.c.l.b16 %v540
    %v1314 = vunpack.c.h.b16 %v540
    %v1315 = vunpack.c.l.b16 %v541
    %v1316 = vunpack.c.h.b16 %v541
    %v1317 = vunpack.c.l.b16 %v542
    %v1318 = vunpack.c.h.b16 %v542
    %v1319 = vunpack.c.l.b16 %v543
    %v1320 = vunpack.c.h.b16 %v543
    %v1321 = vunpack.c.l.b16 %v544
    %v1322 = vunpack.c.h.b16 %v544
    %v1323 = vunpack.c.l.b16 %v545
    %v1324 = vunpack.c.h.b16 %v545
    %v1325 = vunpack.c.l.b16 %v546
    %v1326 = vunpack.c.h.b16 %v546
    %v1327 = vunpack.c.l.b16 %v547
    %v1328 = vunpack.c.h.b16 %v547
    %v1329 = vunpack.c.l.b16 %v548
    %v1330 = vunpack.c.h.b16 %v548
    %v1331 = vunpack.c.l.b16 %v549
    %v1332 = vunpack.c.h.b16 %v549
    %v1333 = vunpack.c.l.b16 %v550
    %v1334 = vunpack.c.h.b16 %v550
    %v1335 = vunpack.c.l.b16 %v551
    %v1336 = vunpack.c.h.b16 %v551
    %v1337 = vunpack.c.l.b16 %v552
    %v1338 = vunpack.c.h.b16 %v552
    %v1339 = vunpack.c.l.b16 %v553
    %v1340 = vunpack.c.h.b16 %v553
    %v1341 = vunpack.c.l.b16 %v554
    %v1342 = vunpack.c.h.b16 %v554
    %v1343 = vunpack.c.l.b16 %v555
    %v1344 = vunpack.c.h.b16 %v555
    %v1345 = vunpack.c.l.b16 %v556
    %v1346 = vunpack.c.h.b16 %v556
    %v1347 = vunpack.c.l.b16 %v557
    %v1348 = vunpack.c.h.b16 %v557
    %v1349 = vunpack.c.l.b16 %v558
    %v1350 = vunpack.c.h.b16 %v558
    %v1351 = vunpack.c.l.b16 %v559
    %v1352 = vunpack.c.h.b16 %v559
    %v1353 = vunpack.c.l.b16 %v560
    %v1354 = vunpack.c.h.b16 %v560
    %v1355 = vunpack.c.l.b16 %v561
    %v1356 = vunpack.c.h.b16 %v561
    %v1357 = vunpack.c.l.b16 %v562
    %v1358 = vunpack.c.h.b16 %v562
    %v1359 = vunpack.c.l.b16 %v563
    %v1360 = vunpack.c.h.b16 %v563
    %v1361 = vunpack.c.l.b16 %v564
    %v1362 = vunpack.c.h.b16 %v564
    %v1363 = vunpack.c.l.b16 %v565
    %v1364 = vunpack.c.h.b16 %v565
    %v1365 = vunpack.c.l.b16 %v566
    %v1366 = vunpack.c.h.b16 %v566
    %v1367 = vunpack.c.l.b16 %v567
    %v1368 = vunpack.c.h.b16 %v567
    %v1369 = vunpack.c.l.b16 %v568
    %v1370 = vunpack.c.h.b16 %v568
    %v1371 = vunpack.c.l.b16 %v569
    %v1372 = vunpack.c.h.b16 %v569
    %v1373 = vunpack.c.l.b16 %v570
    %v1374 = vunpack.c.h.b16 %v570
    %v1375 = vunpack.c.l.b16 %v571
    %v1376 = vunpack.c.h.b16 %v571
    %v1377 = vunpack.c.l.b16 %v572
    %v1378 = vunpack.c.h.b16 %v572
    %v1379 = vunpack.c.l.b16 %v573
    %v1380 = vunpack.c.h.b16 %v573
    %v1381 = vunpack.c.l.b16 %v574
    %v1382 = vunpack.c.h.b16 %v574
    %v1383 = vunpack.c.l.b16 %v575
    %v1384 = vunpack.c.h.b16 %v575
    %v1385 = vunpack.c.l.b16 %v576
    %v1386 = vunpack.c.h.b16 %v576
    %v1387 = vpack.c.b16 %v883, %v875
    %v1388 = vpack.c.b16 %v884, %v876
    %v1389 = vpack.c.b16 %v885, %v877
    %v1390 = vpack.c.b16 %v886, %v878
    %v1391 = vpack.c.b16 %v887, %v879
    %v1392 = vpack.c.b16 %v888, %v880
    %v1393 = vpack.c.b16 %v889, %v881
    %v1394 = vpack.c.b16 %v890, %v882
    %v1395 = vpack.c.b16 %v899, %v891
    %v1396 = vpack.c.b16 %v900, %v892
    %v1397 = vpack.c.b16 %v901, %v893
    %v1398 = vpack.c.b16 %v902, %v894
    %v1399 = vpack.c.b16 %v903, %v895
    %v1400 = vpack.c.b16 %v904, %v896
    %v1401 = vpack.c.b16 %v905, %v897
    %v1402 = vpack.c.b16 %v906, %v898
    %v1403 = vpack.c.b16 %v915, %v907
    %v1404 = vpack.c.b16 %v916, %v908
    %v1405 = vpack.c.b16 %v917, %v909
    %v1406 = vpack.c.b16 %v918, %v910
    %v1407 = vpack.c.b16 %v919, %v911
    %v1408 = vpack.c.b16 %v920, %v912
    %v1409 = vpack.c.b16 %v921, %v913
    %v1410 = vpack.c.b16 %v922, %v914
    %v1411 = vpack.c.b16 %v931, %v923
    %v1412 = vpack.c.b16 %v932, %v924
    %v1413 = vpack.c.b16 %v933, %v925
    %v1414 = vpack.c.b16 %v934, %v926
    %v1415 = vpack.c.b16 %v935, %v927
    %v1416 = vpack.c.b16 %v936, %v928
    %v1417 = vpack.c.b16 %v937, %v929
    %v1418 = vpack.c.b16 %v938, %v930
    %v1419 = vpack.c.b16 %v947, %v939
    %v1420 = vpack.c.b16 %v948, %v940
    %v1421 = vpack.c.b16 %v949, %v941
    %v1422 = vpack.c.b16 %v950, %v942
    %v1423 = vpack.c.b16 %v951, %v943
    %v1424 = vpack.c.b16 %v952, %v944
    %v1425 = vpack.c.b16 %v953, %v945
    %v1426 = vpack.c.b16 %v954, %v946
    %v1427 = vpack.c.b16 %v963, %v955
    %v1428 = vpack.c.b16 %v964, %v956
    %v1429 = vpack.c.b16 %v965, %v957
    %v1430 = vpack.c.b16 %v966, %v958
    %v1431 = vpack.c.b16 %v967, %v959
    %v1432 = vpack.c.b16 %v968, %v960
    %v1433 = vpack.c.b16 %v969, %v961
    %v1434 = vpack.c.b16 %v970, %v962
    %v1435 = vpack.c.b16 %v979, %v971
    %v1436 = vpack.c.b16 %v980, %v972
    %v1437 = vpack.c.b16 %v981, %v973
    %v1438 = vpack.c.b16 %v982, %v974
    %v1439 = vpack.c.b16 %v983, %v975
    %v1440 = vpack.c.b16 %v984, %v976
    %v1441 = vpack.c.b16 %v985, %v977
    %v1442 = vpack.c.b16 %v986, %v978
    %v1443 = vpack.c.b16 %v995, %v987
    %v1444 = vpack.c.b16 %v996, %v988
    %v1445 = vpack.c.b16 %v997, %v989
    %v1446 = vpack.c.b16 %v998, %v990
    %v1447 = vpack.c.b16 %v999, %v991
    %v1448 = vpack.c.b16 %v1000, %v992
    %v1449 = vpack.c.b16 %v1001, %v993
    %v1450 = vpack.c.b16 %v1002, %v994
    %v1451 = vpack.c.b16 %v1011, %v1003
    %v1452 = vpack.c.b16 %v1012, %v1004
    %v1453 = vpack.c.b16 %v1013, %v1005
    %v1454 = vpack.c.b16 %v1014, %v1006
    %v1455 = vpack.c.b16 %v1015, %v1007
    %v1456 = vpack.c.b16 %v1016, %v1008
    %v1457 = vpack.c.b16 %v1017, %v1009
    %v1458 = vpack.c.b16 %v1018, %v1010
    %v1459 = vpack.c.b16 %v1027, %v1019
    %v1460 = vpack.c.b16 %v1028, %v1020
    %v1461 = vpack.c.b16 %v1029, %v1021
    %v1462 = vpack.c.b16 %v1030, %v1022
    %v1463 = vpack.c.b16 %v1031, %v1023
    %v1464 = vpack.c.b16 %v1032, %v1024
    %v1465 = vpack.c.b16 %v1033, %v1025
    %v1466 = vpack.c.b16 %v1034, %v1026
    %v1467 = vpack.c.b16 %v1043, %v1035
    %v1468 = vpack.c.b16 %v1044, %v1036
    %v1469 = vpack.c.b16 %v1045, %v1037
    %v1470 = vpack.c.b16 %v1046, %v1038
    %v1471 = vpack.c.b16 %v1047, %v1039
    %v1472 = vpack.c.b16 %v1048, %v1040
    %v1473 = vpack.c.b16 %v1049, %v1041
    %v1474 = vpack.c.b16 %v1050, %v1042
    %v1475 = vpack.c.b16 %v1059, %v1051
    %v1476 = vpack.c.b16 %v1060, %v1052
    %v1477 = vpack.c.b16 %v1061, %v1053
    %v1478 = vpack.c.b16 %v1062, %v1054
    %v1479 = vpack.c.b16 %v1063, %v1055
    %v1480 = vpack.c.b16 %v1064, %v1056
    %v1481 = vpack.c.b16 %v1065, %v1057
    %v1482 = vpack.c.b16 %v1066, %v1058
    %v1483 = vpack.c.b16 %v1075, %v1067
    %v1484 = vpack.c.b16 %v1076, %v1068
    %v1485 = vpack.c.b16 %v1077, %v1069
    %v1486 = vpack.c.b16 %v1078, %v1070
    %v1487 = vpack.c.b16 %v1079, %v1071
    %v1488 = vpack.c.b16 %v1080, %v1072
    %v1489 = vpack.c.b16 %v1081, %v1073
    %v1490 = vpack.c.b16 %v1082, %v1074
    %v1491 = vpack.c.b16 %v1091, %v1083
    %v1492 = vpack.c.b16 %v1092, %v1084
    %v1493 = vpack.c.b16 %v1093, %v1085
    %v1494 = vpack.c.b16 %v1094, %v1086
    %v1495 = vpack.c.b16 %v1095, %v1087
    %v1496 = vpack.c.b16 %v1096, %v1088
    %v1497 = vpack.c.b16 %v1097, %v1089
    %v1498 = vpack.c.b16 %v1098, %v1090
    %v1499 = vpack.c.b16 %v1107, %v1099
    %v1500 = vpack.c.b16 %v1108, %v1100
    %v1501 = vpack.c.b16 %v1109, %v1101
    %v1502 = vpack.c.b16 %v1110, %v1102
    %v1503 = vpack.c.b16 %v1111, %v1103
    %v1504 = vpack.c.b16 %v1112, %v1104
    %v1505 = vpack.c.b16 %v1113, %v1105
    %v1506 = vpack.c.b16 %v1114, %v1106
    %v1507 = vpack.c.b16 %v1123, %v1115
    %v1508 = vpack.c.b16 %v1124, %v1116
    %v1509 = vpack.c.b16 %v1125, %v1117
    %v1510 = vpack.c.b16 %v1126, %v1118
    %v1511 = vpack.c.b16 %v1127, %v1119
    %v1512 = vpack.c.b16 %v1128, %v1120
    %v1513 = vpack.c.b16 %v1129, %v1121
    %v1514 = vpack.c.b16 %v1130, %v1122
    %v1515 = vpack.c.b16 %v1139, %v1131
    %v1516 = vpack.c.b16 %v1140, %v1132
    %v1517 = vpack.c.b16 %v1141, %v1133
    %v1518 = vpack.c.b16 %v1142, %v1134
    %v1519 = vpack.c.b16 %v1143, %v1135
    %v1520 = vpack.c.b16 %v1144, %v1136
    %v1521 = vpack.c.b16 %v1145, %v1137
    %v1522 = vpack.c.b16 %v1146, %v1138
    %v1523 = vpack.c.b16 %v1155, %v1147
    %v1524 = vpack.c.b16 %v1156, %v1148
    %v1525 = vpack.c.b16 %v1157, %v1149
    %v1526 = vpack.c.b16 %v1158, %v1150
    %v1527 = vpack.c.b16 %v1159, %v1151
    %v1528 = vpack.c.b16 %v1160, %v1152
    %v1529 = vpack.c.b16 %v1161, %v1153
    %v1530 = vpack.c.b16 %v1162, %v1154
    %v1531 = vpack.c.b16 %v1171, %v1163
    %v1532 = vpack.c.b16 %v1172, %v1164
    %v1533 = vpack.c.b16 %v1173, %v1165
    %v1534 = vpack.c.b16 %v1174, %v1166
    %v1535 = vpack.c.b16 %v1175, %v1167
    %v1536 = vpack.c.b16 %v1176, %v1168
    %v1537 = vpack.c.b16 %v1177, %v1169
    %v1538 = vpack.c.b16 %v1178, %v1170
    %v1539 = vpack.c.b16 %v1187, %v1179
    %v1540 = vpack.c.b16 %v1188, %v1180
    %v1541 = vpack.c.b16 %v1189, %v1181
    %v1542 = vpack.c.b16 %v1190, %v1182
    %v1543 = vpack.c.b16 %v1191, %v1183
    %v1544 = vpack.c.b16 %v1192, %v1184
    %v1545 = vpack.c.b16 %v1193, %v1185
    %v1546 = vpack.c.b16 %v1194, %v1186
    %v1547 = vpack.c.b16 %v1203, %v1195
    %v1548 = vpack.c.b16 %v1204, %v1196
    %v1549 = vpack.c.b16 %v1205, %v1197
    %v1550 = vpack.c.b16 %v1206, %v1198
    %v1551 = vpack.c.b16 %v1207, %v1199
    %v1552 = vpack.c.b16 %v1208, %v1200
    %v1553 = vpack.c.b16 %v1209, %v1201
    %v1554 = vpack.c.b16 %v1210, %v1202
    %v1555 = vpack.c.b16 %v1219, %v1211
    %v1556 = vpack.c.b16 %v1220, %v1212
    %v1557 = vpack.c.b16 %v1221, %v1213
    %v1558 = vpack.c.b16 %v1222, %v1214
    %v1559 = vpack.c.b16 %v1223, %v1215
    %v1560 = vpack.c.b16 %v1224, %v1216
    %v1561 = vpack.c.b16 %v1225, %v1217
    %v1562 = vpack.c.b16 %v1226, %v1218
    %v1563 = vpack.c.b16 %v1235, %v1227
    %v1564 = vpack.c.b16 %v1236, %v1228
    %v1565 = vpack.c.b16 %v1237, %v1229
    %v1566 = vpack.c.b16 %v1238, %v1230
    %v1567 = vpack.c.b16 %v1239, %v1231
    %v1568 = vpack.c.b16 %v1240, %v1232
    %v1569 = vpack.c.b16 %v1241, %v1233
    %v1570 = vpack.c.b16 %v1242, %v1234
    %v1571 = vpack.c.b16 %v1251, %v1243
    %v1572 = vpack.c.b16 %v1252, %v1244
    %v1573 = vpack.c.b16 %v1253, %v1245
    %v1574 = vpack.c.b16 %v1254, %v1246
    %v1575 = vpack.c.b16 %v1255, %v1247
    %v1576 = vpack.c.b16 %v1256, %v1248
    %v1577 = vpack.c.b16 %v1257, %v1249
    %v1578 = vpack.c.b16 %v1258, %v1250
    %v1579 = vpack.c.b16 %v1267, %v1259
    %v1580 = vpack.c.b16 %v1268, %v1260
    %v1581 = vpack.c.b16 %v1269, %v1261
    %v1582 = vpack.c.b16 %v1270, %v1262
    %v1583 = vpack.c.b16 %v1271, %v1263
    %v1584 = vpack.c.b16 %v1272, %v1264
    %v1585 = vpack.c.b16 %v1273, %v1265
    %v1586 = vpack.c.b16 %v1274, %v1266
    %v1587 = vpack.c.b16 %v1283, %v1275
    %v1588 = vpack.c.b16 %v1284, %v1276
    %v1589 = vpack.c.b16 %v1285, %v1277
    %v1590 = vpack.c.b16 %v1286, %v1278
    %v1591 = vpack.c.b16 %v1287, %v1279
    %v1592 = vpack.c.b16 %v1288, %v1280
    %v1593 = vpack.c.b16 %v1289, %v1281
    %v1594 = vpack.c.b16 %v1290, %v1282
    %v1595 = vpack.c.b16 %v1299, %v1291
    %v1596 = vpack.c.b16 %v1300, %v1292
    %v1597 = vpack.c.b16 %v1301, %v1293
    %v1598 = vpack.c.b16 %v1302, %v1294
    %v1599 = vpack.c.b16 %v1303, %v1295
    %v1600 = vpack.c.b16 %v1304, %v1296
    %v1601 = vpack.c.b16 %v1305, %v1297
    %v1602 = vpack.c.b16 %v1306, %v1298
    %v1603 = vpack.c.b16 %v1315, %v1307
    %v1604 = vpack.c.b16 %v1316, %v1308
    %v1605 = vpack.c.b16 %v1317, %v1309
    %v1606 = vpack.c.b16 %v1318, %v1310
    %v1607 = vpack.c.b16 %v1319, %v1311
    %v1608 = vpack.c.b16 %v1320, %v1312
    %v1609 = vpack.c.b16 %v1321, %v1313
    %v1610 = vpack.c.b16 %v1322, %v1314
    %v1611 = vpack.c.b16 %v1331, %v1323
    %v1612 = vpack.c.b16 %v1332, %v1324
    %v1613 = vpack.c.b16 %v1333, %v1325
    %v1614 = vpack.c.b16 %v1334, %v1326
    %v1615 = vpack.c.b16 %v1335, %v1327
    %v1616 = vpack.c.b16 %v1336, %v1328
    %v1617 = vpack.c.b16 %v1337, %v1329
    %v1618 = vpack.c.b16 %v1338, %v1330
    %v1619 = vpack.c.b16 %v1347, %v1339
    %v1620 = vpack.c.b16 %v1348, %v1340
    %v1621 = vpack.c.b16 %v1349, %v1341
    %v1622 = vpack.c.b16 %v1350, %v1342
    %v1623 = vpack.c.b16 %v1351, %v1343
    %v1624 = vpack.c.b16 %v1352, %v1344
    %v1625 = vpack.c.b16 %v1353, %v1345
    %v1626 = vpack.c.b16 %v1354, %v1346
    %v1627 = vpack.c.b16 %v1363, %v1355
    %v1628 = vpack.c.b16 %v1364, %v1356
    %v1629 = vpack.c.b16 %v1365, %v1357
    %v1630 = vpack.c.b16 %v1366, %v1358
    %v1631 = vpack.c.b16 %v1367, %v1359
    %v1632 = vpack.c.b16 %v1368, %v1360
    %v1633 = vpack.c.b16 %v1369, %v1361
    %v1634 = vpack.c.b16 %v1370, %v1362
    %v1635 = vpack.c.b16 %v1379, %v1371
    %v1636 = vpack.c.b16 %v1380, %v1372
    %v1637 = vpack.c.b16 %v1381, %v1373
    %v1638 = vpack.c.b16 %v1382, %v1374
    %v1639 = vpack.c.b16 %v1383, %v1375
    %v1640 = vpack.c.b16 %v1384, %v1376
    %v1641 = vpack.c.b16 %v1385, %v1377
    %v1642 = vpack.c.b16 %v1386, %v1378
    %1899 = vmatprep.subr.bf16.mxu0 %v1388
    %1900 = vmatpush1.bf16.msra.mxu0 %v1387
    %1901 = vmatprep.subr.bf16.mxu0 %v1396
    %1902 = vmatpush1.bf16.msra.mxu0 %v1395
    %1903 = vmatprep.subr.bf16.mxu0 %v1404
    %1904 = vmatpush1.bf16.msra.mxu0 %v1403
    %1905 = vmatprep.subr.bf16.mxu0 %v1412
    %1906 = vmatpush1.bf16.msra.mxu0 %v1411
    %1907 = vmatprep.subr.bf16.mxu0 %v1420
    %1908 = vmatpush1.bf16.msra.mxu0 %v1419
    %1909 = vmatprep.subr.bf16.mxu0 %v1428
    %1910 = vmatpush1.bf16.msra.mxu0 %v1427
    %1911 = vmatprep.subr.bf16.mxu0 %v1436
    %1912 = vmatpush1.bf16.msra.mxu0 %v1435
    %1913 = vmatprep.subr.bf16.mxu0 %v1444
    %1914 = vmatpush1.bf16.msra.mxu0 %v1443
    %1915 = vmatprep.subr.bf16.mxu0 %v1452
    %1916 = vmatpush1.bf16.msra.mxu0 %v1451
    %1917 = vmatprep.subr.bf16.mxu0 %v1460
    %1918 = vmatpush1.bf16.msra.mxu0 %v1459
    %1919 = vmatprep.subr.bf16.mxu0 %v1468
    %1920 = vmatpush1.bf16.msra.mxu0 %v1467
    %1921 = vmatprep.subr.bf16.mxu0 %v1476
    %1922 = vmatpush1.bf16.msra.mxu0 %v1475
    %1923 = vmatprep.subr.bf16.mxu0 %v1484
    %1924 = vmatpush1.bf16.msra.mxu0 %v1483
    %1925 = vmatprep.subr.bf16.mxu0 %v1492
    %1926 = vmatpush1.bf16.msra.mxu0 %v1491
    %1927 = vmatprep.subr.bf16.mxu0 %v1500
    %1928 = vmatpush1.bf16.msra.mxu0 %v1499
    %1929 = vmatprep.subr.bf16.mxu0 %v1508
    %1930 = vmatpush1.bf16.msra.mxu0 %v1507
    %1931 = vmatprep.mubr.bf16.mxu0 %v318
    %1932 = vmatmul.mubr.bf16.gmra.mrb[0].mxu0 %v317
    %v1933 = vpop.f32.mrb[0].mxu0
    %v1934 = vadd.f32 %v582, %v1933
    %v1935 = vpop.f32.mrb[0].mxu0
    %v1936 = vadd.f32 %v586, %v1935
    %v1937 = vpop.f32.mrb[0].mxu0
    %v1938 = vpop.f32.mrb[0].mxu0
    %1939 = vdwg.mxu0
    %1940 = vmatprep.subr.bf16.mxu0 %v1516
    %1941 = vmatpush1.bf16.msra.mxu0 %v1515
    %1942 = vmatprep.subr.bf16.mxu0 %v1524
    %1943 = vmatpush1.bf16.msra.mxu0 %v1523
    %1944 = vmatprep.subr.bf16.mxu0 %v1532
    %1945 = vmatpush1.bf16.msra.mxu0 %v1531
    %1946 = vmatprep.subr.bf16.mxu0 %v1540
    %1947 = vmatpush1.bf16.msra.mxu0 %v1539
    %1948 = vmatprep.subr.bf16.mxu0 %v1548
    %1949 = vmatpush1.bf16.msra.mxu0 %v1547
    %1950 = vmatprep.subr.bf16.mxu0 %v1556
    %1951 = vmatpush1.bf16.msra.mxu0 %v1555
    %1952 = vmatprep.subr.bf16.mxu0 %v1564
    %1953 = vmatpush1.bf16.msra.mxu0 %v1563
    %1954 = vmatprep.subr.bf16.mxu0 %v1572
    %1955 = vmatpush1.bf16.msra.mxu0 %v1571
    %1956 = vmatprep.subr.bf16.mxu0 %v1580
    %1957 = vmatpush1.bf16.msra.mxu0 %v1579
    %1958 = vmatprep.subr.bf16.mxu0 %v1588
    %1959 = vmatpush1.bf16.msra.mxu0 %v1587
    %1960 = vmatprep.subr.bf16.mxu0 %v1596
    %1961 = vmatpush1.bf16.msra.mxu0 %v1595
    %1962 = vmatprep.subr.bf16.mxu0 %v1604
    %1963 = vmatpush1.bf16.msra.mxu0 %v1603
    %1964 = vmatprep.subr.bf16.mxu0 %v1612
    %1965 = vmatpush1.bf16.msra.mxu0 %v1611
    %1966 = vmatprep.subr.bf16.mxu0 %v1620
    %1967 = vmatpush1.bf16.msra.mxu0 %v1619
    %1968 = vmatprep.subr.bf16.mxu0 %v1628
    %1969 = vmatpush1.bf16.msra.mxu0 %v1627
    %1970 = vmatprep.subr.bf16.mxu0 %v1636
    %1971 = vmatpush1.bf16.msra.mxu0 %v1635
    %1972 = vmatprep.mubr.bf16.mxu0 %v320
    %1973 = vmatmul.mubr.bf16.gmra.mrb[0].mxu0 %v319
    %v1974 = vpop.f32.mrb[0].mxu0
    %v1975 = vadd.f32 %v1934, %v1974
    %v1976 = vpop.f32.mrb[0].mxu0
    %v1977 = vadd.f32 %v1936, %v1976
    %v1978 = vpop.f32.mrb[0].mxu0
    %v1979 = vpop.f32.mrb[0].mxu0
    %1980 = vdwg.mxu0
    %1981 = vmatprep.subr.bf16.mxu0 %v1390
    %1982 = vmatpush1.bf16.msra.mxu0 %v1389
    %1983 = vmatprep.subr.bf16.mxu0 %v1398
    %1984 = vmatpush1.bf16.msra.mxu0 %v1397
    %1985 = vmatprep.subr.bf16.mxu0 %v1406
    %1986 = vmatpush1.bf16.msra.mxu0 %v1405
    %1987 = vmatprep.subr.bf16.mxu0 %v1414
    %1988 = vmatpush1.bf16.msra.mxu0 %v1413
    %1989 = vmatprep.subr.bf16.mxu0 %v1422
    %1990 = vmatpush1.bf16.msra.mxu0 %v1421
    %1991 = vmatprep.subr.bf16.mxu0 %v1430
    %1992 = vmatpush1.bf16.msra.mxu0 %v1429
    %1993 = vmatprep.subr.bf16.mxu0 %v1438
    %1994 = vmatpush1.bf16.msra.mxu0 %v1437
    %1995 = vmatprep.subr.bf16.mxu0 %v1446
    %1996 = vmatpush1.bf16.msra.mxu0 %v1445
    %1997 = vmatprep.subr.bf16.mxu0 %v1454
    %1998 = vmatpush1.bf16.msra.mxu0 %v1453
    %1999 = vmatprep.subr.bf16.mxu0 %v1462
    %2000 = vmatpush1.bf16.msra.mxu0 %v1461
    %2001 = vmatprep.subr.bf16.mxu0 %v1470
    %2002 = vmatpush1.bf16.msra.mxu0 %v1469
    %2003 = vmatprep.subr.bf16.mxu0 %v1478
    %2004 = vmatpush1.bf16.msra.mxu0 %v1477
    %2005 = vmatprep.subr.bf16.mxu0 %v1486
    %2006 = vmatpush1.bf16.msra.mxu0 %v1485
    %2007 = vmatprep.subr.bf16.mxu0 %v1494
    %2008 = vmatpush1.bf16.msra.mxu0 %v1493
    %2009 = vmatprep.subr.bf16.mxu0 %v1502
    %2010 = vmatpush1.bf16.msra.mxu0 %v1501
    %2011 = vmatprep.subr.bf16.mxu0 %v1510
    %2012 = vmatpush1.bf16.msra.mxu0 %v1509
    %2013 = vmatprep.mubr.bf16.mxu0 %v318
    %2014 = vmatmul.mubr.bf16.gmra.mrb[0].mxu0 %v317
    %v2015 = vpop.f32.mrb[0].mxu0
    %v2016 = vadd.f32 %v590, %v2015
    %v2017 = vpop.f32.mrb[0].mxu0
    %v2018 = vadd.f32 %v594, %v2017
    %v2019 = vpop.f32.mrb[0].mxu0
    %v2020 = vpop.f32.mrb[0].mxu0
    %2021 = vdwg.mxu0
    %2022 = vmatprep.subr.bf16.mxu0 %v1518
    %2023 = vmatpush1.bf16.msra.mxu0 %v1517
    %2024 = vmatprep.subr.bf16.mxu0 %v1526
    %2025 = vmatpush1.bf16.msra.mxu0 %v1525
    %2026 = vmatprep.subr.bf16.mxu0 %v1534
    %2027 = vmatpush1.bf16.msra.mxu0 %v1533
    %2028 = vmatprep.subr.bf16.mxu0 %v1542
    %2029 = vmatpush1.bf16.msra.mxu0 %v1541
    %2030 = vmatprep.subr.bf16.mxu0 %v1550
    %2031 = vmatpush1.bf16.msra.mxu0 %v1549
    %2032 = vmatprep.subr.bf16.mxu0 %v1558
    %2033 = vmatpush1.bf16.msra.mxu0 %v1557
    %2034 = vmatprep.subr.bf16.mxu0 %v1566
    %2035 = vmatpush1.bf16.msra.mxu0 %v1565
    %2036 = vmatprep.subr.bf16.mxu0 %v1574
    %2037 = vmatpush1.bf16.msra.mxu0 %v1573
    %2038 = vmatprep.subr.bf16.mxu0 %v1582
    %2039 = vmatpush1.bf16.msra.mxu0 %v1581
    %2040 = vmatprep.subr.bf16.mxu0 %v1590
    %2041 = vmatpush1.bf16.msra.mxu0 %v1589
    %2042 = vmatprep.subr.bf16.mxu0 %v1598
    %2043 = vmatpush1.bf16.msra.mxu0 %v1597
    %2044 = vmatprep.subr.bf16.mxu0 %v1606
    %2045 = vmatpush1.bf16.msra.mxu0 %v1605
    %2046 = vmatprep.subr.bf16.mxu0 %v1614
    %2047 = vmatpush1.bf16.msra.mxu0 %v1613
    %2048 = vmatprep.subr.bf16.mxu0 %v1622
    %2049 = vmatpush1.bf16.msra.mxu0 %v1621
    %2050 = vmatprep.subr.bf16.mxu0 %v1630
    %2051 = vmatpush1.bf16.msra.mxu0 %v1629
    %2052 = vmatprep.subr.bf16.mxu0 %v1638
    %2053 = vmatpush1.bf16.msra.mxu0 %v1637
    %2054 = vmatprep.mubr.bf16.mxu0 %v320
    %2055 = vmatmul.mubr.bf16.gmra.mrb[0].mxu0 %v319
    %v2056 = vpop.f32.mrb[0].mxu0
    %v2057 = vadd.f32 %v2016, %v2056
    %v2058 = vpop.f32.mrb[0].mxu0
    %v2059 = vadd.f32 %v2018, %v2058
    %v2060 = vpop.f32.mrb[0].mxu0
    %v2061 = vpop.f32.mrb[0].mxu0
    %2062 = vdwg.mxu0
    %2063 = vmatprep.subr.bf16.mxu0 %v1392
    %2064 = vmatpush1.bf16.msra.mxu0 %v1391
    %2065 = vmatprep.subr.bf16.mxu0 %v1400
    %2066 = vmatpush1.bf16.msra.mxu0 %v1399
    %2067 = vmatprep.subr.bf16.mxu0 %v1408
    %2068 = vmatpush1.bf16.msra.mxu0 %v1407
    %2069 = vmatprep.subr.bf16.mxu0 %v1416
    %2070 = vmatpush1.bf16.msra.mxu0 %v1415
    %2071 = vmatprep.subr.bf16.mxu0 %v1424
    %2072 = vmatpush1.bf16.msra.mxu0 %v1423
    %2073 = vmatprep.subr.bf16.mxu0 %v1432
    %2074 = vmatpush1.bf16.msra.mxu0 %v1431
    %2075 = vmatprep.subr.bf16.mxu0 %v1440
    %2076 = vmatpush1.bf16.msra.mxu0 %v1439
    %2077 = vmatprep.subr.bf16.mxu0 %v1448
    %2078 = vmatpush1.bf16.msra.mxu0 %v1447
    %2079 = vmatprep.subr.bf16.mxu0 %v1456
    %2080 = vmatpush1.bf16.msra.mxu0 %v1455
    %2081 = vmatprep.subr.bf16.mxu0 %v1464
    %2082 = vmatpush1.bf16.msra.mxu0 %v1463
    %2083 = vmatprep.subr.bf16.mxu0 %v1472
    %2084 = vmatpush1.bf16.msra.mxu0 %v1471
    %2085 = vmatprep.subr.bf16.mxu0 %v1480
    %2086 = vmatpush1.bf16.msra.mxu0 %v1479
    %2087 = vmatprep.subr.bf16.mxu0 %v1488
    %2088 = vmatpush1.bf16.msra.mxu0 %v1487
    %2089 = vmatprep.subr.bf16.mxu0 %v1496
    %2090 = vmatpush1.bf16.msra.mxu0 %v1495
    %2091 = vmatprep.subr.bf16.mxu0 %v1504
    %2092 = vmatpush1.bf16.msra.mxu0 %v1503
    %2093 = vmatprep.subr.bf16.mxu0 %v1512
    %2094 = vmatpush1.bf16.msra.mxu0 %v1511
    %2095 = vmatprep.mubr.bf16.mxu0 %v318
    %2096 = vmatmul.mubr.bf16.gmra.mrb[0].mxu0 %v317
    %v2097 = vpop.f32.mrb[0].mxu0
    %v2098 = vadd.f32 %v598, %v2097
    %v2099 = vpop.f32.mrb[0].mxu0
    %v2100 = vadd.f32 %v602, %v2099
    %v2101 = vpop.f32.mrb[0].mxu0
    %v2102 = vpop.f32.mrb[0].mxu0
    %2103 = vdwg.mxu0
    %2104 = vmatprep.subr.bf16.mxu0 %v1520
    %2105 = vmatpush1.bf16.msra.mxu0 %v1519
    %2106 = vmatprep.subr.bf16.mxu0 %v1528
    %2107 = vmatpush1.bf16.msra.mxu0 %v1527
    %2108 = vmatprep.subr.bf16.mxu0 %v1536
    %2109 = vmatpush1.bf16.msra.mxu0 %v1535
    %2110 = vmatprep.subr.bf16.mxu0 %v1544
    %2111 = vmatpush1.bf16.msra.mxu0 %v1543
    %2112 = vmatprep.subr.bf16.mxu0 %v1552
    %2113 = vmatpush1.bf16.msra.mxu0 %v1551
    %2114 = vmatprep.subr.bf16.mxu0 %v1560
    %2115 = vmatpush1.bf16.msra.mxu0 %v1559
    %2116 = vmatprep.subr.bf16.mxu0 %v1568
    %2117 = vmatpush1.bf16.msra.mxu0 %v1567
    %2118 = vmatprep.subr.bf16.mxu0 %v1576
    %2119 = vmatpush1.bf16.msra.mxu0 %v1575
    %2120 = vmatprep.subr.bf16.mxu0 %v1584
    %2121 = vmatpush1.bf16.msra.mxu0 %v1583
    %2122 = vmatprep.subr.bf16.mxu0 %v1592
    %2123 = vmatpush1.bf16.msra.mxu0 %v1591
    %2124 = vmatprep.subr.bf16.mxu0 %v1600
    %2125 = vmatpush1.bf16.msra.mxu0 %v1599
    %2126 = vmatprep.subr.bf16.mxu0 %v1608
    %2127 = vmatpush1.bf16.msra.mxu0 %v1607
    %2128 = vmatprep.subr.bf16.mxu0 %v1616
    %2129 = vmatpush1.bf16.msra.mxu0 %v1615
    %2130 = vmatprep.subr.bf16.mxu0 %v1624
    %2131 = vmatpush1.bf16.msra.mxu0 %v1623
    %2132 = vmatprep.subr.bf16.mxu0 %v1632
    %2133 = vmatpush1.bf16.msra.mxu0 %v1631
    %2134 = vmatprep.subr.bf16.mxu0 %v1640
    %2135 = vmatpush1.bf16.msra.mxu0 %v1639
    %2136 = vmatprep.mubr.bf16.mxu0 %v320
    %2137 = vmatmul.mubr.bf16.gmra.mrb[0].mxu0 %v319
    %v2138 = vpop.f32.mrb[0].mxu0
    %v2139 = vadd.f32 %v2098, %v2138
    %v2140 = vpop.f32.mrb[0].mxu0
    %v2141 = vadd.f32 %v2100, %v2140
    %v2142 = vpop.f32.mrb[0].mxu0
    %v2143 = vpop.f32.mrb[0].mxu0
    %2144 = vdwg.mxu0
    %2145 = vmatprep.subr.bf16.mxu0 %v1394
    %2146 = vmatpush1.bf16.msra.mxu0 %v1393
    %2147 = vmatprep.subr.bf16.mxu0 %v1402
    %2148 = vmatpush1.bf16.msra.mxu0 %v1401
    %2149 = vmatprep.subr.bf16.mxu0 %v1410
    %2150 = vmatpush1.bf16.msra.mxu0 %v1409
    %2151 = vmatprep.subr.bf16.mxu0 %v1418
    %2152 = vmatpush1.bf16.msra.mxu0 %v1417
    %2153 = vmatprep.subr.bf16.mxu0 %v1426
    %2154 = vmatpush1.bf16.msra.mxu0 %v1425
    %2155 = vmatprep.subr.bf16.mxu0 %v1434
    %2156 = vmatpush1.bf16.msra.mxu0 %v1433
    %2157 = vmatprep.subr.bf16.mxu0 %v1442
    %2158 = vmatpush1.bf16.msra.mxu0 %v1441
    %2159 = vmatprep.subr.bf16.mxu0 %v1450
    %2160 = vmatpush1.bf16.msra.mxu0 %v1449
    %2161 = vmatprep.subr.bf16.mxu0 %v1458
    %2162 = vmatpush1.bf16.msra.mxu0 %v1457
    %2163 = vmatprep.subr.bf16.mxu0 %v1466
    %2164 = vmatpush1.bf16.msra.mxu0 %v1465
    %2165 = vmatprep.subr.bf16.mxu0 %v1474
    %2166 = vmatpush1.bf16.msra.mxu0 %v1473
    %2167 = vmatprep.subr.bf16.mxu0 %v1482
    %2168 = vmatpush1.bf16.msra.mxu0 %v1481
    %2169 = vmatprep.subr.bf16.mxu0 %v1490
    %2170 = vmatpush1.bf16.msra.mxu0 %v1489
    %2171 = vmatprep.subr.bf16.mxu0 %v1498
    %2172 = vmatpush1.bf16.msra.mxu0 %v1497
    %2173 = vmatprep.subr.bf16.mxu0 %v1506
    %2174 = vmatpush1.bf16.msra.mxu0 %v1505
    %2175 = vmatprep.subr.bf16.mxu0 %v1514
    %2176 = vmatpush1.bf16.msra.mxu0 %v1513
    %2177 = vmatprep.mubr.bf16.mxu0 %v318
    %2178 = vmatmul.mubr.bf16.gmra.mrb[0].mxu0 %v317
    %v2179 = vpop.f32.mrb[0].mxu0
    %v2180 = vadd.f32 %v606, %v2179
    %v2181 = vpop.f32.mrb[0].mxu0
    %v2182 = vadd.f32 %v610, %v2181
    %v2183 = vpop.f32.mrb[0].mxu0
    %v2184 = vpop.f32.mrb[0].mxu0
    %2185 = vdwg.mxu0
    %2186 = vmatprep.subr.bf16.mxu0 %v1522
    %2187 = vmatpush1.bf16.msra.mxu0 %v1521
    %2188 = vmatprep.subr.bf16.mxu0 %v1530
    %2189 = vmatpush1.bf16.msra.mxu0 %v1529
    %2190 = vmatprep.subr.bf16.mxu0 %v1538
    %2191 = vmatpush1.bf16.msra.mxu0 %v1537
    %2192 = vmatprep.subr.bf16.mxu0 %v1546
    %2193 = vmatpush1.bf16.msra.mxu0 %v1545
    %2194 = vmatprep.subr.bf16.mxu0 %v1554
    %2195 = vmatpush1.bf16.msra.mxu0 %v1553
    %2196 = vmatprep.subr.bf16.mxu0 %v1562
    %2197 = vmatpush1.bf16.msra.mxu0 %v1561
    %2198 = vmatprep.subr.bf16.mxu0 %v1570
    %2199 = vmatpush1.bf16.msra.mxu0 %v1569
    %2200 = vmatprep.subr.bf16.mxu0 %v1578
    %2201 = vmatpush1.bf16.msra.mxu0 %v1577
    %2202 = vmatprep.subr.bf16.mxu0 %v1586
    %2203 = vmatpush1.bf16.msra.mxu0 %v1585
    %2204 = vmatprep.subr.bf16.mxu0 %v1594
    %2205 = vmatpush1.bf16.msra.mxu0 %v1593
    %2206 = vmatprep.subr.bf16.mxu0 %v1602
    %2207 = vmatpush1.bf16.msra.mxu0 %v1601
    %2208 = vmatprep.subr.bf16.mxu0 %v1610
    %2209 = vmatpush1.bf16.msra.mxu0 %v1609
    %2210 = vmatprep.subr.bf16.mxu0 %v1618
    %2211 = vmatpush1.bf16.msra.mxu0 %v1617
    %2212 = vmatprep.subr.bf16.mxu0 %v1626
    %2213 = vmatpush1.bf16.msra.mxu0 %v1625
    %2214 = vmatprep.subr.bf16.mxu0 %v1634
    %2215 = vmatpush1.bf16.msra.mxu0 %v1633
    %2216 = vmatprep.subr.bf16.mxu0 %v1642
    %2217 = vmatpush1.bf16.msra.mxu0 %v1641
    %2218 = vmatprep.mubr.bf16.mxu0 %v320
    %2219 = vmatmul.mubr.bf16.gmra.mrb[0].mxu0 %v319
    %v2220 = vpop.f32.mrb[0].mxu0
    %v2221 = vadd.f32 %v2180, %v2220
    %v2222 = vpop.f32.mrb[0].mxu0
    %v2223 = vadd.f32 %v2182, %v2222
    %v2224 = vpop.f32.mrb[0].mxu0
    %v2225 = vpop.f32.mrb[0].mxu0
    %2226 = vdwg.mxu0
    %v2227 = vmax.f32 %v1975, 0.0
    %v2228 = vmax.f32 %v1977, 0.0
    %v2229 = vmax.f32 %v2057, 0.0
    %v2230 = vmax.f32 %v2059, 0.0
    %v2231 = vmax.f32 %v2139, 0.0
    %v2232 = vmax.f32 %v2141, 0.0
    %v2233 = vmax.f32 %v2221, 0.0
    %v2234 = vmax.f32 %v2223, 0.0
    %v2235 = vpack.c.bf16 %v2227, %v2227
    %v2236 = vpack.c.bf16 %v2228, %v2228
    %v2237 = vpack.c.bf16 %v2229, %v2229
    %v2238 = vpack.c.bf16 %v2230, %v2230
    %v2239 = vpack.c.bf16 %v2231, %v2231
    %v2240 = vpack.c.bf16 %v2232, %v2232
    %v2241 = vpack.c.bf16 %v2233, %v2233
    %v2242 = vpack.c.bf16 %v2234, %v2234
    %v2243 = vld [vmem:[%s5] sm:$0xf]
    %v2244 = vld [vmem:[%s5 + $0x4] sm:$0xf]
    %v2245 = vld [vmem:[%s5 + $0x8] sm:$0xf]
    %v2246 = vld [vmem:[%s5 + $0xc] sm:$0xf]
    %v2247 = vld [vmem:[%s5 + $0x10] sm:$0xf]
    %v2248 = vld [vmem:[%s5 + $0x14] sm:$0xf]
    %v2249 = vld [vmem:[%s5 + $0x18] sm:$0xf]
    %v2250 = vld [vmem:[%s5 + $0x1c] sm:$0xf]
    %v2251 = vld [vmem:[%s5 + $0x20] sm:$0xf]
    %v2252 = vld [vmem:[%s5 + $0x24] sm:$0xf]
    %v2253 = vld [vmem:[%s5 + $0x28] sm:$0xf]
    %v2254 = vld [vmem:[%s5 + $0x2c] sm:$0xf]
    %v2255 = vld [vmem:[%s5 + $0x30] sm:$0xf]
    %v2256 = vld [vmem:[%s5 + $0x34] sm:$0xf]
    %v2257 = vld [vmem:[%s5 + $0x38] sm:$0xf]
    %v2258 = vld [vmem:[%s5 + $0x3c] sm:$0xf]
    %v2259 = vld [vmem:[%s5 + $0x40] sm:$0xf]
    %v2260 = vld [vmem:[%s5 + $0x44] sm:$0xf]
    %v2261 = vld [vmem:[%s5 + $0x48] sm:$0xf]
    %v2262 = vld [vmem:[%s5 + $0x4c] sm:$0xf]
    %v2263 = vld [vmem:[%s5 + $0x50] sm:$0xf]
    %v2264 = vld [vmem:[%s5 + $0x54] sm:$0xf]
    %v2265 = vld [vmem:[%s5 + $0x58] sm:$0xf]
    %v2266 = vld [vmem:[%s5 + $0x5c] sm:$0xf]
    %v2267 = vld [vmem:[%s5 + $0x60] sm:$0xf]
    %v2268 = vld [vmem:[%s5 + $0x64] sm:$0xf]
    %v2269 = vld [vmem:[%s5 + $0x68] sm:$0xf]
    %v2270 = vld [vmem:[%s5 + $0x6c] sm:$0xf]
    %v2271 = vld [vmem:[%s5 + $0x70] sm:$0xf]
    %v2272 = vld [vmem:[%s5 + $0x74] sm:$0xf]
    %v2273 = vld [vmem:[%s5 + $0x78] sm:$0xf]
    %v2274 = vld [vmem:[%s5 + $0x7c] sm:$0xf]
    %v2307 = vunpack.c.l.b16 %v2243
    %v2308 = vunpack.c.l.b16 %v2244
    %v2309 = vunpack.c.l.b16 %v2245
    %v2310 = vunpack.c.l.b16 %v2246
    %v2311 = vunpack.c.l.b16 %v2247
    %v2312 = vunpack.c.l.b16 %v2248
    %v2313 = vunpack.c.l.b16 %v2249
    %v2314 = vunpack.c.l.b16 %v2250
    %v2315 = vunpack.c.l.b16 %v2251
    %v2316 = vunpack.c.l.b16 %v2252
    %v2317 = vunpack.c.l.b16 %v2253
    %v2318 = vunpack.c.l.b16 %v2254
    %v2319 = vunpack.c.l.b16 %v2255
    %v2320 = vunpack.c.l.b16 %v2256
    %v2321 = vunpack.c.l.b16 %v2257
    %v2322 = vunpack.c.l.b16 %v2258
    %v2323 = vunpack.c.l.b16 %v2259
    %v2324 = vunpack.c.l.b16 %v2260
    %v2325 = vunpack.c.l.b16 %v2261
    %v2326 = vunpack.c.l.b16 %v2262
    %v2327 = vunpack.c.l.b16 %v2263
    %v2328 = vunpack.c.l.b16 %v2264
    %v2329 = vunpack.c.l.b16 %v2265
    %v2330 = vunpack.c.l.b16 %v2266
    %v2331 = vunpack.c.l.b16 %v2267
    %v2332 = vunpack.c.l.b16 %v2268
    %v2333 = vunpack.c.l.b16 %v2269
    %v2334 = vunpack.c.l.b16 %v2270
    %v2335 = vunpack.c.l.b16 %v2271
    %v2336 = vunpack.c.l.b16 %v2272
    %v2337 = vunpack.c.l.b16 %v2273
    %v2338 = vunpack.c.l.b16 %v2274
    %v2339 = vpack.c.b16 %v2308, %v2307
    %v2340 = vpack.c.b16 %v2310, %v2309
    %v2341 = vpack.c.b16 %v2312, %v2311
    %v2342 = vpack.c.b16 %v2314, %v2313
    %v2343 = vpack.c.b16 %v2316, %v2315
    %v2344 = vpack.c.b16 %v2318, %v2317
    %v2345 = vpack.c.b16 %v2320, %v2319
    %v2346 = vpack.c.b16 %v2322, %v2321
    %v2347 = vpack.c.b16 %v2324, %v2323
    %v2348 = vpack.c.b16 %v2326, %v2325
    %v2349 = vpack.c.b16 %v2328, %v2327
    %v2350 = vpack.c.b16 %v2330, %v2329
    %v2351 = vpack.c.b16 %v2332, %v2331
    %v2352 = vpack.c.b16 %v2334, %v2333
    %v2353 = vpack.c.b16 %v2336, %v2335
    %v2354 = vpack.c.b16 %v2338, %v2337
    %2371 = vmatprep.subr.bf16.mxu0 0
    %2372 = vmatpush1.bf16.msra.mxu0 %v2339
    %2373 = vmatprep.subr.bf16.mxu0 0
    %2374 = vmatpush1.bf16.msra.mxu0 %v2340
    %2375 = vmatprep.subr.bf16.mxu0 0
    %2376 = vmatpush1.bf16.msra.mxu0 %v2341
    %2377 = vmatprep.subr.bf16.mxu0 0
    %2378 = vmatpush1.bf16.msra.mxu0 %v2342
    %2379 = vmatprep.subr.bf16.mxu0 0
    %2380 = vmatpush1.bf16.msra.mxu0 %v2343
    %2381 = vmatprep.subr.bf16.mxu0 0
    %2382 = vmatpush1.bf16.msra.mxu0 %v2344
    %2383 = vmatprep.subr.bf16.mxu0 0
    %2384 = vmatpush1.bf16.msra.mxu0 %v2345
    %2385 = vmatprep.subr.bf16.mxu0 0
    %2386 = vmatpush1.bf16.msra.mxu0 %v2346
    %2387 = vmatprep.subr.bf16.mxu0 0
    %2388 = vmatpush1.bf16.msra.mxu0 %v2347
    %2389 = vmatprep.subr.bf16.mxu0 0
    %2390 = vmatpush1.bf16.msra.mxu0 %v2348
    %2391 = vmatprep.subr.bf16.mxu0 0
    %2392 = vmatpush1.bf16.msra.mxu0 %v2349
    %2393 = vmatprep.subr.bf16.mxu0 0
    %2394 = vmatpush1.bf16.msra.mxu0 %v2350
    %2395 = vmatprep.subr.bf16.mxu0 0
    %2396 = vmatpush1.bf16.msra.mxu0 %v2351
    %2397 = vmatprep.subr.bf16.mxu0 0
    %2398 = vmatpush1.bf16.msra.mxu0 %v2352
    %2399 = vmatprep.subr.bf16.mxu0 0
    %2400 = vmatpush1.bf16.msra.mxu0 %v2353
    %2401 = vmatprep.subr.bf16.mxu0 0
    %2402 = vmatpush1.bf16.msra.mxu0 %v2354
    %2403 = vmatprep.mubr.bf16.mxu0 %v2236
    %2404 = vmatmul.mubr.bf16.gmra.mrb[0].mxu0 %v2235
    %v2405 = vpop.f32.mrb[0].mxu0
    %v2406 = vadd.f32 0.0, %v2405
    %v2407 = vpop.f32.mrb[0].mxu0
    %v2408 = vpop.f32.mrb[0].mxu0
    %v2409 = vpop.f32.mrb[0].mxu0
    %2410 = vdwg.mxu0
    %s2411 = scalar_lea.vmem %s5, 128
    %v2412 = vld [vmem:[%s2411] sm:$0xf]
    %v2413 = vld [vmem:[%s2411 + $0x4] sm:$0xf]
    %v2414 = vld [vmem:[%s2411 + $0x8] sm:$0xf]
    %v2415 = vld [vmem:[%s2411 + $0xc] sm:$0xf]
    %v2416 = vld [vmem:[%s2411 + $0x10] sm:$0xf]
    %v2417 = vld [vmem:[%s2411 + $0x14] sm:$0xf]
    %v2418 = vld [vmem:[%s2411 + $0x18] sm:$0xf]
    %v2419 = vld [vmem:[%s2411 + $0x1c] sm:$0xf]
    %v2420 = vld [vmem:[%s2411 + $0x20] sm:$0xf]
    %v2421 = vld [vmem:[%s2411 + $0x24] sm:$0xf]
    %v2422 = vld [vmem:[%s2411 + $0x28] sm:$0xf]
    %v2423 = vld [vmem:[%s2411 + $0x2c] sm:$0xf]
    %v2424 = vld [vmem:[%s2411 + $0x30] sm:$0xf]
    %v2425 = vld [vmem:[%s2411 + $0x34] sm:$0xf]
    %v2426 = vld [vmem:[%s2411 + $0x38] sm:$0xf]
    %v2427 = vld [vmem:[%s2411 + $0x3c] sm:$0xf]
    %v2428 = vld [vmem:[%s2411 + $0x40] sm:$0xf]
    %v2429 = vld [vmem:[%s2411 + $0x44] sm:$0xf]
    %v2430 = vld [vmem:[%s2411 + $0x48] sm:$0xf]
    %v2431 = vld [vmem:[%s2411 + $0x4c] sm:$0xf]
    %v2432 = vld [vmem:[%s2411 + $0x50] sm:$0xf]
    %v2433 = vld [vmem:[%s2411 + $0x54] sm:$0xf]
    %v2434 = vld [vmem:[%s2411 + $0x58] sm:$0xf]
    %v2435 = vld [vmem:[%s2411 + $0x5c] sm:$0xf]
    %v2436 = vld [vmem:[%s2411 + $0x60] sm:$0xf]
    %v2437 = vld [vmem:[%s2411 + $0x64] sm:$0xf]
    %v2438 = vld [vmem:[%s2411 + $0x68] sm:$0xf]
    %v2439 = vld [vmem:[%s2411 + $0x6c] sm:$0xf]
    %v2440 = vld [vmem:[%s2411 + $0x70] sm:$0xf]
    %v2441 = vld [vmem:[%s2411 + $0x74] sm:$0xf]
    %v2442 = vld [vmem:[%s2411 + $0x78] sm:$0xf]
    %v2443 = vld [vmem:[%s2411 + $0x7c] sm:$0xf]
    %v2476 = vunpack.c.l.b16 %v2412
    %v2477 = vunpack.c.l.b16 %v2413
    %v2478 = vunpack.c.l.b16 %v2414
    %v2479 = vunpack.c.l.b16 %v2415
    %v2480 = vunpack.c.l.b16 %v2416
    %v2481 = vunpack.c.l.b16 %v2417
    %v2482 = vunpack.c.l.b16 %v2418
    %v2483 = vunpack.c.l.b16 %v2419
    %v2484 = vunpack.c.l.b16 %v2420
    %v2485 = vunpack.c.l.b16 %v2421
    %v2486 = vunpack.c.l.b16 %v2422
    %v2487 = vunpack.c.l.b16 %v2423
    %v2488 = vunpack.c.l.b16 %v2424
    %v2489 = vunpack.c.l.b16 %v2425
    %v2490 = vunpack.c.l.b16 %v2426
    %v2491 = vunpack.c.l.b16 %v2427
    %v2492 = vunpack.c.l.b16 %v2428
    %v2493 = vunpack.c.l.b16 %v2429
    %v2494 = vunpack.c.l.b16 %v2430
    %v2495 = vunpack.c.l.b16 %v2431
    %v2496 = vunpack.c.l.b16 %v2432
    %v2497 = vunpack.c.l.b16 %v2433
    %v2498 = vunpack.c.l.b16 %v2434
    %v2499 = vunpack.c.l.b16 %v2435
    %v2500 = vunpack.c.l.b16 %v2436
    %v2501 = vunpack.c.l.b16 %v2437
    %v2502 = vunpack.c.l.b16 %v2438
    %v2503 = vunpack.c.l.b16 %v2439
    %v2504 = vunpack.c.l.b16 %v2440
    %v2505 = vunpack.c.l.b16 %v2441
    %v2506 = vunpack.c.l.b16 %v2442
    %v2507 = vunpack.c.l.b16 %v2443
    %v2508 = vpack.c.b16 %v2477, %v2476
    %v2509 = vpack.c.b16 %v2479, %v2478
    %v2510 = vpack.c.b16 %v2481, %v2480
    %v2511 = vpack.c.b16 %v2483, %v2482
    %v2512 = vpack.c.b16 %v2485, %v2484
    %v2513 = vpack.c.b16 %v2487, %v2486
    %v2514 = vpack.c.b16 %v2489, %v2488
    %v2515 = vpack.c.b16 %v2491, %v2490
    %v2516 = vpack.c.b16 %v2493, %v2492
    %v2517 = vpack.c.b16 %v2495, %v2494
    %v2518 = vpack.c.b16 %v2497, %v2496
    %v2519 = vpack.c.b16 %v2499, %v2498
    %v2520 = vpack.c.b16 %v2501, %v2500
    %v2521 = vpack.c.b16 %v2503, %v2502
    %v2522 = vpack.c.b16 %v2505, %v2504
    %v2523 = vpack.c.b16 %v2507, %v2506
    %2540 = vmatprep.subr.bf16.mxu0 0
    %2541 = vmatpush1.bf16.msra.mxu0 %v2508
    %2542 = vmatprep.subr.bf16.mxu0 0
    %2543 = vmatpush1.bf16.msra.mxu0 %v2509
    %2544 = vmatprep.subr.bf16.mxu0 0
    %2545 = vmatpush1.bf16.msra.mxu0 %v2510
    %2546 = vmatprep.subr.bf16.mxu0 0
    %2547 = vmatpush1.bf16.msra.mxu0 %v2511
    %2548 = vmatprep.subr.bf16.mxu0 0
    %2549 = vmatpush1.bf16.msra.mxu0 %v2512
    %2550 = vmatprep.subr.bf16.mxu0 0
    %2551 = vmatpush1.bf16.msra.mxu0 %v2513
    %2552 = vmatprep.subr.bf16.mxu0 0
    %2553 = vmatpush1.bf16.msra.mxu0 %v2514
    %2554 = vmatprep.subr.bf16.mxu0 0
    %2555 = vmatpush1.bf16.msra.mxu0 %v2515
    %2556 = vmatprep.subr.bf16.mxu0 0
    %2557 = vmatpush1.bf16.msra.mxu0 %v2516
    %2558 = vmatprep.subr.bf16.mxu0 0
    %2559 = vmatpush1.bf16.msra.mxu0 %v2517
    %2560 = vmatprep.subr.bf16.mxu0 0
    %2561 = vmatpush1.bf16.msra.mxu0 %v2518
    %2562 = vmatprep.subr.bf16.mxu0 0
    %2563 = vmatpush1.bf16.msra.mxu0 %v2519
    %2564 = vmatprep.subr.bf16.mxu0 0
    %2565 = vmatpush1.bf16.msra.mxu0 %v2520
    %2566 = vmatprep.subr.bf16.mxu0 0
    %2567 = vmatpush1.bf16.msra.mxu0 %v2521
    %2568 = vmatprep.subr.bf16.mxu0 0
    %2569 = vmatpush1.bf16.msra.mxu0 %v2522
    %2570 = vmatprep.subr.bf16.mxu0 0
    %2571 = vmatpush1.bf16.msra.mxu0 %v2523
    %2572 = vmatprep.mubr.bf16.mxu0 %v2238
    %2573 = vmatmul.mubr.bf16.gmra.mrb[0].mxu0 %v2237
    %v2574 = vpop.f32.mrb[0].mxu0
    %v2575 = vadd.f32 0.0, %v2574
    %v2576 = vpop.f32.mrb[0].mxu0
    %v2577 = vpop.f32.mrb[0].mxu0
    %v2578 = vpop.f32.mrb[0].mxu0
    %2579 = vdwg.mxu0
    %s2580 = scalar_lea.vmem %s5, 256
    %v2581 = vld [vmem:[%s2580] sm:$0xf]
    %v2582 = vld [vmem:[%s2580 + $0x4] sm:$0xf]
    %v2583 = vld [vmem:[%s2580 + $0x8] sm:$0xf]
    %v2584 = vld [vmem:[%s2580 + $0xc] sm:$0xf]
    %v2585 = vld [vmem:[%s2580 + $0x10] sm:$0xf]
    %v2586 = vld [vmem:[%s2580 + $0x14] sm:$0xf]
    %v2587 = vld [vmem:[%s2580 + $0x18] sm:$0xf]
    %v2588 = vld [vmem:[%s2580 + $0x1c] sm:$0xf]
    %v2589 = vld [vmem:[%s2580 + $0x20] sm:$0xf]
    %v2590 = vld [vmem:[%s2580 + $0x24] sm:$0xf]
    %v2591 = vld [vmem:[%s2580 + $0x28] sm:$0xf]
    %v2592 = vld [vmem:[%s2580 + $0x2c] sm:$0xf]
    %v2593 = vld [vmem:[%s2580 + $0x30] sm:$0xf]
    %v2594 = vld [vmem:[%s2580 + $0x34] sm:$0xf]
    %v2595 = vld [vmem:[%s2580 + $0x38] sm:$0xf]
    %v2596 = vld [vmem:[%s2580 + $0x3c] sm:$0xf]
    %v2597 = vld [vmem:[%s2580 + $0x40] sm:$0xf]
    %v2598 = vld [vmem:[%s2580 + $0x44] sm:$0xf]
    %v2599 = vld [vmem:[%s2580 + $0x48] sm:$0xf]
    %v2600 = vld [vmem:[%s2580 + $0x4c] sm:$0xf]
    %v2601 = vld [vmem:[%s2580 + $0x50] sm:$0xf]
    %v2602 = vld [vmem:[%s2580 + $0x54] sm:$0xf]
    %v2603 = vld [vmem:[%s2580 + $0x58] sm:$0xf]
    %v2604 = vld [vmem:[%s2580 + $0x5c] sm:$0xf]
    %v2605 = vld [vmem:[%s2580 + $0x60] sm:$0xf]
    %v2606 = vld [vmem:[%s2580 + $0x64] sm:$0xf]
    %v2607 = vld [vmem:[%s2580 + $0x68] sm:$0xf]
    %v2608 = vld [vmem:[%s2580 + $0x6c] sm:$0xf]
    %v2609 = vld [vmem:[%s2580 + $0x70] sm:$0xf]
    %v2610 = vld [vmem:[%s2580 + $0x74] sm:$0xf]
    %v2611 = vld [vmem:[%s2580 + $0x78] sm:$0xf]
    %v2612 = vld [vmem:[%s2580 + $0x7c] sm:$0xf]
    %v2645 = vunpack.c.l.b16 %v2581
    %v2646 = vunpack.c.l.b16 %v2582
    %v2647 = vunpack.c.l.b16 %v2583
    %v2648 = vunpack.c.l.b16 %v2584
    %v2649 = vunpack.c.l.b16 %v2585
    %v2650 = vunpack.c.l.b16 %v2586
    %v2651 = vunpack.c.l.b16 %v2587
    %v2652 = vunpack.c.l.b16 %v2588
    %v2653 = vunpack.c.l.b16 %v2589
    %v2654 = vunpack.c.l.b16 %v2590
    %v2655 = vunpack.c.l.b16 %v2591
    %v2656 = vunpack.c.l.b16 %v2592
    %v2657 = vunpack.c.l.b16 %v2593
    %v2658 = vunpack.c.l.b16 %v2594
    %v2659 = vunpack.c.l.b16 %v2595
    %v2660 = vunpack.c.l.b16 %v2596
    %v2661 = vunpack.c.l.b16 %v2597
    %v2662 = vunpack.c.l.b16 %v2598
    %v2663 = vunpack.c.l.b16 %v2599
    %v2664 = vunpack.c.l.b16 %v2600
    %v2665 = vunpack.c.l.b16 %v2601
    %v2666 = vunpack.c.l.b16 %v2602
    %v2667 = vunpack.c.l.b16 %v2603
    %v2668 = vunpack.c.l.b16 %v2604
    %v2669 = vunpack.c.l.b16 %v2605
    %v2670 = vunpack.c.l.b16 %v2606
    %v2671 = vunpack.c.l.b16 %v2607
    %v2672 = vunpack.c.l.b16 %v2608
    %v2673 = vunpack.c.l.b16 %v2609
    %v2674 = vunpack.c.l.b16 %v2610
    %v2675 = vunpack.c.l.b16 %v2611
    %v2676 = vunpack.c.l.b16 %v2612
    %v2677 = vpack.c.b16 %v2646, %v2645
    %v2678 = vpack.c.b16 %v2648, %v2647
    %v2679 = vpack.c.b16 %v2650, %v2649
    %v2680 = vpack.c.b16 %v2652, %v2651
    %v2681 = vpack.c.b16 %v2654, %v2653
    %v2682 = vpack.c.b16 %v2656, %v2655
    %v2683 = vpack.c.b16 %v2658, %v2657
    %v2684 = vpack.c.b16 %v2660, %v2659
    %v2685 = vpack.c.b16 %v2662, %v2661
    %v2686 = vpack.c.b16 %v2664, %v2663
    %v2687 = vpack.c.b16 %v2666, %v2665
    %v2688 = vpack.c.b16 %v2668, %v2667
    %v2689 = vpack.c.b16 %v2670, %v2669
    %v2690 = vpack.c.b16 %v2672, %v2671
    %v2691 = vpack.c.b16 %v2674, %v2673
    %v2692 = vpack.c.b16 %v2676, %v2675
    %2709 = vmatprep.subr.bf16.mxu0 0
    %2710 = vmatpush1.bf16.msra.mxu0 %v2677
    %2711 = vmatprep.subr.bf16.mxu0 0
    %2712 = vmatpush1.bf16.msra.mxu0 %v2678
    %2713 = vmatprep.subr.bf16.mxu0 0
    %2714 = vmatpush1.bf16.msra.mxu0 %v2679
    %2715 = vmatprep.subr.bf16.mxu0 0
    %2716 = vmatpush1.bf16.msra.mxu0 %v2680
    %2717 = vmatprep.subr.bf16.mxu0 0
    %2718 = vmatpush1.bf16.msra.mxu0 %v2681
    %2719 = vmatprep.subr.bf16.mxu0 0
    %2720 = vmatpush1.bf16.msra.mxu0 %v2682
    %2721 = vmatprep.subr.bf16.mxu0 0
    %2722 = vmatpush1.bf16.msra.mxu0 %v2683
    %2723 = vmatprep.subr.bf16.mxu0 0
    %2724 = vmatpush1.bf16.msra.mxu0 %v2684
    %2725 = vmatprep.subr.bf16.mxu0 0
    %2726 = vmatpush1.bf16.msra.mxu0 %v2685
    %2727 = vmatprep.subr.bf16.mxu0 0
    %2728 = vmatpush1.bf16.msra.mxu0 %v2686
    %2729 = vmatprep.subr.bf16.mxu0 0
    %2730 = vmatpush1.bf16.msra.mxu0 %v2687
    %2731 = vmatprep.subr.bf16.mxu0 0
    %2732 = vmatpush1.bf16.msra.mxu0 %v2688
    %2733 = vmatprep.subr.bf16.mxu0 0
    %2734 = vmatpush1.bf16.msra.mxu0 %v2689
    %2735 = vmatprep.subr.bf16.mxu0 0
    %2736 = vmatpush1.bf16.msra.mxu0 %v2690
    %2737 = vmatprep.subr.bf16.mxu0 0
    %2738 = vmatpush1.bf16.msra.mxu0 %v2691
    %2739 = vmatprep.subr.bf16.mxu0 0
    %2740 = vmatpush1.bf16.msra.mxu0 %v2692
    %2741 = vmatprep.mubr.bf16.mxu0 %v2240
    %2742 = vmatmul.mubr.bf16.gmra.mrb[0].mxu0 %v2239
    %v2743 = vpop.f32.mrb[0].mxu0
    %v2744 = vadd.f32 0.0, %v2743
    %v2745 = vpop.f32.mrb[0].mxu0
    %v2746 = vpop.f32.mrb[0].mxu0
    %v2747 = vpop.f32.mrb[0].mxu0
    %2748 = vdwg.mxu0
    %s2749 = scalar_lea.vmem %s5, 384
    %v2750 = vld [vmem:[%s2749] sm:$0xf]
    %v2751 = vld [vmem:[%s2749 + $0x4] sm:$0xf]
    %v2752 = vld [vmem:[%s2749 + $0x8] sm:$0xf]
    %v2753 = vld [vmem:[%s2749 + $0xc] sm:$0xf]
    %v2754 = vld [vmem:[%s2749 + $0x10] sm:$0xf]
    %v2755 = vld [vmem:[%s2749 + $0x14] sm:$0xf]
    %v2756 = vld [vmem:[%s2749 + $0x18] sm:$0xf]
    %v2757 = vld [vmem:[%s2749 + $0x1c] sm:$0xf]
    %v2758 = vld [vmem:[%s2749 + $0x20] sm:$0xf]
    %v2759 = vld [vmem:[%s2749 + $0x24] sm:$0xf]
    %v2760 = vld [vmem:[%s2749 + $0x28] sm:$0xf]
    %v2761 = vld [vmem:[%s2749 + $0x2c] sm:$0xf]
    %v2762 = vld [vmem:[%s2749 + $0x30] sm:$0xf]
    %v2763 = vld [vmem:[%s2749 + $0x34] sm:$0xf]
    %v2764 = vld [vmem:[%s2749 + $0x38] sm:$0xf]
    %v2765 = vld [vmem:[%s2749 + $0x3c] sm:$0xf]
    %v2766 = vld [vmem:[%s2749 + $0x40] sm:$0xf]
    %v2767 = vld [vmem:[%s2749 + $0x44] sm:$0xf]
    %v2768 = vld [vmem:[%s2749 + $0x48] sm:$0xf]
    %v2769 = vld [vmem:[%s2749 + $0x4c] sm:$0xf]
    %v2770 = vld [vmem:[%s2749 + $0x50] sm:$0xf]
    %v2771 = vld [vmem:[%s2749 + $0x54] sm:$0xf]
    %v2772 = vld [vmem:[%s2749 + $0x58] sm:$0xf]
    %v2773 = vld [vmem:[%s2749 + $0x5c] sm:$0xf]
    %v2774 = vld [vmem:[%s2749 + $0x60] sm:$0xf]
    %v2775 = vld [vmem:[%s2749 + $0x64] sm:$0xf]
    %v2776 = vld [vmem:[%s2749 + $0x68] sm:$0xf]
    %v2777 = vld [vmem:[%s2749 + $0x6c] sm:$0xf]
    %v2778 = vld [vmem:[%s2749 + $0x70] sm:$0xf]
    %v2779 = vld [vmem:[%s2749 + $0x74] sm:$0xf]
    %v2780 = vld [vmem:[%s2749 + $0x78] sm:$0xf]
    %v2781 = vld [vmem:[%s2749 + $0x7c] sm:$0xf]
    %v2814 = vunpack.c.l.b16 %v2750
    %v2815 = vunpack.c.l.b16 %v2751
    %v2816 = vunpack.c.l.b16 %v2752
    %v2817 = vunpack.c.l.b16 %v2753
    %v2818 = vunpack.c.l.b16 %v2754
    %v2819 = vunpack.c.l.b16 %v2755
    %v2820 = vunpack.c.l.b16 %v2756
    %v2821 = vunpack.c.l.b16 %v2757
    %v2822 = vunpack.c.l.b16 %v2758
    %v2823 = vunpack.c.l.b16 %v2759
    %v2824 = vunpack.c.l.b16 %v2760
    %v2825 = vunpack.c.l.b16 %v2761
    %v2826 = vunpack.c.l.b16 %v2762
    %v2827 = vunpack.c.l.b16 %v2763
    %v2828 = vunpack.c.l.b16 %v2764
    %v2829 = vunpack.c.l.b16 %v2765
    %v2830 = vunpack.c.l.b16 %v2766
    %v2831 = vunpack.c.l.b16 %v2767
    %v2832 = vunpack.c.l.b16 %v2768
    %v2833 = vunpack.c.l.b16 %v2769
    %v2834 = vunpack.c.l.b16 %v2770
    %v2835 = vunpack.c.l.b16 %v2771
    %v2836 = vunpack.c.l.b16 %v2772
    %v2837 = vunpack.c.l.b16 %v2773
    %v2838 = vunpack.c.l.b16 %v2774
    %v2839 = vunpack.c.l.b16 %v2775
    %v2840 = vunpack.c.l.b16 %v2776
    %v2841 = vunpack.c.l.b16 %v2777
    %v2842 = vunpack.c.l.b16 %v2778
    %v2843 = vunpack.c.l.b16 %v2779
    %v2844 = vunpack.c.l.b16 %v2780
    %v2845 = vunpack.c.l.b16 %v2781
    %v2846 = vpack.c.b16 %v2815, %v2814
    %v2847 = vpack.c.b16 %v2817, %v2816
    %v2848 = vpack.c.b16 %v2819, %v2818
    %v2849 = vpack.c.b16 %v2821, %v2820
    %v2850 = vpack.c.b16 %v2823, %v2822
    %v2851 = vpack.c.b16 %v2825, %v2824
    %v2852 = vpack.c.b16 %v2827, %v2826
    %v2853 = vpack.c.b16 %v2829, %v2828
    %v2854 = vpack.c.b16 %v2831, %v2830
    %v2855 = vpack.c.b16 %v2833, %v2832
    %v2856 = vpack.c.b16 %v2835, %v2834
    %v2857 = vpack.c.b16 %v2837, %v2836
    %v2858 = vpack.c.b16 %v2839, %v2838
    %v2859 = vpack.c.b16 %v2841, %v2840
    %v2860 = vpack.c.b16 %v2843, %v2842
    %v2861 = vpack.c.b16 %v2845, %v2844
    %2878 = vmatprep.subr.bf16.mxu0 0
    %2879 = vmatpush1.bf16.msra.mxu0 %v2846
    %2880 = vmatprep.subr.bf16.mxu0 0
    %2881 = vmatpush1.bf16.msra.mxu0 %v2847
    %2882 = vmatprep.subr.bf16.mxu0 0
    %2883 = vmatpush1.bf16.msra.mxu0 %v2848
    %2884 = vmatprep.subr.bf16.mxu0 0
    %2885 = vmatpush1.bf16.msra.mxu0 %v2849
    %2886 = vmatprep.subr.bf16.mxu0 0
    %2887 = vmatpush1.bf16.msra.mxu0 %v2850
    %2888 = vmatprep.subr.bf16.mxu0 0
    %2889 = vmatpush1.bf16.msra.mxu0 %v2851
    %2890 = vmatprep.subr.bf16.mxu0 0
    %2891 = vmatpush1.bf16.msra.mxu0 %v2852
    %2892 = vmatprep.subr.bf16.mxu0 0
    %2893 = vmatpush1.bf16.msra.mxu0 %v2853
    %2894 = vmatprep.subr.bf16.mxu0 0
    %2895 = vmatpush1.bf16.msra.mxu0 %v2854
    %2896 = vmatprep.subr.bf16.mxu0 0
    %2897 = vmatpush1.bf16.msra.mxu0 %v2855
    %2898 = vmatprep.subr.bf16.mxu0 0
    %2899 = vmatpush1.bf16.msra.mxu0 %v2856
    %2900 = vmatprep.subr.bf16.mxu0 0
    %2901 = vmatpush1.bf16.msra.mxu0 %v2857
    %2902 = vmatprep.subr.bf16.mxu0 0
    %2903 = vmatpush1.bf16.msra.mxu0 %v2858
    %2904 = vmatprep.subr.bf16.mxu0 0
    %2905 = vmatpush1.bf16.msra.mxu0 %v2859
    %2906 = vmatprep.subr.bf16.mxu0 0
    %2907 = vmatpush1.bf16.msra.mxu0 %v2860
    %2908 = vmatprep.subr.bf16.mxu0 0
    %2909 = vmatpush1.bf16.msra.mxu0 %v2861
    %2910 = vmatprep.mubr.bf16.mxu0 %v2242
    %2911 = vmatmul.mubr.bf16.gmra.mrb[0].mxu0 %v2241
    %v2912 = vpop.f32.mrb[0].mxu0
    %v2913 = vadd.f32 0.0, %v2912
    %v2914 = vpop.f32.mrb[0].mxu0
    %v2915 = vpop.f32.mrb[0].mxu0
    %v2916 = vpop.f32.mrb[0].mxu0
    %2917 = vdwg.mxu0
    %v2918 = vld [vmem:[%s6] sm:$0xf]
    %v2920 = vlaneseq
    %v2921 = vshrl.u32 %v2920, 7
    %v2922 = vsub.s32 0, %v2921
    %v2923 = vrot.slane %v2918, %v2922
    %v2924 = vlaneseq
    %v2925 = vshrl.u32 %v2924, 7
    %v2926 = vsub.s32 1, %v2925
    %v2927 = vrot.slane %v2918, %v2926
    %v2928 = vlaneseq
    %v2929 = vshrl.u32 %v2928, 7
    %v2930 = vsub.s32 2, %v2929
    %v2931 = vrot.slane %v2918, %v2930
    %v2932 = vlaneseq
    %v2933 = vshrl.u32 %v2932, 7
    %v2934 = vsub.s32 3, %v2933
    %v2935 = vrot.slane %v2918, %v2934
    %v2940 = vadd.f32 %v2406, %v2923
    %v2941 = vadd.f32 %v2575, %v2927
    %v2942 = vadd.f32 %v2744, %v2931
    %v2943 = vadd.f32 %v2913, %v2935
    %v2944 = vmax.f32 %v2940, 0.0
    %v2945 = vmax.f32 %v2941, 0.0
    %v2946 = vmax.f32 %v2942, 0.0
    %v2947 = vmax.f32 %v2943, 0.0
    %v2948 = vpack.c.bf16 %v2944, %v2944
    %v2949 = vpack.c.bf16 %v2945, %v2945
    %v2950 = vpack.c.bf16 %v2946, %v2946
    %v2951 = vpack.c.bf16 %v2947, %v2947
    %v2952 = vld [vmem:[#allocation5] sm:$0xff]
    %v2953 = vld [vmem:[#allocation5 + $0x8] sm:$0xff]
    %v2954 = vld [vmem:[#allocation5 + $0x10] sm:$0xff]
    %v2955 = vld [vmem:[#allocation5 + $0x18] sm:$0xff]
    %v2956 = vld [vmem:[#allocation5 + $0x20] sm:$0xff]
    %v2957 = vld [vmem:[#allocation5 + $0x28] sm:$0xff]
    %v2958 = vld [vmem:[#allocation5 + $0x30] sm:$0xff]
    %v2959 = vld [vmem:[#allocation5 + $0x38] sm:$0xff]
    %v2960 = vld [vmem:[#allocation5 + $0x40] sm:$0xff]
    %v2961 = vld [vmem:[#allocation5 + $0x48] sm:$0xff]
    %v2962 = vld [vmem:[#allocation5 + $0x50] sm:$0xff]
    %v2963 = vld [vmem:[#allocation5 + $0x58] sm:$0xff]
    %v2964 = vld [vmem:[#allocation5 + $0x60] sm:$0xff]
    %v2965 = vld [vmem:[#allocation5 + $0x68] sm:$0xff]
    %v2966 = vld [vmem:[#allocation5 + $0x70] sm:$0xff]
    %v2967 = vld [vmem:[#allocation5 + $0x78] sm:$0xff]
    %v2968 = vld [vmem:[#allocation5 + $0x80] sm:$0xff]
    %v2969 = vld [vmem:[#allocation5 + $0x88] sm:$0xff]
    %v2970 = vld [vmem:[#allocation5 + $0x90] sm:$0xff]
    %v2971 = vld [vmem:[#allocation5 + $0x98] sm:$0xff]
    %v2972 = vld [vmem:[#allocation5 + $0xa0] sm:$0xff]
    %v2973 = vld [vmem:[#allocation5 + $0xa8] sm:$0xff]
    %v2974 = vld [vmem:[#allocation5 + $0xb0] sm:$0xff]
    %v2975 = vld [vmem:[#allocation5 + $0xb8] sm:$0xff]
    %v2976 = vld [vmem:[#allocation5 + $0xc0] sm:$0xff]
    %v2977 = vld [vmem:[#allocation5 + $0xc8] sm:$0xff]
    %v2978 = vld [vmem:[#allocation5 + $0xd0] sm:$0xff]
    %v2979 = vld [vmem:[#allocation5 + $0xd8] sm:$0xff]
    %v2980 = vld [vmem:[#allocation5 + $0xe0] sm:$0xff]
    %v2981 = vld [vmem:[#allocation5 + $0xe8] sm:$0xff]
    %v2982 = vld [vmem:[#allocation5 + $0xf0] sm:$0xff]
    %v2983 = vld [vmem:[#allocation5 + $0xf8] sm:$0xff]
    %v2984 = vld [vmem:[#allocation5 + $0x100] sm:$0xff]
    %v2985 = vld [vmem:[#allocation5 + $0x108] sm:$0xff]
    %v2986 = vld [vmem:[#allocation5 + $0x110] sm:$0xff]
    %v2987 = vld [vmem:[#allocation5 + $0x118] sm:$0xff]
    %v2988 = vld [vmem:[#allocation5 + $0x120] sm:$0xff]
    %v2989 = vld [vmem:[#allocation5 + $0x128] sm:$0xff]
    %v2990 = vld [vmem:[#allocation5 + $0x130] sm:$0xff]
    %v2991 = vld [vmem:[#allocation5 + $0x138] sm:$0xff]
    %v2992 = vld [vmem:[#allocation5 + $0x140] sm:$0xff]
    %v2993 = vld [vmem:[#allocation5 + $0x148] sm:$0xff]
    %v2994 = vld [vmem:[#allocation5 + $0x150] sm:$0xff]
    %v2995 = vld [vmem:[#allocation5 + $0x158] sm:$0xff]
    %v2996 = vld [vmem:[#allocation5 + $0x160] sm:$0xff]
    %v2997 = vld [vmem:[#allocation5 + $0x168] sm:$0xff]
    %v2998 = vld [vmem:[#allocation5 + $0x170] sm:$0xff]
    %v2999 = vld [vmem:[#allocation5 + $0x178] sm:$0xff]
    %v3000 = vld [vmem:[#allocation5 + $0x180] sm:$0xff]
    %v3001 = vld [vmem:[#allocation5 + $0x188] sm:$0xff]
    %v3002 = vld [vmem:[#allocation5 + $0x190] sm:$0xff]
    %v3003 = vld [vmem:[#allocation5 + $0x198] sm:$0xff]
    %v3004 = vld [vmem:[#allocation5 + $0x1a0] sm:$0xff]
    %v3005 = vld [vmem:[#allocation5 + $0x1a8] sm:$0xff]
    %v3006 = vld [vmem:[#allocation5 + $0x1b0] sm:$0xff]
    %v3007 = vld [vmem:[#allocation5 + $0x1b8] sm:$0xff]
    %v3008 = vld [vmem:[#allocation5 + $0x1c0] sm:$0xff]
    %v3009 = vld [vmem:[#allocation5 + $0x1c8] sm:$0xff]
    %v3010 = vld [vmem:[#allocation5 + $0x1d0] sm:$0xff]
    %v3011 = vld [vmem:[#allocation5 + $0x1d8] sm:$0xff]
    %v3012 = vld [vmem:[#allocation5 + $0x1e0] sm:$0xff]
    %v3013 = vld [vmem:[#allocation5 + $0x1e8] sm:$0xff]
    %v3014 = vld [vmem:[#allocation5 + $0x1f0] sm:$0xff]
    %v3015 = vld [vmem:[#allocation5 + $0x1f8] sm:$0xff]
    %v3016 = vld [vmem:[%s8] sm:$0x3]
    %v3018 = vlaneseq
    %v3019 = vshrl.u32 %v3018, 7
    %v3020 = vsub.s32 0, %v3019
    %v3021 = vrot.slane %v3016, %v3020
    %v3022 = vlaneseq
    %v3023 = vshrl.u32 %v3022, 7
    %v3024 = vsub.s32 1, %v3023
    %v3025 = vrot.slane %v3016, %v3024
    %v3092 = vunpack.c.l.b16 %v2952
    %v3093 = vunpack.c.h.b16 %v2952
    %v3094 = vunpack.c.l.b16 %v2953
    %v3095 = vunpack.c.h.b16 %v2953
    %v3096 = vunpack.c.l.b16 %v2954
    %v3097 = vunpack.c.h.b16 %v2954
    %v3098 = vunpack.c.l.b16 %v2955
    %v3099 = vunpack.c.h.b16 %v2955
    %v3100 = vunpack.c.l.b16 %v2956
    %v3101 = vunpack.c.h.b16 %v2956
    %v3102 = vunpack.c.l.b16 %v2957
    %v3103 = vunpack.c.h.b16 %v2957
    %v3104 = vunpack.c.l.b16 %v2958
    %v3105 = vunpack.c.h.b16 %v2958
    %v3106 = vunpack.c.l.b16 %v2959
    %v3107 = vunpack.c.h.b16 %v2959
    %v3108 = vunpack.c.l.b16 %v2960
    %v3109 = vunpack.c.h.b16 %v2960
    %v3110 = vunpack.c.l.b16 %v2961
    %v3111 = vunpack.c.h.b16 %v2961
    %v3112 = vunpack.c.l.b16 %v2962
    %v3113 = vunpack.c.h.b16 %v2962
    %v3114 = vunpack.c.l.b16 %v2963
    %v3115 = vunpack.c.h.b16 %v2963
    %v3116 = vunpack.c.l.b16 %v2964
    %v3117 = vunpack.c.h.b16 %v2964
    %v3118 = vunpack.c.l.b16 %v2965
    %v3119 = vunpack.c.h.b16 %v2965
    %v3120 = vunpack.c.l.b16 %v2966
    %v3121 = vunpack.c.h.b16 %v2966
    %v3122 = vunpack.c.l.b16 %v2967
    %v3123 = vunpack.c.h.b16 %v2967
    %v3124 = vunpack.c.l.b16 %v2968
    %v3125 = vunpack.c.h.b16 %v2968
    %v3126 = vunpack.c.l.b16 %v2969
    %v3127 = vunpack.c.h.b16 %v2969
    %v3128 = vunpack.c.l.b16 %v2970
    %v3129 = vunpack.c.h.b16 %v2970
    %v3130 = vunpack.c.l.b16 %v2971
    %v3131 = vunpack.c.h.b16 %v2971
    %v3132 = vunpack.c.l.b16 %v2972
    %v3133 = vunpack.c.h.b16 %v2972
    %v3134 = vunpack.c.l.b16 %v2973
    %v3135 = vunpack.c.h.b16 %v2973
    %v3136 = vunpack.c.l.b16 %v2974
    %v3137 = vunpack.c.h.b16 %v2974
    %v3138 = vunpack.c.l.b16 %v2975
    %v3139 = vunpack.c.h.b16 %v2975
    %v3140 = vunpack.c.l.b16 %v2976
    %v3141 = vunpack.c.h.b16 %v2976
    %v3142 = vunpack.c.l.b16 %v2977
    %v3143 = vunpack.c.h.b16 %v2977
    %v3144 = vunpack.c.l.b16 %v2978
    %v3145 = vunpack.c.h.b16 %v2978
    %v3146 = vunpack.c.l.b16 %v2979
    %v3147 = vunpack.c.h.b16 %v2979
    %v3148 = vunpack.c.l.b16 %v2980
    %v3149 = vunpack.c.h.b16 %v2980
    %v3150 = vunpack.c.l.b16 %v2981
    %v3151 = vunpack.c.h.b16 %v2981
    %v3152 = vunpack.c.l.b16 %v2982
    %v3153 = vunpack.c.h.b16 %v2982
    %v3154 = vunpack.c.l.b16 %v2983
    %v3155 = vunpack.c.h.b16 %v2983
    %v3156 = vunpack.c.l.b16 %v2984
    %v3157 = vunpack.c.h.b16 %v2984
    %v3158 = vunpack.c.l.b16 %v2985
    %v3159 = vunpack.c.h.b16 %v2985
    %v3160 = vunpack.c.l.b16 %v2986
    %v3161 = vunpack.c.h.b16 %v2986
    %v3162 = vunpack.c.l.b16 %v2987
    %v3163 = vunpack.c.h.b16 %v2987
    %v3164 = vunpack.c.l.b16 %v2988
    %v3165 = vunpack.c.h.b16 %v2988
    %v3166 = vunpack.c.l.b16 %v2989
    %v3167 = vunpack.c.h.b16 %v2989
    %v3168 = vunpack.c.l.b16 %v2990
    %v3169 = vunpack.c.h.b16 %v2990
    %v3170 = vunpack.c.l.b16 %v2991
    %v3171 = vunpack.c.h.b16 %v2991
    %v3172 = vunpack.c.l.b16 %v2992
    %v3173 = vunpack.c.h.b16 %v2992
    %v3174 = vunpack.c.l.b16 %v2993
    %v3175 = vunpack.c.h.b16 %v2993
    %v3176 = vunpack.c.l.b16 %v2994
    %v3177 = vunpack.c.h.b16 %v2994
    %v3178 = vunpack.c.l.b16 %v2995
    %v3179 = vunpack.c.h.b16 %v2995
    %v3180 = vunpack.c.l.b16 %v2996
    %v3181 = vunpack.c.h.b16 %v2996
    %v3182 = vunpack.c.l.b16 %v2997
    %v3183 = vunpack.c.h.b16 %v2997
    %v3184 = vunpack.c.l.b16 %v2998
    %v3185 = vunpack.c.h.b16 %v2998
    %v3186 = vunpack.c.l.b16 %v2999
    %v3187 = vunpack.c.h.b16 %v2999
    %v3188 = vunpack.c.l.b16 %v3000
    %v3189 = vunpack.c.h.b16 %v3000
    %v3190 = vunpack.c.l.b16 %v3001
    %v3191 = vunpack.c.h.b16 %v3001
    %v3192 = vunpack.c.l.b16 %v3002
    %v3193 = vunpack.c.h.b16 %v3002
    %v3194 = vunpack.c.l.b16 %v3003
    %v3195 = vunpack.c.h.b16 %v3003
    %v3196 = vunpack.c.l.b16 %v3004
    %v3197 = vunpack.c.h.b16 %v3004
    %v3198 = vunpack.c.l.b16 %v3005
    %v3199 = vunpack.c.h.b16 %v3005
    %v3200 = vunpack.c.l.b16 %v3006
    %v3201 = vunpack.c.h.b16 %v3006
    %v3202 = vunpack.c.l.b16 %v3007
    %v3203 = vunpack.c.h.b16 %v3007
    %v3204 = vunpack.c.l.b16 %v3008
    %v3205 = vunpack.c.h.b16 %v3008
    %v3206 = vunpack.c.l.b16 %v3009
    %v3207 = vunpack.c.h.b16 %v3009
    %v3208 = vunpack.c.l.b16 %v3010
    %v3209 = vunpack.c.h.b16 %v3010
    %v3210 = vunpack.c.l.b16 %v3011
    %v3211 = vunpack.c.h.b16 %v3011
    %v3212 = vunpack.c.l.b16 %v3012
    %v3213 = vunpack.c.h.b16 %v3012
    %v3214 = vunpack.c.l.b16 %v3013
    %v3215 = vunpack.c.h.b16 %v3013
    %v3216 = vunpack.c.l.b16 %v3014
    %v3217 = vunpack.c.h.b16 %v3014
    %v3218 = vunpack.c.l.b16 %v3015
    %v3219 = vunpack.c.h.b16 %v3015
    %v3220 = vpack.c.b16 %v3094, %v3092
    %v3221 = vpack.c.b16 %v3095, %v3093
    %v3222 = vpack.c.b16 %v3098, %v3096
    %v3223 = vpack.c.b16 %v3099, %v3097
    %v3224 = vpack.c.b16 %v3102, %v3100
    %v3225 = vpack.c.b16 %v3103, %v3101
    %v3226 = vpack.c.b16 %v3106, %v3104
    %v3227 = vpack.c.b16 %v3107, %v3105
    %v3228 = vpack.c.b16 %v3110, %v3108
    %v3229 = vpack.c.b16 %v3111, %v3109
    %v3230 = vpack.c.b16 %v3114, %v3112
    %v3231 = vpack.c.b16 %v3115, %v3113
    %v3232 = vpack.c.b16 %v3118, %v3116
    %v3233 = vpack.c.b16 %v3119, %v3117
    %v3234 = vpack.c.b16 %v3122, %v3120
    %v3235 = vpack.c.b16 %v3123, %v3121
    %v3236 = vpack.c.b16 %v3126, %v3124
    %v3237 = vpack.c.b16 %v3127, %v3125
    %v3238 = vpack.c.b16 %v3130, %v3128
    %v3239 = vpack.c.b16 %v3131, %v3129
    %v3240 = vpack.c.b16 %v3134, %v3132
    %v3241 = vpack.c.b16 %v3135, %v3133
    %v3242 = vpack.c.b16 %v3138, %v3136
    %v3243 = vpack.c.b16 %v3139, %v3137
    %v3244 = vpack.c.b16 %v3142, %v3140
    %v3245 = vpack.c.b16 %v3143, %v3141
    %v3246 = vpack.c.b16 %v3146, %v3144
    %v3247 = vpack.c.b16 %v3147, %v3145
    %v3248 = vpack.c.b16 %v3150, %v3148
    %v3249 = vpack.c.b16 %v3151, %v3149
    %v3250 = vpack.c.b16 %v3154, %v3152
    %v3251 = vpack.c.b16 %v3155, %v3153
    %v3252 = vpack.c.b16 %v3158, %v3156
    %v3253 = vpack.c.b16 %v3159, %v3157
    %v3254 = vpack.c.b16 %v3162, %v3160
    %v3255 = vpack.c.b16 %v3163, %v3161
    %v3256 = vpack.c.b16 %v3166, %v3164
    %v3257 = vpack.c.b16 %v3167, %v3165
    %v3258 = vpack.c.b16 %v3170, %v3168
    %v3259 = vpack.c.b16 %v3171, %v3169
    %v3260 = vpack.c.b16 %v3174, %v3172
    %v3261 = vpack.c.b16 %v3175, %v3173
    %v3262 = vpack.c.b16 %v3178, %v3176
    %v3263 = vpack.c.b16 %v3179, %v3177
    %v3264 = vpack.c.b16 %v3182, %v3180
    %v3265 = vpack.c.b16 %v3183, %v3181
    %v3266 = vpack.c.b16 %v3186, %v3184
    %v3267 = vpack.c.b16 %v3187, %v3185
    %v3268 = vpack.c.b16 %v3190, %v3188
    %v3269 = vpack.c.b16 %v3191, %v3189
    %v3270 = vpack.c.b16 %v3194, %v3192
    %v3271 = vpack.c.b16 %v3195, %v3193
    %v3272 = vpack.c.b16 %v3198, %v3196
    %v3273 = vpack.c.b16 %v3199, %v3197
    %v3274 = vpack.c.b16 %v3202, %v3200
    %v3275 = vpack.c.b16 %v3203, %v3201
    %v3276 = vpack.c.b16 %v3206, %v3204
    %v3277 = vpack.c.b16 %v3207, %v3205
    %v3278 = vpack.c.b16 %v3210, %v3208
    %v3279 = vpack.c.b16 %v3211, %v3209
    %v3280 = vpack.c.b16 %v3214, %v3212
    %v3281 = vpack.c.b16 %v3215, %v3213
    %v3282 = vpack.c.b16 %v3218, %v3216
    %v3283 = vpack.c.b16 %v3219, %v3217
    %3348 = vmatprep.subr.bf16.mxu0 %v3221
    %3349 = vmatpush1.bf16.msra.mxu0 %v3220
    %3350 = vmatprep.subr.bf16.mxu0 %v3223
    %3351 = vmatpush1.bf16.msra.mxu0 %v3222
    %3352 = vmatprep.subr.bf16.mxu0 %v3225
    %3353 = vmatpush1.bf16.msra.mxu0 %v3224
    %3354 = vmatprep.subr.bf16.mxu0 %v3227
    %3355 = vmatpush1.bf16.msra.mxu0 %v3226
    %3356 = vmatprep.subr.bf16.mxu0 %v3229
    %3357 = vmatpush1.bf16.msra.mxu0 %v3228
    %3358 = vmatprep.subr.bf16.mxu0 %v3231
    %3359 = vmatpush1.bf16.msra.mxu0 %v3230
    %3360 = vmatprep.subr.bf16.mxu0 %v3233
    %3361 = vmatpush1.bf16.msra.mxu0 %v3232
    %3362 = vmatprep.subr.bf16.mxu0 %v3235
    %3363 = vmatpush1.bf16.msra.mxu0 %v3234
    %3364 = vmatprep.subr.bf16.mxu0 %v3237
    %3365 = vmatpush1.bf16.msra.mxu0 %v3236
    %3366 = vmatprep.subr.bf16.mxu0 %v3239
    %3367 = vmatpush1.bf16.msra.mxu0 %v3238
    %3368 = vmatprep.subr.bf16.mxu0 %v3241
    %3369 = vmatpush1.bf16.msra.mxu0 %v3240
    %3370 = vmatprep.subr.bf16.mxu0 %v3243
    %3371 = vmatpush1.bf16.msra.mxu0 %v3242
    %3372 = vmatprep.subr.bf16.mxu0 %v3245
    %3373 = vmatpush1.bf16.msra.mxu0 %v3244
    %3374 = vmatprep.subr.bf16.mxu0 %v3247
    %3375 = vmatpush1.bf16.msra.mxu0 %v3246
    %3376 = vmatprep.subr.bf16.mxu0 %v3249
    %3377 = vmatpush1.bf16.msra.mxu0 %v3248
    %3378 = vmatprep.subr.bf16.mxu0 %v3251
    %3379 = vmatpush1.bf16.msra.mxu0 %v3250
    %3380 = vmatprep.mubr.bf16.mxu0 %v2949
    %3381 = vmatmul.mubr.bf16.gmra.mrb[0].mxu0 %v2948
    %v3382 = vpop.f32.mrb[0].mxu0
    %v3383 = vadd.f32 %v3021, %v3382
    %v3384 = vpop.f32.mrb[0].mxu0
    %v3385 = vadd.f32 %v3025, %v3384
    %v3386 = vpop.f32.mrb[0].mxu0
    %v3387 = vpop.f32.mrb[0].mxu0
    %3388 = vdwg.mxu0
    %3389 = vmatprep.subr.bf16.mxu0 %v3253
    %3390 = vmatpush1.bf16.msra.mxu0 %v3252
    %3391 = vmatprep.subr.bf16.mxu0 %v3255
    %3392 = vmatpush1.bf16.msra.mxu0 %v3254
    %3393 = vmatprep.subr.bf16.mxu0 %v3257
    %3394 = vmatpush1.bf16.msra.mxu0 %v3256
    %3395 = vmatprep.subr.bf16.mxu0 %v3259
    %3396 = vmatpush1.bf16.msra.mxu0 %v3258
    %3397 = vmatprep.subr.bf16.mxu0 %v3261
    %3398 = vmatpush1.bf16.msra.mxu0 %v3260
    %3399 = vmatprep.subr.bf16.mxu0 %v3263
    %3400 = vmatpush1.bf16.msra.mxu0 %v3262
    %3401 = vmatprep.subr.bf16.mxu0 %v3265
    %3402 = vmatpush1.bf16.msra.mxu0 %v3264
    %3403 = vmatprep.subr.bf16.mxu0 %v3267
    %3404 = vmatpush1.bf16.msra.mxu0 %v3266
    %3405 = vmatprep.subr.bf16.mxu0 %v3269
    %3406 = vmatpush1.bf16.msra.mxu0 %v3268
    %3407 = vmatprep.subr.bf16.mxu0 %v3271
    %3408 = vmatpush1.bf16.msra.mxu0 %v3270
    %3409 = vmatprep.subr.bf16.mxu0 %v3273
    %3410 = vmatpush1.bf16.msra.mxu0 %v3272
    %3411 = vmatprep.subr.bf16.mxu0 %v3275
    %3412 = vmatpush1.bf16.msra.mxu0 %v3274
    %3413 = vmatprep.subr.bf16.mxu0 %v3277
    %3414 = vmatpush1.bf16.msra.mxu0 %v3276
    %3415 = vmatprep.subr.bf16.mxu0 %v3279
    %3416 = vmatpush1.bf16.msra.mxu0 %v3278
    %3417 = vmatprep.subr.bf16.mxu0 %v3281
    %3418 = vmatpush1.bf16.msra.mxu0 %v3280
    %3419 = vmatprep.subr.bf16.mxu0 %v3283
    %3420 = vmatpush1.bf16.msra.mxu0 %v3282
    %3421 = vmatprep.mubr.bf16.mxu0 %v2951
    %3422 = vmatmul.mubr.bf16.gmra.mrb[0].mxu0 %v2950
    %v3423 = vpop.f32.mrb[0].mxu0
    %v3424 = vadd.f32 %v3383, %v3423
    %v3425 = vpop.f32.mrb[0].mxu0
    %v3426 = vadd.f32 %v3385, %v3425
    %v3427 = vpop.f32.mrb[0].mxu0
    %v3428 = vpop.f32.mrb[0].mxu0
    %3429 = vdwg.mxu0
    %v3430 = vmax.f32 %v3424, 0.0
    %v3431 = vmax.f32 %v3426, 0.0
    %v3432 = vpack.c.bf16 %v3430, %v3430
    %v3433 = vpack.c.bf16 %v3431, %v3431
    %v3434 = vld [vmem:[#allocation7] sm:$0xff]
    %v3435 = vld [vmem:[#allocation7 + $0x8] sm:$0xf]
    %v3436 = vld [vmem:[#allocation7 + $0xc] sm:$0xff]
    %v3437 = vld [vmem:[#allocation7 + $0x14] sm:$0xf]
    %v3438 = vld [vmem:[#allocation7 + $0x18] sm:$0xff]
    %v3439 = vld [vmem:[#allocation7 + $0x20] sm:$0xf]
    %v3440 = vld [vmem:[#allocation7 + $0x24] sm:$0xff]
    %v3441 = vld [vmem:[#allocation7 + $0x2c] sm:$0xf]
    %v3442 = vld [vmem:[#allocation7 + $0x30] sm:$0xff]
    %v3443 = vld [vmem:[#allocation7 + $0x38] sm:$0xf]
    %v3444 = vld [vmem:[#allocation7 + $0x3c] sm:$0xff]
    %v3445 = vld [vmem:[#allocation7 + $0x44] sm:$0xf]
    %v3446 = vld [vmem:[#allocation7 + $0x48] sm:$0xff]
    %v3447 = vld [vmem:[#allocation7 + $0x50] sm:$0xf]
    %v3448 = vld [vmem:[#allocation7 + $0x54] sm:$0xff]
    %v3449 = vld [vmem:[#allocation7 + $0x5c] sm:$0xf]
    %v3450 = vld [vmem:[#allocation7 + $0x60] sm:$0xff]
    %v3451 = vld [vmem:[#allocation7 + $0x68] sm:$0xf]
    %v3452 = vld [vmem:[#allocation7 + $0x6c] sm:$0xff]
    %v3453 = vld [vmem:[#allocation7 + $0x74] sm:$0xf]
    %v3454 = vld [vmem:[#allocation7 + $0x78] sm:$0xff]
    %v3455 = vld [vmem:[#allocation7 + $0x80] sm:$0xf]
    %v3456 = vld [vmem:[#allocation7 + $0x84] sm:$0xff]
    %v3457 = vld [vmem:[#allocation7 + $0x8c] sm:$0xf]
    %v3458 = vld [vmem:[#allocation7 + $0x90] sm:$0xff]
    %v3459 = vld [vmem:[#allocation7 + $0x98] sm:$0xf]
    %v3460 = vld [vmem:[#allocation7 + $0x9c] sm:$0xff]
    %v3461 = vld [vmem:[#allocation7 + $0xa4] sm:$0xf]
    %v3462 = vld [vmem:[#allocation7 + $0xa8] sm:$0xff]
    %v3463 = vld [vmem:[#allocation7 + $0xb0] sm:$0xf]
    %v3464 = vld [vmem:[#allocation7 + $0xb4] sm:$0xff]
    %v3465 = vld [vmem:[#allocation7 + $0xbc] sm:$0xf]
    %v3466 = vld [vmem:[#allocation7 + $0xc0] sm:$0xff]
    %v3467 = vld [vmem:[#allocation7 + $0xc8] sm:$0xf]
    %v3468 = vld [vmem:[#allocation7 + $0xcc] sm:$0xff]
    %v3469 = vld [vmem:[#allocation7 + $0xd4] sm:$0xf]
    %v3470 = vld [vmem:[#allocation7 + $0xd8] sm:$0xff]
    %v3471 = vld [vmem:[#allocation7 + $0xe0] sm:$0xf]
    %v3472 = vld [vmem:[#allocation7 + $0xe4] sm:$0xff]
    %v3473 = vld [vmem:[#allocation7 + $0xec] sm:$0xf]
    %v3474 = vld [vmem:[#allocation7 + $0xf0] sm:$0xff]
    %v3475 = vld [vmem:[#allocation7 + $0xf8] sm:$0xf]
    %v3476 = vld [vmem:[#allocation7 + $0xfc] sm:$0xff]
    %v3477 = vld [vmem:[#allocation7 + $0x104] sm:$0xf]
    %v3478 = vld [vmem:[#allocation7 + $0x108] sm:$0xff]
    %v3479 = vld [vmem:[#allocation7 + $0x110] sm:$0xf]
    %v3480 = vld [vmem:[#allocation7 + $0x114] sm:$0xff]
    %v3481 = vld [vmem:[#allocation7 + $0x11c] sm:$0xf]
    %v3482 = vld [vmem:[#allocation7 + $0x120] sm:$0xff]
    %v3483 = vld [vmem:[#allocation7 + $0x128] sm:$0xf]
    %v3484 = vld [vmem:[#allocation7 + $0x12c] sm:$0xff]
    %v3485 = vld [vmem:[#allocation7 + $0x134] sm:$0xf]
    %v3486 = vld [vmem:[#allocation7 + $0x138] sm:$0xff]
    %v3487 = vld [vmem:[#allocation7 + $0x140] sm:$0xf]
    %v3488 = vld [vmem:[#allocation7 + $0x144] sm:$0xff]
    %v3489 = vld [vmem:[#allocation7 + $0x14c] sm:$0xf]
    %v3490 = vld [vmem:[#allocation7 + $0x150] sm:$0xff]
    %v3491 = vld [vmem:[#allocation7 + $0x158] sm:$0xf]
    %v3492 = vld [vmem:[#allocation7 + $0x15c] sm:$0xff]
    %v3493 = vld [vmem:[#allocation7 + $0x164] sm:$0xf]
    %v3494 = vld [vmem:[#allocation7 + $0x168] sm:$0xff]
    %v3495 = vld [vmem:[#allocation7 + $0x170] sm:$0xf]
    %v3496 = vld [vmem:[#allocation7 + $0x174] sm:$0xff]
    %v3497 = vld [vmem:[#allocation7 + $0x17c] sm:$0xf]
    %v3498 = vld [vmem:[%s10] sm:$0x7]
    %v3500 = vlaneseq
    %v3501 = vshrl.u32 %v3500, 7
    %v3502 = vsub.s32 0, %v3501
    %v3503 = vrot.slane %v3498, %v3502
    %v3504 = vlaneseq
    %v3505 = vshrl.u32 %v3504, 7
    %v3506 = vsub.s32 1, %v3505
    %v3507 = vrot.slane %v3498, %v3506
    %v3508 = vlaneseq
    %v3509 = vshrl.u32 %v3508, 7
    %v3510 = vsub.s32 2, %v3509
    %v3511 = vrot.slane %v3498, %v3510
    %v3579 = vunpack.c.l.b16 %v3434
    %v3580 = vunpack.c.h.b16 %v3434
    %v3581 = vunpack.c.l.b16 %v3435
    %v3582 = vunpack.c.l.b16 %v3436
    %v3583 = vunpack.c.h.b16 %v3436
    %v3584 = vunpack.c.l.b16 %v3437
    %v3585 = vunpack.c.l.b16 %v3438
    %v3586 = vunpack.c.h.b16 %v3438
    %v3587 = vunpack.c.l.b16 %v3439
    %v3588 = vunpack.c.l.b16 %v3440
    %v3589 = vunpack.c.h.b16 %v3440
    %v3590 = vunpack.c.l.b16 %v3441
    %v3591 = vunpack.c.l.b16 %v3442
    %v3592 = vunpack.c.h.b16 %v3442
    %v3593 = vunpack.c.l.b16 %v3443
    %v3594 = vunpack.c.l.b16 %v3444
    %v3595 = vunpack.c.h.b16 %v3444
    %v3596 = vunpack.c.l.b16 %v3445
    %v3597 = vunpack.c.l.b16 %v3446
    %v3598 = vunpack.c.h.b16 %v3446
    %v3599 = vunpack.c.l.b16 %v3447
    %v3600 = vunpack.c.l.b16 %v3448
    %v3601 = vunpack.c.h.b16 %v3448
    %v3602 = vunpack.c.l.b16 %v3449
    %v3603 = vunpack.c.l.b16 %v3450
    %v3604 = vunpack.c.h.b16 %v3450
    %v3605 = vunpack.c.l.b16 %v3451
    %v3606 = vunpack.c.l.b16 %v3452
    %v3607 = vunpack.c.h.b16 %v3452
    %v3608 = vunpack.c.l.b16 %v3453
    %v3609 = vunpack.c.l.b16 %v3454
    %v3610 = vunpack.c.h.b16 %v3454
    %v3611 = vunpack.c.l.b16 %v3455
    %v3612 = vunpack.c.l.b16 %v3456
    %v3613 = vunpack.c.h.b16 %v3456
    %v3614 = vunpack.c.l.b16 %v3457
    %v3615 = vunpack.c.l.b16 %v3458
    %v3616 = vunpack.c.h.b16 %v3458
    %v3617 = vunpack.c.l.b16 %v3459
    %v3618 = vunpack.c.l.b16 %v3460
    %v3619 = vunpack.c.h.b16 %v3460
    %v3620 = vunpack.c.l.b16 %v3461
    %v3621 = vunpack.c.l.b16 %v3462
    %v3622 = vunpack.c.h.b16 %v3462
    %v3623 = vunpack.c.l.b16 %v3463
    %v3624 = vunpack.c.l.b16 %v3464
    %v3625 = vunpack.c.h.b16 %v3464
    %v3626 = vunpack.c.l.b16 %v3465
    %v3627 = vunpack.c.l.b16 %v3466
    %v3628 = vunpack.c.h.b16 %v3466
    %v3629 = vunpack.c.l.b16 %v3467
    %v3630 = vunpack.c.l.b16 %v3468
    %v3631 = vunpack.c.h.b16 %v3468
    %v3632 = vunpack.c.l.b16 %v3469
    %v3633 = vunpack.c.l.b16 %v3470
    %v3634 = vunpack.c.h.b16 %v3470
    %v3635 = vunpack.c.l.b16 %v3471
    %v3636 = vunpack.c.l.b16 %v3472
    %v3637 = vunpack.c.h.b16 %v3472
    %v3638 = vunpack.c.l.b16 %v3473
    %v3639 = vunpack.c.l.b16 %v3474
    %v3640 = vunpack.c.h.b16 %v3474
    %v3641 = vunpack.c.l.b16 %v3475
    %v3642 = vunpack.c.l.b16 %v3476
    %v3643 = vunpack.c.h.b16 %v3476
    %v3644 = vunpack.c.l.b16 %v3477
    %v3645 = vunpack.c.l.b16 %v3478
    %v3646 = vunpack.c.h.b16 %v3478
    %v3647 = vunpack.c.l.b16 %v3479
    %v3648 = vunpack.c.l.b16 %v3480
    %v3649 = vunpack.c.h.b16 %v3480
    %v3650 = vunpack.c.l.b16 %v3481
    %v3651 = vunpack.c.l.b16 %v3482
    %v3652 = vunpack.c.h.b16 %v3482
    %v3653 = vunpack.c.l.b16 %v3483
    %v3654 = vunpack.c.l.b16 %v3484
    %v3655 = vunpack.c.h.b16 %v3484
    %v3656 = vunpack.c.l.b16 %v3485
    %v3657 = vunpack.c.l.b16 %v3486
    %v3658 = vunpack.c.h.b16 %v3486
    %v3659 = vunpack.c.l.b16 %v3487
    %v3660 = vunpack.c.l.b16 %v3488
    %v3661 = vunpack.c.h.b16 %v3488
    %v3662 = vunpack.c.l.b16 %v3489
    %v3663 = vunpack.c.l.b16 %v3490
    %v3664 = vunpack.c.h.b16 %v3490
    %v3665 = vunpack.c.l.b16 %v3491
    %v3666 = vunpack.c.l.b16 %v3492
    %v3667 = vunpack.c.h.b16 %v3492
    %v3668 = vunpack.c.l.b16 %v3493
    %v3669 = vunpack.c.l.b16 %v3494
    %v3670 = vunpack.c.h.b16 %v3494
    %v3671 = vunpack.c.l.b16 %v3495
    %v3672 = vunpack.c.l.b16 %v3496
    %v3673 = vunpack.c.h.b16 %v3496
    %v3674 = vunpack.c.l.b16 %v3497
    %v3675 = vpack.c.b16 %v3582, %v3579
    %v3676 = vpack.c.b16 %v3583, %v3580
    %v3677 = vpack.c.b16 %v3584, %v3581
    %v3678 = vpack.c.b16 %v3588, %v3585
    %v3679 = vpack.c.b16 %v3589, %v3586
    %v3680 = vpack.c.b16 %v3590, %v3587
    %v3681 = vpack.c.b16 %v3594, %v3591
    %v3682 = vpack.c.b16 %v3595, %v3592
    %v3683 = vpack.c.b16 %v3596, %v3593
    %v3684 = vpack.c.b16 %v3600, %v3597
    %v3685 = vpack.c.b16 %v3601, %v3598
    %v3686 = vpack.c.b16 %v3602, %v3599
    %v3687 = vpack.c.b16 %v3606, %v3603
    %v3688 = vpack.c.b16 %v3607, %v3604
    %v3689 = vpack.c.b16 %v3608, %v3605
    %v3690 = vpack.c.b16 %v3612, %v3609
    %v3691 = vpack.c.b16 %v3613, %v3610
    %v3692 = vpack.c.b16 %v3614, %v3611
    %v3693 = vpack.c.b16 %v3618, %v3615
    %v3694 = vpack.c.b16 %v3619, %v3616
    %v3695 = vpack.c.b16 %v3620, %v3617
    %v3696 = vpack.c.b16 %v3624, %v3621
    %v3697 = vpack.c.b16 %v3625, %v3622
    %v3698 = vpack.c.b16 %v3626, %v3623
    %v3699 = vpack.c.b16 %v3630, %v3627
    %v3700 = vpack.c.b16 %v3631, %v3628
    %v3701 = vpack.c.b16 %v3632, %v3629
    %v3702 = vpack.c.b16 %v3636, %v3633
    %v3703 = vpack.c.b16 %v3637, %v3634
    %v3704 = vpack.c.b16 %v3638, %v3635
    %v3705 = vpack.c.b16 %v3642, %v3639
    %v3706 = vpack.c.b16 %v3643, %v3640
    %v3707 = vpack.c.b16 %v3644, %v3641
    %v3708 = vpack.c.b16 %v3648, %v3645
    %v3709 = vpack.c.b16 %v3649, %v3646
    %v3710 = vpack.c.b16 %v3650, %v3647
    %v3711 = vpack.c.b16 %v3654, %v3651
    %v3712 = vpack.c.b16 %v3655, %v3652
    %v3713 = vpack.c.b16 %v3656, %v3653
    %v3714 = vpack.c.b16 %v3660, %v3657
    %v3715 = vpack.c.b16 %v3661, %v3658
    %v3716 = vpack.c.b16 %v3662, %v3659
    %v3717 = vpack.c.b16 %v3666, %v3663
    %v3718 = vpack.c.b16 %v3667, %v3664
    %v3719 = vpack.c.b16 %v3668, %v3665
    %v3720 = vpack.c.b16 %v3672, %v3669
    %v3721 = vpack.c.b16 %v3673, %v3670
    %v3722 = vpack.c.b16 %v3674, %v3671
    %3771 = vmatprep.subr.bf16.mxu0 %v3676
    %3772 = vmatpush1.bf16.msra.mxu0 %v3675
    %3773 = vmatprep.subr.bf16.mxu0 %v3679
    %3774 = vmatpush1.bf16.msra.mxu0 %v3678
    %3775 = vmatprep.subr.bf16.mxu0 %v3682
    %3776 = vmatpush1.bf16.msra.mxu0 %v3681
    %3777 = vmatprep.subr.bf16.mxu0 %v3685
    %3778 = vmatpush1.bf16.msra.mxu0 %v3684
    %3779 = vmatprep.subr.bf16.mxu0 %v3688
    %3780 = vmatpush1.bf16.msra.mxu0 %v3687
    %3781 = vmatprep.subr.bf16.mxu0 %v3691
    %3782 = vmatpush1.bf16.msra.mxu0 %v3690
    %3783 = vmatprep.subr.bf16.mxu0 %v3694
    %3784 = vmatpush1.bf16.msra.mxu0 %v3693
    %3785 = vmatprep.subr.bf16.mxu0 %v3697
    %3786 = vmatpush1.bf16.msra.mxu0 %v3696
    %3787 = vmatprep.subr.bf16.mxu0 %v3700
    %3788 = vmatpush1.bf16.msra.mxu0 %v3699
    %3789 = vmatprep.subr.bf16.mxu0 %v3703
    %3790 = vmatpush1.bf16.msra.mxu0 %v3702
    %3791 = vmatprep.subr.bf16.mxu0 %v3706
    %3792 = vmatpush1.bf16.msra.mxu0 %v3705
    %3793 = vmatprep.subr.bf16.mxu0 %v3709
    %3794 = vmatpush1.bf16.msra.mxu0 %v3708
    %3795 = vmatprep.subr.bf16.mxu0 %v3712
    %3796 = vmatpush1.bf16.msra.mxu0 %v3711
    %3797 = vmatprep.subr.bf16.mxu0 %v3715
    %3798 = vmatpush1.bf16.msra.mxu0 %v3714
    %3799 = vmatprep.subr.bf16.mxu0 %v3718
    %3800 = vmatpush1.bf16.msra.mxu0 %v3717
    %3801 = vmatprep.subr.bf16.mxu0 %v3721
    %3802 = vmatpush1.bf16.msra.mxu0 %v3720
    %3803 = vmatprep.mubr.bf16.mxu0 %v3433
    %3804 = vmatmul.mubr.bf16.gmra.mrb[0].mxu0 %v3432
    %v3805 = vpop.f32.mrb[0].mxu0
    %v3806 = vadd.f32 %v3503, %v3805
    %v3807 = vpop.f32.mrb[0].mxu0
    %v3808 = vadd.f32 %v3507, %v3807
    %v3809 = vpop.f32.mrb[0].mxu0
    %v3810 = vpop.f32.mrb[0].mxu0
    %3811 = vdwg.mxu0
    %3812 = vmatprep.subr.bf16.mxu0 0
    %3813 = vmatpush1.bf16.msra.mxu0 %v3677
    %3814 = vmatprep.subr.bf16.mxu0 0
    %3815 = vmatpush1.bf16.msra.mxu0 %v3680
    %3816 = vmatprep.subr.bf16.mxu0 0
    %3817 = vmatpush1.bf16.msra.mxu0 %v3683
    %3818 = vmatprep.subr.bf16.mxu0 0
    %3819 = vmatpush1.bf16.msra.mxu0 %v3686
    %3820 = vmatprep.subr.bf16.mxu0 0
    %3821 = vmatpush1.bf16.msra.mxu0 %v3689
    %3822 = vmatprep.subr.bf16.mxu0 0
    %3823 = vmatpush1.bf16.msra.mxu0 %v3692
    %3824 = vmatprep.subr.bf16.mxu0 0
    %3825 = vmatpush1.bf16.msra.mxu0 %v3695
    %3826 = vmatprep.subr.bf16.mxu0 0
    %3827 = vmatpush1.bf16.msra.mxu0 %v3698
    %3828 = vmatprep.subr.bf16.mxu0 0
    %3829 = vmatpush1.bf16.msra.mxu0 %v3701
    %3830 = vmatprep.subr.bf16.mxu0 0
    %3831 = vmatpush1.bf16.msra.mxu0 %v3704
    %3832 = vmatprep.subr.bf16.mxu0 0
    %3833 = vmatpush1.bf16.msra.mxu0 %v3707
    %3834 = vmatprep.subr.bf16.mxu0 0
    %3835 = vmatpush1.bf16.msra.mxu0 %v3710
    %3836 = vmatprep.subr.bf16.mxu0 0
    %3837 = vmatpush1.bf16.msra.mxu0 %v3713
    %3838 = vmatprep.subr.bf16.mxu0 0
    %3839 = vmatpush1.bf16.msra.mxu0 %v3716
    %3840 = vmatprep.subr.bf16.mxu0 0
    %3841 = vmatpush1.bf16.msra.mxu0 %v3719
    %3842 = vmatprep.subr.bf16.mxu0 0
    %3843 = vmatpush1.bf16.msra.mxu0 %v3722
    %3844 = vmatprep.mubr.bf16.mxu0 %v3433
    %3845 = vmatmul.mubr.bf16.gmra.mrb[0].mxu0 %v3432
    %v3846 = vpop.f32.mrb[0].mxu0
    %v3847 = vadd.f32 %v3511, %v3846
    %v3848 = vpop.f32.mrb[0].mxu0
    %v3849 = vpop.f32.mrb[0].mxu0
    %v3850 = vpop.f32.mrb[0].mxu0
    %3851 = vdwg.mxu0
    %v3852 = vmax.f32 %v3806, 0.0
    %v3853 = vmax.f32 %v3808, 0.0
    %v3854 = vmax.f32 %v3847, 0.0
    %v3855 = vpack.c.bf16 %v3852, %v3852
    %v3856 = vpack.c.bf16 %v3853, %v3853
    %v3857 = vpack.c.bf16 %v3854, %v3854
    %v3858 = vld [vmem:[%s11] sm:$0xff]
    %v3859 = vld [vmem:[%s11 + $0x8] sm:$0xff]
    %v3860 = vld [vmem:[%s11 + $0x10] sm:$0xff]
    %v3861 = vld [vmem:[%s11 + $0x18] sm:$0xff]
    %v3862 = vld [vmem:[%s11 + $0x20] sm:$0xff]
    %v3863 = vld [vmem:[%s11 + $0x28] sm:$0xff]
    %v3864 = vld [vmem:[%s11 + $0x30] sm:$0xff]
    %v3865 = vld [vmem:[%s11 + $0x38] sm:$0xff]
    %v3866 = vld [vmem:[%s11 + $0x40] sm:$0xff]
    %v3867 = vld [vmem:[%s11 + $0x48] sm:$0xff]
    %v3868 = vld [vmem:[%s11 + $0x50] sm:$0xff]
    %v3869 = vld [vmem:[%s11 + $0x58] sm:$0xff]
    %v3870 = vld [vmem:[%s11 + $0x60] sm:$0xff]
    %v3871 = vld [vmem:[%s11 + $0x68] sm:$0xff]
    %v3872 = vld [vmem:[%s11 + $0x70] sm:$0xff]
    %v3873 = vld [vmem:[%s11 + $0x78] sm:$0xff]
    %v3874 = vld [vmem:[%s11 + $0x80] sm:$0xff]
    %v3875 = vld [vmem:[%s11 + $0x88] sm:$0xff]
    %v3876 = vld [vmem:[%s11 + $0x90] sm:$0xff]
    %v3877 = vld [vmem:[%s11 + $0x98] sm:$0xff]
    %v3878 = vld [vmem:[%s11 + $0xa0] sm:$0xff]
    %v3879 = vld [vmem:[%s11 + $0xa8] sm:$0xff]
    %v3880 = vld [vmem:[%s11 + $0xb0] sm:$0xff]
    %v3881 = vld [vmem:[%s11 + $0xb8] sm:$0xff]
    %v3882 = vld [vmem:[%s11 + $0xc0] sm:$0xff]
    %v3883 = vld [vmem:[%s11 + $0xc8] sm:$0xff]
    %v3884 = vld [vmem:[%s11 + $0xd0] sm:$0xff]
    %v3885 = vld [vmem:[%s11 + $0xd8] sm:$0xff]
    %v3886 = vld [vmem:[%s11 + $0xe0] sm:$0xff]
    %v3887 = vld [vmem:[%s11 + $0xe8] sm:$0xff]
    %v3888 = vld [vmem:[%s11 + $0xf0] sm:$0xff]
    %v3889 = vld [vmem:[%s11 + $0xf8] sm:$0xff]
    %v3890 = vld [vmem:[%s11 + $0x100] sm:$0xff]
    %v3891 = vld [vmem:[%s11 + $0x108] sm:$0xff]
    %v3892 = vld [vmem:[%s11 + $0x110] sm:$0xff]
    %v3893 = vld [vmem:[%s11 + $0x118] sm:$0xff]
    %v3894 = vld [vmem:[%s11 + $0x120] sm:$0xff]
    %v3895 = vld [vmem:[%s11 + $0x128] sm:$0xff]
    %v3896 = vld [vmem:[%s11 + $0x130] sm:$0xff]
    %v3897 = vld [vmem:[%s11 + $0x138] sm:$0xff]
    %v3898 = vld [vmem:[%s11 + $0x140] sm:$0xff]
    %v3899 = vld [vmem:[%s11 + $0x148] sm:$0xff]
    %v3900 = vld [vmem:[%s11 + $0x150] sm:$0xff]
    %v3901 = vld [vmem:[%s11 + $0x158] sm:$0xff]
    %v3902 = vld [vmem:[%s11 + $0x160] sm:$0xff]
    %v3903 = vld [vmem:[%s11 + $0x168] sm:$0xff]
    %v3904 = vld [vmem:[%s11 + $0x170] sm:$0xff]
    %v3905 = vld [vmem:[%s11 + $0x178] sm:$0xff]
    %v3906 = vld [vmem:[%s12] sm:$0x3]
    %v3908 = vlaneseq
    %v3909 = vshrl.u32 %v3908, 7
    %v3910 = vsub.s32 0, %v3909
    %v3911 = vrot.slane %v3906, %v3910
    %v3912 = vlaneseq
    %v3913 = vshrl.u32 %v3912, 7
    %v3914 = vsub.s32 1, %v3913
    %v3915 = vrot.slane %v3906, %v3914
    %v3966 = vunpack.c.l.b16 %v3858
    %v3967 = vunpack.c.h.b16 %v3858
    %v3968 = vunpack.c.l.b16 %v3859
    %v3969 = vunpack.c.h.b16 %v3859
    %v3970 = vunpack.c.l.b16 %v3860
    %v3971 = vunpack.c.h.b16 %v3860
    %v3972 = vunpack.c.l.b16 %v3861
    %v3973 = vunpack.c.h.b16 %v3861
    %v3974 = vunpack.c.l.b16 %v3862
    %v3975 = vunpack.c.h.b16 %v3862
    %v3976 = vunpack.c.l.b16 %v3863
    %v3977 = vunpack.c.h.b16 %v3863
    %v3978 = vunpack.c.l.b16 %v3864
    %v3979 = vunpack.c.h.b16 %v3864
    %v3980 = vunpack.c.l.b16 %v3865
    %v3981 = vunpack.c.h.b16 %v3865
    %v3982 = vunpack.c.l.b16 %v3866
    %v3983 = vunpack.c.h.b16 %v3866
    %v3984 = vunpack.c.l.b16 %v3867
    %v3985 = vunpack.c.h.b16 %v3867
    %v3986 = vunpack.c.l.b16 %v3868
    %v3987 = vunpack.c.h.b16 %v3868
    %v3988 = vunpack.c.l.b16 %v3869
    %v3989 = vunpack.c.h.b16 %v3869
    %v3990 = vunpack.c.l.b16 %v3870
    %v3991 = vunpack.c.h.b16 %v3870
    %v3992 = vunpack.c.l.b16 %v3871
    %v3993 = vunpack.c.h.b16 %v3871
    %v3994 = vunpack.c.l.b16 %v3872
    %v3995 = vunpack.c.h.b16 %v3872
    %v3996 = vunpack.c.l.b16 %v3873
    %v3997 = vunpack.c.h.b16 %v3873
    %v3998 = vunpack.c.l.b16 %v3874
    %v3999 = vunpack.c.h.b16 %v3874
    %v4000 = vunpack.c.l.b16 %v3875
    %v4001 = vunpack.c.h.b16 %v3875
    %v4002 = vunpack.c.l.b16 %v3876
    %v4003 = vunpack.c.h.b16 %v3876
    %v4004 = vunpack.c.l.b16 %v3877
    %v4005 = vunpack.c.h.b16 %v3877
    %v4006 = vunpack.c.l.b16 %v3878
    %v4007 = vunpack.c.h.b16 %v3878
    %v4008 = vunpack.c.l.b16 %v3879
    %v4009 = vunpack.c.h.b16 %v3879
    %v4010 = vunpack.c.l.b16 %v3880
    %v4011 = vunpack.c.h.b16 %v3880
    %v4012 = vunpack.c.l.b16 %v3881
    %v4013 = vunpack.c.h.b16 %v3881
    %v4014 = vunpack.c.l.b16 %v3882
    %v4015 = vunpack.c.h.b16 %v3882
    %v4016 = vunpack.c.l.b16 %v3883
    %v4017 = vunpack.c.h.b16 %v3883
    %v4018 = vunpack.c.l.b16 %v3884
    %v4019 = vunpack.c.h.b16 %v3884
    %v4020 = vunpack.c.l.b16 %v3885
    %v4021 = vunpack.c.h.b16 %v3885
    %v4022 = vunpack.c.l.b16 %v3886
    %v4023 = vunpack.c.h.b16 %v3886
    %v4024 = vunpack.c.l.b16 %v3887
    %v4025 = vunpack.c.h.b16 %v3887
    %v4026 = vunpack.c.l.b16 %v3888
    %v4027 = vunpack.c.h.b16 %v3888
    %v4028 = vunpack.c.l.b16 %v3889
    %v4029 = vunpack.c.h.b16 %v3889
    %v4030 = vunpack.c.l.b16 %v3890
    %v4031 = vunpack.c.h.b16 %v3890
    %v4032 = vunpack.c.l.b16 %v3891
    %v4033 = vunpack.c.h.b16 %v3891
    %v4034 = vunpack.c.l.b16 %v3892
    %v4035 = vunpack.c.h.b16 %v3892
    %v4036 = vunpack.c.l.b16 %v3893
    %v4037 = vunpack.c.h.b16 %v3893
    %v4038 = vunpack.c.l.b16 %v3894
    %v4039 = vunpack.c.h.b16 %v3894
    %v4040 = vunpack.c.l.b16 %v3895
    %v4041 = vunpack.c.h.b16 %v3895
    %v4042 = vunpack.c.l.b16 %v3896
    %v4043 = vunpack.c.h.b16 %v3896
    %v4044 = vunpack.c.l.b16 %v3897
    %v4045 = vunpack.c.h.b16 %v3897
    %v4046 = vunpack.c.l.b16 %v3898
    %v4047 = vunpack.c.h.b16 %v3898
    %v4048 = vunpack.c.l.b16 %v3899
    %v4049 = vunpack.c.h.b16 %v3899
    %v4050 = vunpack.c.l.b16 %v3900
    %v4051 = vunpack.c.h.b16 %v3900
    %v4052 = vunpack.c.l.b16 %v3901
    %v4053 = vunpack.c.h.b16 %v3901
    %v4054 = vunpack.c.l.b16 %v3902
    %v4055 = vunpack.c.h.b16 %v3902
    %v4056 = vunpack.c.l.b16 %v3903
    %v4057 = vunpack.c.h.b16 %v3903
    %v4058 = vunpack.c.l.b16 %v3904
    %v4059 = vunpack.c.h.b16 %v3904
    %v4060 = vunpack.c.l.b16 %v3905
    %v4061 = vunpack.c.h.b16 %v3905
    %v4062 = vpack.c.b16 %v3968, %v3966
    %v4063 = vpack.c.b16 %v3969, %v3967
    %v4064 = vpack.c.b16 %v3972, %v3970
    %v4065 = vpack.c.b16 %v3973, %v3971
    %v4066 = vpack.c.b16 %v3976, %v3974
    %v4067 = vpack.c.b16 %v3977, %v3975
    %v4068 = vpack.c.b16 %v3980, %v3978
    %v4069 = vpack.c.b16 %v3981, %v3979
    %v4070 = vpack.c.b16 %v3984, %v3982
    %v4071 = vpack.c.b16 %v3985, %v3983
    %v4072 = vpack.c.b16 %v3988, %v3986
    %v4073 = vpack.c.b16 %v3989, %v3987
    %v4074 = vpack.c.b16 %v3992, %v3990
    %v4075 = vpack.c.b16 %v3993, %v3991
    %v4076 = vpack.c.b16 %v3996, %v3994
    %v4077 = vpack.c.b16 %v3997, %v3995
    %v4078 = vpack.c.b16 %v4000, %v3998
    %v4079 = vpack.c.b16 %v4001, %v3999
    %v4080 = vpack.c.b16 %v4004, %v4002
    %v4081 = vpack.c.b16 %v4005, %v4003
    %v4082 = vpack.c.b16 %v4008, %v4006
    %v4083 = vpack.c.b16 %v4009, %v4007
    %v4084 = vpack.c.b16 %v4012, %v4010
    %v4085 = vpack.c.b16 %v4013, %v4011
    %v4086 = vpack.c.b16 %v4016, %v4014
    %v4087 = vpack.c.b16 %v4017, %v4015
    %v4088 = vpack.c.b16 %v4020, %v4018
    %v4089 = vpack.c.b16 %v4021, %v4019
    %v4090 = vpack.c.b16 %v4024, %v4022
    %v4091 = vpack.c.b16 %v4025, %v4023
    %v4092 = vpack.c.b16 %v4028, %v4026
    %v4093 = vpack.c.b16 %v4029, %v4027
    %v4094 = vpack.c.b16 %v4032, %v4030
    %v4095 = vpack.c.b16 %v4033, %v4031
    %v4096 = vpack.c.b16 %v4036, %v4034
    %v4097 = vpack.c.b16 %v4037, %v4035
    %v4098 = vpack.c.b16 %v4040, %v4038
    %v4099 = vpack.c.b16 %v4041, %v4039
    %v4100 = vpack.c.b16 %v4044, %v4042
    %v4101 = vpack.c.b16 %v4045, %v4043
    %v4102 = vpack.c.b16 %v4048, %v4046
    %v4103 = vpack.c.b16 %v4049, %v4047
    %v4104 = vpack.c.b16 %v4052, %v4050
    %v4105 = vpack.c.b16 %v4053, %v4051
    %v4106 = vpack.c.b16 %v4056, %v4054
    %v4107 = vpack.c.b16 %v4057, %v4055
    %v4108 = vpack.c.b16 %v4060, %v4058
    %v4109 = vpack.c.b16 %v4061, %v4059
    %4158 = vmatprep.subr.bf16.mxu0 %v4063
    %4159 = vmatpush1.bf16.msra.mxu0 %v4062
    %4160 = vmatprep.subr.bf16.mxu0 %v4065
    %4161 = vmatpush1.bf16.msra.mxu0 %v4064
    %4162 = vmatprep.subr.bf16.mxu0 %v4067
    %4163 = vmatpush1.bf16.msra.mxu0 %v4066
    %4164 = vmatprep.subr.bf16.mxu0 %v4069
    %4165 = vmatpush1.bf16.msra.mxu0 %v4068
    %4166 = vmatprep.subr.bf16.mxu0 %v4071
    %4167 = vmatpush1.bf16.msra.mxu0 %v4070
    %4168 = vmatprep.subr.bf16.mxu0 %v4073
    %4169 = vmatpush1.bf16.msra.mxu0 %v4072
    %4170 = vmatprep.subr.bf16.mxu0 %v4075
    %4171 = vmatpush1.bf16.msra.mxu0 %v4074
    %4172 = vmatprep.subr.bf16.mxu0 %v4077
    %4173 = vmatpush1.bf16.msra.mxu0 %v4076
    %4174 = vmatprep.subr.bf16.mxu0 %v4079
    %4175 = vmatpush1.bf16.msra.mxu0 %v4078
    %4176 = vmatprep.subr.bf16.mxu0 %v4081
    %4177 = vmatpush1.bf16.msra.mxu0 %v4080
    %4178 = vmatprep.subr.bf16.mxu0 %v4083
    %4179 = vmatpush1.bf16.msra.mxu0 %v4082
    %4180 = vmatprep.subr.bf16.mxu0 %v4085
    %4181 = vmatpush1.bf16.msra.mxu0 %v4084
    %4182 = vmatprep.subr.bf16.mxu0 %v4087
    %4183 = vmatpush1.bf16.msra.mxu0 %v4086
    %4184 = vmatprep.subr.bf16.mxu0 %v4089
    %4185 = vmatpush1.bf16.msra.mxu0 %v4088
    %4186 = vmatprep.subr.bf16.mxu0 %v4091
    %4187 = vmatpush1.bf16.msra.mxu0 %v4090
    %4188 = vmatprep.subr.bf16.mxu0 %v4093
    %4189 = vmatpush1.bf16.msra.mxu0 %v4092
    %4190 = vmatprep.mubr.bf16.mxu0 %v3856
    %4191 = vmatmul.mubr.bf16.gmra.mrb[0].mxu0 %v3855
    %v4192 = vpop.f32.mrb[0].mxu0
    %v4193 = vadd.f32 %v3911, %v4192
    %v4194 = vpop.f32.mrb[0].mxu0
    %v4195 = vadd.f32 %v3915, %v4194
    %v4196 = vpop.f32.mrb[0].mxu0
    %v4197 = vpop.f32.mrb[0].mxu0
    %4198 = vdwg.mxu0
    %4199 = vmatprep.subr.bf16.mxu0 %v4095
    %4200 = vmatpush1.bf16.msra.mxu0 %v4094
    %4201 = vmatprep.subr.bf16.mxu0 %v4097
    %4202 = vmatpush1.bf16.msra.mxu0 %v4096
    %4203 = vmatprep.subr.bf16.mxu0 %v4099
    %4204 = vmatpush1.bf16.msra.mxu0 %v4098
    %4205 = vmatprep.subr.bf16.mxu0 %v4101
    %4206 = vmatpush1.bf16.msra.mxu0 %v4100
    %4207 = vmatprep.subr.bf16.mxu0 %v4103
    %4208 = vmatpush1.bf16.msra.mxu0 %v4102
    %4209 = vmatprep.subr.bf16.mxu0 %v4105
    %4210 = vmatpush1.bf16.msra.mxu0 %v4104
    %4211 = vmatprep.subr.bf16.mxu0 %v4107
    %4212 = vmatpush1.bf16.msra.mxu0 %v4106
    %4213 = vmatprep.subr.bf16.mxu0 %v4109
    %4214 = vmatpush1.bf16.msra.mxu0 %v4108
    %4215 = vmatprep.subr.bf16.mxu0 0
    %4216 = vmatpush1.bf16.msra.mxu0 0
    %4217 = vmatprep.subr.bf16.mxu0 0
    %4218 = vmatpush1.bf16.msra.mxu0 0
    %4219 = vmatprep.subr.bf16.mxu0 0
    %4220 = vmatpush1.bf16.msra.mxu0 0
    %4221 = vmatprep.subr.bf16.mxu0 0
    %4222 = vmatpush1.bf16.msra.mxu0 0
    %4223 = vmatprep.subr.bf16.mxu0 0
    %4224 = vmatpush1.bf16.msra.mxu0 0
    %4225 = vmatprep.subr.bf16.mxu0 0
    %4226 = vmatpush1.bf16.msra.mxu0 0
    %4227 = vmatprep.subr.bf16.mxu0 0
    %4228 = vmatpush1.bf16.msra.mxu0 0
    %4229 = vmatprep.subr.bf16.mxu0 0
    %4230 = vmatpush1.bf16.msra.mxu0 0
    %4231 = vmatprep.mubr.bf16.mxu0 0
    %4232 = vmatmul.mubr.bf16.gmra.mrb[0].mxu0 %v3857
    %v4233 = vpop.f32.mrb[0].mxu0
    %v4234 = vadd.f32 %v4193, %v4233
    %v4235 = vpop.f32.mrb[0].mxu0
    %v4236 = vadd.f32 %v4195, %v4235
    %v4237 = vpop.f32.mrb[0].mxu0
    %v4238 = vpop.f32.mrb[0].mxu0
    %4239 = vdwg.mxu0
    %v4240 = vmax.f32 %v4234, 0.0
    %v4241 = vmax.f32 %v4236, 0.0
    %v4242 = vpack.c.bf16 %v4240, %v4240
    %v4243 = vpack.c.bf16 %v4241, %v4241
    %v4244 = vld [vmem:[#allocation8] sm:$0xf]
    %v4245 = vld [vmem:[#allocation8 + $0x4] sm:$0xf]
    %v4246 = vld [vmem:[#allocation8 + $0x8] sm:$0xf]
    %v4247 = vld [vmem:[#allocation8 + $0xc] sm:$0xf]
    %v4248 = vld [vmem:[#allocation8 + $0x10] sm:$0xf]
    %v4249 = vld [vmem:[#allocation8 + $0x14] sm:$0xf]
    %v4250 = vld [vmem:[#allocation8 + $0x18] sm:$0xf]
    %v4251 = vld [vmem:[#allocation8 + $0x1c] sm:$0xf]
    %v4252 = vld [vmem:[#allocation8 + $0x20] sm:$0xf]
    %v4253 = vld [vmem:[#allocation8 + $0x24] sm:$0xf]
    %v4254 = vld [vmem:[#allocation8 + $0x28] sm:$0xf]
    %v4255 = vld [vmem:[#allocation8 + $0x2c] sm:$0xf]
    %v4256 = vld [vmem:[#allocation8 + $0x30] sm:$0xf]
    %v4257 = vld [vmem:[#allocation8 + $0x34] sm:$0xf]
    %v4258 = vld [vmem:[#allocation8 + $0x38] sm:$0xf]
    %v4259 = vld [vmem:[#allocation8 + $0x3c] sm:$0xf]
    %v4260 = vld [vmem:[#allocation8 + $0x40] sm:$0xf]
    %v4261 = vld [vmem:[#allocation8 + $0x44] sm:$0xf]
    %v4262 = vld [vmem:[#allocation8 + $0x48] sm:$0xf]
    %v4263 = vld [vmem:[#allocation8 + $0x4c] sm:$0xf]
    %v4264 = vld [vmem:[#allocation8 + $0x50] sm:$0xf]
    %v4265 = vld [vmem:[#allocation8 + $0x54] sm:$0xf]
    %v4266 = vld [vmem:[#allocation8 + $0x58] sm:$0xf]
    %v4267 = vld [vmem:[#allocation8 + $0x5c] sm:$0xf]
    %v4268 = vld [vmem:[%s14] sm:$0x1]
    %v4270 = vlaneseq
    %v4271 = vshrl.u32 %v4270, 7
    %v4272 = vsub.s32 0, %v4271
    %v4273 = vrot.slane %v4268, %v4272
    %v4299 = vunpack.c.l.b16 %v4244
    %v4300 = vunpack.c.l.b16 %v4245
    %v4301 = vunpack.c.l.b16 %v4246
    %v4302 = vunpack.c.l.b16 %v4247
    %v4303 = vunpack.c.l.b16 %v4248
    %v4304 = vunpack.c.l.b16 %v4249
    %v4305 = vunpack.c.l.b16 %v4250
    %v4306 = vunpack.c.l.b16 %v4251
    %v4307 = vunpack.c.l.b16 %v4252
    %v4308 = vunpack.c.l.b16 %v4253
    %v4309 = vunpack.c.l.b16 %v4254
    %v4310 = vunpack.c.l.b16 %v4255
    %v4311 = vunpack.c.l.b16 %v4256
    %v4312 = vunpack.c.l.b16 %v4257
    %v4313 = vunpack.c.l.b16 %v4258
    %v4314 = vunpack.c.l.b16 %v4259
    %v4315 = vunpack.c.l.b16 %v4260
    %v4316 = vunpack.c.l.b16 %v4261
    %v4317 = vunpack.c.l.b16 %v4262
    %v4318 = vunpack.c.l.b16 %v4263
    %v4319 = vunpack.c.l.b16 %v4264
    %v4320 = vunpack.c.l.b16 %v4265
    %v4321 = vunpack.c.l.b16 %v4266
    %v4322 = vunpack.c.l.b16 %v4267
    %v4323 = vpack.c.b16 %v4300, %v4299
    %v4324 = vpack.c.b16 %v4302, %v4301
    %v4325 = vpack.c.b16 %v4304, %v4303
    %v4326 = vpack.c.b16 %v4306, %v4305
    %v4327 = vpack.c.b16 %v4308, %v4307
    %v4328 = vpack.c.b16 %v4310, %v4309
    %v4329 = vpack.c.b16 %v4312, %v4311
    %v4330 = vpack.c.b16 %v4314, %v4313
    %v4331 = vpack.c.b16 %v4316, %v4315
    %v4332 = vpack.c.b16 %v4318, %v4317
    %v4333 = vpack.c.b16 %v4320, %v4319
    %v4334 = vpack.c.b16 %v4322, %v4321
    %v4348 = vsel %vm227, %v4243, 0
    %4350 = vmatprep.subr.bf16.mxu0 0
    %4351 = vmatpush1.bf16.msra.mxu0 %v4323
    %4352 = vmatprep.subr.bf16.mxu0 0
    %4353 = vmatpush1.bf16.msra.mxu0 %v4324
    %4354 = vmatprep.subr.bf16.mxu0 0
    %4355 = vmatpush1.bf16.msra.mxu0 %v4325
    %4356 = vmatprep.subr.bf16.mxu0 0
    %4357 = vmatpush1.bf16.msra.mxu0 %v4326
    %4358 = vmatprep.subr.bf16.mxu0 0
    %4359 = vmatpush1.bf16.msra.mxu0 %v4327
    %4360 = vmatprep.subr.bf16.mxu0 0
    %4361 = vmatpush1.bf16.msra.mxu0 %v4328
    %4362 = vmatprep.subr.bf16.mxu0 0
    %4363 = vmatpush1.bf16.msra.mxu0 %v4329
    %4364 = vmatprep.subr.bf16.mxu0 0
    %4365 = vmatpush1.bf16.msra.mxu0 %v4330
    %4366 = vmatprep.subr.bf16.mxu0 0
    %4367 = vmatpush1.bf16.msra.mxu0 %v4331
    %4368 = vmatprep.subr.bf16.mxu0 0
    %4369 = vmatpush1.bf16.msra.mxu0 %v4332
    %4370 = vmatprep.subr.bf16.mxu0 0
    %4371 = vmatpush1.bf16.msra.mxu0 %v4333
    %4372 = vmatprep.subr.bf16.mxu0 0
    %4373 = vmatpush1.bf16.msra.mxu0 %v4334
    %4374 = vmatprep.subr.bf16.mxu0 0
    %4375 = vmatpush1.bf16.msra.mxu0 0
    %4376 = vmatprep.subr.bf16.mxu0 0
    %4377 = vmatpush1.bf16.msra.mxu0 0
    %4378 = vmatprep.subr.bf16.mxu0 0
    %4379 = vmatpush1.bf16.msra.mxu0 0
    %4380 = vmatprep.subr.bf16.mxu0 0
    %4381 = vmatpush1.bf16.msra.mxu0 0
    %4382 = vmatprep.mubr.bf16.mxu0 %v4348
    %4383 = vmatmul.mubr.bf16.gmra.mrb[0].mxu0 %v4242
    %v4384 = vpop.f32.mrb[0].mxu0
    %v4385 = vadd.f32 %v4273, %v4384
    %v4386 = vpop.f32.mrb[0].mxu0
    %v4387 = vpop.f32.mrb[0].mxu0
    %v4388 = vpop.f32.mrb[0].mxu0
    %4389 = vdwg.mxu0
    %4390 = vst [vmem:[#allocation10] sm:$0xff] %v4385
    // Predicated region
    $region78: #{tpu_custom_call.1} parent=1 // pred_check
      _
    $region79: #{tpu_custom_call.1} parent=1 // pred_check_branch
      %4392 = sbr.rel (0) target = $region81
    $region80: #{tpu_custom_call.1} parent=1 // pred_region
      %s4394 = ssub.s32 128, 128
      %4395 = vsyncadd [#allocation4], %s4394
      %s4397 = sshll.u32 [#allocation10], 4
      %s4398 = int_to_ptr.vmem [resolvable:$true] %s4397
      %4400 = dma.vmem_to_hbm [thread:$0]  %s4398, 128, %s15, [#allocation4]
    $region81: #{tpu_custom_call.1} parent=1 // pred_fallthru
      _
    // Predicated region
    $region82: #{tpu_custom_call.1} parent=1 // pred_check
      _
    $region83: #{tpu_custom_call.1} parent=1 // pred_check_branch
      %4402 = sbr.rel (0) target = $region85
    $region84: #{tpu_custom_call.1} parent=1 // pred_region
      %4403 = dma.done [#allocation4], 128
    $region85: #{tpu_custom_call.1} parent=1 // pred_fallthru
      _
    %4404 = vsyncpa [#allocation3], 1
    %4405 = vsyncpa [#allocation6], 1
    %4406 = vsyncpa [#allocation9], 1
    %4407 = vsyncpa [#allocation4], 1

</llo_original>
